<compile_context>
chip_gen: v6e
topology: v6e:2x2x1
jax: 0.10.0
libtpu: 0.0.40
codegen_flags: <defaults>
</compile_context>

<pallas_src>
import functools

import jax
import jax.numpy as jnp
from jax.experimental import pallas as pl
from jax.experimental.pallas import tpu as pltpu  # noqa: F401  (TPU backend)

CPAD = 128  # lane-dense channel padding for the conv stack


def _spec2d(shape):
    # Full-array 2D block, no grid.
    return pl.BlockSpec(shape, lambda: (0, 0))


# ---------------------------------------------------------------------------
# Pallas kernels
# ---------------------------------------------------------------------------
def _matmul_bn_relu_kernel(a_ref, w_ref, b_ref, g_ref, be_ref, o_ref, *, eps):
    """o = relu(batchnorm(a @ w + b)); BN stats over all M rows (per column)."""
    acc = jnp.dot(a_ref[...], w_ref[...], preferred_element_type=jnp.float32)
    acc = acc + b_ref[...]
    mean = jnp.mean(acc, axis=0, keepdims=True)
    diff = acc - mean
    var = jnp.mean(diff * diff, axis=0, keepdims=True)        # biased, like torch
    y = diff * jax.lax.rsqrt(var + eps) * g_ref[...] + be_ref[...]
    o_ref[...] = jnp.maximum(y, 0.0)


def _mlp_heads_kernel(*refs, eps, has_cond):
    """Whole MLP tail fused: fc1->BN->ReLU->fc2->BN->ReLU->[cat y]->
    merged(mean||logvar) layer1->BN->ReLU->merged layer2."""
    if has_cond:
        x_ref, y_ref = refs[:2]
        rest = refs[2:]
    else:
        x_ref = refs[0]
        y_ref = None
        rest = refs[1:]
    (w1, b1, g1, be1, w2, b2, g2, be2,
     wh1, bh1, gh, beh, wh2, bh2, o_ref) = rest

    def bn_relu(v, g, b):
        mu = jnp.mean(v, axis=0, keepdims=True)
        d = v - mu
        var = jnp.mean(d * d, axis=0, keepdims=True)
        return jnp.maximum(d * jax.lax.rsqrt(var + eps) * g + b, 0.0)

    h = jnp.dot(x_ref[...], w1[...], preferred_element_type=jnp.float32) + b1[...]
    h = bn_relu(h, g1[...], be1[...])
    h = jnp.dot(h, w2[...], preferred_element_type=jnp.float32) + b2[...]
    h = bn_relu(h, g2[...], be2[...])
    if has_cond:
        h = jnp.concatenate([h, y_ref[...]], axis=1)
    t = jnp.dot(h, wh1[...], preferred_element_type=jnp.float32) + bh1[...]
    t = bn_relu(t, gh[...], beh[...])
    o_ref[...] = jnp.dot(t, wh2[...], preferred_element_type=jnp.float32) + bh2[...]


# ---------------------------------------------------------------------------
# Layer wrappers (glue + pallas_call)
# ---------------------------------------------------------------------------
def conv_bn_relu(x_nhwc, w_flat, b_row, g_row, be_row, *, kh, kw):
    """VALID conv (stride 1) + BatchNorm2d(train-mode) + ReLU, fused in one kernel.

    x_nhwc: (N, H, W, Cin); w_flat: (kh*kw*Cin, CoutPad) with feature order
    (i, j, cin); b/g/be: (1, CoutPad).
    """
    n, h, w, c = x_nhwc.shape
    oh, ow = h - kh + 1, w - kw + 1
    # im2col in plain JAX (tiny tensors at these shapes).
    patches = [x_nhwc[:, i:i + oh, j:j + ow, :] for i in range(kh) for j in range(kw)]
    a = jnp.concatenate(patches, axis=-1).reshape(n * oh * ow, kh * kw * c)
    m, k = a.shape
    cout = w_flat.shape[1]
    out = pl.pallas_call(
        functools.partial(_matmul_bn_relu_kernel, eps=1e-5),
        out_shape=jax.ShapeDtypeStruct((m, cout), jnp.float32),
        in_specs=[_spec2d((m, k)), _spec2d((k, cout)),
                  _spec2d((1, cout)), _spec2d((1, cout)), _spec2d((1, cout))],
        out_specs=_spec2d((m, cout)),
    )(a, w_flat, b_row, g_row, be_row)
    return out.reshape(n, oh, ow, cout)


def maxpool2(x_nhwc):
    # 2x2 max pool, stride 2 (plain-JAX glue).
    n, h, w, c = x_nhwc.shape
    x = x_nhwc.reshape(n, h // 2, 2, w // 2, 2, c)
    return jnp.max(x, axis=(2, 4))


def mlp_heads_fused(p, xf, y=None):
    """One pallas_call for the whole MLP tail; returns (N, 2*nhid) = [mean||logvar]."""
    has_cond = y is not None
    inputs = [xf]
    if has_cond:
        inputs.append(y.astype(jnp.float32))
    inputs += [p["fc1_w"], p["fc1_b"], p["fcbn1_g"], p["fcbn1_b"],
               p["fc2_w"], p["fc2_b"], p["fcbn2_g"], p["fcbn2_b"],
               p["h1_w"], p["h1_b"], p["hbn_g"], p["hbn_b"],
               p["h2_w"], p["h2_b"]]
    n = xf.shape[0]
    nout = p["h2_b"].shape[1]
    kernel = functools.partial(_mlp_heads_kernel, eps=1e-5, has_cond=has_cond)
    return pl.pallas_call(
        kernel,
        out_shape=jax.ShapeDtypeStruct((n, nout), jnp.float32),
        in_specs=[_spec2d(a.shape) for a in inputs],
        out_specs=_spec2d((n, nout)),
    )(*inputs)


# ---------------------------------------------------------------------------
# Parameter construction (deterministic, synthetic) + packing for the kernels
# ---------------------------------------------------------------------------
def _pad_row(v, width, fill=0.0):
    out = jnp.full((1, width), fill, jnp.float32)
    return out.at[0, : v.shape[0]].set(v.astype(jnp.float32))


def _pack_conv(w_oihw, b, g, be, *, cin_pad):
    """torch (Cout, Cin, KH, KW) -> (KH*KW*cin_pad, CPAD) matmul weight,
    plus channel-padded bias / BN gamma / BN beta rows."""
    cout, cin, kh, kw = w_oihw.shape
    wt = jnp.transpose(w_oihw, (2, 3, 1, 0))                   # (kh, kw, cin, cout)
    wp = jnp.zeros((kh, kw, cin_pad, CPAD), jnp.float32)
    wp = wp.at[:, :, :cin, :cout].set(wt)
    return (wp.reshape(kh * kw * cin_pad, CPAD),
            _pad_row(b, CPAD, 0.0),
            _pad_row(g, CPAD, 1.0),
            _pad_row(be, CPAD, 0.0))


def _pack_fc1(fc1_w, hh, ww, c_real=64):
    """Fold torch's NCHW x.view(batch,-1) ordering and the channel padding into
    the fc1 weight (consumes the NHWC/128-padded flattened feature directly)."""
    dout = fc1_w.shape[0]
    w_r = fc1_w.reshape(dout, c_real, hh, ww)                  # (out, c, y, x)
    w_nhwc = jnp.transpose(w_r, (2, 3, 1, 0))                  # (y, x, c, out)
    wp = jnp.zeros((hh, ww, CPAD, dout), jnp.float32)
    wp = wp.at[:, :, :c_real, :].set(w_nhwc)
    return wp.reshape(hh * ww * CPAD, dout)


def _pack_heads(m1_w, m1_b, mbn_g, mbn_b, m2_w, m2_b,
                v1_w, v1_b, vbn_g, vbn_b, v2_w, v2_b):
    """Merge calc_mean / calc_logvar into one lane-dense pair of matmuls."""
    h1_w = jnp.concatenate([m1_w.T, v1_w.T], axis=1)           # (128+ncond, 128)
    h1_b = jnp.concatenate([m1_b, v1_b])[None, :]
    hbn_g = jnp.concatenate([mbn_g, vbn_g])[None, :]
    hbn_b = jnp.concatenate([mbn_b, vbn_b])[None, :]
    nhid = m2_w.shape[0]
    h2_w = jnp.zeros((128, 2 * nhid), jnp.float32)
    h2_w = h2_w.at[:64, :nhid].set(m2_w.T)                     # block-diagonal
    h2_w = h2_w.at[64:, nhid:].set(v2_w.T)
    h2_b = jnp.concatenate([m2_b, v2_b])[None, :]
    return {"h1_w": h1_w, "h1_b": h1_b, "hbn_g": hbn_g, "hbn_b": hbn_b,
            "h2_w": h2_w, "h2_b": h2_b}


def init_params(shape, nhid=16, ncond=0, seed=0):
    c, h, w = shape
    ww = ((w - 8) // 2 - 4) // 2
    hh = ((h - 8) // 2 - 4) // 2
    flat = ww * hh * 64

    keys = iter(jax.random.split(jax.random.PRNGKey(seed), 32))

    def winit(shp, scale=0.05):
        return (scale * jax.random.normal(next(keys), shp)).astype(jnp.float32)

    def zeros(n):
        return jnp.zeros((n,), jnp.float32)

    def ones(n):
        return jnp.ones((n,), jnp.float32)

    # Raw torch-layout parameters (Conv2d: (out,in,kh,kw); Linear: (out,in)),
    # fresh BN modules (gamma=1, beta=0, train-mode batch statistics).
    conv1_w, conv1_b = winit((16, c, 5, 5)), zeros(16)
    conv2_w, conv2_b = winit((32, 16, 5, 5)), zeros(32)
    conv3_w, conv3_b = winit((64, 32, 3, 3)), zeros(64)
    conv4_w, conv4_b = winit((64, 64, 3, 3)), zeros(64)
    fc1_w, fc1_b = winit((256, flat)), zeros(256)
    fc2_w, fc2_b = winit((128, 256)), zeros(128)
    m1_w, m1_b = winit((64, 128 + ncond)), zeros(64)
    m2_w, m2_b = winit((nhid, 64)), zeros(nhid)
    v1_w, v1_b = winit((64, 128 + ncond)), zeros(64)
    v2_w, v2_b = winit((nhid, 64)), zeros(nhid)

    params = {
        "c1": _pack_conv(conv1_w, conv1_b, ones(16), zeros(16), cin_pad=c),
        "c2": _pack_conv(conv2_w, conv2_b, ones(32), zeros(32), cin_pad=CPAD),
        "c3": _pack_conv(conv3_w, conv3_b, ones(64), zeros(64), cin_pad=CPAD),
        "c4": _pack_conv(conv4_w, conv4_b, ones(64), zeros(64), cin_pad=CPAD),
        "fc1_w": _pack_fc1(fc1_w, hh, ww, c_real=64),
        "fc1_b": fc1_b[None, :],
        "fcbn1_g": ones(256)[None, :], "fcbn1_b": zeros(256)[None, :],
        "fc2_w": jnp.transpose(fc2_w), "fc2_b": fc2_b[None, :],
        "fcbn2_g": ones(128)[None, :], "fcbn2_b": zeros(128)[None, :],
    }
    params.update(_pack_heads(m1_w, m1_b, ones(64), zeros(64), m2_w, m2_b,
                              v1_w, v1_b, ones(64), zeros(64), v2_w, v2_b))
    return params


# ---------------------------------------------------------------------------
# Encoder forward
# ---------------------------------------------------------------------------
def encoder_forward(params, x_nchw, y=None):
    # x_nchw is [N, C, H, W] (PyTorch convention); convs run internally NHWC
    # with output channels padded to 128 lanes.
    x = jnp.transpose(x_nchw, (0, 2, 3, 1)).astype(jnp.float32)

    # --- encode_conv (each call = fused conv + BN + ReLU Pallas kernel) ---
    x = conv_bn_relu(x, *params["c1"], kh=5, kw=5)
    x = conv_bn_relu(x, *params["c2"], kh=5, kw=5)
    x = maxpool2(x)
    x = conv_bn_relu(x, *params["c3"], kh=3, kw=3)
    x = conv_bn_relu(x, *params["c4"], kh=3, kw=3)
    x = maxpool2(x)
    # TODO(synk): torch prints 'shape of feature map' / 'shape of latent vector'
    # here; host-side prints omitted.

    # --- Flatten: NHWC(128-padded) flatten; torch's NCHW view-ordering is
    #     folded into fc1_w at init, so no runtime transpose is needed. ---
    n = x.shape[0]
    xf = x.reshape(n, -1)

    # --- encode_mlp + calc_mean + calc_logvar: ONE fused Pallas kernel ---
    out = mlp_heads_fused(params, xf, y)
    nhid = out.shape[1] // 2
    return out[:, :nhid], out[:, nhid:]


# ---------------------------------------------------------------------------
# Main
# ---------------------------------------------------------------------------
if __name__ == "__main__":
    # Geometry requires ((s - 8)//2 - 4)//2 >= 1  ->  spatial >= 20.
    N, C, H, W = 2, 3, 20, 20
    nhid, ncond = 16, 0

    params = init_params((C, H, W), nhid=nhid, ncond=ncond, seed=0)
    x = jax.random.normal(jax.random.PRNGKey(0), (N, C, H, W), dtype=jnp.float32)

    fwd = jax.jit(functools.partial(encoder_forward, params))
    mean, logvar = fwd(x)
    jax.block_until_ready((mean, logvar))

    assert mean.shape == (N, nhid) and logvar.shape == (N, nhid)
    assert bool(jnp.all(jnp.isfinite(mean))) and bool(jnp.all(jnp.isfinite(logvar)))
    print("KERNEL_OK")
</pallas_src>

<mosaic_0001>
module attributes {stable_mosaic.version = 11 : i64} {
  func.func @_matmul_bn_relu_kernel(%arg0: memref<512x75xf32, #tpu.memory_space<vmem>>, %arg1: memref<75x128xf32, #tpu.memory_space<vmem>>, %arg2: memref<1x128xf32, #tpu.memory_space<vmem>>, %arg3: memref<1x128xf32, #tpu.memory_space<vmem>>, %arg4: memref<1x128xf32, #tpu.memory_space<vmem>>, %arg5: memref<512x128xf32, #tpu.memory_space<vmem>>) attributes {dimension_semantics = [], scalar_prefetch = 0 : i64, scratch_operands = 0 : i64, tpu.core_type = #tpu.core_type<tc>} {
    %c0 = arith.constant 0 : index
    %c0_0 = arith.constant 0 : index
    %0 = vector.load %arg0[%c0, %c0_0] : memref<512x75xf32, #tpu.memory_space<vmem>>, vector<512x75xf32>
    %c0_1 = arith.constant 0 : index
    %c0_2 = arith.constant 0 : index
    %1 = vector.load %arg1[%c0_1, %c0_2] : memref<75x128xf32, #tpu.memory_space<vmem>>, vector<75x128xf32>
    %cst = arith.constant dense<0.000000e+00> : vector<512x128xf32>
    %2 = tpu.matmul %0, %1, %cst {dimension_numbers = #tpu.dot_dimension_numbers<[1], [0], [0], [1], [0, 0, 1, 1], [], []>} : vector<512x75xf32>, vector<75x128xf32>, vector<512x128xf32> -> vector<512x128xf32>
    %c0_3 = arith.constant 0 : index
    %c0_4 = arith.constant 0 : index
    %3 = vector.load %arg2[%c0_3, %c0_4] : memref<1x128xf32, #tpu.memory_space<vmem>>, vector<1x128xf32>
    %4 = vector.broadcast %3 : vector<1x128xf32> to vector<512x128xf32>
    %5 = arith.addf %2, %4 : vector<512x128xf32>
    %cst_5 = arith.constant dense<0.000000e+00> : vector<128xf32>
    %6 = vector.multi_reduction <add>, %5, %cst_5 [0] : vector<512x128xf32> to vector<128xf32>
    %7 = vector.shape_cast %6 : vector<128xf32> to vector<1x128xf32>
    %cst_6 = arith.constant 5.120000e+02 : f32
    %8 = vector.broadcast %cst_6 : f32 to vector<1x128xf32>
    %9 = arith.divf %7, %8 : vector<1x128xf32>
    %10 = vector.broadcast %9 : vector<1x128xf32> to vector<512x128xf32>
    %11 = arith.subf %5, %10 : vector<512x128xf32>
    %12 = arith.mulf %11, %11 : vector<512x128xf32>
    %cst_7 = arith.constant dense<0.000000e+00> : vector<128xf32>
    %13 = vector.multi_reduction <add>, %12, %cst_7 [0] : vector<512x128xf32> to vector<128xf32>
    %14 = vector.shape_cast %13 : vector<128xf32> to vector<1x128xf32>
    %cst_8 = arith.constant 5.120000e+02 : f32
    %15 = vector.broadcast %cst_8 : f32 to vector<1x128xf32>
    %16 = arith.divf %14, %15 : vector<1x128xf32>
    %cst_9 = arith.constant 9.99999974E-6 : f32
    %17 = vector.broadcast %cst_9 : f32 to vector<1x128xf32>
    %18 = arith.addf %16, %17 : vector<1x128xf32>
    %19 = math.rsqrt %18 : vector<1x128xf32>
    %20 = vector.broadcast %19 : vector<1x128xf32> to vector<512x128xf32>
    %21 = arith.mulf %11, %20 : vector<512x128xf32>
    %c0_10 = arith.constant 0 : index
    %c0_11 = arith.constant 0 : index
    %22 = vector.load %arg3[%c0_10, %c0_11] : memref<1x128xf32, #tpu.memory_space<vmem>>, vector<1x128xf32>
    %23 = vector.broadcast %22 : vector<1x128xf32> to vector<512x128xf32>
    %24 = arith.mulf %21, %23 : vector<512x128xf32>
    %c0_12 = arith.constant 0 : index
    %c0_13 = arith.constant 0 : index
    %25 = vector.load %arg4[%c0_12, %c0_13] : memref<1x128xf32, #tpu.memory_space<vmem>>, vector<1x128xf32>
    %26 = vector.broadcast %25 : vector<1x128xf32> to vector<512x128xf32>
    %27 = arith.addf %24, %26 : vector<512x128xf32>
    %cst_14 = arith.constant 0.000000e+00 : f32
    %28 = vector.broadcast %cst_14 : f32 to vector<512x128xf32>
    %29 = arith.maximumf %27, %28 : vector<512x128xf32>
    %c0_15 = arith.constant 0 : index
    %c0_16 = arith.constant 0 : index
    %30 = vector.load %arg5[%c0_15, %c0_16] : memref<512x128xf32, #tpu.memory_space<vmem>>, vector<512x128xf32>
    tpu.vector_store %arg5[%c0_15, %c0_16], %29 {strides = array<i32>} : memref<512x128xf32, #tpu.memory_space<vmem>>, vector<512x128xf32>,
    return
  }
}

module attributes {stable_mosaic.version = 11 : i64} {
  func.func @_matmul_bn_relu_kernel(%arg0: memref<288x3200xf32, #tpu.memory_space<vmem>>, %arg1: memref<3200x128xf32, #tpu.memory_space<vmem>>, %arg2: memref<1x128xf32, #tpu.memory_space<vmem>>, %arg3: memref<1x128xf32, #tpu.memory_space<vmem>>, %arg4: memref<1x128xf32, #tpu.memory_space<vmem>>, %arg5: memref<288x128xf32, #tpu.memory_space<vmem>>) attributes {dimension_semantics = [], scalar_prefetch = 0 : i64, scratch_operands = 0 : i64, tpu.core_type = #tpu.core_type<tc>} {
    %c0 = arith.constant 0 : index
    %c0_0 = arith.constant 0 : index
    %0 = vector.load %arg0[%c0, %c0_0] : memref<288x3200xf32, #tpu.memory_space<vmem>>, vector<288x3200xf32>
    %c0_1 = arith.constant 0 : index
    %c0_2 = arith.constant 0 : index
    %1 = vector.load %arg1[%c0_1, %c0_2] : memref<3200x128xf32, #tpu.memory_space<vmem>>, vector<3200x128xf32>
    %cst = arith.constant dense<0.000000e+00> : vector<288x128xf32>
    %2 = tpu.matmul %0, %1, %cst {dimension_numbers = #tpu.dot_dimension_numbers<[1], [0], [0], [1], [0, 0, 1, 1], [], []>} : vector<288x3200xf32>, vector<3200x128xf32>, vector<288x128xf32> -> vector<288x128xf32>
    %c0_3 = arith.constant 0 : index
    %c0_4 = arith.constant 0 : index
    %3 = vector.load %arg2[%c0_3, %c0_4] : memref<1x128xf32, #tpu.memory_space<vmem>>, vector<1x128xf32>
    %4 = vector.broadcast %3 : vector<1x128xf32> to vector<288x128xf32>
    %5 = arith.addf %2, %4 : vector<288x128xf32>
    %cst_5 = arith.constant dense<0.000000e+00> : vector<128xf32>
    %6 = vector.multi_reduction <add>, %5, %cst_5 [0] : vector<288x128xf32> to vector<128xf32>
    %7 = vector.shape_cast %6 : vector<128xf32> to vector<1x128xf32>
    %cst_6 = arith.constant 2.880000e+02 : f32
    %8 = vector.broadcast %cst_6 : f32 to vector<1x128xf32>
    %9 = arith.divf %7, %8 : vector<1x128xf32>
    %10 = vector.broadcast %9 : vector<1x128xf32> to vector<288x128xf32>
    %11 = arith.subf %5, %10 : vector<288x128xf32>
    %12 = arith.mulf %11, %11 : vector<288x128xf32>
    %cst_7 = arith.constant dense<0.000000e+00> : vector<128xf32>
    %13 = vector.multi_reduction <add>, %12, %cst_7 [0] : vector<288x128xf32> to vector<128xf32>
    %14 = vector.shape_cast %13 : vector<128xf32> to vector<1x128xf32>
    %cst_8 = arith.constant 2.880000e+02 : f32
    %15 = vector.broadcast %cst_8 : f32 to vector<1x128xf32>
    %16 = arith.divf %14, %15 : vector<1x128xf32>
    %cst_9 = arith.constant 9.99999974E-6 : f32
    %17 = vector.broadcast %cst_9 : f32 to vector<1x128xf32>
    %18 = arith.addf %16, %17 : vector<1x128xf32>
    %19 = math.rsqrt %18 : vector<1x128xf32>
    %20 = vector.broadcast %19 : vector<1x128xf32> to vector<288x128xf32>
    %21 = arith.mulf %11, %20 : vector<288x128xf32>
    %c0_10 = arith.constant 0 : index
    %c0_11 = arith.constant 0 : index
    %22 = vector.load %arg3[%c0_10, %c0_11] : memref<1x128xf32, #tpu.memory_space<vmem>>, vector<1x128xf32>
    %23 = vector.broadcast %22 : vector<1x128xf32> to vector<288x128xf32>
    %24 = arith.mulf %21, %23 : vector<288x128xf32>
    %c0_12 = arith.constant 0 : index
    %c0_13 = arith.constant 0 : index
    %25 = vector.load %arg4[%c0_12, %c0_13] : memref<1x128xf32, #tpu.memory_space<vmem>>, vector<1x128xf32>
    %26 = vector.broadcast %25 : vector<1x128xf32> to vector<288x128xf32>
    %27 = arith.addf %24, %26 : vector<288x128xf32>
    %cst_14 = arith.constant 0.000000e+00 : f32
    %28 = vector.broadcast %cst_14 : f32 to vector<288x128xf32>
    %29 = arith.maximumf %27, %28 : vector<288x128xf32>
    %c0_15 = arith.constant 0 : index
    %c0_16 = arith.constant 0 : index
    %30 = vector.load %arg5[%c0_15, %c0_16] : memref<288x128xf32, #tpu.memory_space<vmem>>, vector<288x128xf32>
    tpu.vector_store %arg5[%c0_15, %c0_16], %29 {strides = array<i32>} : memref<288x128xf32, #tpu.memory_space<vmem>>, vector<288x128xf32>,
    return
  }
}

module attributes {stable_mosaic.version = 11 : i64} {
  func.func @_matmul_bn_relu_kernel(%arg0: memref<32x1152xf32, #tpu.memory_space<vmem>>, %arg1: memref<1152x128xf32, #tpu.memory_space<vmem>>, %arg2: memref<1x128xf32, #tpu.memory_space<vmem>>, %arg3: memref<1x128xf32, #tpu.memory_space<vmem>>, %arg4: memref<1x128xf32, #tpu.memory_space<vmem>>, %arg5: memref<32x128xf32, #tpu.memory_space<vmem>>) attributes {dimension_semantics = [], scalar_prefetch = 0 : i64, scratch_operands = 0 : i64, tpu.core_type = #tpu.core_type<tc>} {
    %c0 = arith.constant 0 : index
    %c0_0 = arith.constant 0 : index
    %0 = vector.load %arg0[%c0, %c0_0] : memref<32x1152xf32, #tpu.memory_space<vmem>>, vector<32x1152xf32>
    %c0_1 = arith.constant 0 : index
    %c0_2 = arith.constant 0 : index
    %1 = vector.load %arg1[%c0_1, %c0_2] : memref<1152x128xf32, #tpu.memory_space<vmem>>, vector<1152x128xf32>
    %cst = arith.constant dense<0.000000e+00> : vector<32x128xf32>
    %2 = tpu.matmul %0, %1, %cst {dimension_numbers = #tpu.dot_dimension_numbers<[1], [0], [0], [1], [0, 0, 1, 1], [], []>} : vector<32x1152xf32>, vector<1152x128xf32>, vector<32x128xf32> -> vector<32x128xf32>
    %c0_3 = arith.constant 0 : index
    %c0_4 = arith.constant 0 : index
    %3 = vector.load %arg2[%c0_3, %c0_4] : memref<1x128xf32, #tpu.memory_space<vmem>>, vector<1x128xf32>
    %4 = vector.broadcast %3 : vector<1x128xf32> to vector<32x128xf32>
    %5 = arith.addf %2, %4 : vector<32x128xf32>
    %cst_5 = arith.constant dense<0.000000e+00> : vector<128xf32>
    %6 = vector.multi_reduction <add>, %5, %cst_5 [0] : vector<32x128xf32> to vector<128xf32>
    %7 = vector.shape_cast %6 : vector<128xf32> to vector<1x128xf32>
    %cst_6 = arith.constant 3.200000e+01 : f32
    %8 = vector.broadcast %cst_6 : f32 to vector<1x128xf32>
    %9 = arith.divf %7, %8 : vector<1x128xf32>
    %10 = vector.broadcast %9 : vector<1x128xf32> to vector<32x128xf32>
    %11 = arith.subf %5, %10 : vector<32x128xf32>
    %12 = arith.mulf %11, %11 : vector<32x128xf32>
    %cst_7 = arith.constant dense<0.000000e+00> : vector<128xf32>
    %13 = vector.multi_reduction <add>, %12, %cst_7 [0] : vector<32x128xf32> to vector<128xf32>
    %14 = vector.shape_cast %13 : vector<128xf32> to vector<1x128xf32>
    %cst_8 = arith.constant 3.200000e+01 : f32
    %15 = vector.broadcast %cst_8 : f32 to vector<1x128xf32>
    %16 = arith.divf %14, %15 : vector<1x128xf32>
    %cst_9 = arith.constant 9.99999974E-6 : f32
    %17 = vector.broadcast %cst_9 : f32 to vector<1x128xf32>
    %18 = arith.addf %16, %17 : vector<1x128xf32>
    %19 = math.rsqrt %18 : vector<1x128xf32>
    %20 = vector.broadcast %19 : vector<1x128xf32> to vector<32x128xf32>
    %21 = arith.mulf %11, %20 : vector<32x128xf32>
    %c0_10 = arith.constant 0 : index
    %c0_11 = arith.constant 0 : index
    %22 = vector.load %arg3[%c0_10, %c0_11] : memref<1x128xf32, #tpu.memory_space<vmem>>, vector<1x128xf32>
    %23 = vector.broadcast %22 : vector<1x128xf32> to vector<32x128xf32>
    %24 = arith.mulf %21, %23 : vector<32x128xf32>
    %c0_12 = arith.constant 0 : index
    %c0_13 = arith.constant 0 : index
    %25 = vector.load %arg4[%c0_12, %c0_13] : memref<1x128xf32, #tpu.memory_space<vmem>>, vector<1x128xf32>
    %26 = vector.broadcast %25 : vector<1x128xf32> to vector<32x128xf32>
    %27 = arith.addf %24, %26 : vector<32x128xf32>
    %cst_14 = arith.constant 0.000000e+00 : f32
    %28 = vector.broadcast %cst_14 : f32 to vector<32x128xf32>
    %29 = arith.maximumf %27, %28 : vector<32x128xf32>
    %c0_15 = arith.constant 0 : index
    %c0_16 = arith.constant 0 : index
    %30 = vector.load %arg5[%c0_15, %c0_16] : memref<32x128xf32, #tpu.memory_space<vmem>>, vector<32x128xf32>
    tpu.vector_store %arg5[%c0_15, %c0_16], %29 {strides = array<i32>} : memref<32x128xf32, #tpu.memory_space<vmem>>, vector<32x128xf32>,
    return
  }
}

module attributes {stable_mosaic.version = 11 : i64} {
  func.func @_matmul_bn_relu_kernel(%arg0: memref<8x1152xf32, #tpu.memory_space<vmem>>, %arg1: memref<1152x128xf32, #tpu.memory_space<vmem>>, %arg2: memref<1x128xf32, #tpu.memory_space<vmem>>, %arg3: memref<1x128xf32, #tpu.memory_space<vmem>>, %arg4: memref<1x128xf32, #tpu.memory_space<vmem>>, %arg5: memref<8x128xf32, #tpu.memory_space<vmem>>) attributes {dimension_semantics = [], scalar_prefetch = 0 : i64, scratch_operands = 0 : i64, tpu.core_type = #tpu.core_type<tc>} {
    %c0 = arith.constant 0 : index
    %c0_0 = arith.constant 0 : index
    %0 = vector.load %arg0[%c0, %c0_0] : memref<8x1152xf32, #tpu.memory_space<vmem>>, vector<8x1152xf32>
    %c0_1 = arith.constant 0 : index
    %c0_2 = arith.constant 0 : index
    %1 = vector.load %arg1[%c0_1, %c0_2] : memref<1152x128xf32, #tpu.memory_space<vmem>>, vector<1152x128xf32>
    %cst = arith.constant dense<0.000000e+00> : vector<8x128xf32>
    %2 = tpu.matmul %0, %1, %cst {dimension_numbers = #tpu.dot_dimension_numbers<[1], [0], [0], [1], [0, 0, 1, 1], [], []>} : vector<8x1152xf32>, vector<1152x128xf32>, vector<8x128xf32> -> vector<8x128xf32>
    %c0_3 = arith.constant 0 : index
    %c0_4 = arith.constant 0 : index
    %3 = vector.load %arg2[%c0_3, %c0_4] : memref<1x128xf32, #tpu.memory_space<vmem>>, vector<1x128xf32>
    %4 = vector.broadcast %3 : vector<1x128xf32> to vector<8x128xf32>
    %5 = arith.addf %2, %4 : vector<8x128xf32>
    %cst_5 = arith.constant dense<0.000000e+00> : vector<128xf32>
    %6 = vector.multi_reduction <add>, %5, %cst_5 [0] : vector<8x128xf32> to vector<128xf32>
    %7 = vector.shape_cast %6 : vector<128xf32> to vector<1x128xf32>
    %cst_6 = arith.constant 8.000000e+00 : f32
    %8 = vector.broadcast %cst_6 : f32 to vector<1x128xf32>
    %9 = arith.divf %7, %8 : vector<1x128xf32>
    %10 = vector.broadcast %9 : vector<1x128xf32> to vector<8x128xf32>
    %11 = arith.subf %5, %10 : vector<8x128xf32>
    %12 = arith.mulf %11, %11 : vector<8x128xf32>
    %cst_7 = arith.constant dense<0.000000e+00> : vector<128xf32>
    %13 = vector.multi_reduction <add>, %12, %cst_7 [0] : vector<8x128xf32> to vector<128xf32>
    %14 = vector.shape_cast %13 : vector<128xf32> to vector<1x128xf32>
    %cst_8 = arith.constant 8.000000e+00 : f32
    %15 = vector.broadcast %cst_8 : f32 to vector<1x128xf32>
    %16 = arith.divf %14, %15 : vector<1x128xf32>
    %cst_9 = arith.constant 9.99999974E-6 : f32
    %17 = vector.broadcast %cst_9 : f32 to vector<1x128xf32>
    %18 = arith.addf %16, %17 : vector<1x128xf32>
    %19 = math.rsqrt %18 : vector<1x128xf32>
    %20 = vector.broadcast %19 : vector<1x128xf32> to vector<8x128xf32>
    %21 = arith.mulf %11, %20 : vector<8x128xf32>
    %c0_10 = arith.constant 0 : index
    %c0_11 = arith.constant 0 : index
    %22 = vector.load %arg3[%c0_10, %c0_11] : memref<1x128xf32, #tpu.memory_space<vmem>>, vector<1x128xf32>
    %23 = vector.broadcast %22 : vector<1x128xf32> to vector<8x128xf32>
    %24 = arith.mulf %21, %23 : vector<8x128xf32>
    %c0_12 = arith.constant 0 : index
    %c0_13 = arith.constant 0 : index
    %25 = vector.load %arg4[%c0_12, %c0_13] : memref<1x128xf32, #tpu.memory_space<vmem>>, vector<1x128xf32>
    %26 = vector.broadcast %25 : vector<1x128xf32> to vector<8x128xf32>
    %27 = arith.addf %24, %26 : vector<8x128xf32>
    %cst_14 = arith.constant 0.000000e+00 : f32
    %28 = vector.broadcast %cst_14 : f32 to vector<8x128xf32>
    %29 = arith.maximumf %27, %28 : vector<8x128xf32>
    %c0_15 = arith.constant 0 : index
    %c0_16 = arith.constant 0 : index
    %30 = vector.load %arg5[%c0_15, %c0_16] : memref<8x128xf32, #tpu.memory_space<vmem>>, vector<8x128xf32>
    tpu.vector_store %arg5[%c0_15, %c0_16], %29 {strides = array<i32>} : memref<8x128xf32, #tpu.memory_space<vmem>>, vector<8x128xf32>,
    return
  }
}

module attributes {stable_mosaic.version = 11 : i64} {
  func.func @_mlp_heads_kernel(%arg0: memref<2x128xf32, #tpu.memory_space<vmem>>, %arg1: memref<128x256xf32, #tpu.memory_space<vmem>>, %arg2: memref<1x256xf32, #tpu.memory_space<vmem>>, %arg3: memref<1x256xf32, #tpu.memory_space<vmem>>, %arg4: memref<1x256xf32, #tpu.memory_space<vmem>>, %arg5: memref<256x128xf32, #tpu.memory_space<vmem>>, %arg6: memref<1x128xf32, #tpu.memory_space<vmem>>, %arg7: memref<1x128xf32, #tpu.memory_space<vmem>>, %arg8: memref<1x128xf32, #tpu.memory_space<vmem>>, %arg9: memref<128x128xf32, #tpu.memory_space<vmem>>, %arg10: memref<1x128xf32, #tpu.memory_space<vmem>>, %arg11: memref<1x128xf32, #tpu.memory_space<vmem>>, %arg12: memref<1x128xf32, #tpu.memory_space<vmem>>, %arg13: memref<128x32xf32, #tpu.memory_space<vmem>>, %arg14: memref<1x32xf32, #tpu.memory_space<vmem>>, %arg15: memref<2x32xf32, #tpu.memory_space<vmem>>) attributes {dimension_semantics = [], scalar_prefetch = 0 : i64, scratch_operands = 0 : i64, tpu.core_type = #tpu.core_type<tc>} {
    %c0 = arith.constant 0 : index
    %c0_0 = arith.constant 0 : index
    %0 = vector.load %arg0[%c0, %c0_0] : memref<2x128xf32, #tpu.memory_space<vmem>>, vector<2x128xf32>
    %c0_1 = arith.constant 0 : index
    %c0_2 = arith.constant 0 : index
    %1 = vector.load %arg1[%c0_1, %c0_2] : memref<128x256xf32, #tpu.memory_space<vmem>>, vector<128x256xf32>
    %cst = arith.constant dense<0.000000e+00> : vector<2x256xf32>
    %2 = tpu.matmul %0, %1, %cst {dimension_numbers = #tpu.dot_dimension_numbers<[1], [0], [0], [1], [0, 0, 1, 1], [], []>} : vector<2x128xf32>, vector<128x256xf32>, vector<2x256xf32> -> vector<2x256xf32>
    %c0_3 = arith.constant 0 : index
    %c0_4 = arith.constant 0 : index
    %3 = vector.load %arg2[%c0_3, %c0_4] : memref<1x256xf32, #tpu.memory_space<vmem>>, vector<1x256xf32>
    %4 = vector.broadcast %3 : vector<1x256xf32> to vector<2x256xf32>
    %5 = arith.addf %2, %4 : vector<2x256xf32>
    %c0_5 = arith.constant 0 : index
    %c0_6 = arith.constant 0 : index
    %6 = vector.load %arg3[%c0_5, %c0_6] : memref<1x256xf32, #tpu.memory_space<vmem>>, vector<1x256xf32>
    %c0_7 = arith.constant 0 : index
    %c0_8 = arith.constant 0 : index
    %7 = vector.load %arg4[%c0_7, %c0_8] : memref<1x256xf32, #tpu.memory_space<vmem>>, vector<1x256xf32>
    %cst_9 = arith.constant dense<0.000000e+00> : vector<256xf32>
    %8 = vector.multi_reduction <add>, %5, %cst_9 [0] : vector<2x256xf32> to vector<256xf32>
    %9 = vector.shape_cast %8 : vector<256xf32> to vector<1x256xf32>
    %cst_10 = arith.constant 2.000000e+00 : f32
    %10 = vector.broadcast %cst_10 : f32 to vector<1x256xf32>
    %11 = arith.divf %9, %10 : vector<1x256xf32>
    %12 = vector.broadcast %11 : vector<1x256xf32> to vector<2x256xf32>
    %13 = arith.subf %5, %12 : vector<2x256xf32>
    %14 = arith.mulf %13, %13 : vector<2x256xf32>
    %cst_11 = arith.constant dense<0.000000e+00> : vector<256xf32>
    %15 = vector.multi_reduction <add>, %14, %cst_11 [0] : vector<2x256xf32> to vector<256xf32>
    %16 = vector.shape_cast %15 : vector<256xf32> to vector<1x256xf32>
    %cst_12 = arith.constant 2.000000e+00 : f32
    %17 = vector.broadcast %cst_12 : f32 to vector<1x256xf32>
    %18 = arith.divf %16, %17 : vector<1x256xf32>
    %cst_13 = arith.constant 9.99999974E-6 : f32
    %19 = vector.broadcast %cst_13 : f32 to vector<1x256xf32>
    %20 = arith.addf %18, %19 : vector<1x256xf32>
    %21 = math.rsqrt %20 : vector<1x256xf32>
    %22 = vector.broadcast %21 : vector<1x256xf32> to vector<2x256xf32>
    %23 = arith.mulf %13, %22 : vector<2x256xf32>
    %24 = vector.broadcast %6 : vector<1x256xf32> to vector<2x256xf32>
    %25 = arith.mulf %23, %24 : vector<2x256xf32>
    %26 = vector.broadcast %7 : vector<1x256xf32> to vector<2x256xf32>
    %27 = arith.addf %25, %26 : vector<2x256xf32>
    %cst_14 = arith.constant 0.000000e+00 : f32
    %28 = vector.broadcast %cst_14 : f32 to vector<2x256xf32>
    %29 = arith.maximumf %27, %28 : vector<2x256xf32>
    %c0_15 = arith.constant 0 : index
    %c0_16 = arith.constant 0 : index
    %30 = vector.load %arg5[%c0_15, %c0_16] : memref<256x128xf32, #tpu.memory_space<vmem>>, vector<256x128xf32>
    %cst_17 = arith.constant dense<0.000000e+00> : vector<2x128xf32>
    %31 = tpu.matmul %29, %30, %cst_17 {dimension_numbers = #tpu.dot_dimension_numbers<[1], [0], [0], [1], [0, 0, 1, 1], [], []>} : vector<2x256xf32>, vector<256x128xf32>, vector<2x128xf32> -> vector<2x128xf32>
    %c0_18 = arith.constant 0 : index
    %c0_19 = arith.constant 0 : index
    %32 = vector.load %arg6[%c0_18, %c0_19] : memref<1x128xf32, #tpu.memory_space<vmem>>, vector<1x128xf32>
    %33 = vector.broadcast %32 : vector<1x128xf32> to vector<2x128xf32>
    %34 = arith.addf %31, %33 : vector<2x128xf32>
    %c0_20 = arith.constant 0 : index
    %c0_21 = arith.constant 0 : index
    %35 = vector.load %arg7[%c0_20, %c0_21] : memref<1x128xf32, #tpu.memory_space<vmem>>, vector<1x128xf32>
    %c0_22 = arith.constant 0 : index
    %c0_23 = arith.constant 0 : index
    %36 = vector.load %arg8[%c0_22, %c0_23] : memref<1x128xf32, #tpu.memory_space<vmem>>, vector<1x128xf32>
    %cst_24 = arith.constant dense<0.000000e+00> : vector<128xf32>
    %37 = vector.multi_reduction <add>, %34, %cst_24 [0] : vector<2x128xf32> to vector<128xf32>
    %38 = vector.shape_cast %37 : vector<128xf32> to vector<1x128xf32>
    %cst_25 = arith.constant 2.000000e+00 : f32
    %39 = vector.broadcast %cst_25 : f32 to vector<1x128xf32>
    %40 = arith.divf %38, %39 : vector<1x128xf32>
    %41 = vector.broadcast %40 : vector<1x128xf32> to vector<2x128xf32>
    %42 = arith.subf %34, %41 : vector<2x128xf32>
    %43 = arith.mulf %42, %42 : vector<2x128xf32>
    %cst_26 = arith.constant dense<0.000000e+00> : vector<128xf32>
    %44 = vector.multi_reduction <add>, %43, %cst_26 [0] : vector<2x128xf32> to vector<128xf32>
    %45 = vector.shape_cast %44 : vector<128xf32> to vector<1x128xf32>
    %cst_27 = arith.constant 2.000000e+00 : f32
    %46 = vector.broadcast %cst_27 : f32 to vector<1x128xf32>
    %47 = arith.divf %45, %46 : vector<1x128xf32>
    %cst_28 = arith.constant 9.99999974E-6 : f32
    %48 = vector.broadcast %cst_28 : f32 to vector<1x128xf32>
    %49 = arith.addf %47, %48 : vector<1x128xf32>
    %50 = math.rsqrt %49 : vector<1x128xf32>
    %51 = vector.broadcast %50 : vector<1x128xf32> to vector<2x128xf32>
    %52 = arith.mulf %42, %51 : vector<2x128xf32>
    %53 = vector.broadcast %35 : vector<1x128xf32> to vector<2x128xf32>
    %54 = arith.mulf %52, %53 : vector<2x128xf32>
    %55 = vector.broadcast %36 : vector<1x128xf32> to vector<2x128xf32>
    %56 = arith.addf %54, %55 : vector<2x128xf32>
    %cst_29 = arith.constant 0.000000e+00 : f32
    %57 = vector.broadcast %cst_29 : f32 to vector<2x128xf32>
    %58 = arith.maximumf %56, %57 : vector<2x128xf32>
    %c0_30 = arith.constant 0 : index
    %c0_31 = arith.constant 0 : index
    %59 = vector.load %arg9[%c0_30, %c0_31] : memref<128x128xf32, #tpu.memory_space<vmem>>, vector<128x128xf32>
    %cst_32 = arith.constant dense<0.000000e+00> : vector<2x128xf32>
    %60 = tpu.matmul %58, %59, %cst_32 {dimension_numbers = #tpu.dot_dimension_numbers<[1], [0], [0], [1], [0, 0, 1, 1], [], []>} : vector<2x128xf32>, vector<128x128xf32>, vector<2x128xf32> -> vector<2x128xf32>
    %c0_33 = arith.constant 0 : index
    %c0_34 = arith.constant 0 : index
    %61 = vector.load %arg10[%c0_33, %c0_34] : memref<1x128xf32, #tpu.memory_space<vmem>>, vector<1x128xf32>
    %62 = vector.broadcast %61 : vector<1x128xf32> to vector<2x128xf32>
    %63 = arith.addf %60, %62 : vector<2x128xf32>
    %c0_35 = arith.constant 0 : index
    %c0_36 = arith.constant 0 : index
    %64 = vector.load %arg11[%c0_35, %c0_36] : memref<1x128xf32, #tpu.memory_space<vmem>>, vector<1x128xf32>
    %c0_37 = arith.constant 0 : index
    %c0_38 = arith.constant 0 : index
    %65 = vector.load %arg12[%c0_37, %c0_38] : memref<1x128xf32, #tpu.memory_space<vmem>>, vector<1x128xf32>
    %cst_39 = arith.constant dense<0.000000e+00> : vector<128xf32>
    %66 = vector.multi_reduction <add>, %63, %cst_39 [0] : vector<2x128xf32> to vector<128xf32>
    %67 = vector.shape_cast %66 : vector<128xf32> to vector<1x128xf32>
    %cst_40 = arith.constant 2.000000e+00 : f32
    %68 = vector.broadcast %cst_40 : f32 to vector<1x128xf32>
    %69 = arith.divf %67, %68 : vector<1x128xf32>
    %70 = vector.broadcast %69 : vector<1x128xf32> to vector<2x128xf32>
    %71 = arith.subf %63, %70 : vector<2x128xf32>
    %72 = arith.mulf %71, %71 : vector<2x128xf32>
    %cst_41 = arith.constant dense<0.000000e+00> : vector<128xf32>
    %73 = vector.multi_reduction <add>, %72, %cst_41 [0] : vector<2x128xf32> to vector<128xf32>
    %74 = vector.shape_cast %73 : vector<128xf32> to vector<1x128xf32>
    %cst_42 = arith.constant 2.000000e+00 : f32
    %75 = vector.broadcast %cst_42 : f32 to vector<1x128xf32>
    %76 = arith.divf %74, %75 : vector<1x128xf32>
    %cst_43 = arith.constant 9.99999974E-6 : f32
    %77 = vector.broadcast %cst_43 : f32 to vector<1x128xf32>
    %78 = arith.addf %76, %77 : vector<1x128xf32>
    %79 = math.rsqrt %78 : vector<1x128xf32>
    %80 = vector.broadcast %79 : vector<1x128xf32> to vector<2x128xf32>
    %81 = arith.mulf %71, %80 : vector<2x128xf32>
    %82 = vector.broadcast %64 : vector<1x128xf32> to vector<2x128xf32>
    %83 = arith.mulf %81, %82 : vector<2x128xf32>
    %84 = vector.broadcast %65 : vector<1x128xf32> to vector<2x128xf32>
    %85 = arith.addf %83, %84 : vector<2x128xf32>
    %cst_44 = arith.constant 0.000000e+00 : f32
    %86 = vector.broadcast %cst_44 : f32 to vector<2x128xf32>
    %87 = arith.maximumf %85, %86 : vector<2x128xf32>
    %c0_45 = arith.constant 0 : index
    %c0_46 = arith.constant 0 : index
    %88 = vector.load %arg13[%c0_45, %c0_46] : memref<128x32xf32, #tpu.memory_space<vmem>>, vector<128x32xf32>
    %cst_47 = arith.constant dense<0.000000e+00> : vector<2x32xf32>
    %89 = tpu.matmul %87, %88, %cst_47 {dimension_numbers = #tpu.dot_dimension_numbers<[1], [0], [0], [1], [0, 0, 1, 1], [], []>} : vector<2x128xf32>, vector<128x32xf32>, vector<2x32xf32> -> vector<2x32xf32>
    %c0_48 = arith.constant 0 : index
    %c0_49 = arith.constant 0 : index
    %90 = vector.load %arg14[%c0_48, %c0_49] : memref<1x32xf32, #tpu.memory_space<vmem>>, vector<1x32xf32>
    %91 = vector.broadcast %90 : vector<1x32xf32> to vector<2x32xf32>
    %92 = arith.addf %89, %91 : vector<2x32xf32>
    %c0_50 = arith.constant 0 : index
    %c0_51 = arith.constant 0 : index
    %93 = vector.load %arg15[%c0_50, %c0_51] : memref<2x32xf32, #tpu.memory_space<vmem>>, vector<2x32xf32>
    tpu.vector_store %arg15[%c0_50, %c0_51], %92 {strides = array<i32>} : memref<2x32xf32, #tpu.memory_space<vmem>>, vector<2x32xf32>,
    return
  }
}

</mosaic_0001>

<llo_original>
// kernel: encoder_forward.5
$region0: #{encoder_forward.5}
  #allocation0 [shape = 'u32[]', space=smem, size = 0x4, offset = 0x4, fixed_abs, tag = 'smem constant byte address 0x4 - core index']
  #allocation1 [shape = 'u32[144,128]{1,0:T(1,128)}', space=vmem, size = 0x12000, scoped, tag = 'internal scratch']
  %s0 = inlined_call_operand.vmem [shape: f32[512,75], index: 0, kind: input, shape index: {}]
  %s1 = inlined_call_operand.vmem [shape: f32[75,128], index: 1, kind: input, shape index: {}]
  %s2 = inlined_call_operand.vmem [shape: f32[1,128], index: 2, kind: input, shape index: {}, may-alias: {2,4}]
  %s3 = inlined_call_operand.vmem [shape: f32[1,128], index: 3, kind: input, shape index: {}]
  %s4 = inlined_call_operand.vmem [shape: f32[1,128], index: 4, kind: input, shape index: {}, may-alias: {2,4}]
  %s5 = inlined_call_operand.vmem [shape: f32[512,128], index: 5, kind: output, shape index: {}]
  %s6 = sld [smem:[#allocation0]]
  $region30: #{encoder_forward.5} parent=0
    _
  %s8 = ssub.s32 1, %s6
  %s9 = scalar_select 0, %s8, %s6
  // Predicated region
  $region2: #{encoder_forward.5} parent=0 // pred_check
    _
  $region3: #{encoder_forward.5} parent=0 // pred_check_branch
    %11 = sbr.rel (0) target = $region5
  $region4: #{encoder_forward.5} parent=0 // pred_region
    _
  $region5: #{encoder_forward.5} parent=0 // pred_fallthru
    _
  // Predicated region
  $region6: #{encoder_forward.5} parent=0 // pred_check
    _
  $region7: #{encoder_forward.5} parent=0 // pred_check_branch
    %13 = sbr.rel (0) target = $region9
  $region8: #{encoder_forward.5} parent=0 // pred_region
    _
  $region9: #{encoder_forward.5} parent=0 // pred_fallthru
    _
  // Predicated region
  $region10: #{encoder_forward.5} parent=0 // pred_check
    _
  $region11: #{encoder_forward.5} parent=0 // pred_check_branch
    %15 = sbr.rel (0) target = $region13
  $region12: #{encoder_forward.5} parent=0 // pred_region
    _
  $region13: #{encoder_forward.5} parent=0 // pred_fallthru
    _
  // Predicated region
  $region14: #{encoder_forward.5} parent=0 // pred_check
    _
  $region15: #{encoder_forward.5} parent=0 // pred_check_branch
    %17 = sbr.rel (0) target = $region17
  $region16: #{encoder_forward.5} parent=0 // pred_region
    _
  $region17: #{encoder_forward.5} parent=0 // pred_fallthru
    _
  // Predicated region
  $region18: #{encoder_forward.5} parent=0 // pred_check
    _
  $region19: #{encoder_forward.5} parent=0 // pred_check_branch
    %19 = sbr.rel (0) target = $region21
  $region20: #{encoder_forward.5} parent=0 // pred_region
    _
  $region21: #{encoder_forward.5} parent=0 // pred_fallthru
    _
  %v20 = vld [vmem:[%s0] sm:$0xff]
  %v21 = vld [vmem:[%s0 + $0x8] sm:$0xff]
  %v22 = vld [vmem:[%s0 + $0x10] sm:$0xff]
  %v23 = vld [vmem:[%s0 + $0x18] sm:$0xff]
  %v24 = vld [vmem:[%s0 + $0x20] sm:$0xff]
  %v25 = vld [vmem:[%s0 + $0x28] sm:$0xff]
  %v26 = vld [vmem:[%s0 + $0x30] sm:$0xff]
  %v27 = vld [vmem:[%s0 + $0x38] sm:$0xff]
  %v28 = vld [vmem:[%s0 + $0x40] sm:$0xff]
  %v29 = vld [vmem:[%s0 + $0x48] sm:$0xff]
  %v30 = vld [vmem:[%s0 + $0x50] sm:$0xff]
  %v31 = vld [vmem:[%s0 + $0x58] sm:$0xff]
  %v32 = vld [vmem:[%s0 + $0x60] sm:$0xff]
  %v33 = vld [vmem:[%s0 + $0x68] sm:$0xff]
  %v34 = vld [vmem:[%s0 + $0x70] sm:$0xff]
  %v35 = vld [vmem:[%s0 + $0x78] sm:$0xff]
  %v36 = vld [vmem:[%s0 + $0x80] sm:$0xff]
  %v37 = vld [vmem:[%s0 + $0x88] sm:$0xff]
  %v38 = vld [vmem:[%s0 + $0x90] sm:$0xff]
  %v39 = vld [vmem:[%s0 + $0x98] sm:$0xff]
  %v40 = vld [vmem:[%s0 + $0xa0] sm:$0xff]
  %v41 = vld [vmem:[%s0 + $0xa8] sm:$0xff]
  %v42 = vld [vmem:[%s0 + $0xb0] sm:$0xff]
  %v43 = vld [vmem:[%s0 + $0xb8] sm:$0xff]
  %v44 = vld [vmem:[%s0 + $0xc0] sm:$0xff]
  %v45 = vld [vmem:[%s0 + $0xc8] sm:$0xff]
  %v46 = vld [vmem:[%s0 + $0xd0] sm:$0xff]
  %v47 = vld [vmem:[%s0 + $0xd8] sm:$0xff]
  %v48 = vld [vmem:[%s0 + $0xe0] sm:$0xff]
  %v49 = vld [vmem:[%s0 + $0xe8] sm:$0xff]
  %v50 = vld [vmem:[%s0 + $0xf0] sm:$0xff]
  %v51 = vld [vmem:[%s0 + $0xf8] sm:$0xff]
  %v52 = vld [vmem:[%s0 + $0x100] sm:$0xff]
  %v53 = vld [vmem:[%s0 + $0x108] sm:$0xff]
  %v54 = vld [vmem:[%s0 + $0x110] sm:$0xff]
  %v55 = vld [vmem:[%s0 + $0x118] sm:$0xff]
  %v56 = vld [vmem:[%s0 + $0x120] sm:$0xff]
  %v57 = vld [vmem:[%s0 + $0x128] sm:$0xff]
  %v58 = vld [vmem:[%s0 + $0x130] sm:$0xff]
  %v59 = vld [vmem:[%s0 + $0x138] sm:$0xff]
  %v60 = vld [vmem:[%s0 + $0x140] sm:$0xff]
  %v61 = vld [vmem:[%s0 + $0x148] sm:$0xff]
  %v62 = vld [vmem:[%s0 + $0x150] sm:$0xff]
  %v63 = vld [vmem:[%s0 + $0x158] sm:$0xff]
  %v64 = vld [vmem:[%s0 + $0x160] sm:$0xff]
  %v65 = vld [vmem:[%s0 + $0x168] sm:$0xff]
  %v66 = vld [vmem:[%s0 + $0x170] sm:$0xff]
  %v67 = vld [vmem:[%s0 + $0x178] sm:$0xff]
  %v68 = vld [vmem:[%s0 + $0x180] sm:$0xff]
  %v69 = vld [vmem:[%s0 + $0x188] sm:$0xff]
  %v70 = vld [vmem:[%s0 + $0x190] sm:$0xff]
  %v71 = vld [vmem:[%s0 + $0x198] sm:$0xff]
  %v72 = vld [vmem:[%s0 + $0x1a0] sm:$0xff]
  %v73 = vld [vmem:[%s0 + $0x1a8] sm:$0xff]
  %v74 = vld [vmem:[%s0 + $0x1b0] sm:$0xff]
  %v75 = vld [vmem:[%s0 + $0x1b8] sm:$0xff]
  %v76 = vld [vmem:[%s0 + $0x1c0] sm:$0xff]
  %v77 = vld [vmem:[%s0 + $0x1c8] sm:$0xff]
  %v78 = vld [vmem:[%s0 + $0x1d0] sm:$0xff]
  %v79 = vld [vmem:[%s0 + $0x1d8] sm:$0xff]
  %v80 = vld [vmem:[%s0 + $0x1e0] sm:$0xff]
  %v81 = vld [vmem:[%s0 + $0x1e8] sm:$0xff]
  %v82 = vld [vmem:[%s0 + $0x1f0] sm:$0xff]
  %v83 = vld [vmem:[%s0 + $0x1f8] sm:$0xff]
  %v84 = vld [vmem:[%s1] sm:$0xff]
  %v85 = vld [vmem:[%s1 + $0x8] sm:$0xff]
  %v86 = vld [vmem:[%s1 + $0x10] sm:$0xff]
  %v87 = vld [vmem:[%s1 + $0x18] sm:$0xff]
  %v88 = vld [vmem:[%s1 + $0x20] sm:$0xff]
  %v89 = vld [vmem:[%s1 + $0x28] sm:$0xff]
  %v90 = vld [vmem:[%s1 + $0x30] sm:$0xff]
  %v91 = vld [vmem:[%s1 + $0x38] sm:$0xff]
  %v92 = vld [vmem:[%s1 + $0x40] sm:$0xff]
  %v93 = vld [vmem:[%s1 + $0x48] sm:$0x7]
  %v94 = vld [vmem:[%s2] sm:$0x1]
  %v96 = vlaneseq
  %v97 = vshrl.u32 %v96, 7
  %v98 = vsub.s32 0, %v97
  %v99 = vrot.slane %v94, %v98
  %vm101 = vcmask 613376
  %v103 = vsel %vm101, %v20, 0
  %v106 = vsel %vm101, %v21, 0
  %v109 = vsel %vm101, %v22, 0
  %v112 = vsel %vm101, %v23, 0
  %v115 = vsel %vm101, %v24, 0
  %v118 = vsel %vm101, %v25, 0
  %v121 = vsel %vm101, %v26, 0
  %v124 = vsel %vm101, %v27, 0
  %v127 = vsel %vm101, %v28, 0
  %v130 = vsel %vm101, %v29, 0
  %v133 = vsel %vm101, %v30, 0
  %v136 = vsel %vm101, %v31, 0
  %v139 = vsel %vm101, %v32, 0
  %v142 = vsel %vm101, %v33, 0
  %v145 = vsel %vm101, %v34, 0
  %v148 = vsel %vm101, %v35, 0
  %v151 = vsel %vm101, %v36, 0
  %v154 = vsel %vm101, %v37, 0
  %v157 = vsel %vm101, %v38, 0
  %v160 = vsel %vm101, %v39, 0
  %v163 = vsel %vm101, %v40, 0
  %v166 = vsel %vm101, %v41, 0
  %v169 = vsel %vm101, %v42, 0
  %v172 = vsel %vm101, %v43, 0
  %v175 = vsel %vm101, %v44, 0
  %v178 = vsel %vm101, %v45, 0
  %v181 = vsel %vm101, %v46, 0
  %v184 = vsel %vm101, %v47, 0
  %v187 = vsel %vm101, %v48, 0
  %v190 = vsel %vm101, %v49, 0
  %v193 = vsel %vm101, %v50, 0
  %v196 = vsel %vm101, %v51, 0
  %v199 = vsel %vm101, %v52, 0
  %v202 = vsel %vm101, %v53, 0
  %v205 = vsel %vm101, %v54, 0
  %v208 = vsel %vm101, %v55, 0
  %v211 = vsel %vm101, %v56, 0
  %v214 = vsel %vm101, %v57, 0
  %v217 = vsel %vm101, %v58, 0
  %v220 = vsel %vm101, %v59, 0
  %v223 = vsel %vm101, %v60, 0
  %v226 = vsel %vm101, %v61, 0
  %v229 = vsel %vm101, %v62, 0
  %v232 = vsel %vm101, %v63, 0
  %v235 = vsel %vm101, %v64, 0
  %v238 = vsel %vm101, %v65, 0
  %v241 = vsel %vm101, %v66, 0
  %v244 = vsel %vm101, %v67, 0
  %v247 = vsel %vm101, %v68, 0
  %v250 = vsel %vm101, %v69, 0
  %v253 = vsel %vm101, %v70, 0
  %v256 = vsel %vm101, %v71, 0
  %v259 = vsel %vm101, %v72, 0
  %v262 = vsel %vm101, %v73, 0
  %v265 = vsel %vm101, %v74, 0
  %v268 = vsel %vm101, %v75, 0
  %v271 = vsel %vm101, %v76, 0
  %v274 = vsel %vm101, %v77, 0
  %v277 = vsel %vm101, %v78, 0
  %v280 = vsel %vm101, %v79, 0
  %v283 = vsel %vm101, %v80, 0
  %v286 = vsel %vm101, %v81, 0
  %v289 = vsel %vm101, %v82, 0
  %v292 = vsel %vm101, %v83, 0
  %vm294 = vcmask 1042432
  %v296 = vsel %vm294, %v93, 0
  %298 = vmatprep.subr.mxu0 0.0
  %299 = vmatpush1.msra.mxu0 0.0
  %300 = vmatprep.subr.mxu0 0.0
  %301 = vmatpush1.msra.mxu0 0.0
  %302 = vmatprep.subr.mxu0 0.0
  %303 = vmatpush1.msra.mxu0 0.0
  %304 = vmatprep.subr.mxu0 0.0
  %305 = vmatpush1.msra.mxu0 0.0
  %306 = vmatprep.subr.mxu0 0.0
  %307 = vmatpush1.msra.mxu0 0.0
  %308 = vmatprep.subr.mxu0 0.0
  %309 = vmatpush1.msra.mxu0 0.0
  %310 = vmatprep.subr.mxu0 0.0
  %311 = vmatpush1.msra.mxu0 %v296
  %312 = vmatprep.subr.mxu0 0.0
  %313 = vmatpush1.msra.mxu0 %v92
  %314 = vmatprep.subr.mxu0 0.0
  %315 = vmatpush1.msra.mxu0 %v91
  %316 = vmatprep.subr.mxu0 0.0
  %317 = vmatpush1.msra.mxu0 %v90
  %318 = vmatprep.subr.mxu0 0.0
  %319 = vmatpush1.msra.mxu0 %v89
  %320 = vmatprep.subr.mxu0 0.0
  %321 = vmatpush1.msra.mxu0 %v88
  %322 = vmatprep.subr.mxu0 0.0
  %323 = vmatpush1.msra.mxu0 %v87
  %324 = vmatprep.subr.mxu0 0.0
  %325 = vmatpush1.msra.mxu0 %v86
  %326 = vmatprep.subr.mxu0 0.0
  %327 = vmatpush1.msra.mxu0 %v85
  %328 = vmatprep.subr.mxu0 0.0
  %329 = vmatpush1.msra.mxu0 %v84
  %330 = vmatprep.subr.mxu0 0.0
  %331 = vmatpush2.msra.mxu0 0.0
  %332 = vmatprep.subr.mxu0 0.0
  %333 = vmatpush2.msra.mxu0 0.0
  %334 = vmatprep.subr.mxu0 0.0
  %335 = vmatpush2.msra.mxu0 0.0
  %336 = vmatprep.subr.mxu0 0.0
  %337 = vmatpush2.msra.mxu0 0.0
  %338 = vmatprep.subr.mxu0 0.0
  %339 = vmatpush2.msra.mxu0 0.0
  %340 = vmatprep.subr.mxu0 0.0
  %341 = vmatpush2.msra.mxu0 0.0
  %342 = vmatprep.subr.mxu0 0.0
  %343 = vmatpush2.msra.mxu0 0.0
  %344 = vmatprep.subr.mxu0 0.0
  %345 = vmatpush2.msra.mxu0 0.0
  %346 = vmatprep.subr.mxu0 0.0
  %347 = vmatpush2.msra.mxu0 0.0
  %348 = vmatprep.subr.mxu0 0.0
  %349 = vmatpush2.msra.mxu0 0.0
  %350 = vmatprep.subr.mxu0 0.0
  %351 = vmatpush2.msra.mxu0 0.0
  %352 = vmatprep.subr.mxu0 0.0
  %353 = vmatpush2.msra.mxu0 0.0
  %354 = vmatprep.subr.mxu0 0.0
  %355 = vmatpush2.msra.mxu0 0.0
  %356 = vmatprep.subr.mxu0 0.0
  %357 = vmatpush2.msra.mxu0 0.0
  %358 = vmatprep.subr.mxu0 0.0
  %359 = vmatpush2.msra.mxu0 0.0
  %360 = vmatprep.subr.mxu0 0.0
  %361 = vmatpush2.msra.mxu0 0.0
  %362 = vmatprep.mubr.f32.mxu0 0.0
  %363 = vmatmul.mubr.f32.gmra.mxu0 %v103
  %v364 = vpop.f32.mrf.mxu0
  %v365 = vadd.f32 %v99, %v364
  %v366 = vpop.f32.mrf.mxu0
  %367 = vmatprep.mubr.f32.mxu0 0.0
  %368 = vmatmul.mubr.f32.gmra.mxu0 %v106
  %v369 = vpop.f32.mrf.mxu0
  %v370 = vadd.f32 %v99, %v369
  %v371 = vpop.f32.mrf.mxu0
  %372 = vmatprep.mubr.f32.mxu0 0.0
  %373 = vmatmul.mubr.f32.gmra.mxu0 %v109
  %v374 = vpop.f32.mrf.mxu0
  %v375 = vadd.f32 %v99, %v374
  %v376 = vpop.f32.mrf.mxu0
  %377 = vmatprep.mubr.f32.mxu0 0.0
  %378 = vmatmul.mubr.f32.gmra.mxu0 %v112
  %v379 = vpop.f32.mrf.mxu0
  %v380 = vadd.f32 %v99, %v379
  %v381 = vpop.f32.mrf.mxu0
  %382 = vmatprep.mubr.f32.mxu0 0.0
  %383 = vmatmul.mubr.f32.gmra.mxu0 %v115
  %v384 = vpop.f32.mrf.mxu0
  %v385 = vadd.f32 %v99, %v384
  %v386 = vpop.f32.mrf.mxu0
  %387 = vmatprep.mubr.f32.mxu0 0.0
  %388 = vmatmul.mubr.f32.gmra.mxu0 %v118
  %v389 = vpop.f32.mrf.mxu0
  %v390 = vadd.f32 %v99, %v389
  %v391 = vpop.f32.mrf.mxu0
  %392 = vmatprep.mubr.f32.mxu0 0.0
  %393 = vmatmul.mubr.f32.gmra.mxu0 %v121
  %v394 = vpop.f32.mrf.mxu0
  %v395 = vadd.f32 %v99, %v394
  %v396 = vpop.f32.mrf.mxu0
  %397 = vmatprep.mubr.f32.mxu0 0.0
  %398 = vmatmul.mubr.f32.gmra.mxu0 %v124
  %v399 = vpop.f32.mrf.mxu0
  %v400 = vadd.f32 %v99, %v399
  %v401 = vpop.f32.mrf.mxu0
  %402 = vmatprep.mubr.f32.mxu0 0.0
  %403 = vmatmul.mubr.f32.gmra.mxu0 %v127
  %v404 = vpop.f32.mrf.mxu0
  %v405 = vadd.f32 %v99, %v404
  %v406 = vpop.f32.mrf.mxu0
  %407 = vmatprep.mubr.f32.mxu0 0.0
  %408 = vmatmul.mubr.f32.gmra.mxu0 %v130
  %v409 = vpop.f32.mrf.mxu0
  %v410 = vadd.f32 %v99, %v409
  %v411 = vpop.f32.mrf.mxu0
  %412 = vmatprep.mubr.f32.mxu0 0.0
  %413 = vmatmul.mubr.f32.gmra.mxu0 %v133
  %v414 = vpop.f32.mrf.mxu0
  %v415 = vadd.f32 %v99, %v414
  %v416 = vpop.f32.mrf.mxu0
  %417 = vmatprep.mubr.f32.mxu0 0.0
  %418 = vmatmul.mubr.f32.gmra.mxu0 %v136
  %v419 = vpop.f32.mrf.mxu0
  %v420 = vadd.f32 %v99, %v419
  %v421 = vpop.f32.mrf.mxu0
  %422 = vmatprep.mubr.f32.mxu0 0.0
  %423 = vmatmul.mubr.f32.gmra.mxu0 %v139
  %v424 = vpop.f32.mrf.mxu0
  %v425 = vadd.f32 %v99, %v424
  %v426 = vpop.f32.mrf.mxu0
  %427 = vmatprep.mubr.f32.mxu0 0.0
  %428 = vmatmul.mubr.f32.gmra.mxu0 %v142
  %v429 = vpop.f32.mrf.mxu0
  %v430 = vadd.f32 %v99, %v429
  %v431 = vpop.f32.mrf.mxu0
  %432 = vmatprep.mubr.f32.mxu0 0.0
  %433 = vmatmul.mubr.f32.gmra.mxu0 %v145
  %v434 = vpop.f32.mrf.mxu0
  %v435 = vadd.f32 %v99, %v434
  %v436 = vpop.f32.mrf.mxu0
  %437 = vmatprep.mubr.f32.mxu0 0.0
  %438 = vmatmul.mubr.f32.gmra.mxu0 %v148
  %v439 = vpop.f32.mrf.mxu0
  %v440 = vadd.f32 %v99, %v439
  %v441 = vpop.f32.mrf.mxu0
  %442 = vmatprep.mubr.f32.mxu0 0.0
  %443 = vmatmul.mubr.f32.gmra.mxu0 %v151
  %v444 = vpop.f32.mrf.mxu0
  %v445 = vadd.f32 %v99, %v444
  %v446 = vpop.f32.mrf.mxu0
  %447 = vmatprep.mubr.f32.mxu0 0.0
  %448 = vmatmul.mubr.f32.gmra.mxu0 %v154
  %v449 = vpop.f32.mrf.mxu0
  %v450 = vadd.f32 %v99, %v449
  %v451 = vpop.f32.mrf.mxu0
  %452 = vmatprep.mubr.f32.mxu0 0.0
  %453 = vmatmul.mubr.f32.gmra.mxu0 %v157
  %v454 = vpop.f32.mrf.mxu0
  %v455 = vadd.f32 %v99, %v454
  %v456 = vpop.f32.mrf.mxu0
  %457 = vmatprep.mubr.f32.mxu0 0.0
  %458 = vmatmul.mubr.f32.gmra.mxu0 %v160
  %v459 = vpop.f32.mrf.mxu0
  %v460 = vadd.f32 %v99, %v459
  %v461 = vpop.f32.mrf.mxu0
  %462 = vmatprep.mubr.f32.mxu0 0.0
  %463 = vmatmul.mubr.f32.gmra.mxu0 %v163
  %v464 = vpop.f32.mrf.mxu0
  %v465 = vadd.f32 %v99, %v464
  %v466 = vpop.f32.mrf.mxu0
  %467 = vmatprep.mubr.f32.mxu0 0.0
  %468 = vmatmul.mubr.f32.gmra.mxu0 %v166
  %v469 = vpop.f32.mrf.mxu0
  %v470 = vadd.f32 %v99, %v469
  %v471 = vpop.f32.mrf.mxu0
  %472 = vmatprep.mubr.f32.mxu0 0.0
  %473 = vmatmul.mubr.f32.gmra.mxu0 %v169
  %v474 = vpop.f32.mrf.mxu0
  %v475 = vadd.f32 %v99, %v474
  %v476 = vpop.f32.mrf.mxu0
  %477 = vmatprep.mubr.f32.mxu0 0.0
  %478 = vmatmul.mubr.f32.gmra.mxu0 %v172
  %v479 = vpop.f32.mrf.mxu0
  %v480 = vadd.f32 %v99, %v479
  %v481 = vpop.f32.mrf.mxu0
  %482 = vmatprep.mubr.f32.mxu0 0.0
  %483 = vmatmul.mubr.f32.gmra.mxu0 %v175
  %v484 = vpop.f32.mrf.mxu0
  %v485 = vadd.f32 %v99, %v484
  %v486 = vpop.f32.mrf.mxu0
  %487 = vmatprep.mubr.f32.mxu0 0.0
  %488 = vmatmul.mubr.f32.gmra.mxu0 %v178
  %v489 = vpop.f32.mrf.mxu0
  %v490 = vadd.f32 %v99, %v489
  %v491 = vpop.f32.mrf.mxu0
  %492 = vmatprep.mubr.f32.mxu0 0.0
  %493 = vmatmul.mubr.f32.gmra.mxu0 %v181
  %v494 = vpop.f32.mrf.mxu0
  %v495 = vadd.f32 %v99, %v494
  %v496 = vpop.f32.mrf.mxu0
  %497 = vmatprep.mubr.f32.mxu0 0.0
  %498 = vmatmul.mubr.f32.gmra.mxu0 %v184
  %v499 = vpop.f32.mrf.mxu0
  %v500 = vadd.f32 %v99, %v499
  %v501 = vpop.f32.mrf.mxu0
  %502 = vmatprep.mubr.f32.mxu0 0.0
  %503 = vmatmul.mubr.f32.gmra.mxu0 %v187
  %v504 = vpop.f32.mrf.mxu0
  %v505 = vadd.f32 %v99, %v504
  %v506 = vpop.f32.mrf.mxu0
  %507 = vmatprep.mubr.f32.mxu0 0.0
  %508 = vmatmul.mubr.f32.gmra.mxu0 %v190
  %v509 = vpop.f32.mrf.mxu0
  %v510 = vadd.f32 %v99, %v509
  %v511 = vpop.f32.mrf.mxu0
  %512 = vmatprep.mubr.f32.mxu0 0.0
  %513 = vmatmul.mubr.f32.gmra.mxu0 %v193
  %v514 = vpop.f32.mrf.mxu0
  %v515 = vadd.f32 %v99, %v514
  %v516 = vpop.f32.mrf.mxu0
  %517 = vmatprep.mubr.f32.mxu0 0.0
  %518 = vmatmul.mubr.f32.gmra.mxu0 %v196
  %v519 = vpop.f32.mrf.mxu0
  %v520 = vadd.f32 %v99, %v519
  %v521 = vpop.f32.mrf.mxu0
  %522 = vmatprep.mubr.f32.mxu0 0.0
  %523 = vmatmul.mubr.f32.gmra.mxu0 %v199
  %v524 = vpop.f32.mrf.mxu0
  %v525 = vadd.f32 %v99, %v524
  %v526 = vpop.f32.mrf.mxu0
  %527 = vmatprep.mubr.f32.mxu0 0.0
  %528 = vmatmul.mubr.f32.gmra.mxu0 %v202
  %v529 = vpop.f32.mrf.mxu0
  %v530 = vadd.f32 %v99, %v529
  %v531 = vpop.f32.mrf.mxu0
  %532 = vmatprep.mubr.f32.mxu0 0.0
  %533 = vmatmul.mubr.f32.gmra.mxu0 %v205
  %v534 = vpop.f32.mrf.mxu0
  %v535 = vadd.f32 %v99, %v534
  %v536 = vpop.f32.mrf.mxu0
  %537 = vmatprep.mubr.f32.mxu0 0.0
  %538 = vmatmul.mubr.f32.gmra.mxu0 %v208
  %v539 = vpop.f32.mrf.mxu0
  %v540 = vadd.f32 %v99, %v539
  %v541 = vpop.f32.mrf.mxu0
  %542 = vmatprep.mubr.f32.mxu0 0.0
  %543 = vmatmul.mubr.f32.gmra.mxu0 %v211
  %v544 = vpop.f32.mrf.mxu0
  %v545 = vadd.f32 %v99, %v544
  %v546 = vpop.f32.mrf.mxu0
  %547 = vmatprep.mubr.f32.mxu0 0.0
  %548 = vmatmul.mubr.f32.gmra.mxu0 %v214
  %v549 = vpop.f32.mrf.mxu0
  %v550 = vadd.f32 %v99, %v549
  %v551 = vpop.f32.mrf.mxu0
  %552 = vmatprep.mubr.f32.mxu0 0.0
  %553 = vmatmul.mubr.f32.gmra.mxu0 %v217
  %v554 = vpop.f32.mrf.mxu0
  %v555 = vadd.f32 %v99, %v554
  %v556 = vpop.f32.mrf.mxu0
  %557 = vmatprep.mubr.f32.mxu0 0.0
  %558 = vmatmul.mubr.f32.gmra.mxu0 %v220
  %v559 = vpop.f32.mrf.mxu0
  %v560 = vadd.f32 %v99, %v559
  %v561 = vpop.f32.mrf.mxu0
  %562 = vmatprep.mubr.f32.mxu0 0.0
  %563 = vmatmul.mubr.f32.gmra.mxu0 %v223
  %v564 = vpop.f32.mrf.mxu0
  %v565 = vadd.f32 %v99, %v564
  %v566 = vpop.f32.mrf.mxu0
  %567 = vmatprep.mubr.f32.mxu0 0.0
  %568 = vmatmul.mubr.f32.gmra.mxu0 %v226
  %v569 = vpop.f32.mrf.mxu0
  %v570 = vadd.f32 %v99, %v569
  %v571 = vpop.f32.mrf.mxu0
  %572 = vmatprep.mubr.f32.mxu0 0.0
  %573 = vmatmul.mubr.f32.gmra.mxu0 %v229
  %v574 = vpop.f32.mrf.mxu0
  %v575 = vadd.f32 %v99, %v574
  %v576 = vpop.f32.mrf.mxu0
  %577 = vmatprep.mubr.f32.mxu0 0.0
  %578 = vmatmul.mubr.f32.gmra.mxu0 %v232
  %v579 = vpop.f32.mrf.mxu0
  %v580 = vadd.f32 %v99, %v579
  %v581 = vpop.f32.mrf.mxu0
  %582 = vmatprep.mubr.f32.mxu0 0.0
  %583 = vmatmul.mubr.f32.gmra.mxu0 %v235
  %v584 = vpop.f32.mrf.mxu0
  %v585 = vadd.f32 %v99, %v584
  %v586 = vpop.f32.mrf.mxu0
  %587 = vmatprep.mubr.f32.mxu0 0.0
  %588 = vmatmul.mubr.f32.gmra.mxu0 %v238
  %v589 = vpop.f32.mrf.mxu0
  %v590 = vadd.f32 %v99, %v589
  %v591 = vpop.f32.mrf.mxu0
  %592 = vmatprep.mubr.f32.mxu0 0.0
  %593 = vmatmul.mubr.f32.gmra.mxu0 %v241
  %v594 = vpop.f32.mrf.mxu0
  %v595 = vadd.f32 %v99, %v594
  %v596 = vpop.f32.mrf.mxu0
  %597 = vmatprep.mubr.f32.mxu0 0.0
  %598 = vmatmul.mubr.f32.gmra.mxu0 %v244
  %v599 = vpop.f32.mrf.mxu0
  %v600 = vadd.f32 %v99, %v599
  %v601 = vpop.f32.mrf.mxu0
  %602 = vmatprep.mubr.f32.mxu0 0.0
  %603 = vmatmul.mubr.f32.gmra.mxu0 %v247
  %v604 = vpop.f32.mrf.mxu0
  %v605 = vadd.f32 %v99, %v604
  %v606 = vpop.f32.mrf.mxu0
  %607 = vmatprep.mubr.f32.mxu0 0.0
  %608 = vmatmul.mubr.f32.gmra.mxu0 %v250
  %v609 = vpop.f32.mrf.mxu0
  %v610 = vadd.f32 %v99, %v609
  %v611 = vpop.f32.mrf.mxu0
  %612 = vmatprep.mubr.f32.mxu0 0.0
  %613 = vmatmul.mubr.f32.gmra.mxu0 %v253
  %v614 = vpop.f32.mrf.mxu0
  %v615 = vadd.f32 %v99, %v614
  %v616 = vpop.f32.mrf.mxu0
  %617 = vmatprep.mubr.f32.mxu0 0.0
  %618 = vmatmul.mubr.f32.gmra.mxu0 %v256
  %v619 = vpop.f32.mrf.mxu0
  %v620 = vadd.f32 %v99, %v619
  %v621 = vpop.f32.mrf.mxu0
  %622 = vmatprep.mubr.f32.mxu0 0.0
  %623 = vmatmul.mubr.f32.gmra.mxu0 %v259
  %v624 = vpop.f32.mrf.mxu0
  %v625 = vadd.f32 %v99, %v624
  %v626 = vpop.f32.mrf.mxu0
  %627 = vmatprep.mubr.f32.mxu0 0.0
  %628 = vmatmul.mubr.f32.gmra.mxu0 %v262
  %v629 = vpop.f32.mrf.mxu0
  %v630 = vadd.f32 %v99, %v629
  %v631 = vpop.f32.mrf.mxu0
  %632 = vmatprep.mubr.f32.mxu0 0.0
  %633 = vmatmul.mubr.f32.gmra.mxu0 %v265
  %v634 = vpop.f32.mrf.mxu0
  %v635 = vadd.f32 %v99, %v634
  %v636 = vpop.f32.mrf.mxu0
  %637 = vmatprep.mubr.f32.mxu0 0.0
  %638 = vmatmul.mubr.f32.gmra.mxu0 %v268
  %v639 = vpop.f32.mrf.mxu0
  %v640 = vadd.f32 %v99, %v639
  %v641 = vpop.f32.mrf.mxu0
  %642 = vmatprep.mubr.f32.mxu0 0.0
  %643 = vmatmul.mubr.f32.gmra.mxu0 %v271
  %v644 = vpop.f32.mrf.mxu0
  %v645 = vadd.f32 %v99, %v644
  %v646 = vpop.f32.mrf.mxu0
  %647 = vmatprep.mubr.f32.mxu0 0.0
  %648 = vmatmul.mubr.f32.gmra.mxu0 %v274
  %v649 = vpop.f32.mrf.mxu0
  %v650 = vadd.f32 %v99, %v649
  %v651 = vpop.f32.mrf.mxu0
  %652 = vmatprep.mubr.f32.mxu0 0.0
  %653 = vmatmul.mubr.f32.gmra.mxu0 %v277
  %v654 = vpop.f32.mrf.mxu0
  %v655 = vadd.f32 %v99, %v654
  %v656 = vpop.f32.mrf.mxu0
  %657 = vmatprep.mubr.f32.mxu0 0.0
  %658 = vmatmul.mubr.f32.gmra.mxu0 %v280
  %v659 = vpop.f32.mrf.mxu0
  %v660 = vadd.f32 %v99, %v659
  %v661 = vpop.f32.mrf.mxu0
  %662 = vmatprep.mubr.f32.mxu0 0.0
  %663 = vmatmul.mubr.f32.gmra.mxu0 %v283
  %v664 = vpop.f32.mrf.mxu0
  %v665 = vadd.f32 %v99, %v664
  %v666 = vpop.f32.mrf.mxu0
  %667 = vmatprep.mubr.f32.mxu0 0.0
  %668 = vmatmul.mubr.f32.gmra.mxu0 %v286
  %v669 = vpop.f32.mrf.mxu0
  %v670 = vadd.f32 %v99, %v669
  %v671 = vpop.f32.mrf.mxu0
  %672 = vmatprep.mubr.f32.mxu0 0.0
  %673 = vmatmul.mubr.f32.gmra.mxu0 %v289
  %v674 = vpop.f32.mrf.mxu0
  %v675 = vadd.f32 %v99, %v674
  %v676 = vpop.f32.mrf.mxu0
  %677 = vmatprep.mubr.f32.mxu0 0.0
  %678 = vmatmul.mubr.f32.gmra.mxu0 %v292
  %v679 = vpop.f32.mrf.mxu0
  %v680 = vadd.f32 %v99, %v679
  %v681 = vpop.f32.mrf.mxu0
  %682 = vdwg.mxu0
  %v683 = vadd.f32 %v365, %v370
  %v684 = vadd.f32 %v683, %v375
  %v685 = vadd.f32 %v684, %v380
  %v686 = vadd.f32 %v685, %v385
  %v687 = vadd.f32 %v686, %v390
  %v688 = vadd.f32 %v687, %v395
  %v689 = vadd.f32 %v688, %v400
  %v690 = vadd.f32 %v689, %v405
  %v691 = vadd.f32 %v690, %v410
  %v692 = vadd.f32 %v691, %v415
  %v693 = vadd.f32 %v692, %v420
  %v694 = vadd.f32 %v693, %v425
  %v695 = vadd.f32 %v694, %v430
  %v696 = vadd.f32 %v695, %v435
  %v697 = vadd.f32 %v696, %v440
  %v698 = vadd.f32 %v697, %v445
  %v699 = vadd.f32 %v698, %v450
  %v700 = vadd.f32 %v699, %v455
  %v701 = vadd.f32 %v700, %v460
  %v702 = vadd.f32 %v701, %v465
  %v703 = vadd.f32 %v702, %v470
  %v704 = vadd.f32 %v703, %v475
  %v705 = vadd.f32 %v704, %v480
  %v706 = vadd.f32 %v705, %v485
  %v707 = vadd.f32 %v706, %v490
  %v708 = vadd.f32 %v707, %v495
  %v709 = vadd.f32 %v708, %v500
  %v710 = vadd.f32 %v709, %v505
  %v711 = vadd.f32 %v710, %v510
  %v712 = vadd.f32 %v711, %v515
  %v713 = vadd.f32 %v712, %v520
  %v714 = vadd.f32 %v713, %v525
  %v715 = vadd.f32 %v714, %v530
  %v716 = vadd.f32 %v715, %v535
  %v717 = vadd.f32 %v716, %v540
  %v718 = vadd.f32 %v717, %v545
  %v719 = vadd.f32 %v718, %v550
  %v720 = vadd.f32 %v719, %v555
  %v721 = vadd.f32 %v720, %v560
  %v722 = vadd.f32 %v721, %v565
  %v723 = vadd.f32 %v722, %v570
  %v724 = vadd.f32 %v723, %v575
  %v725 = vadd.f32 %v724, %v580
  %v726 = vadd.f32 %v725, %v585
  %v727 = vadd.f32 %v726, %v590
  %v728 = vadd.f32 %v727, %v595
  %v729 = vadd.f32 %v728, %v600
  %v730 = vadd.f32 %v729, %v605
  %v731 = vadd.f32 %v730, %v610
  %v732 = vadd.f32 %v731, %v615
  %v733 = vadd.f32 %v732, %v620
  %v734 = vadd.f32 %v733, %v625
  %v735 = vadd.f32 %v734, %v630
  %v736 = vadd.f32 %v735, %v635
  %v737 = vadd.f32 %v736, %v640
  %v738 = vadd.f32 %v737, %v645
  %v739 = vadd.f32 %v738, %v650
  %v740 = vadd.f32 %v739, %v655
  %v741 = vadd.f32 %v740, %v660
  %v742 = vadd.f32 %v741, %v665
  %v743 = vadd.f32 %v742, %v670
  %v744 = vadd.f32 %v743, %v675
  %v745 = vadd.f32 %v744, %v680
  %v746 = vrot.slane %v745, 4
  %v747 = vadd.f32 %v745, %v746
  %v748 = vrot.slane %v747, 2
  %v749 = vadd.f32 %v747, %v748
  %v750 = vrot.slane %v749, 1
  %v751 = vadd.f32 %v749, %v750
  %v752 = vrcp.pop 512.0
  %v753 = vmul.f32 %v751, %v752
  %v754 = vsub.f32 %v365, %v753
  %v755 = vsub.f32 %v370, %v753
  %v756 = vsub.f32 %v375, %v753
  %v757 = vsub.f32 %v380, %v753
  %v758 = vsub.f32 %v385, %v753
  %v759 = vsub.f32 %v390, %v753
  %v760 = vsub.f32 %v395, %v753
  %v761 = vsub.f32 %v400, %v753
  %v762 = vsub.f32 %v405, %v753
  %v763 = vsub.f32 %v410, %v753
  %v764 = vsub.f32 %v415, %v753
  %v765 = vsub.f32 %v420, %v753
  %v766 = vsub.f32 %v425, %v753
  %v767 = vsub.f32 %v430, %v753
  %v768 = vsub.f32 %v435, %v753
  %v769 = vsub.f32 %v440, %v753
  %v770 = vsub.f32 %v445, %v753
  %v771 = vsub.f32 %v450, %v753
  %v772 = vsub.f32 %v455, %v753
  %v773 = vsub.f32 %v460, %v753
  %v774 = vsub.f32 %v465, %v753
  %v775 = vsub.f32 %v470, %v753
  %v776 = vsub.f32 %v475, %v753
  %v777 = vsub.f32 %v480, %v753
  %v778 = vsub.f32 %v485, %v753
  %v779 = vsub.f32 %v490, %v753
  %v780 = vsub.f32 %v495, %v753
  %v781 = vsub.f32 %v500, %v753
  %v782 = vsub.f32 %v505, %v753
  %v783 = vsub.f32 %v510, %v753
  %v784 = vsub.f32 %v515, %v753
  %v785 = vsub.f32 %v520, %v753
  %v786 = vsub.f32 %v525, %v753
  %v787 = vsub.f32 %v530, %v753
  %v788 = vsub.f32 %v535, %v753
  %v789 = vsub.f32 %v540, %v753
  %v790 = vsub.f32 %v545, %v753
  %v791 = vsub.f32 %v550, %v753
  %v792 = vsub.f32 %v555, %v753
  %v793 = vsub.f32 %v560, %v753
  %v794 = vsub.f32 %v565, %v753
  %v795 = vsub.f32 %v570, %v753
  %v796 = vsub.f32 %v575, %v753
  %v797 = vsub.f32 %v580, %v753
  %v798 = vsub.f32 %v585, %v753
  %v799 = vsub.f32 %v590, %v753
  %v800 = vsub.f32 %v595, %v753
  %v801 = vsub.f32 %v600, %v753
  %v802 = vsub.f32 %v605, %v753
  %v803 = vsub.f32 %v610, %v753
  %v804 = vsub.f32 %v615, %v753
  %v805 = vsub.f32 %v620, %v753
  %v806 = vsub.f32 %v625, %v753
  %v807 = vsub.f32 %v630, %v753
  %v808 = vsub.f32 %v635, %v753
  %v809 = vsub.f32 %v640, %v753
  %v810 = vsub.f32 %v645, %v753
  %v811 = vsub.f32 %v650, %v753
  %v812 = vsub.f32 %v655, %v753
  %v813 = vsub.f32 %v660, %v753
  %v814 = vsub.f32 %v665, %v753
  %v815 = vsub.f32 %v670, %v753
  %v816 = vsub.f32 %v675, %v753
  %v817 = vsub.f32 %v680, %v753
  %v818 = vmul.f32 %v754, %v754
  %v819 = vmul.f32 %v755, %v755
  %v820 = vmul.f32 %v756, %v756
  %v821 = vmul.f32 %v757, %v757
  %v822 = vmul.f32 %v758, %v758
  %v823 = vmul.f32 %v759, %v759
  %v824 = vmul.f32 %v760, %v760
  %v825 = vmul.f32 %v761, %v761
  %v826 = vmul.f32 %v762, %v762
  %v827 = vmul.f32 %v763, %v763
  %v828 = vmul.f32 %v764, %v764
  %v829 = vmul.f32 %v765, %v765
  %v830 = vmul.f32 %v766, %v766
  %v831 = vmul.f32 %v767, %v767
  %v832 = vmul.f32 %v768, %v768
  %v833 = vmul.f32 %v769, %v769
  %v834 = vmul.f32 %v770, %v770
  %v835 = vmul.f32 %v771, %v771
  %v836 = vmul.f32 %v772, %v772
  %v837 = vmul.f32 %v773, %v773
  %v838 = vmul.f32 %v774, %v774
  %v839 = vmul.f32 %v775, %v775
  %v840 = vmul.f32 %v776, %v776
  %v841 = vmul.f32 %v777, %v777
  %v842 = vmul.f32 %v778, %v778
  %v843 = vmul.f32 %v779, %v779
  %v844 = vmul.f32 %v780, %v780
  %v845 = vmul.f32 %v781, %v781
  %v846 = vmul.f32 %v782, %v782
  %v847 = vmul.f32 %v783, %v783
  %v848 = vmul.f32 %v784, %v784
  %v849 = vmul.f32 %v785, %v785
  %v850 = vmul.f32 %v786, %v786
  %v851 = vmul.f32 %v787, %v787
  %v852 = vmul.f32 %v788, %v788
  %v853 = vmul.f32 %v789, %v789
  %v854 = vmul.f32 %v790, %v790
  %v855 = vmul.f32 %v791, %v791
  %v856 = vmul.f32 %v792, %v792
  %v857 = vmul.f32 %v793, %v793
  %v858 = vmul.f32 %v794, %v794
  %v859 = vmul.f32 %v795, %v795
  %v860 = vmul.f32 %v796, %v796
  %v861 = vmul.f32 %v797, %v797
  %v862 = vmul.f32 %v798, %v798
  %v863 = vmul.f32 %v799, %v799
  %v864 = vmul.f32 %v800, %v800
  %v865 = vmul.f32 %v801, %v801
  %v866 = vmul.f32 %v802, %v802
  %v867 = vmul.f32 %v803, %v803
  %v868 = vmul.f32 %v804, %v804
  %v869 = vmul.f32 %v805, %v805
  %v870 = vmul.f32 %v806, %v806
  %v871 = vmul.f32 %v807, %v807
  %v872 = vmul.f32 %v808, %v808
  %v873 = vmul.f32 %v809, %v809
  %v874 = vmul.f32 %v810, %v810
  %v875 = vmul.f32 %v811, %v811
  %v876 = vmul.f32 %v812, %v812
  %v877 = vmul.f32 %v813, %v813
  %v878 = vmul.f32 %v814, %v814
  %v879 = vmul.f32 %v815, %v815
  %v880 = vmul.f32 %v816, %v816
  %v881 = vmul.f32 %v817, %v817
  %v882 = vadd.f32 %v818, %v819
  %v883 = vadd.f32 %v882, %v820
  %v884 = vadd.f32 %v883, %v821
  %v885 = vadd.f32 %v884, %v822
  %v886 = vadd.f32 %v885, %v823
  %v887 = vadd.f32 %v886, %v824
  %v888 = vadd.f32 %v887, %v825
  %v889 = vadd.f32 %v888, %v826
  %v890 = vadd.f32 %v889, %v827
  %v891 = vadd.f32 %v890, %v828
  %v892 = vadd.f32 %v891, %v829
  %v893 = vadd.f32 %v892, %v830
  %v894 = vadd.f32 %v893, %v831
  %v895 = vadd.f32 %v894, %v832
  %v896 = vadd.f32 %v895, %v833
  %v897 = vadd.f32 %v896, %v834
  %v898 = vadd.f32 %v897, %v835
  %v899 = vadd.f32 %v898, %v836
  %v900 = vadd.f32 %v899, %v837
  %v901 = vadd.f32 %v900, %v838
  %v902 = vadd.f32 %v901, %v839
  %v903 = vadd.f32 %v902, %v840
  %v904 = vadd.f32 %v903, %v841
  %v905 = vadd.f32 %v904, %v842
  %v906 = vadd.f32 %v905, %v843
  %v907 = vadd.f32 %v906, %v844
  %v908 = vadd.f32 %v907, %v845
  %v909 = vadd.f32 %v908, %v846
  %v910 = vadd.f32 %v909, %v847
  %v911 = vadd.f32 %v910, %v848
  %v912 = vadd.f32 %v911, %v849
  %v913 = vadd.f32 %v912, %v850
  %v914 = vadd.f32 %v913, %v851
  %v915 = vadd.f32 %v914, %v852
  %v916 = vadd.f32 %v915, %v853
  %v917 = vadd.f32 %v916, %v854
  %v918 = vadd.f32 %v917, %v855
  %v919 = vadd.f32 %v918, %v856
  %v920 = vadd.f32 %v919, %v857
  %v921 = vadd.f32 %v920, %v858
  %v922 = vadd.f32 %v921, %v859
  %v923 = vadd.f32 %v922, %v860
  %v924 = vadd.f32 %v923, %v861
  %v925 = vadd.f32 %v924, %v862
  %v926 = vadd.f32 %v925, %v863
  %v927 = vadd.f32 %v926, %v864
  %v928 = vadd.f32 %v927, %v865
  %v929 = vadd.f32 %v928, %v866
  %v930 = vadd.f32 %v929, %v867
  %v931 = vadd.f32 %v930, %v868
  %v932 = vadd.f32 %v931, %v869
  %v933 = vadd.f32 %v932, %v870
  %v934 = vadd.f32 %v933, %v871
  %v935 = vadd.f32 %v934, %v872
  %v936 = vadd.f32 %v935, %v873
  %v937 = vadd.f32 %v936, %v874
  %v938 = vadd.f32 %v937, %v875
  %v939 = vadd.f32 %v938, %v876
  %v940 = vadd.f32 %v939, %v877
  %v941 = vadd.f32 %v940, %v878
  %v942 = vadd.f32 %v941, %v879
  %v943 = vadd.f32 %v942, %v880
  %v944 = vadd.f32 %v943, %v881
  %v945 = vrot.slane %v944, 4
  %v946 = vadd.f32 %v944, %v945
  %v947 = vrot.slane %v946, 2
  %v948 = vadd.f32 %v946, %v947
  %v949 = vrot.slane %v948, 1
  %v950 = vadd.f32 %v948, %v949
  %v951 = vmul.f32 %v950, %v752
  %v952 = vadd.f32 %v951, 1e-05
  %v953 = vrsqrt.pop %v952
  %v954 = vmul.f32 %v754, %v953
  %v955 = vmul.f32 %v755, %v953
  %v956 = vmul.f32 %v756, %v953
  %v957 = vmul.f32 %v757, %v953
  %v958 = vmul.f32 %v758, %v953
  %v959 = vmul.f32 %v759, %v953
  %v960 = vmul.f32 %v760, %v953
  %v961 = vmul.f32 %v761, %v953
  %v962 = vmul.f32 %v762, %v953
  %v963 = vmul.f32 %v763, %v953
  %v964 = vmul.f32 %v764, %v953
  %v965 = vmul.f32 %v765, %v953
  %v966 = vmul.f32 %v766, %v953
  %v967 = vmul.f32 %v767, %v953
  %v968 = vmul.f32 %v768, %v953
  %v969 = vmul.f32 %v769, %v953
  %v970 = vmul.f32 %v770, %v953
  %v971 = vmul.f32 %v771, %v953
  %v972 = vmul.f32 %v772, %v953
  %v973 = vmul.f32 %v773, %v953
  %v974 = vmul.f32 %v774, %v953
  %v975 = vmul.f32 %v775, %v953
  %v976 = vmul.f32 %v776, %v953
  %v977 = vmul.f32 %v777, %v953
  %v978 = vmul.f32 %v778, %v953
  %v979 = vmul.f32 %v779, %v953
  %v980 = vmul.f32 %v780, %v953
  %v981 = vmul.f32 %v781, %v953
  %v982 = vmul.f32 %v782, %v953
  %v983 = vmul.f32 %v783, %v953
  %v984 = vmul.f32 %v784, %v953
  %v985 = vmul.f32 %v785, %v953
  %v986 = vmul.f32 %v786, %v953
  %v987 = vmul.f32 %v787, %v953
  %v988 = vmul.f32 %v788, %v953
  %v989 = vmul.f32 %v789, %v953
  %v990 = vmul.f32 %v790, %v953
  %v991 = vmul.f32 %v791, %v953
  %v992 = vmul.f32 %v792, %v953
  %v993 = vmul.f32 %v793, %v953
  %v994 = vmul.f32 %v794, %v953
  %v995 = vmul.f32 %v795, %v953
  %v996 = vmul.f32 %v796, %v953
  %v997 = vmul.f32 %v797, %v953
  %v998 = vmul.f32 %v798, %v953
  %v999 = vmul.f32 %v799, %v953
  %v1000 = vmul.f32 %v800, %v953
  %v1001 = vmul.f32 %v801, %v953
  %v1002 = vmul.f32 %v802, %v953
  %v1003 = vmul.f32 %v803, %v953
  %v1004 = vmul.f32 %v804, %v953
  %v1005 = vmul.f32 %v805, %v953
  %v1006 = vmul.f32 %v806, %v953
  %v1007 = vmul.f32 %v807, %v953
  %v1008 = vmul.f32 %v808, %v953
  %v1009 = vmul.f32 %v809, %v953
  %v1010 = vmul.f32 %v810, %v953
  %v1011 = vmul.f32 %v811, %v953
  %v1012 = vmul.f32 %v812, %v953
  %v1013 = vmul.f32 %v813, %v953
  %v1014 = vmul.f32 %v814, %v953
  %v1015 = vmul.f32 %v815, %v953
  %v1016 = vmul.f32 %v816, %v953
  %v1017 = vmul.f32 %v817, %v953
  %v1018 = vld [vmem:[%s3] sm:$0x1]
  %v1020 = vlaneseq
  %v1021 = vshrl.u32 %v1020, 7
  %v1022 = vsub.s32 0, %v1021
  %v1023 = vrot.slane %v1018, %v1022
  %v1025 = vmul.f32 %v954, %v1023
  %v1026 = vmul.f32 %v955, %v1023
  %v1027 = vmul.f32 %v956, %v1023
  %v1028 = vmul.f32 %v957, %v1023
  %v1029 = vmul.f32 %v958, %v1023
  %v1030 = vmul.f32 %v959, %v1023
  %v1031 = vmul.f32 %v960, %v1023
  %v1032 = vmul.f32 %v961, %v1023
  %v1033 = vmul.f32 %v962, %v1023
  %v1034 = vmul.f32 %v963, %v1023
  %v1035 = vmul.f32 %v964, %v1023
  %v1036 = vmul.f32 %v965, %v1023
  %v1037 = vmul.f32 %v966, %v1023
  %v1038 = vmul.f32 %v967, %v1023
  %v1039 = vmul.f32 %v968, %v1023
  %v1040 = vmul.f32 %v969, %v1023
  %v1041 = vmul.f32 %v970, %v1023
  %v1042 = vmul.f32 %v971, %v1023
  %v1043 = vmul.f32 %v972, %v1023
  %v1044 = vmul.f32 %v973, %v1023
  %v1045 = vmul.f32 %v974, %v1023
  %v1046 = vmul.f32 %v975, %v1023
  %v1047 = vmul.f32 %v976, %v1023
  %v1048 = vmul.f32 %v977, %v1023
  %v1049 = vmul.f32 %v978, %v1023
  %v1050 = vmul.f32 %v979, %v1023
  %v1051 = vmul.f32 %v980, %v1023
  %v1052 = vmul.f32 %v981, %v1023
  %v1053 = vmul.f32 %v982, %v1023
  %v1054 = vmul.f32 %v983, %v1023
  %v1055 = vmul.f32 %v984, %v1023
  %v1056 = vmul.f32 %v985, %v1023
  %v1057 = vmul.f32 %v986, %v1023
  %v1058 = vmul.f32 %v987, %v1023
  %v1059 = vmul.f32 %v988, %v1023
  %v1060 = vmul.f32 %v989, %v1023
  %v1061 = vmul.f32 %v990, %v1023
  %v1062 = vmul.f32 %v991, %v1023
  %v1063 = vmul.f32 %v992, %v1023
  %v1064 = vmul.f32 %v993, %v1023
  %v1065 = vmul.f32 %v994, %v1023
  %v1066 = vmul.f32 %v995, %v1023
  %v1067 = vmul.f32 %v996, %v1023
  %v1068 = vmul.f32 %v997, %v1023
  %v1069 = vmul.f32 %v998, %v1023
  %v1070 = vmul.f32 %v999, %v1023
  %v1071 = vmul.f32 %v1000, %v1023
  %v1072 = vmul.f32 %v1001, %v1023
  %v1073 = vmul.f32 %v1002, %v1023
  %v1074 = vmul.f32 %v1003, %v1023
  %v1075 = vmul.f32 %v1004, %v1023
  %v1076 = vmul.f32 %v1005, %v1023
  %v1077 = vmul.f32 %v1006, %v1023
  %v1078 = vmul.f32 %v1007, %v1023
  %v1079 = vmul.f32 %v1008, %v1023
  %v1080 = vmul.f32 %v1009, %v1023
  %v1081 = vmul.f32 %v1010, %v1023
  %v1082 = vmul.f32 %v1011, %v1023
  %v1083 = vmul.f32 %v1012, %v1023
  %v1084 = vmul.f32 %v1013, %v1023
  %v1085 = vmul.f32 %v1014, %v1023
  %v1086 = vmul.f32 %v1015, %v1023
  %v1087 = vmul.f32 %v1016, %v1023
  %v1088 = vmul.f32 %v1017, %v1023
  %v1089 = vld [vmem:[%s4] sm:$0x1]
  %v1091 = vlaneseq
  %v1092 = vshrl.u32 %v1091, 7
  %v1093 = vsub.s32 0, %v1092
  %v1094 = vrot.slane %v1089, %v1093
  %v1096 = vadd.f32 %v1025, %v1094
  %v1097 = vadd.f32 %v1026, %v1094
  %v1098 = vadd.f32 %v1027, %v1094
  %v1099 = vadd.f32 %v1028, %v1094
  %v1100 = vadd.f32 %v1029, %v1094
  %v1101 = vadd.f32 %v1030, %v1094
  %v1102 = vadd.f32 %v1031, %v1094
  %v1103 = vadd.f32 %v1032, %v1094
  %v1104 = vadd.f32 %v1033, %v1094
  %v1105 = vadd.f32 %v1034, %v1094
  %v1106 = vadd.f32 %v1035, %v1094
  %v1107 = vadd.f32 %v1036, %v1094
  %v1108 = vadd.f32 %v1037, %v1094
  %v1109 = vadd.f32 %v1038, %v1094
  %v1110 = vadd.f32 %v1039, %v1094
  %v1111 = vadd.f32 %v1040, %v1094
  %v1112 = vadd.f32 %v1041, %v1094
  %v1113 = vadd.f32 %v1042, %v1094
  %v1114 = vadd.f32 %v1043, %v1094
  %v1115 = vadd.f32 %v1044, %v1094
  %v1116 = vadd.f32 %v1045, %v1094
  %v1117 = vadd.f32 %v1046, %v1094
  %v1118 = vadd.f32 %v1047, %v1094
  %v1119 = vadd.f32 %v1048, %v1094
  %v1120 = vadd.f32 %v1049, %v1094
  %v1121 = vadd.f32 %v1050, %v1094
  %v1122 = vadd.f32 %v1051, %v1094
  %v1123 = vadd.f32 %v1052, %v1094
  %v1124 = vadd.f32 %v1053, %v1094
  %v1125 = vadd.f32 %v1054, %v1094
  %v1126 = vadd.f32 %v1055, %v1094
  %v1127 = vadd.f32 %v1056, %v1094
  %v1128 = vadd.f32 %v1057, %v1094
  %v1129 = vadd.f32 %v1058, %v1094
  %v1130 = vadd.f32 %v1059, %v1094
  %v1131 = vadd.f32 %v1060, %v1094
  %v1132 = vadd.f32 %v1061, %v1094
  %v1133 = vadd.f32 %v1062, %v1094
  %v1134 = vadd.f32 %v1063, %v1094
  %v1135 = vadd.f32 %v1064, %v1094
  %v1136 = vadd.f32 %v1065, %v1094
  %v1137 = vadd.f32 %v1066, %v1094
  %v1138 = vadd.f32 %v1067, %v1094
  %v1139 = vadd.f32 %v1068, %v1094
  %v1140 = vadd.f32 %v1069, %v1094
  %v1141 = vadd.f32 %v1070, %v1094
  %v1142 = vadd.f32 %v1071, %v1094
  %v1143 = vadd.f32 %v1072, %v1094
  %v1144 = vadd.f32 %v1073, %v1094
  %v1145 = vadd.f32 %v1074, %v1094
  %v1146 = vadd.f32 %v1075, %v1094
  %v1147 = vadd.f32 %v1076, %v1094
  %v1148 = vadd.f32 %v1077, %v1094
  %v1149 = vadd.f32 %v1078, %v1094
  %v1150 = vadd.f32 %v1079, %v1094
  %v1151 = vadd.f32 %v1080, %v1094
  %v1152 = vadd.f32 %v1081, %v1094
  %v1153 = vadd.f32 %v1082, %v1094
  %v1154 = vadd.f32 %v1083, %v1094
  %v1155 = vadd.f32 %v1084, %v1094
  %v1156 = vadd.f32 %v1085, %v1094
  %v1157 = vadd.f32 %v1086, %v1094
  %v1158 = vadd.f32 %v1087, %v1094
  %v1159 = vadd.f32 %v1088, %v1094
  %v1160 = vmax.f32 %v1096, 0.0
  %v1161 = vmax.f32 %v1097, 0.0
  %v1162 = vmax.f32 %v1098, 0.0
  %v1163 = vmax.f32 %v1099, 0.0
  %v1164 = vmax.f32 %v1100, 0.0
  %v1165 = vmax.f32 %v1101, 0.0
  %v1166 = vmax.f32 %v1102, 0.0
  %v1167 = vmax.f32 %v1103, 0.0
  %v1168 = vmax.f32 %v1104, 0.0
  %v1169 = vmax.f32 %v1105, 0.0
  %v1170 = vmax.f32 %v1106, 0.0
  %v1171 = vmax.f32 %v1107, 0.0
  %v1172 = vmax.f32 %v1108, 0.0
  %v1173 = vmax.f32 %v1109, 0.0
  %v1174 = vmax.f32 %v1110, 0.0
  %v1175 = vmax.f32 %v1111, 0.0
  %v1176 = vmax.f32 %v1112, 0.0
  %v1177 = vmax.f32 %v1113, 0.0
  %v1178 = vmax.f32 %v1114, 0.0
  %v1179 = vmax.f32 %v1115, 0.0
  %v1180 = vmax.f32 %v1116, 0.0
  %v1181 = vmax.f32 %v1117, 0.0
  %v1182 = vmax.f32 %v1118, 0.0
  %v1183 = vmax.f32 %v1119, 0.0
  %v1184 = vmax.f32 %v1120, 0.0
  %v1185 = vmax.f32 %v1121, 0.0
  %v1186 = vmax.f32 %v1122, 0.0
  %v1187 = vmax.f32 %v1123, 0.0
  %v1188 = vmax.f32 %v1124, 0.0
  %v1189 = vmax.f32 %v1125, 0.0
  %v1190 = vmax.f32 %v1126, 0.0
  %v1191 = vmax.f32 %v1127, 0.0
  %v1192 = vmax.f32 %v1128, 0.0
  %v1193 = vmax.f32 %v1129, 0.0
  %v1194 = vmax.f32 %v1130, 0.0
  %v1195 = vmax.f32 %v1131, 0.0
  %v1196 = vmax.f32 %v1132, 0.0
  %v1197 = vmax.f32 %v1133, 0.0
  %v1198 = vmax.f32 %v1134, 0.0
  %v1199 = vmax.f32 %v1135, 0.0
  %v1200 = vmax.f32 %v1136, 0.0
  %v1201 = vmax.f32 %v1137, 0.0
  %v1202 = vmax.f32 %v1138, 0.0
  %v1203 = vmax.f32 %v1139, 0.0
  %v1204 = vmax.f32 %v1140, 0.0
  %v1205 = vmax.f32 %v1141, 0.0
  %v1206 = vmax.f32 %v1142, 0.0
  %v1207 = vmax.f32 %v1143, 0.0
  %v1208 = vmax.f32 %v1144, 0.0
  %v1209 = vmax.f32 %v1145, 0.0
  %v1210 = vmax.f32 %v1146, 0.0
  %v1211 = vmax.f32 %v1147, 0.0
  %v1212 = vmax.f32 %v1148, 0.0
  %v1213 = vmax.f32 %v1149, 0.0
  %v1214 = vmax.f32 %v1150, 0.0
  %v1215 = vmax.f32 %v1151, 0.0
  %v1216 = vmax.f32 %v1152, 0.0
  %v1217 = vmax.f32 %v1153, 0.0
  %v1218 = vmax.f32 %v1154, 0.0
  %v1219 = vmax.f32 %v1155, 0.0
  %v1220 = vmax.f32 %v1156, 0.0
  %v1221 = vmax.f32 %v1157, 0.0
  %v1222 = vmax.f32 %v1158, 0.0
  %v1223 = vmax.f32 %v1159, 0.0
  %1224 = vst [vmem:[%s5] sm:$0xff] %v1160
  %1225 = vst [vmem:[%s5 + $0x8] sm:$0xff] %v1161
  %1226 = vst [vmem:[%s5 + $0x10] sm:$0xff] %v1162
  %1227 = vst [vmem:[%s5 + $0x18] sm:$0xff] %v1163
  %1228 = vst [vmem:[%s5 + $0x20] sm:$0xff] %v1164
  %1229 = vst [vmem:[%s5 + $0x28] sm:$0xff] %v1165
  %1230 = vst [vmem:[%s5 + $0x30] sm:$0xff] %v1166
  %1231 = vst [vmem:[%s5 + $0x38] sm:$0xff] %v1167
  %1232 = vst [vmem:[%s5 + $0x40] sm:$0xff] %v1168
  %1233 = vst [vmem:[%s5 + $0x48] sm:$0xff] %v1169
  %1234 = vst [vmem:[%s5 + $0x50] sm:$0xff] %v1170
  %1235 = vst [vmem:[%s5 + $0x58] sm:$0xff] %v1171
  %1236 = vst [vmem:[%s5 + $0x60] sm:$0xff] %v1172
  %1237 = vst [vmem:[%s5 + $0x68] sm:$0xff] %v1173
  %1238 = vst [vmem:[%s5 + $0x70] sm:$0xff] %v1174
  %1239 = vst [vmem:[%s5 + $0x78] sm:$0xff] %v1175
  %1240 = vst [vmem:[%s5 + $0x80] sm:$0xff] %v1176
  %1241 = vst [vmem:[%s5 + $0x88] sm:$0xff] %v1177
  %1242 = vst [vmem:[%s5 + $0x90] sm:$0xff] %v1178
  %1243 = vst [vmem:[%s5 + $0x98] sm:$0xff] %v1179
  %1244 = vst [vmem:[%s5 + $0xa0] sm:$0xff] %v1180
  %1245 = vst [vmem:[%s5 + $0xa8] sm:$0xff] %v1181
  %1246 = vst [vmem:[%s5 + $0xb0] sm:$0xff] %v1182
  %1247 = vst [vmem:[%s5 + $0xb8] sm:$0xff] %v1183
  %1248 = vst [vmem:[%s5 + $0xc0] sm:$0xff] %v1184
  %1249 = vst [vmem:[%s5 + $0xc8] sm:$0xff] %v1185
  %1250 = vst [vmem:[%s5 + $0xd0] sm:$0xff] %v1186
  %1251 = vst [vmem:[%s5 + $0xd8] sm:$0xff] %v1187
  %1252 = vst [vmem:[%s5 + $0xe0] sm:$0xff] %v1188
  %1253 = vst [vmem:[%s5 + $0xe8] sm:$0xff] %v1189
  %1254 = vst [vmem:[%s5 + $0xf0] sm:$0xff] %v1190
  %1255 = vst [vmem:[%s5 + $0xf8] sm:$0xff] %v1191
  %1256 = vst [vmem:[%s5 + $0x100] sm:$0xff] %v1192
  %1257 = vst [vmem:[%s5 + $0x108] sm:$0xff] %v1193
  %1258 = vst [vmem:[%s5 + $0x110] sm:$0xff] %v1194
  %1259 = vst [vmem:[%s5 + $0x118] sm:$0xff] %v1195
  %1260 = vst [vmem:[%s5 + $0x120] sm:$0xff] %v1196
  %1261 = vst [vmem:[%s5 + $0x128] sm:$0xff] %v1197
  %1262 = vst [vmem:[%s5 + $0x130] sm:$0xff] %v1198
  %1263 = vst [vmem:[%s5 + $0x138] sm:$0xff] %v1199
  %1264 = vst [vmem:[%s5 + $0x140] sm:$0xff] %v1200
  %1265 = vst [vmem:[%s5 + $0x148] sm:$0xff] %v1201
  %1266 = vst [vmem:[%s5 + $0x150] sm:$0xff] %v1202
  %1267 = vst [vmem:[%s5 + $0x158] sm:$0xff] %v1203
  %1268 = vst [vmem:[%s5 + $0x160] sm:$0xff] %v1204
  %1269 = vst [vmem:[%s5 + $0x168] sm:$0xff] %v1205
  %1270 = vst [vmem:[%s5 + $0x170] sm:$0xff] %v1206
  %1271 = vst [vmem:[%s5 + $0x178] sm:$0xff] %v1207
  %1272 = vst [vmem:[%s5 + $0x180] sm:$0xff] %v1208
  %1273 = vst [vmem:[%s5 + $0x188] sm:$0xff] %v1209
  %1274 = vst [vmem:[%s5 + $0x190] sm:$0xff] %v1210
  %1275 = vst [vmem:[%s5 + $0x198] sm:$0xff] %v1211
  %1276 = vst [vmem:[%s5 + $0x1a0] sm:$0xff] %v1212
  %1277 = vst [vmem:[%s5 + $0x1a8] sm:$0xff] %v1213
  %1278 = vst [vmem:[%s5 + $0x1b0] sm:$0xff] %v1214
  %1279 = vst [vmem:[%s5 + $0x1b8] sm:$0xff] %v1215
  %1280 = vst [vmem:[%s5 + $0x1c0] sm:$0xff] %v1216
  %1281 = vst [vmem:[%s5 + $0x1c8] sm:$0xff] %v1217
  %1282 = vst [vmem:[%s5 + $0x1d0] sm:$0xff] %v1218
  %1283 = vst [vmem:[%s5 + $0x1d8] sm:$0xff] %v1219
  %1284 = vst [vmem:[%s5 + $0x1e0] sm:$0xff] %v1220
  %1285 = vst [vmem:[%s5 + $0x1e8] sm:$0xff] %v1221
  %1286 = vst [vmem:[%s5 + $0x1f0] sm:$0xff] %v1222
  %1287 = vst [vmem:[%s5 + $0x1f8] sm:$0xff] %v1223
  // Predicated region
  $region22: #{encoder_forward.5} parent=0 // pred_check
    _
  $region23: #{encoder_forward.5} parent=0 // pred_check_branch
    %1289 = sbr.rel (0) target = $region25
  $region24: #{encoder_forward.5} parent=0 // pred_region
    _
  $region25: #{encoder_forward.5} parent=0 // pred_fallthru
    _
  // Predicated region
  $region26: #{encoder_forward.5} parent=0 // pred_check
    _
  $region27: #{encoder_forward.5} parent=0 // pred_check_branch
    %1291 = sbr.rel (0) target = $region29
  $region28: #{encoder_forward.5} parent=0 // pred_region
    _
  $region29: #{encoder_forward.5} parent=0 // pred_fallthru
    _

// kernel: encoder_forward.7
$region0: #{encoder_forward.7}
  #allocation0 [shape = 'u32[]', space=smem, size = 0x4, offset = 0x4, fixed_abs, tag = 'smem constant byte address 0x4 - core index']
  #allocation1 [shape = 'u32[144,128]{1,0:T(1,128)}', space=vmem, size = 0x12000, scoped, tag = 'internal scratch']
  %s0 = inlined_call_operand.vmem [shape: f32[32,1152], index: 0, kind: input, shape index: {}]
  %s1 = inlined_call_operand.vmem [shape: f32[1152,128], index: 1, kind: input, shape index: {}]
  %s2 = inlined_call_operand.vmem [shape: f32[1,128], index: 2, kind: input, shape index: {}, may-alias: {2,4}]
  %s3 = inlined_call_operand.vmem [shape: f32[1,128], index: 3, kind: input, shape index: {}]
  %s4 = inlined_call_operand.vmem [shape: f32[1,128], index: 4, kind: input, shape index: {}, may-alias: {2,4}]
  %s5 = inlined_call_operand.vmem [shape: f32[32,128], index: 5, kind: output, shape index: {}]
  %s6 = sld [smem:[#allocation0]]
  $region30: #{encoder_forward.7} parent=0
    _
  %s8 = ssub.s32 1, %s6
  %s9 = scalar_select 0, %s8, %s6
  // Predicated region
  $region2: #{encoder_forward.7} parent=0 // pred_check
    _
  $region3: #{encoder_forward.7} parent=0 // pred_check_branch
    %11 = sbr.rel (0) target = $region5
  $region4: #{encoder_forward.7} parent=0 // pred_region
    _
  $region5: #{encoder_forward.7} parent=0 // pred_fallthru
    _
  // Predicated region
  $region6: #{encoder_forward.7} parent=0 // pred_check
    _
  $region7: #{encoder_forward.7} parent=0 // pred_check_branch
    %13 = sbr.rel (0) target = $region9
  $region8: #{encoder_forward.7} parent=0 // pred_region
    _
  $region9: #{encoder_forward.7} parent=0 // pred_fallthru
    _
  // Predicated region
  $region10: #{encoder_forward.7} parent=0 // pred_check
    _
  $region11: #{encoder_forward.7} parent=0 // pred_check_branch
    %15 = sbr.rel (0) target = $region13
  $region12: #{encoder_forward.7} parent=0 // pred_region
    _
  $region13: #{encoder_forward.7} parent=0 // pred_fallthru
    _
  // Predicated region
  $region14: #{encoder_forward.7} parent=0 // pred_check
    _
  $region15: #{encoder_forward.7} parent=0 // pred_check_branch
    %17 = sbr.rel (0) target = $region17
  $region16: #{encoder_forward.7} parent=0 // pred_region
    _
  $region17: #{encoder_forward.7} parent=0 // pred_fallthru
    _
  // Predicated region
  $region18: #{encoder_forward.7} parent=0 // pred_check
    _
  $region19: #{encoder_forward.7} parent=0 // pred_check_branch
    %19 = sbr.rel (0) target = $region21
  $region20: #{encoder_forward.7} parent=0 // pred_region
    _
  $region21: #{encoder_forward.7} parent=0 // pred_fallthru
    _
  %v20 = vld [vmem:[%s0] sm:$0xff]
  %v21 = vld [vmem:[%s0 + $0x8] sm:$0xff]
  %v22 = vld [vmem:[%s0 + $0x10] sm:$0xff]
  %v23 = vld [vmem:[%s0 + $0x18] sm:$0xff]
  %v24 = vld [vmem:[%s0 + $0x20] sm:$0xff]
  %v25 = vld [vmem:[%s0 + $0x28] sm:$0xff]
  %v26 = vld [vmem:[%s0 + $0x30] sm:$0xff]
  %v27 = vld [vmem:[%s0 + $0x38] sm:$0xff]
  %v28 = vld [vmem:[%s0 + $0x40] sm:$0xff]
  %v29 = vld [vmem:[%s0 + $0x48] sm:$0xff]
  %v30 = vld [vmem:[%s0 + $0x50] sm:$0xff]
  %v31 = vld [vmem:[%s0 + $0x58] sm:$0xff]
  %v32 = vld [vmem:[%s0 + $0x60] sm:$0xff]
  %v33 = vld [vmem:[%s0 + $0x68] sm:$0xff]
  %v34 = vld [vmem:[%s0 + $0x70] sm:$0xff]
  %v35 = vld [vmem:[%s0 + $0x78] sm:$0xff]
  %v36 = vld [vmem:[%s0 + $0x80] sm:$0xff]
  %v37 = vld [vmem:[%s0 + $0x88] sm:$0xff]
  %v38 = vld [vmem:[%s0 + $0x90] sm:$0xff]
  %v39 = vld [vmem:[%s0 + $0x98] sm:$0xff]
  %v40 = vld [vmem:[%s0 + $0xa0] sm:$0xff]
  %v41 = vld [vmem:[%s0 + $0xa8] sm:$0xff]
  %v42 = vld [vmem:[%s0 + $0xb0] sm:$0xff]
  %v43 = vld [vmem:[%s0 + $0xb8] sm:$0xff]
  %v44 = vld [vmem:[%s0 + $0xc0] sm:$0xff]
  %v45 = vld [vmem:[%s0 + $0xc8] sm:$0xff]
  %v46 = vld [vmem:[%s0 + $0xd0] sm:$0xff]
  %v47 = vld [vmem:[%s0 + $0xd8] sm:$0xff]
  %v48 = vld [vmem:[%s0 + $0xe0] sm:$0xff]
  %v49 = vld [vmem:[%s0 + $0xe8] sm:$0xff]
  %v50 = vld [vmem:[%s0 + $0xf0] sm:$0xff]
  %v51 = vld [vmem:[%s0 + $0xf8] sm:$0xff]
  %v52 = vld [vmem:[%s0 + $0x100] sm:$0xff]
  %v53 = vld [vmem:[%s0 + $0x108] sm:$0xff]
  %v54 = vld [vmem:[%s0 + $0x110] sm:$0xff]
  %v55 = vld [vmem:[%s0 + $0x118] sm:$0xff]
  %v56 = vld [vmem:[%s1] sm:$0xff]
  %v57 = vld [vmem:[%s1 + $0x8] sm:$0xff]
  %v58 = vld [vmem:[%s1 + $0x10] sm:$0xff]
  %v59 = vld [vmem:[%s1 + $0x18] sm:$0xff]
  %v60 = vld [vmem:[%s1 + $0x20] sm:$0xff]
  %v61 = vld [vmem:[%s1 + $0x28] sm:$0xff]
  %v62 = vld [vmem:[%s1 + $0x30] sm:$0xff]
  %v63 = vld [vmem:[%s1 + $0x38] sm:$0xff]
  %v64 = vld [vmem:[%s1 + $0x40] sm:$0xff]
  %v65 = vld [vmem:[%s1 + $0x48] sm:$0xff]
  %v66 = vld [vmem:[%s1 + $0x50] sm:$0xff]
  %v67 = vld [vmem:[%s1 + $0x58] sm:$0xff]
  %v68 = vld [vmem:[%s1 + $0x60] sm:$0xff]
  %v69 = vld [vmem:[%s1 + $0x68] sm:$0xff]
  %v70 = vld [vmem:[%s1 + $0x70] sm:$0xff]
  %v71 = vld [vmem:[%s1 + $0x78] sm:$0xff]
  %v72 = vld [vmem:[%s1 + $0x80] sm:$0xff]
  %v73 = vld [vmem:[%s1 + $0x88] sm:$0xff]
  %v74 = vld [vmem:[%s1 + $0x90] sm:$0xff]
  %v75 = vld [vmem:[%s1 + $0x98] sm:$0xff]
  %v76 = vld [vmem:[%s1 + $0xa0] sm:$0xff]
  %v77 = vld [vmem:[%s1 + $0xa8] sm:$0xff]
  %v78 = vld [vmem:[%s1 + $0xb0] sm:$0xff]
  %v79 = vld [vmem:[%s1 + $0xb8] sm:$0xff]
  %v80 = vld [vmem:[%s1 + $0xc0] sm:$0xff]
  %v81 = vld [vmem:[%s1 + $0xc8] sm:$0xff]
  %v82 = vld [vmem:[%s1 + $0xd0] sm:$0xff]
  %v83 = vld [vmem:[%s1 + $0xd8] sm:$0xff]
  %v84 = vld [vmem:[%s1 + $0xe0] sm:$0xff]
  %v85 = vld [vmem:[%s1 + $0xe8] sm:$0xff]
  %v86 = vld [vmem:[%s1 + $0xf0] sm:$0xff]
  %v87 = vld [vmem:[%s1 + $0xf8] sm:$0xff]
  %v88 = vld [vmem:[%s1 + $0x100] sm:$0xff]
  %v89 = vld [vmem:[%s1 + $0x108] sm:$0xff]
  %v90 = vld [vmem:[%s1 + $0x110] sm:$0xff]
  %v91 = vld [vmem:[%s1 + $0x118] sm:$0xff]
  %v92 = vld [vmem:[%s1 + $0x120] sm:$0xff]
  %v93 = vld [vmem:[%s1 + $0x128] sm:$0xff]
  %v94 = vld [vmem:[%s1 + $0x130] sm:$0xff]
  %v95 = vld [vmem:[%s1 + $0x138] sm:$0xff]
  %v96 = vld [vmem:[%s1 + $0x140] sm:$0xff]
  %v97 = vld [vmem:[%s1 + $0x148] sm:$0xff]
  %v98 = vld [vmem:[%s1 + $0x150] sm:$0xff]
  %v99 = vld [vmem:[%s1 + $0x158] sm:$0xff]
  %v100 = vld [vmem:[%s1 + $0x160] sm:$0xff]
  %v101 = vld [vmem:[%s1 + $0x168] sm:$0xff]
  %v102 = vld [vmem:[%s1 + $0x170] sm:$0xff]
  %v103 = vld [vmem:[%s1 + $0x178] sm:$0xff]
  %v104 = vld [vmem:[%s1 + $0x180] sm:$0xff]
  %v105 = vld [vmem:[%s1 + $0x188] sm:$0xff]
  %v106 = vld [vmem:[%s1 + $0x190] sm:$0xff]
  %v107 = vld [vmem:[%s1 + $0x198] sm:$0xff]
  %v108 = vld [vmem:[%s1 + $0x1a0] sm:$0xff]
  %v109 = vld [vmem:[%s1 + $0x1a8] sm:$0xff]
  %v110 = vld [vmem:[%s1 + $0x1b0] sm:$0xff]
  %v111 = vld [vmem:[%s1 + $0x1b8] sm:$0xff]
  %v112 = vld [vmem:[%s1 + $0x1c0] sm:$0xff]
  %v113 = vld [vmem:[%s1 + $0x1c8] sm:$0xff]
  %v114 = vld [vmem:[%s1 + $0x1d0] sm:$0xff]
  %v115 = vld [vmem:[%s1 + $0x1d8] sm:$0xff]
  %v116 = vld [vmem:[%s1 + $0x1e0] sm:$0xff]
  %v117 = vld [vmem:[%s1 + $0x1e8] sm:$0xff]
  %v118 = vld [vmem:[%s1 + $0x1f0] sm:$0xff]
  %v119 = vld [vmem:[%s1 + $0x1f8] sm:$0xff]
  %v120 = vld [vmem:[%s1 + $0x200] sm:$0xff]
  %v121 = vld [vmem:[%s1 + $0x208] sm:$0xff]
  %v122 = vld [vmem:[%s1 + $0x210] sm:$0xff]
  %v123 = vld [vmem:[%s1 + $0x218] sm:$0xff]
  %v124 = vld [vmem:[%s1 + $0x220] sm:$0xff]
  %v125 = vld [vmem:[%s1 + $0x228] sm:$0xff]
  %v126 = vld [vmem:[%s1 + $0x230] sm:$0xff]
  %v127 = vld [vmem:[%s1 + $0x238] sm:$0xff]
  %v128 = vld [vmem:[%s1 + $0x240] sm:$0xff]
  %v129 = vld [vmem:[%s1 + $0x248] sm:$0xff]
  %v130 = vld [vmem:[%s1 + $0x250] sm:$0xff]
  %v131 = vld [vmem:[%s1 + $0x258] sm:$0xff]
  %v132 = vld [vmem:[%s1 + $0x260] sm:$0xff]
  %v133 = vld [vmem:[%s1 + $0x268] sm:$0xff]
  %v134 = vld [vmem:[%s1 + $0x270] sm:$0xff]
  %v135 = vld [vmem:[%s1 + $0x278] sm:$0xff]
  %v136 = vld [vmem:[%s1 + $0x280] sm:$0xff]
  %v137 = vld [vmem:[%s1 + $0x288] sm:$0xff]
  %v138 = vld [vmem:[%s1 + $0x290] sm:$0xff]
  %v139 = vld [vmem:[%s1 + $0x298] sm:$0xff]
  %v140 = vld [vmem:[%s1 + $0x2a0] sm:$0xff]
  %v141 = vld [vmem:[%s1 + $0x2a8] sm:$0xff]
  %v142 = vld [vmem:[%s1 + $0x2b0] sm:$0xff]
  %v143 = vld [vmem:[%s1 + $0x2b8] sm:$0xff]
  %v144 = vld [vmem:[%s1 + $0x2c0] sm:$0xff]
  %v145 = vld [vmem:[%s1 + $0x2c8] sm:$0xff]
  %v146 = vld [vmem:[%s1 + $0x2d0] sm:$0xff]
  %v147 = vld [vmem:[%s1 + $0x2d8] sm:$0xff]
  %v148 = vld [vmem:[%s1 + $0x2e0] sm:$0xff]
  %v149 = vld [vmem:[%s1 + $0x2e8] sm:$0xff]
  %v150 = vld [vmem:[%s1 + $0x2f0] sm:$0xff]
  %v151 = vld [vmem:[%s1 + $0x2f8] sm:$0xff]
  %v152 = vld [vmem:[%s1 + $0x300] sm:$0xff]
  %v153 = vld [vmem:[%s1 + $0x308] sm:$0xff]
  %v154 = vld [vmem:[%s1 + $0x310] sm:$0xff]
  %v155 = vld [vmem:[%s1 + $0x318] sm:$0xff]
  %v156 = vld [vmem:[%s1 + $0x320] sm:$0xff]
  %v157 = vld [vmem:[%s1 + $0x328] sm:$0xff]
  %v158 = vld [vmem:[%s1 + $0x330] sm:$0xff]
  %v159 = vld [vmem:[%s1 + $0x338] sm:$0xff]
  %v160 = vld [vmem:[%s1 + $0x340] sm:$0xff]
  %v161 = vld [vmem:[%s1 + $0x348] sm:$0xff]
  %v162 = vld [vmem:[%s1 + $0x350] sm:$0xff]
  %v163 = vld [vmem:[%s1 + $0x358] sm:$0xff]
  %v164 = vld [vmem:[%s1 + $0x360] sm:$0xff]
  %v165 = vld [vmem:[%s1 + $0x368] sm:$0xff]
  %v166 = vld [vmem:[%s1 + $0x370] sm:$0xff]
  %v167 = vld [vmem:[%s1 + $0x378] sm:$0xff]
  %v168 = vld [vmem:[%s1 + $0x380] sm:$0xff]
  %v169 = vld [vmem:[%s1 + $0x388] sm:$0xff]
  %v170 = vld [vmem:[%s1 + $0x390] sm:$0xff]
  %v171 = vld [vmem:[%s1 + $0x398] sm:$0xff]
  %v172 = vld [vmem:[%s1 + $0x3a0] sm:$0xff]
  %v173 = vld [vmem:[%s1 + $0x3a8] sm:$0xff]
  %v174 = vld [vmem:[%s1 + $0x3b0] sm:$0xff]
  %v175 = vld [vmem:[%s1 + $0x3b8] sm:$0xff]
  %v176 = vld [vmem:[%s1 + $0x3c0] sm:$0xff]
  %v177 = vld [vmem:[%s1 + $0x3c8] sm:$0xff]
  %v178 = vld [vmem:[%s1 + $0x3d0] sm:$0xff]
  %v179 = vld [vmem:[%s1 + $0x3d8] sm:$0xff]
  %v180 = vld [vmem:[%s1 + $0x3e0] sm:$0xff]
  %v181 = vld [vmem:[%s1 + $0x3e8] sm:$0xff]
  %v182 = vld [vmem:[%s1 + $0x3f0] sm:$0xff]
  %v183 = vld [vmem:[%s1 + $0x3f8] sm:$0xff]
  %v184 = vld [vmem:[%s1 + $0x400] sm:$0xff]
  %v185 = vld [vmem:[%s1 + $0x408] sm:$0xff]
  %v186 = vld [vmem:[%s1 + $0x410] sm:$0xff]
  %v187 = vld [vmem:[%s1 + $0x418] sm:$0xff]
  %v188 = vld [vmem:[%s1 + $0x420] sm:$0xff]
  %v189 = vld [vmem:[%s1 + $0x428] sm:$0xff]
  %v190 = vld [vmem:[%s1 + $0x430] sm:$0xff]
  %v191 = vld [vmem:[%s1 + $0x438] sm:$0xff]
  %v192 = vld [vmem:[%s1 + $0x440] sm:$0xff]
  %v193 = vld [vmem:[%s1 + $0x448] sm:$0xff]
  %v194 = vld [vmem:[%s1 + $0x450] sm:$0xff]
  %v195 = vld [vmem:[%s1 + $0x458] sm:$0xff]
  %v196 = vld [vmem:[%s1 + $0x460] sm:$0xff]
  %v197 = vld [vmem:[%s1 + $0x468] sm:$0xff]
  %v198 = vld [vmem:[%s1 + $0x470] sm:$0xff]
  %v199 = vld [vmem:[%s1 + $0x478] sm:$0xff]
  %v200 = vld [vmem:[%s2] sm:$0x1]
  %v202 = vlaneseq
  %v203 = vshrl.u32 %v202, 7
  %v204 = vsub.s32 0, %v203
  %v205 = vrot.slane %v200, %v204
  %207 = vmatprep.subr.mxu0 0.0
  %208 = vmatpush1.msra.mxu0 %v71
  %209 = vmatprep.subr.mxu0 0.0
  %210 = vmatpush1.msra.mxu0 %v70
  %211 = vmatprep.subr.mxu0 0.0
  %212 = vmatpush1.msra.mxu0 %v69
  %213 = vmatprep.subr.mxu0 0.0
  %214 = vmatpush1.msra.mxu0 %v68
  %215 = vmatprep.subr.mxu0 0.0
  %216 = vmatpush1.msra.mxu0 %v67
  %217 = vmatprep.subr.mxu0 0.0
  %218 = vmatpush1.msra.mxu0 %v66
  %219 = vmatprep.subr.mxu0 0.0
  %220 = vmatpush1.msra.mxu0 %v65
  %221 = vmatprep.subr.mxu0 0.0
  %222 = vmatpush1.msra.mxu0 %v64
  %223 = vmatprep.subr.mxu0 0.0
  %224 = vmatpush1.msra.mxu0 %v63
  %225 = vmatprep.subr.mxu0 0.0
  %226 = vmatpush1.msra.mxu0 %v62
  %227 = vmatprep.subr.mxu0 0.0
  %228 = vmatpush1.msra.mxu0 %v61
  %229 = vmatprep.subr.mxu0 0.0
  %230 = vmatpush1.msra.mxu0 %v60
  %231 = vmatprep.subr.mxu0 0.0
  %232 = vmatpush1.msra.mxu0 %v59
  %233 = vmatprep.subr.mxu0 0.0
  %234 = vmatpush1.msra.mxu0 %v58
  %235 = vmatprep.subr.mxu0 0.0
  %236 = vmatpush1.msra.mxu0 %v57
  %237 = vmatprep.subr.mxu0 0.0
  %238 = vmatpush1.msra.mxu0 %v56
  %239 = vmatprep.subr.mxu0 0.0
  %240 = vmatpush2.msra.mxu0 %v87
  %241 = vmatprep.subr.mxu0 0.0
  %242 = vmatpush2.msra.mxu0 %v86
  %243 = vmatprep.subr.mxu0 0.0
  %244 = vmatpush2.msra.mxu0 %v85
  %245 = vmatprep.subr.mxu0 0.0
  %246 = vmatpush2.msra.mxu0 %v84
  %247 = vmatprep.subr.mxu0 0.0
  %248 = vmatpush2.msra.mxu0 %v83
  %249 = vmatprep.subr.mxu0 0.0
  %250 = vmatpush2.msra.mxu0 %v82
  %251 = vmatprep.subr.mxu0 0.0
  %252 = vmatpush2.msra.mxu0 %v81
  %253 = vmatprep.subr.mxu0 0.0
  %254 = vmatpush2.msra.mxu0 %v80
  %255 = vmatprep.subr.mxu0 0.0
  %256 = vmatpush2.msra.mxu0 %v79
  %257 = vmatprep.subr.mxu0 0.0
  %258 = vmatpush2.msra.mxu0 %v78
  %259 = vmatprep.subr.mxu0 0.0
  %260 = vmatpush2.msra.mxu0 %v77
  %261 = vmatprep.subr.mxu0 0.0
  %262 = vmatpush2.msra.mxu0 %v76
  %263 = vmatprep.subr.mxu0 0.0
  %264 = vmatpush2.msra.mxu0 %v75
  %265 = vmatprep.subr.mxu0 0.0
  %266 = vmatpush2.msra.mxu0 %v74
  %267 = vmatprep.subr.mxu0 0.0
  %268 = vmatpush2.msra.mxu0 %v73
  %269 = vmatprep.subr.mxu0 0.0
  %270 = vmatpush2.msra.mxu0 %v72
  %271 = vmatprep.mubr.f32.mxu0 %v21
  %272 = vmatmul.mubr.f32.gmra.mxu0 %v20
  %v273 = vpop.f32.mrf.mxu0
  %v274 = vadd.f32 %v205, %v273
  %v275 = vpop.f32.mrf.mxu0
  %276 = vmatprep.mubr.f32.mxu0 %v30
  %277 = vmatmul.mubr.f32.gmra.mxu0 %v29
  %v278 = vpop.f32.mrf.mxu0
  %v279 = vadd.f32 %v205, %v278
  %v280 = vpop.f32.mrf.mxu0
  %281 = vmatprep.mubr.f32.mxu0 %v39
  %282 = vmatmul.mubr.f32.gmra.mxu0 %v38
  %v283 = vpop.f32.mrf.mxu0
  %v284 = vadd.f32 %v205, %v283
  %v285 = vpop.f32.mrf.mxu0
  %286 = vmatprep.mubr.f32.mxu0 %v48
  %287 = vmatmul.mubr.f32.gmra.mxu0 %v47
  %v288 = vpop.f32.mrf.mxu0
  %v289 = vadd.f32 %v205, %v288
  %v290 = vpop.f32.mrf.mxu0
  %291 = vdwg.mxu0
  %292 = vmatprep.subr.mxu0 0.0
  %293 = vmatpush1.msra.mxu0 %v103
  %294 = vmatprep.subr.mxu0 0.0
  %295 = vmatpush1.msra.mxu0 %v102
  %296 = vmatprep.subr.mxu0 0.0
  %297 = vmatpush1.msra.mxu0 %v101
  %298 = vmatprep.subr.mxu0 0.0
  %299 = vmatpush1.msra.mxu0 %v100
  %300 = vmatprep.subr.mxu0 0.0
  %301 = vmatpush1.msra.mxu0 %v99
  %302 = vmatprep.subr.mxu0 0.0
  %303 = vmatpush1.msra.mxu0 %v98
  %304 = vmatprep.subr.mxu0 0.0
  %305 = vmatpush1.msra.mxu0 %v97
  %306 = vmatprep.subr.mxu0 0.0
  %307 = vmatpush1.msra.mxu0 %v96
  %308 = vmatprep.subr.mxu0 0.0
  %309 = vmatpush1.msra.mxu0 %v95
  %310 = vmatprep.subr.mxu0 0.0
  %311 = vmatpush1.msra.mxu0 %v94
  %312 = vmatprep.subr.mxu0 0.0
  %313 = vmatpush1.msra.mxu0 %v93
  %314 = vmatprep.subr.mxu0 0.0
  %315 = vmatpush1.msra.mxu0 %v92
  %316 = vmatprep.subr.mxu0 0.0
  %317 = vmatpush1.msra.mxu0 %v91
  %318 = vmatprep.subr.mxu0 0.0
  %319 = vmatpush1.msra.mxu0 %v90
  %320 = vmatprep.subr.mxu0 0.0
  %321 = vmatpush1.msra.mxu0 %v89
  %322 = vmatprep.subr.mxu0 0.0
  %323 = vmatpush1.msra.mxu0 %v88
  %324 = vmatprep.subr.mxu0 0.0
  %325 = vmatpush2.msra.mxu0 %v119
  %326 = vmatprep.subr.mxu0 0.0
  %327 = vmatpush2.msra.mxu0 %v118
  %328 = vmatprep.subr.mxu0 0.0
  %329 = vmatpush2.msra.mxu0 %v117
  %330 = vmatprep.subr.mxu0 0.0
  %331 = vmatpush2.msra.mxu0 %v116
  %332 = vmatprep.subr.mxu0 0.0
  %333 = vmatpush2.msra.mxu0 %v115
  %334 = vmatprep.subr.mxu0 0.0
  %335 = vmatpush2.msra.mxu0 %v114
  %336 = vmatprep.subr.mxu0 0.0
  %337 = vmatpush2.msra.mxu0 %v113
  %338 = vmatprep.subr.mxu0 0.0
  %339 = vmatpush2.msra.mxu0 %v112
  %340 = vmatprep.subr.mxu0 0.0
  %341 = vmatpush2.msra.mxu0 %v111
  %342 = vmatprep.subr.mxu0 0.0
  %343 = vmatpush2.msra.mxu0 %v110
  %344 = vmatprep.subr.mxu0 0.0
  %345 = vmatpush2.msra.mxu0 %v109
  %346 = vmatprep.subr.mxu0 0.0
  %347 = vmatpush2.msra.mxu0 %v108
  %348 = vmatprep.subr.mxu0 0.0
  %349 = vmatpush2.msra.mxu0 %v107
  %350 = vmatprep.subr.mxu0 0.0
  %351 = vmatpush2.msra.mxu0 %v106
  %352 = vmatprep.subr.mxu0 0.0
  %353 = vmatpush2.msra.mxu0 %v105
  %354 = vmatprep.subr.mxu0 0.0
  %355 = vmatpush2.msra.mxu0 %v104
  %356 = vmatprep.mubr.f32.mxu0 %v23
  %357 = vmatmul.mubr.f32.gmra.mxu0 %v22
  %v358 = vpop.f32.mrf.mxu0
  %v359 = vadd.f32 %v274, %v358
  %v360 = vpop.f32.mrf.mxu0
  %361 = vmatprep.mubr.f32.mxu0 %v32
  %362 = vmatmul.mubr.f32.gmra.mxu0 %v31
  %v363 = vpop.f32.mrf.mxu0
  %v364 = vadd.f32 %v279, %v363
  %v365 = vpop.f32.mrf.mxu0
  %366 = vmatprep.mubr.f32.mxu0 %v41
  %367 = vmatmul.mubr.f32.gmra.mxu0 %v40
  %v368 = vpop.f32.mrf.mxu0
  %v369 = vadd.f32 %v284, %v368
  %v370 = vpop.f32.mrf.mxu0
  %371 = vmatprep.mubr.f32.mxu0 %v50
  %372 = vmatmul.mubr.f32.gmra.mxu0 %v49
  %v373 = vpop.f32.mrf.mxu0
  %v374 = vadd.f32 %v289, %v373
  %v375 = vpop.f32.mrf.mxu0
  %376 = vdwg.mxu0
  %377 = vmatprep.subr.mxu0 0.0
  %378 = vmatpush1.msra.mxu0 %v135
  %379 = vmatprep.subr.mxu0 0.0
  %380 = vmatpush1.msra.mxu0 %v134
  %381 = vmatprep.subr.mxu0 0.0
  %382 = vmatpush1.msra.mxu0 %v133
  %383 = vmatprep.subr.mxu0 0.0
  %384 = vmatpush1.msra.mxu0 %v132
  %385 = vmatprep.subr.mxu0 0.0
  %386 = vmatpush1.msra.mxu0 %v131
  %387 = vmatprep.subr.mxu0 0.0
  %388 = vmatpush1.msra.mxu0 %v130
  %389 = vmatprep.subr.mxu0 0.0
  %390 = vmatpush1.msra.mxu0 %v129
  %391 = vmatprep.subr.mxu0 0.0
  %392 = vmatpush1.msra.mxu0 %v128
  %393 = vmatprep.subr.mxu0 0.0
  %394 = vmatpush1.msra.mxu0 %v127
  %395 = vmatprep.subr.mxu0 0.0
  %396 = vmatpush1.msra.mxu0 %v126
  %397 = vmatprep.subr.mxu0 0.0
  %398 = vmatpush1.msra.mxu0 %v125
  %399 = vmatprep.subr.mxu0 0.0
  %400 = vmatpush1.msra.mxu0 %v124
  %401 = vmatprep.subr.mxu0 0.0
  %402 = vmatpush1.msra.mxu0 %v123
  %403 = vmatprep.subr.mxu0 0.0
  %404 = vmatpush1.msra.mxu0 %v122
  %405 = vmatprep.subr.mxu0 0.0
  %406 = vmatpush1.msra.mxu0 %v121
  %407 = vmatprep.subr.mxu0 0.0
  %408 = vmatpush1.msra.mxu0 %v120
  %409 = vmatprep.subr.mxu0 0.0
  %410 = vmatpush2.msra.mxu0 %v151
  %411 = vmatprep.subr.mxu0 0.0
  %412 = vmatpush2.msra.mxu0 %v150
  %413 = vmatprep.subr.mxu0 0.0
  %414 = vmatpush2.msra.mxu0 %v149
  %415 = vmatprep.subr.mxu0 0.0
  %416 = vmatpush2.msra.mxu0 %v148
  %417 = vmatprep.subr.mxu0 0.0
  %418 = vmatpush2.msra.mxu0 %v147
  %419 = vmatprep.subr.mxu0 0.0
  %420 = vmatpush2.msra.mxu0 %v146
  %421 = vmatprep.subr.mxu0 0.0
  %422 = vmatpush2.msra.mxu0 %v145
  %423 = vmatprep.subr.mxu0 0.0
  %424 = vmatpush2.msra.mxu0 %v144
  %425 = vmatprep.subr.mxu0 0.0
  %426 = vmatpush2.msra.mxu0 %v143
  %427 = vmatprep.subr.mxu0 0.0
  %428 = vmatpush2.msra.mxu0 %v142
  %429 = vmatprep.subr.mxu0 0.0
  %430 = vmatpush2.msra.mxu0 %v141
  %431 = vmatprep.subr.mxu0 0.0
  %432 = vmatpush2.msra.mxu0 %v140
  %433 = vmatprep.subr.mxu0 0.0
  %434 = vmatpush2.msra.mxu0 %v139
  %435 = vmatprep.subr.mxu0 0.0
  %436 = vmatpush2.msra.mxu0 %v138
  %437 = vmatprep.subr.mxu0 0.0
  %438 = vmatpush2.msra.mxu0 %v137
  %439 = vmatprep.subr.mxu0 0.0
  %440 = vmatpush2.msra.mxu0 %v136
  %441 = vmatprep.mubr.f32.mxu0 %v25
  %442 = vmatmul.mubr.f32.gmra.mxu0 %v24
  %v443 = vpop.f32.mrf.mxu0
  %v444 = vadd.f32 %v359, %v443
  %v445 = vpop.f32.mrf.mxu0
  %446 = vmatprep.mubr.f32.mxu0 %v34
  %447 = vmatmul.mubr.f32.gmra.mxu0 %v33
  %v448 = vpop.f32.mrf.mxu0
  %v449 = vadd.f32 %v364, %v448
  %v450 = vpop.f32.mrf.mxu0
  %451 = vmatprep.mubr.f32.mxu0 %v43
  %452 = vmatmul.mubr.f32.gmra.mxu0 %v42
  %v453 = vpop.f32.mrf.mxu0
  %v454 = vadd.f32 %v369, %v453
  %v455 = vpop.f32.mrf.mxu0
  %456 = vmatprep.mubr.f32.mxu0 %v52
  %457 = vmatmul.mubr.f32.gmra.mxu0 %v51
  %v458 = vpop.f32.mrf.mxu0
  %v459 = vadd.f32 %v374, %v458
  %v460 = vpop.f32.mrf.mxu0
  %461 = vdwg.mxu0
  %462 = vmatprep.subr.mxu0 0.0
  %463 = vmatpush1.msra.mxu0 %v167
  %464 = vmatprep.subr.mxu0 0.0
  %465 = vmatpush1.msra.mxu0 %v166
  %466 = vmatprep.subr.mxu0 0.0
  %467 = vmatpush1.msra.mxu0 %v165
  %468 = vmatprep.subr.mxu0 0.0
  %469 = vmatpush1.msra.mxu0 %v164
  %470 = vmatprep.subr.mxu0 0.0
  %471 = vmatpush1.msra.mxu0 %v163
  %472 = vmatprep.subr.mxu0 0.0
  %473 = vmatpush1.msra.mxu0 %v162
  %474 = vmatprep.subr.mxu0 0.0
  %475 = vmatpush1.msra.mxu0 %v161
  %476 = vmatprep.subr.mxu0 0.0
  %477 = vmatpush1.msra.mxu0 %v160
  %478 = vmatprep.subr.mxu0 0.0
  %479 = vmatpush1.msra.mxu0 %v159
  %480 = vmatprep.subr.mxu0 0.0
  %481 = vmatpush1.msra.mxu0 %v158
  %482 = vmatprep.subr.mxu0 0.0
  %483 = vmatpush1.msra.mxu0 %v157
  %484 = vmatprep.subr.mxu0 0.0
  %485 = vmatpush1.msra.mxu0 %v156
  %486 = vmatprep.subr.mxu0 0.0
  %487 = vmatpush1.msra.mxu0 %v155
  %488 = vmatprep.subr.mxu0 0.0
  %489 = vmatpush1.msra.mxu0 %v154
  %490 = vmatprep.subr.mxu0 0.0
  %491 = vmatpush1.msra.mxu0 %v153
  %492 = vmatprep.subr.mxu0 0.0
  %493 = vmatpush1.msra.mxu0 %v152
  %494 = vmatprep.subr.mxu0 0.0
  %495 = vmatpush2.msra.mxu0 %v183
  %496 = vmatprep.subr.mxu0 0.0
  %497 = vmatpush2.msra.mxu0 %v182
  %498 = vmatprep.subr.mxu0 0.0
  %499 = vmatpush2.msra.mxu0 %v181
  %500 = vmatprep.subr.mxu0 0.0
  %501 = vmatpush2.msra.mxu0 %v180
  %502 = vmatprep.subr.mxu0 0.0
  %503 = vmatpush2.msra.mxu0 %v179
  %504 = vmatprep.subr.mxu0 0.0
  %505 = vmatpush2.msra.mxu0 %v178
  %506 = vmatprep.subr.mxu0 0.0
  %507 = vmatpush2.msra.mxu0 %v177
  %508 = vmatprep.subr.mxu0 0.0
  %509 = vmatpush2.msra.mxu0 %v176
  %510 = vmatprep.subr.mxu0 0.0
  %511 = vmatpush2.msra.mxu0 %v175
  %512 = vmatprep.subr.mxu0 0.0
  %513 = vmatpush2.msra.mxu0 %v174
  %514 = vmatprep.subr.mxu0 0.0
  %515 = vmatpush2.msra.mxu0 %v173
  %516 = vmatprep.subr.mxu0 0.0
  %517 = vmatpush2.msra.mxu0 %v172
  %518 = vmatprep.subr.mxu0 0.0
  %519 = vmatpush2.msra.mxu0 %v171
  %520 = vmatprep.subr.mxu0 0.0
  %521 = vmatpush2.msra.mxu0 %v170
  %522 = vmatprep.subr.mxu0 0.0
  %523 = vmatpush2.msra.mxu0 %v169
  %524 = vmatprep.subr.mxu0 0.0
  %525 = vmatpush2.msra.mxu0 %v168
  %526 = vmatprep.mubr.f32.mxu0 %v27
  %527 = vmatmul.mubr.f32.gmra.mxu0 %v26
  %v528 = vpop.f32.mrf.mxu0
  %v529 = vadd.f32 %v444, %v528
  %v530 = vpop.f32.mrf.mxu0
  %531 = vmatprep.mubr.f32.mxu0 %v36
  %532 = vmatmul.mubr.f32.gmra.mxu0 %v35
  %v533 = vpop.f32.mrf.mxu0
  %v534 = vadd.f32 %v449, %v533
  %v535 = vpop.f32.mrf.mxu0
  %536 = vmatprep.mubr.f32.mxu0 %v45
  %537 = vmatmul.mubr.f32.gmra.mxu0 %v44
  %v538 = vpop.f32.mrf.mxu0
  %v539 = vadd.f32 %v454, %v538
  %v540 = vpop.f32.mrf.mxu0
  %541 = vmatprep.mubr.f32.mxu0 %v54
  %542 = vmatmul.mubr.f32.gmra.mxu0 %v53
  %v543 = vpop.f32.mrf.mxu0
  %v544 = vadd.f32 %v459, %v543
  %v545 = vpop.f32.mrf.mxu0
  %546 = vdwg.mxu0
  %547 = vmatprep.subr.mxu0 0.0
  %548 = vmatpush1.msra.mxu0 %v199
  %549 = vmatprep.subr.mxu0 0.0
  %550 = vmatpush1.msra.mxu0 %v198
  %551 = vmatprep.subr.mxu0 0.0
  %552 = vmatpush1.msra.mxu0 %v197
  %553 = vmatprep.subr.mxu0 0.0
  %554 = vmatpush1.msra.mxu0 %v196
  %555 = vmatprep.subr.mxu0 0.0
  %556 = vmatpush1.msra.mxu0 %v195
  %557 = vmatprep.subr.mxu0 0.0
  %558 = vmatpush1.msra.mxu0 %v194
  %559 = vmatprep.subr.mxu0 0.0
  %560 = vmatpush1.msra.mxu0 %v193
  %561 = vmatprep.subr.mxu0 0.0
  %562 = vmatpush1.msra.mxu0 %v192
  %563 = vmatprep.subr.mxu0 0.0
  %564 = vmatpush1.msra.mxu0 %v191
  %565 = vmatprep.subr.mxu0 0.0
  %566 = vmatpush1.msra.mxu0 %v190
  %567 = vmatprep.subr.mxu0 0.0
  %568 = vmatpush1.msra.mxu0 %v189
  %569 = vmatprep.subr.mxu0 0.0
  %570 = vmatpush1.msra.mxu0 %v188
  %571 = vmatprep.subr.mxu0 0.0
  %572 = vmatpush1.msra.mxu0 %v187
  %573 = vmatprep.subr.mxu0 0.0
  %574 = vmatpush1.msra.mxu0 %v186
  %575 = vmatprep.subr.mxu0 0.0
  %576 = vmatpush1.msra.mxu0 %v185
  %577 = vmatprep.subr.mxu0 0.0
  %578 = vmatpush1.msra.mxu0 %v184
  %579 = vmatprep.subr.mxu0 0.0
  %580 = vmatpush2.msra.mxu0 0.0
  %581 = vmatprep.subr.mxu0 0.0
  %582 = vmatpush2.msra.mxu0 0.0
  %583 = vmatprep.subr.mxu0 0.0
  %584 = vmatpush2.msra.mxu0 0.0
  %585 = vmatprep.subr.mxu0 0.0
  %586 = vmatpush2.msra.mxu0 0.0
  %587 = vmatprep.subr.mxu0 0.0
  %588 = vmatpush2.msra.mxu0 0.0
  %589 = vmatprep.subr.mxu0 0.0
  %590 = vmatpush2.msra.mxu0 0.0
  %591 = vmatprep.subr.mxu0 0.0
  %592 = vmatpush2.msra.mxu0 0.0
  %593 = vmatprep.subr.mxu0 0.0
  %594 = vmatpush2.msra.mxu0 0.0
  %595 = vmatprep.subr.mxu0 0.0
  %596 = vmatpush2.msra.mxu0 0.0
  %597 = vmatprep.subr.mxu0 0.0
  %598 = vmatpush2.msra.mxu0 0.0
  %599 = vmatprep.subr.mxu0 0.0
  %600 = vmatpush2.msra.mxu0 0.0
  %601 = vmatprep.subr.mxu0 0.0
  %602 = vmatpush2.msra.mxu0 0.0
  %603 = vmatprep.subr.mxu0 0.0
  %604 = vmatpush2.msra.mxu0 0.0
  %605 = vmatprep.subr.mxu0 0.0
  %606 = vmatpush2.msra.mxu0 0.0
  %607 = vmatprep.subr.mxu0 0.0
  %608 = vmatpush2.msra.mxu0 0.0
  %609 = vmatprep.subr.mxu0 0.0
  %610 = vmatpush2.msra.mxu0 0.0
  %611 = vmatprep.mubr.f32.mxu0 0.0
  %612 = vmatmul.mubr.f32.gmra.mxu0 %v28
  %v613 = vpop.f32.mrf.mxu0
  %v614 = vadd.f32 %v529, %v613
  %v615 = vpop.f32.mrf.mxu0
  %616 = vmatprep.mubr.f32.mxu0 0.0
  %617 = vmatmul.mubr.f32.gmra.mxu0 %v37
  %v618 = vpop.f32.mrf.mxu0
  %v619 = vadd.f32 %v534, %v618
  %v620 = vpop.f32.mrf.mxu0
  %621 = vmatprep.mubr.f32.mxu0 0.0
  %622 = vmatmul.mubr.f32.gmra.mxu0 %v46
  %v623 = vpop.f32.mrf.mxu0
  %v624 = vadd.f32 %v539, %v623
  %v625 = vpop.f32.mrf.mxu0
  %626 = vmatprep.mubr.f32.mxu0 0.0
  %627 = vmatmul.mubr.f32.gmra.mxu0 %v55
  %v628 = vpop.f32.mrf.mxu0
  %v629 = vadd.f32 %v544, %v628
  %v630 = vpop.f32.mrf.mxu0
  %631 = vdwg.mxu0
  %v632 = vadd.f32 %v614, %v619
  %v633 = vadd.f32 %v632, %v624
  %v634 = vadd.f32 %v633, %v629
  %v635 = vrot.slane %v634, 4
  %v636 = vadd.f32 %v634, %v635
  %v637 = vrot.slane %v636, 2
  %v638 = vadd.f32 %v636, %v637
  %v639 = vrot.slane %v638, 1
  %v640 = vadd.f32 %v638, %v639
  %v641 = vrcp.pop 32.0
  %v642 = vmul.f32 %v640, %v641
  %v643 = vsub.f32 %v614, %v642
  %v644 = vsub.f32 %v619, %v642
  %v645 = vsub.f32 %v624, %v642
  %v646 = vsub.f32 %v629, %v642
  %v647 = vmul.f32 %v643, %v643
  %v648 = vmul.f32 %v644, %v644
  %v649 = vmul.f32 %v645, %v645
  %v650 = vmul.f32 %v646, %v646
  %v651 = vadd.f32 %v647, %v648
  %v652 = vadd.f32 %v651, %v649
  %v653 = vadd.f32 %v652, %v650
  %v654 = vrot.slane %v653, 4
  %v655 = vadd.f32 %v653, %v654
  %v656 = vrot.slane %v655, 2
  %v657 = vadd.f32 %v655, %v656
  %v658 = vrot.slane %v657, 1
  %v659 = vadd.f32 %v657, %v658
  %v660 = vmul.f32 %v659, %v641
  %v661 = vadd.f32 %v660, 1e-05
  %v662 = vrsqrt.pop %v661
  %v663 = vmul.f32 %v643, %v662
  %v664 = vmul.f32 %v644, %v662
  %v665 = vmul.f32 %v645, %v662
  %v666 = vmul.f32 %v646, %v662
  %v667 = vld [vmem:[%s3] sm:$0x1]
  %v669 = vlaneseq
  %v670 = vshrl.u32 %v669, 7
  %v671 = vsub.s32 0, %v670
  %v672 = vrot.slane %v667, %v671
  %v674 = vmul.f32 %v663, %v672
  %v675 = vmul.f32 %v664, %v672
  %v676 = vmul.f32 %v665, %v672
  %v677 = vmul.f32 %v666, %v672
  %v678 = vld [vmem:[%s4] sm:$0x1]
  %v680 = vlaneseq
  %v681 = vshrl.u32 %v680, 7
  %v682 = vsub.s32 0, %v681
  %v683 = vrot.slane %v678, %v682
  %v685 = vadd.f32 %v674, %v683
  %v686 = vadd.f32 %v675, %v683
  %v687 = vadd.f32 %v676, %v683
  %v688 = vadd.f32 %v677, %v683
  %v689 = vmax.f32 %v685, 0.0
  %v690 = vmax.f32 %v686, 0.0
  %v691 = vmax.f32 %v687, 0.0
  %v692 = vmax.f32 %v688, 0.0
  %693 = vst [vmem:[%s5] sm:$0xff] %v689
  %694 = vst [vmem:[%s5 + $0x8] sm:$0xff] %v690
  %695 = vst [vmem:[%s5 + $0x10] sm:$0xff] %v691
  %696 = vst [vmem:[%s5 + $0x18] sm:$0xff] %v692
  // Predicated region
  $region22: #{encoder_forward.7} parent=0 // pred_check
    _
  $region23: #{encoder_forward.7} parent=0 // pred_check_branch
    %698 = sbr.rel (0) target = $region25
  $region24: #{encoder_forward.7} parent=0 // pred_region
    _
  $region25: #{encoder_forward.7} parent=0 // pred_fallthru
    _
  // Predicated region
  $region26: #{encoder_forward.7} parent=0 // pred_check
    _
  $region27: #{encoder_forward.7} parent=0 // pred_check_branch
    %700 = sbr.rel (0) target = $region29
  $region28: #{encoder_forward.7} parent=0 // pred_region
    _
  $region29: #{encoder_forward.7} parent=0 // pred_fallthru
    _

// kernel: encoder_forward.8
$region0: #{encoder_forward.8}
  #allocation0 [shape = 'u32[]', space=smem, size = 0x4, offset = 0x4, fixed_abs, tag = 'smem constant byte address 0x4 - core index']
  #allocation1 [shape = 'u32[144,128]{1,0:T(1,128)}', space=vmem, size = 0x12000, scoped, tag = 'internal scratch']
  %s0 = inlined_call_operand.vmem [shape: f32[8,1152], index: 0, kind: input, shape index: {}]
  %s1 = inlined_call_operand.vmem [shape: f32[1152,128], index: 1, kind: input, shape index: {}]
  %s2 = inlined_call_operand.vmem [shape: f32[1,128], index: 2, kind: input, shape index: {}, may-alias: {2,4}]
  %s3 = inlined_call_operand.vmem [shape: f32[1,128], index: 3, kind: input, shape index: {}]
  %s4 = inlined_call_operand.vmem [shape: f32[1,128], index: 4, kind: input, shape index: {}, may-alias: {2,4}]
  %s5 = inlined_call_operand.vmem [shape: f32[8,128], index: 5, kind: output, shape index: {}]
  %s6 = sld [smem:[#allocation0]]
  $region30: #{encoder_forward.8} parent=0
    _
  %s8 = ssub.s32 1, %s6
  %s9 = scalar_select 0, %s8, %s6
  // Predicated region
  $region2: #{encoder_forward.8} parent=0 // pred_check
    _
  $region3: #{encoder_forward.8} parent=0 // pred_check_branch
    %11 = sbr.rel (0) target = $region5
  $region4: #{encoder_forward.8} parent=0 // pred_region
    _
  $region5: #{encoder_forward.8} parent=0 // pred_fallthru
    _
  // Predicated region
  $region6: #{encoder_forward.8} parent=0 // pred_check
    _
  $region7: #{encoder_forward.8} parent=0 // pred_check_branch
    %13 = sbr.rel (0) target = $region9
  $region8: #{encoder_forward.8} parent=0 // pred_region
    _
  $region9: #{encoder_forward.8} parent=0 // pred_fallthru
    _
  // Predicated region
  $region10: #{encoder_forward.8} parent=0 // pred_check
    _
  $region11: #{encoder_forward.8} parent=0 // pred_check_branch
    %15 = sbr.rel (0) target = $region13
  $region12: #{encoder_forward.8} parent=0 // pred_region
    _
  $region13: #{encoder_forward.8} parent=0 // pred_fallthru
    _
  // Predicated region
  $region14: #{encoder_forward.8} parent=0 // pred_check
    _
  $region15: #{encoder_forward.8} parent=0 // pred_check_branch
    %17 = sbr.rel (0) target = $region17
  $region16: #{encoder_forward.8} parent=0 // pred_region
    _
  $region17: #{encoder_forward.8} parent=0 // pred_fallthru
    _
  // Predicated region
  $region18: #{encoder_forward.8} parent=0 // pred_check
    _
  $region19: #{encoder_forward.8} parent=0 // pred_check_branch
    %19 = sbr.rel (0) target = $region21
  $region20: #{encoder_forward.8} parent=0 // pred_region
    _
  $region21: #{encoder_forward.8} parent=0 // pred_fallthru
    _
  %v20 = vld [vmem:[%s0] sm:$0xff]
  %v21 = vld [vmem:[%s0 + $0x8] sm:$0xff]
  %v22 = vld [vmem:[%s0 + $0x10] sm:$0xff]
  %v23 = vld [vmem:[%s0 + $0x18] sm:$0xff]
  %v24 = vld [vmem:[%s0 + $0x20] sm:$0xff]
  %v25 = vld [vmem:[%s0 + $0x28] sm:$0xff]
  %v26 = vld [vmem:[%s0 + $0x30] sm:$0xff]
  %v27 = vld [vmem:[%s0 + $0x38] sm:$0xff]
  %v28 = vld [vmem:[%s0 + $0x40] sm:$0xff]
  %v29 = vld [vmem:[%s1] sm:$0xff]
  %v30 = vld [vmem:[%s1 + $0x8] sm:$0xff]
  %v31 = vld [vmem:[%s1 + $0x10] sm:$0xff]
  %v32 = vld [vmem:[%s1 + $0x18] sm:$0xff]
  %v33 = vld [vmem:[%s1 + $0x20] sm:$0xff]
  %v34 = vld [vmem:[%s1 + $0x28] sm:$0xff]
  %v35 = vld [vmem:[%s1 + $0x30] sm:$0xff]
  %v36 = vld [vmem:[%s1 + $0x38] sm:$0xff]
  %v37 = vld [vmem:[%s1 + $0x40] sm:$0xff]
  %v38 = vld [vmem:[%s1 + $0x48] sm:$0xff]
  %v39 = vld [vmem:[%s1 + $0x50] sm:$0xff]
  %v40 = vld [vmem:[%s1 + $0x58] sm:$0xff]
  %v41 = vld [vmem:[%s1 + $0x60] sm:$0xff]
  %v42 = vld [vmem:[%s1 + $0x68] sm:$0xff]
  %v43 = vld [vmem:[%s1 + $0x70] sm:$0xff]
  %v44 = vld [vmem:[%s1 + $0x78] sm:$0xff]
  %v45 = vld [vmem:[%s1 + $0x80] sm:$0xff]
  %v46 = vld [vmem:[%s1 + $0x88] sm:$0xff]
  %v47 = vld [vmem:[%s1 + $0x90] sm:$0xff]
  %v48 = vld [vmem:[%s1 + $0x98] sm:$0xff]
  %v49 = vld [vmem:[%s1 + $0xa0] sm:$0xff]
  %v50 = vld [vmem:[%s1 + $0xa8] sm:$0xff]
  %v51 = vld [vmem:[%s1 + $0xb0] sm:$0xff]
  %v52 = vld [vmem:[%s1 + $0xb8] sm:$0xff]
  %v53 = vld [vmem:[%s1 + $0xc0] sm:$0xff]
  %v54 = vld [vmem:[%s1 + $0xc8] sm:$0xff]
  %v55 = vld [vmem:[%s1 + $0xd0] sm:$0xff]
  %v56 = vld [vmem:[%s1 + $0xd8] sm:$0xff]
  %v57 = vld [vmem:[%s1 + $0xe0] sm:$0xff]
  %v58 = vld [vmem:[%s1 + $0xe8] sm:$0xff]
  %v59 = vld [vmem:[%s1 + $0xf0] sm:$0xff]
  %v60 = vld [vmem:[%s1 + $0xf8] sm:$0xff]
  %v61 = vld [vmem:[%s1 + $0x100] sm:$0xff]
  %v62 = vld [vmem:[%s1 + $0x108] sm:$0xff]
  %v63 = vld [vmem:[%s1 + $0x110] sm:$0xff]
  %v64 = vld [vmem:[%s1 + $0x118] sm:$0xff]
  %v65 = vld [vmem:[%s1 + $0x120] sm:$0xff]
  %v66 = vld [vmem:[%s1 + $0x128] sm:$0xff]
  %v67 = vld [vmem:[%s1 + $0x130] sm:$0xff]
  %v68 = vld [vmem:[%s1 + $0x138] sm:$0xff]
  %v69 = vld [vmem:[%s1 + $0x140] sm:$0xff]
  %v70 = vld [vmem:[%s1 + $0x148] sm:$0xff]
  %v71 = vld [vmem:[%s1 + $0x150] sm:$0xff]
  %v72 = vld [vmem:[%s1 + $0x158] sm:$0xff]
  %v73 = vld [vmem:[%s1 + $0x160] sm:$0xff]
  %v74 = vld [vmem:[%s1 + $0x168] sm:$0xff]
  %v75 = vld [vmem:[%s1 + $0x170] sm:$0xff]
  %v76 = vld [vmem:[%s1 + $0x178] sm:$0xff]
  %v77 = vld [vmem:[%s1 + $0x180] sm:$0xff]
  %v78 = vld [vmem:[%s1 + $0x188] sm:$0xff]
  %v79 = vld [vmem:[%s1 + $0x190] sm:$0xff]
  %v80 = vld [vmem:[%s1 + $0x198] sm:$0xff]
  %v81 = vld [vmem:[%s1 + $0x1a0] sm:$0xff]
  %v82 = vld [vmem:[%s1 + $0x1a8] sm:$0xff]
  %v83 = vld [vmem:[%s1 + $0x1b0] sm:$0xff]
  %v84 = vld [vmem:[%s1 + $0x1b8] sm:$0xff]
  %v85 = vld [vmem:[%s1 + $0x1c0] sm:$0xff]
  %v86 = vld [vmem:[%s1 + $0x1c8] sm:$0xff]
  %v87 = vld [vmem:[%s1 + $0x1d0] sm:$0xff]
  %v88 = vld [vmem:[%s1 + $0x1d8] sm:$0xff]
  %v89 = vld [vmem:[%s1 + $0x1e0] sm:$0xff]
  %v90 = vld [vmem:[%s1 + $0x1e8] sm:$0xff]
  %v91 = vld [vmem:[%s1 + $0x1f0] sm:$0xff]
  %v92 = vld [vmem:[%s1 + $0x1f8] sm:$0xff]
  %v93 = vld [vmem:[%s1 + $0x200] sm:$0xff]
  %v94 = vld [vmem:[%s1 + $0x208] sm:$0xff]
  %v95 = vld [vmem:[%s1 + $0x210] sm:$0xff]
  %v96 = vld [vmem:[%s1 + $0x218] sm:$0xff]
  %v97 = vld [vmem:[%s1 + $0x220] sm:$0xff]
  %v98 = vld [vmem:[%s1 + $0x228] sm:$0xff]
  %v99 = vld [vmem:[%s1 + $0x230] sm:$0xff]
  %v100 = vld [vmem:[%s1 + $0x238] sm:$0xff]
  %v101 = vld [vmem:[%s1 + $0x240] sm:$0xff]
  %v102 = vld [vmem:[%s1 + $0x248] sm:$0xff]
  %v103 = vld [vmem:[%s1 + $0x250] sm:$0xff]
  %v104 = vld [vmem:[%s1 + $0x258] sm:$0xff]
  %v105 = vld [vmem:[%s1 + $0x260] sm:$0xff]
  %v106 = vld [vmem:[%s1 + $0x268] sm:$0xff]
  %v107 = vld [vmem:[%s1 + $0x270] sm:$0xff]
  %v108 = vld [vmem:[%s1 + $0x278] sm:$0xff]
  %v109 = vld [vmem:[%s1 + $0x280] sm:$0xff]
  %v110 = vld [vmem:[%s1 + $0x288] sm:$0xff]
  %v111 = vld [vmem:[%s1 + $0x290] sm:$0xff]
  %v112 = vld [vmem:[%s1 + $0x298] sm:$0xff]
  %v113 = vld [vmem:[%s1 + $0x2a0] sm:$0xff]
  %v114 = vld [vmem:[%s1 + $0x2a8] sm:$0xff]
  %v115 = vld [vmem:[%s1 + $0x2b0] sm:$0xff]
  %v116 = vld [vmem:[%s1 + $0x2b8] sm:$0xff]
  %v117 = vld [vmem:[%s1 + $0x2c0] sm:$0xff]
  %v118 = vld [vmem:[%s1 + $0x2c8] sm:$0xff]
  %v119 = vld [vmem:[%s1 + $0x2d0] sm:$0xff]
  %v120 = vld [vmem:[%s1 + $0x2d8] sm:$0xff]
  %v121 = vld [vmem:[%s1 + $0x2e0] sm:$0xff]
  %v122 = vld [vmem:[%s1 + $0x2e8] sm:$0xff]
  %v123 = vld [vmem:[%s1 + $0x2f0] sm:$0xff]
  %v124 = vld [vmem:[%s1 + $0x2f8] sm:$0xff]
  %v125 = vld [vmem:[%s1 + $0x300] sm:$0xff]
  %v126 = vld [vmem:[%s1 + $0x308] sm:$0xff]
  %v127 = vld [vmem:[%s1 + $0x310] sm:$0xff]
  %v128 = vld [vmem:[%s1 + $0x318] sm:$0xff]
  %v129 = vld [vmem:[%s1 + $0x320] sm:$0xff]
  %v130 = vld [vmem:[%s1 + $0x328] sm:$0xff]
  %v131 = vld [vmem:[%s1 + $0x330] sm:$0xff]
  %v132 = vld [vmem:[%s1 + $0x338] sm:$0xff]
  %v133 = vld [vmem:[%s1 + $0x340] sm:$0xff]
  %v134 = vld [vmem:[%s1 + $0x348] sm:$0xff]
  %v135 = vld [vmem:[%s1 + $0x350] sm:$0xff]
  %v136 = vld [vmem:[%s1 + $0x358] sm:$0xff]
  %v137 = vld [vmem:[%s1 + $0x360] sm:$0xff]
  %v138 = vld [vmem:[%s1 + $0x368] sm:$0xff]
  %v139 = vld [vmem:[%s1 + $0x370] sm:$0xff]
  %v140 = vld [vmem:[%s1 + $0x378] sm:$0xff]
  %v141 = vld [vmem:[%s1 + $0x380] sm:$0xff]
  %v142 = vld [vmem:[%s1 + $0x388] sm:$0xff]
  %v143 = vld [vmem:[%s1 + $0x390] sm:$0xff]
  %v144 = vld [vmem:[%s1 + $0x398] sm:$0xff]
  %v145 = vld [vmem:[%s1 + $0x3a0] sm:$0xff]
  %v146 = vld [vmem:[%s1 + $0x3a8] sm:$0xff]
  %v147 = vld [vmem:[%s1 + $0x3b0] sm:$0xff]
  %v148 = vld [vmem:[%s1 + $0x3b8] sm:$0xff]
  %v149 = vld [vmem:[%s1 + $0x3c0] sm:$0xff]
  %v150 = vld [vmem:[%s1 + $0x3c8] sm:$0xff]
  %v151 = vld [vmem:[%s1 + $0x3d0] sm:$0xff]
  %v152 = vld [vmem:[%s1 + $0x3d8] sm:$0xff]
  %v153 = vld [vmem:[%s1 + $0x3e0] sm:$0xff]
  %v154 = vld [vmem:[%s1 + $0x3e8] sm:$0xff]
  %v155 = vld [vmem:[%s1 + $0x3f0] sm:$0xff]
  %v156 = vld [vmem:[%s1 + $0x3f8] sm:$0xff]
  %v157 = vld [vmem:[%s1 + $0x400] sm:$0xff]
  %v158 = vld [vmem:[%s1 + $0x408] sm:$0xff]
  %v159 = vld [vmem:[%s1 + $0x410] sm:$0xff]
  %v160 = vld [vmem:[%s1 + $0x418] sm:$0xff]
  %v161 = vld [vmem:[%s1 + $0x420] sm:$0xff]
  %v162 = vld [vmem:[%s1 + $0x428] sm:$0xff]
  %v163 = vld [vmem:[%s1 + $0x430] sm:$0xff]
  %v164 = vld [vmem:[%s1 + $0x438] sm:$0xff]
  %v165 = vld [vmem:[%s1 + $0x440] sm:$0xff]
  %v166 = vld [vmem:[%s1 + $0x448] sm:$0xff]
  %v167 = vld [vmem:[%s1 + $0x450] sm:$0xff]
  %v168 = vld [vmem:[%s1 + $0x458] sm:$0xff]
  %v169 = vld [vmem:[%s1 + $0x460] sm:$0xff]
  %v170 = vld [vmem:[%s1 + $0x468] sm:$0xff]
  %v171 = vld [vmem:[%s1 + $0x470] sm:$0xff]
  %v172 = vld [vmem:[%s1 + $0x478] sm:$0xff]
  %v173 = vld [vmem:[%s2] sm:$0x1]
  %v175 = vlaneseq
  %v176 = vshrl.u32 %v175, 7
  %v177 = vsub.s32 0, %v176
  %v178 = vrot.slane %v173, %v177
  %180 = vmatprep.subr.mxu0 0.0
  %181 = vmatpush1.msra.mxu0 %v44
  %182 = vmatprep.subr.mxu0 0.0
  %183 = vmatpush1.msra.mxu0 %v43
  %184 = vmatprep.subr.mxu0 0.0
  %185 = vmatpush1.msra.mxu0 %v42
  %186 = vmatprep.subr.mxu0 0.0
  %187 = vmatpush1.msra.mxu0 %v41
  %188 = vmatprep.subr.mxu0 0.0
  %189 = vmatpush1.msra.mxu0 %v40
  %190 = vmatprep.subr.mxu0 0.0
  %191 = vmatpush1.msra.mxu0 %v39
  %192 = vmatprep.subr.mxu0 0.0
  %193 = vmatpush1.msra.mxu0 %v38
  %194 = vmatprep.subr.mxu0 0.0
  %195 = vmatpush1.msra.mxu0 %v37
  %196 = vmatprep.subr.mxu0 0.0
  %197 = vmatpush1.msra.mxu0 %v36
  %198 = vmatprep.subr.mxu0 0.0
  %199 = vmatpush1.msra.mxu0 %v35
  %200 = vmatprep.subr.mxu0 0.0
  %201 = vmatpush1.msra.mxu0 %v34
  %202 = vmatprep.subr.mxu0 0.0
  %203 = vmatpush1.msra.mxu0 %v33
  %204 = vmatprep.subr.mxu0 0.0
  %205 = vmatpush1.msra.mxu0 %v32
  %206 = vmatprep.subr.mxu0 0.0
  %207 = vmatpush1.msra.mxu0 %v31
  %208 = vmatprep.subr.mxu0 0.0
  %209 = vmatpush1.msra.mxu0 %v30
  %210 = vmatprep.subr.mxu0 0.0
  %211 = vmatpush1.msra.mxu0 %v29
  %212 = vmatprep.subr.mxu0 0.0
  %213 = vmatpush2.msra.mxu0 %v60
  %214 = vmatprep.subr.mxu0 0.0
  %215 = vmatpush2.msra.mxu0 %v59
  %216 = vmatprep.subr.mxu0 0.0
  %217 = vmatpush2.msra.mxu0 %v58
  %218 = vmatprep.subr.mxu0 0.0
  %219 = vmatpush2.msra.mxu0 %v57
  %220 = vmatprep.subr.mxu0 0.0
  %221 = vmatpush2.msra.mxu0 %v56
  %222 = vmatprep.subr.mxu0 0.0
  %223 = vmatpush2.msra.mxu0 %v55
  %224 = vmatprep.subr.mxu0 0.0
  %225 = vmatpush2.msra.mxu0 %v54
  %226 = vmatprep.subr.mxu0 0.0
  %227 = vmatpush2.msra.mxu0 %v53
  %228 = vmatprep.subr.mxu0 0.0
  %229 = vmatpush2.msra.mxu0 %v52
  %230 = vmatprep.subr.mxu0 0.0
  %231 = vmatpush2.msra.mxu0 %v51
  %232 = vmatprep.subr.mxu0 0.0
  %233 = vmatpush2.msra.mxu0 %v50
  %234 = vmatprep.subr.mxu0 0.0
  %235 = vmatpush2.msra.mxu0 %v49
  %236 = vmatprep.subr.mxu0 0.0
  %237 = vmatpush2.msra.mxu0 %v48
  %238 = vmatprep.subr.mxu0 0.0
  %239 = vmatpush2.msra.mxu0 %v47
  %240 = vmatprep.subr.mxu0 0.0
  %241 = vmatpush2.msra.mxu0 %v46
  %242 = vmatprep.subr.mxu0 0.0
  %243 = vmatpush2.msra.mxu0 %v45
  %244 = vmatprep.mubr.f32.mxu0 %v21
  %245 = vmatmul.mubr.f32.gmra.mxu0 %v20
  %v246 = vpop.f32.mrf.mxu0
  %v247 = vadd.f32 %v178, %v246
  %v248 = vpop.f32.mrf.mxu0
  %249 = vdwg.mxu0
  %250 = vmatprep.subr.mxu0 0.0
  %251 = vmatpush1.msra.mxu0 %v76
  %252 = vmatprep.subr.mxu0 0.0
  %253 = vmatpush1.msra.mxu0 %v75
  %254 = vmatprep.subr.mxu0 0.0
  %255 = vmatpush1.msra.mxu0 %v74
  %256 = vmatprep.subr.mxu0 0.0
  %257 = vmatpush1.msra.mxu0 %v73
  %258 = vmatprep.subr.mxu0 0.0
  %259 = vmatpush1.msra.mxu0 %v72
  %260 = vmatprep.subr.mxu0 0.0
  %261 = vmatpush1.msra.mxu0 %v71
  %262 = vmatprep.subr.mxu0 0.0
  %263 = vmatpush1.msra.mxu0 %v70
  %264 = vmatprep.subr.mxu0 0.0
  %265 = vmatpush1.msra.mxu0 %v69
  %266 = vmatprep.subr.mxu0 0.0
  %267 = vmatpush1.msra.mxu0 %v68
  %268 = vmatprep.subr.mxu0 0.0
  %269 = vmatpush1.msra.mxu0 %v67
  %270 = vmatprep.subr.mxu0 0.0
  %271 = vmatpush1.msra.mxu0 %v66
  %272 = vmatprep.subr.mxu0 0.0
  %273 = vmatpush1.msra.mxu0 %v65
  %274 = vmatprep.subr.mxu0 0.0
  %275 = vmatpush1.msra.mxu0 %v64
  %276 = vmatprep.subr.mxu0 0.0
  %277 = vmatpush1.msra.mxu0 %v63
  %278 = vmatprep.subr.mxu0 0.0
  %279 = vmatpush1.msra.mxu0 %v62
  %280 = vmatprep.subr.mxu0 0.0
  %281 = vmatpush1.msra.mxu0 %v61
  %282 = vmatprep.subr.mxu0 0.0
  %283 = vmatpush2.msra.mxu0 %v92
  %284 = vmatprep.subr.mxu0 0.0
  %285 = vmatpush2.msra.mxu0 %v91
  %286 = vmatprep.subr.mxu0 0.0
  %287 = vmatpush2.msra.mxu0 %v90
  %288 = vmatprep.subr.mxu0 0.0
  %289 = vmatpush2.msra.mxu0 %v89
  %290 = vmatprep.subr.mxu0 0.0
  %291 = vmatpush2.msra.mxu0 %v88
  %292 = vmatprep.subr.mxu0 0.0
  %293 = vmatpush2.msra.mxu0 %v87
  %294 = vmatprep.subr.mxu0 0.0
  %295 = vmatpush2.msra.mxu0 %v86
  %296 = vmatprep.subr.mxu0 0.0
  %297 = vmatpush2.msra.mxu0 %v85
  %298 = vmatprep.subr.mxu0 0.0
  %299 = vmatpush2.msra.mxu0 %v84
  %300 = vmatprep.subr.mxu0 0.0
  %301 = vmatpush2.msra.mxu0 %v83
  %302 = vmatprep.subr.mxu0 0.0
  %303 = vmatpush2.msra.mxu0 %v82
  %304 = vmatprep.subr.mxu0 0.0
  %305 = vmatpush2.msra.mxu0 %v81
  %306 = vmatprep.subr.mxu0 0.0
  %307 = vmatpush2.msra.mxu0 %v80
  %308 = vmatprep.subr.mxu0 0.0
  %309 = vmatpush2.msra.mxu0 %v79
  %310 = vmatprep.subr.mxu0 0.0
  %311 = vmatpush2.msra.mxu0 %v78
  %312 = vmatprep.subr.mxu0 0.0
  %313 = vmatpush2.msra.mxu0 %v77
  %314 = vmatprep.mubr.f32.mxu0 %v23
  %315 = vmatmul.mubr.f32.gmra.mxu0 %v22
  %v316 = vpop.f32.mrf.mxu0
  %v317 = vadd.f32 %v247, %v316
  %v318 = vpop.f32.mrf.mxu0
  %319 = vdwg.mxu0
  %320 = vmatprep.subr.mxu0 0.0
  %321 = vmatpush1.msra.mxu0 %v108
  %322 = vmatprep.subr.mxu0 0.0
  %323 = vmatpush1.msra.mxu0 %v107
  %324 = vmatprep.subr.mxu0 0.0
  %325 = vmatpush1.msra.mxu0 %v106
  %326 = vmatprep.subr.mxu0 0.0
  %327 = vmatpush1.msra.mxu0 %v105
  %328 = vmatprep.subr.mxu0 0.0
  %329 = vmatpush1.msra.mxu0 %v104
  %330 = vmatprep.subr.mxu0 0.0
  %331 = vmatpush1.msra.mxu0 %v103
  %332 = vmatprep.subr.mxu0 0.0
  %333 = vmatpush1.msra.mxu0 %v102
  %334 = vmatprep.subr.mxu0 0.0
  %335 = vmatpush1.msra.mxu0 %v101
  %336 = vmatprep.subr.mxu0 0.0
  %337 = vmatpush1.msra.mxu0 %v100
  %338 = vmatprep.subr.mxu0 0.0
  %339 = vmatpush1.msra.mxu0 %v99
  %340 = vmatprep.subr.mxu0 0.0
  %341 = vmatpush1.msra.mxu0 %v98
  %342 = vmatprep.subr.mxu0 0.0
  %343 = vmatpush1.msra.mxu0 %v97
  %344 = vmatprep.subr.mxu0 0.0
  %345 = vmatpush1.msra.mxu0 %v96
  %346 = vmatprep.subr.mxu0 0.0
  %347 = vmatpush1.msra.mxu0 %v95
  %348 = vmatprep.subr.mxu0 0.0
  %349 = vmatpush1.msra.mxu0 %v94
  %350 = vmatprep.subr.mxu0 0.0
  %351 = vmatpush1.msra.mxu0 %v93
  %352 = vmatprep.subr.mxu0 0.0
  %353 = vmatpush2.msra.mxu0 %v124
  %354 = vmatprep.subr.mxu0 0.0
  %355 = vmatpush2.msra.mxu0 %v123
  %356 = vmatprep.subr.mxu0 0.0
  %357 = vmatpush2.msra.mxu0 %v122
  %358 = vmatprep.subr.mxu0 0.0
  %359 = vmatpush2.msra.mxu0 %v121
  %360 = vmatprep.subr.mxu0 0.0
  %361 = vmatpush2.msra.mxu0 %v120
  %362 = vmatprep.subr.mxu0 0.0
  %363 = vmatpush2.msra.mxu0 %v119
  %364 = vmatprep.subr.mxu0 0.0
  %365 = vmatpush2.msra.mxu0 %v118
  %366 = vmatprep.subr.mxu0 0.0
  %367 = vmatpush2.msra.mxu0 %v117
  %368 = vmatprep.subr.mxu0 0.0
  %369 = vmatpush2.msra.mxu0 %v116
  %370 = vmatprep.subr.mxu0 0.0
  %371 = vmatpush2.msra.mxu0 %v115
  %372 = vmatprep.subr.mxu0 0.0
  %373 = vmatpush2.msra.mxu0 %v114
  %374 = vmatprep.subr.mxu0 0.0
  %375 = vmatpush2.msra.mxu0 %v113
  %376 = vmatprep.subr.mxu0 0.0
  %377 = vmatpush2.msra.mxu0 %v112
  %378 = vmatprep.subr.mxu0 0.0
  %379 = vmatpush2.msra.mxu0 %v111
  %380 = vmatprep.subr.mxu0 0.0
  %381 = vmatpush2.msra.mxu0 %v110
  %382 = vmatprep.subr.mxu0 0.0
  %383 = vmatpush2.msra.mxu0 %v109
  %384 = vmatprep.mubr.f32.mxu0 %v25
  %385 = vmatmul.mubr.f32.gmra.mxu0 %v24
  %v386 = vpop.f32.mrf.mxu0
  %v387 = vadd.f32 %v317, %v386
  %v388 = vpop.f32.mrf.mxu0
  %389 = vdwg.mxu0
  %390 = vmatprep.subr.mxu0 0.0
  %391 = vmatpush1.msra.mxu0 %v140
  %392 = vmatprep.subr.mxu0 0.0
  %393 = vmatpush1.msra.mxu0 %v139
  %394 = vmatprep.subr.mxu0 0.0
  %395 = vmatpush1.msra.mxu0 %v138
  %396 = vmatprep.subr.mxu0 0.0
  %397 = vmatpush1.msra.mxu0 %v137
  %398 = vmatprep.subr.mxu0 0.0
  %399 = vmatpush1.msra.mxu0 %v136
  %400 = vmatprep.subr.mxu0 0.0
  %401 = vmatpush1.msra.mxu0 %v135
  %402 = vmatprep.subr.mxu0 0.0
  %403 = vmatpush1.msra.mxu0 %v134
  %404 = vmatprep.subr.mxu0 0.0
  %405 = vmatpush1.msra.mxu0 %v133
  %406 = vmatprep.subr.mxu0 0.0
  %407 = vmatpush1.msra.mxu0 %v132
  %408 = vmatprep.subr.mxu0 0.0
  %409 = vmatpush1.msra.mxu0 %v131
  %410 = vmatprep.subr.mxu0 0.0
  %411 = vmatpush1.msra.mxu0 %v130
  %412 = vmatprep.subr.mxu0 0.0
  %413 = vmatpush1.msra.mxu0 %v129
  %414 = vmatprep.subr.mxu0 0.0
  %415 = vmatpush1.msra.mxu0 %v128
  %416 = vmatprep.subr.mxu0 0.0
  %417 = vmatpush1.msra.mxu0 %v127
  %418 = vmatprep.subr.mxu0 0.0
  %419 = vmatpush1.msra.mxu0 %v126
  %420 = vmatprep.subr.mxu0 0.0
  %421 = vmatpush1.msra.mxu0 %v125
  %422 = vmatprep.subr.mxu0 0.0
  %423 = vmatpush2.msra.mxu0 %v156
  %424 = vmatprep.subr.mxu0 0.0
  %425 = vmatpush2.msra.mxu0 %v155
  %426 = vmatprep.subr.mxu0 0.0
  %427 = vmatpush2.msra.mxu0 %v154
  %428 = vmatprep.subr.mxu0 0.0
  %429 = vmatpush2.msra.mxu0 %v153
  %430 = vmatprep.subr.mxu0 0.0
  %431 = vmatpush2.msra.mxu0 %v152
  %432 = vmatprep.subr.mxu0 0.0
  %433 = vmatpush2.msra.mxu0 %v151
  %434 = vmatprep.subr.mxu0 0.0
  %435 = vmatpush2.msra.mxu0 %v150
  %436 = vmatprep.subr.mxu0 0.0
  %437 = vmatpush2.msra.mxu0 %v149
  %438 = vmatprep.subr.mxu0 0.0
  %439 = vmatpush2.msra.mxu0 %v148
  %440 = vmatprep.subr.mxu0 0.0
  %441 = vmatpush2.msra.mxu0 %v147
  %442 = vmatprep.subr.mxu0 0.0
  %443 = vmatpush2.msra.mxu0 %v146
  %444 = vmatprep.subr.mxu0 0.0
  %445 = vmatpush2.msra.mxu0 %v145
  %446 = vmatprep.subr.mxu0 0.0
  %447 = vmatpush2.msra.mxu0 %v144
  %448 = vmatprep.subr.mxu0 0.0
  %449 = vmatpush2.msra.mxu0 %v143
  %450 = vmatprep.subr.mxu0 0.0
  %451 = vmatpush2.msra.mxu0 %v142
  %452 = vmatprep.subr.mxu0 0.0
  %453 = vmatpush2.msra.mxu0 %v141
  %454 = vmatprep.mubr.f32.mxu0 %v27
  %455 = vmatmul.mubr.f32.gmra.mxu0 %v26
  %v456 = vpop.f32.mrf.mxu0
  %v457 = vadd.f32 %v387, %v456
  %v458 = vpop.f32.mrf.mxu0
  %459 = vdwg.mxu0
  %460 = vmatprep.subr.mxu0 0.0
  %461 = vmatpush1.msra.mxu0 %v172
  %462 = vmatprep.subr.mxu0 0.0
  %463 = vmatpush1.msra.mxu0 %v171
  %464 = vmatprep.subr.mxu0 0.0
  %465 = vmatpush1.msra.mxu0 %v170
  %466 = vmatprep.subr.mxu0 0.0
  %467 = vmatpush1.msra.mxu0 %v169
  %468 = vmatprep.subr.mxu0 0.0
  %469 = vmatpush1.msra.mxu0 %v168
  %470 = vmatprep.subr.mxu0 0.0
  %471 = vmatpush1.msra.mxu0 %v167
  %472 = vmatprep.subr.mxu0 0.0
  %473 = vmatpush1.msra.mxu0 %v166
  %474 = vmatprep.subr.mxu0 0.0
  %475 = vmatpush1.msra.mxu0 %v165
  %476 = vmatprep.subr.mxu0 0.0
  %477 = vmatpush1.msra.mxu0 %v164
  %478 = vmatprep.subr.mxu0 0.0
  %479 = vmatpush1.msra.mxu0 %v163
  %480 = vmatprep.subr.mxu0 0.0
  %481 = vmatpush1.msra.mxu0 %v162
  %482 = vmatprep.subr.mxu0 0.0
  %483 = vmatpush1.msra.mxu0 %v161
  %484 = vmatprep.subr.mxu0 0.0
  %485 = vmatpush1.msra.mxu0 %v160
  %486 = vmatprep.subr.mxu0 0.0
  %487 = vmatpush1.msra.mxu0 %v159
  %488 = vmatprep.subr.mxu0 0.0
  %489 = vmatpush1.msra.mxu0 %v158
  %490 = vmatprep.subr.mxu0 0.0
  %491 = vmatpush1.msra.mxu0 %v157
  %492 = vmatprep.subr.mxu0 0.0
  %493 = vmatpush2.msra.mxu0 0.0
  %494 = vmatprep.subr.mxu0 0.0
  %495 = vmatpush2.msra.mxu0 0.0
  %496 = vmatprep.subr.mxu0 0.0
  %497 = vmatpush2.msra.mxu0 0.0
  %498 = vmatprep.subr.mxu0 0.0
  %499 = vmatpush2.msra.mxu0 0.0
  %500 = vmatprep.subr.mxu0 0.0
  %501 = vmatpush2.msra.mxu0 0.0
  %502 = vmatprep.subr.mxu0 0.0
  %503 = vmatpush2.msra.mxu0 0.0
  %504 = vmatprep.subr.mxu0 0.0
  %505 = vmatpush2.msra.mxu0 0.0
  %506 = vmatprep.subr.mxu0 0.0
  %507 = vmatpush2.msra.mxu0 0.0
  %508 = vmatprep.subr.mxu0 0.0
  %509 = vmatpush2.msra.mxu0 0.0
  %510 = vmatprep.subr.mxu0 0.0
  %511 = vmatpush2.msra.mxu0 0.0
  %512 = vmatprep.subr.mxu0 0.0
  %513 = vmatpush2.msra.mxu0 0.0
  %514 = vmatprep.subr.mxu0 0.0
  %515 = vmatpush2.msra.mxu0 0.0
  %516 = vmatprep.subr.mxu0 0.0
  %517 = vmatpush2.msra.mxu0 0.0
  %518 = vmatprep.subr.mxu0 0.0
  %519 = vmatpush2.msra.mxu0 0.0
  %520 = vmatprep.subr.mxu0 0.0
  %521 = vmatpush2.msra.mxu0 0.0
  %522 = vmatprep.subr.mxu0 0.0
  %523 = vmatpush2.msra.mxu0 0.0
  %524 = vmatprep.mubr.f32.mxu0 0.0
  %525 = vmatmul.mubr.f32.gmra.mxu0 %v28
  %v526 = vpop.f32.mrf.mxu0
  %v527 = vadd.f32 %v457, %v526
  %v528 = vpop.f32.mrf.mxu0
  %529 = vdwg.mxu0
  %v530 = vrot.slane %v527, 4
  %v531 = vadd.f32 %v527, %v530
  %v532 = vrot.slane %v531, 2
  %v533 = vadd.f32 %v531, %v532
  %v534 = vrot.slane %v533, 1
  %v535 = vadd.f32 %v533, %v534
  %v536 = vrcp.pop 8.0
  %v537 = vmul.f32 %v535, %v536
  %v538 = vsub.f32 %v527, %v537
  %v539 = vmul.f32 %v538, %v538
  %v540 = vrot.slane %v539, 4
  %v541 = vadd.f32 %v539, %v540
  %v542 = vrot.slane %v541, 2
  %v543 = vadd.f32 %v541, %v542
  %v544 = vrot.slane %v543, 1
  %v545 = vadd.f32 %v543, %v544
  %v546 = vmul.f32 %v545, %v536
  %v547 = vadd.f32 %v546, 1e-05
  %v548 = vrsqrt.pop %v547
  %v549 = vmul.f32 %v538, %v548
  %v550 = vld [vmem:[%s3] sm:$0x1]
  %v552 = vlaneseq
  %v553 = vshrl.u32 %v552, 7
  %v554 = vsub.s32 0, %v553
  %v555 = vrot.slane %v550, %v554
  %v557 = vmul.f32 %v549, %v555
  %v558 = vld [vmem:[%s4] sm:$0x1]
  %v560 = vlaneseq
  %v561 = vshrl.u32 %v560, 7
  %v562 = vsub.s32 0, %v561
  %v563 = vrot.slane %v558, %v562
  %v565 = vadd.f32 %v557, %v563
  %v566 = vmax.f32 %v565, 0.0
  %567 = vst [vmem:[%s5] sm:$0xff] %v566
  // Predicated region
  $region22: #{encoder_forward.8} parent=0 // pred_check
    _
  $region23: #{encoder_forward.8} parent=0 // pred_check_branch
    %569 = sbr.rel (0) target = $region25
  $region24: #{encoder_forward.8} parent=0 // pred_region
    _
  $region25: #{encoder_forward.8} parent=0 // pred_fallthru
    _
  // Predicated region
  $region26: #{encoder_forward.8} parent=0 // pred_check
    _
  $region27: #{encoder_forward.8} parent=0 // pred_check_branch
    %571 = sbr.rel (0) target = $region29
  $region28: #{encoder_forward.8} parent=0 // pred_region
    _
  $region29: #{encoder_forward.8} parent=0 // pred_fallthru
    _

// kernel: encoder_forward.9
$region0: #{encoder_forward.9}
  #allocation0 [shape = 'u32[]', space=smem, size = 0x4, offset = 0x4, fixed_abs, tag = 'smem constant byte address 0x4 - core index']
  #allocation1 [shape = 'u32[144,128]{1,0:T(1,128)}', space=vmem, size = 0x12000, scoped, tag = 'internal scratch']
  %s0 = inlined_call_operand.vmem [shape: f32[2,128], index: 0, kind: input, shape index: {}]
  %s1 = inlined_call_operand.vmem [shape: f32[128,256], index: 1, kind: input, shape index: {}]
  %s2 = inlined_call_operand.vmem [shape: f32[1,256], index: 2, kind: input, shape index: {}, may-alias: {2,4}]
  %s3 = inlined_call_operand.vmem [shape: f32[1,256], index: 3, kind: input, shape index: {}]
  %s4 = inlined_call_operand.vmem [shape: f32[1,256], index: 4, kind: input, shape index: {}, may-alias: {2,4}]
  %s5 = inlined_call_operand.vmem [shape: f32[256,128], index: 5, kind: input, shape index: {}]
  %s6 = inlined_call_operand.vmem [shape: f32[1,128], index: 6, kind: input, shape index: {}, may-alias: {6,8,10,12}]
  %s7 = inlined_call_operand.vmem [shape: f32[1,128], index: 7, kind: input, shape index: {}, may-alias: {7,11}]
  %s8 = inlined_call_operand.vmem [shape: f32[1,128], index: 8, kind: input, shape index: {}, may-alias: {6,8,10,12}]
  %s9 = inlined_call_operand.vmem [shape: f32[128,128], index: 9, kind: input, shape index: {}]
  %s10 = inlined_call_operand.vmem [shape: f32[1,128], index: 10, kind: input, shape index: {}, may-alias: {6,8,10,12}]
  %s11 = inlined_call_operand.vmem [shape: f32[1,128], index: 11, kind: input, shape index: {}, may-alias: {7,11}]
  %s12 = inlined_call_operand.vmem [shape: f32[1,128], index: 12, kind: input, shape index: {}, may-alias: {6,8,10,12}]
  %s13 = inlined_call_operand.vmem [shape: f32[128,32], index: 13, kind: input, shape index: {}]
  %s14 = inlined_call_operand.vmem [shape: f32[1,32], index: 14, kind: input, shape index: {}]
  %s15 = inlined_call_operand.vmem [shape: f32[2,32], index: 15, kind: output, shape index: {}]
  %s16 = sld [smem:[#allocation0]]
  $region70: #{encoder_forward.9} parent=0
    _
  %s18 = ssub.s32 1, %s16
  %s19 = scalar_select 0, %s18, %s16
  // Predicated region
  $region2: #{encoder_forward.9} parent=0 // pred_check
    _
  $region3: #{encoder_forward.9} parent=0 // pred_check_branch
    %21 = sbr.rel (0) target = $region5
  $region4: #{encoder_forward.9} parent=0 // pred_region
    _
  $region5: #{encoder_forward.9} parent=0 // pred_fallthru
    _
  // Predicated region
  $region6: #{encoder_forward.9} parent=0 // pred_check
    _
  $region7: #{encoder_forward.9} parent=0 // pred_check_branch
    %23 = sbr.rel (0) target = $region9
  $region8: #{encoder_forward.9} parent=0 // pred_region
    _
  $region9: #{encoder_forward.9} parent=0 // pred_fallthru
    _
  // Predicated region
  $region10: #{encoder_forward.9} parent=0 // pred_check
    _
  $region11: #{encoder_forward.9} parent=0 // pred_check_branch
    %25 = sbr.rel (0) target = $region13
  $region12: #{encoder_forward.9} parent=0 // pred_region
    _
  $region13: #{encoder_forward.9} parent=0 // pred_fallthru
    _
  // Predicated region
  $region14: #{encoder_forward.9} parent=0 // pred_check
    _
  $region15: #{encoder_forward.9} parent=0 // pred_check_branch
    %27 = sbr.rel (0) target = $region17
  $region16: #{encoder_forward.9} parent=0 // pred_region
    _
  $region17: #{encoder_forward.9} parent=0 // pred_fallthru
    _
  // Predicated region
  $region18: #{encoder_forward.9} parent=0 // pred_check
    _
  $region19: #{encoder_forward.9} parent=0 // pred_check_branch
    %29 = sbr.rel (0) target = $region21
  $region20: #{encoder_forward.9} parent=0 // pred_region
    _
  $region21: #{encoder_forward.9} parent=0 // pred_fallthru
    _
  // Predicated region
  $region22: #{encoder_forward.9} parent=0 // pred_check
    _
  $region23: #{encoder_forward.9} parent=0 // pred_check_branch
    %31 = sbr.rel (0) target = $region25
  $region24: #{encoder_forward.9} parent=0 // pred_region
    _
  $region25: #{encoder_forward.9} parent=0 // pred_fallthru
    _
  // Predicated region
  $region26: #{encoder_forward.9} parent=0 // pred_check
    _
  $region27: #{encoder_forward.9} parent=0 // pred_check_branch
    %33 = sbr.rel (0) target = $region29
  $region28: #{encoder_forward.9} parent=0 // pred_region
    _
  $region29: #{encoder_forward.9} parent=0 // pred_fallthru
    _
  // Predicated region
  $region30: #{encoder_forward.9} parent=0 // pred_check
    _
  $region31: #{encoder_forward.9} parent=0 // pred_check_branch
    %35 = sbr.rel (0) target = $region33
  $region32: #{encoder_forward.9} parent=0 // pred_region
    _
  $region33: #{encoder_forward.9} parent=0 // pred_fallthru
    _
  // Predicated region
  $region34: #{encoder_forward.9} parent=0 // pred_check
    _
  $region35: #{encoder_forward.9} parent=0 // pred_check_branch
    %37 = sbr.rel (0) target = $region37
  $region36: #{encoder_forward.9} parent=0 // pred_region
    _
  $region37: #{encoder_forward.9} parent=0 // pred_fallthru
    _
  // Predicated region
  $region38: #{encoder_forward.9} parent=0 // pred_check
    _
  $region39: #{encoder_forward.9} parent=0 // pred_check_branch
    %39 = sbr.rel (0) target = $region41
  $region40: #{encoder_forward.9} parent=0 // pred_region
    _
  $region41: #{encoder_forward.9} parent=0 // pred_fallthru
    _
  // Predicated region
  $region42: #{encoder_forward.9} parent=0 // pred_check
    _
  $region43: #{encoder_forward.9} parent=0 // pred_check_branch
    %41 = sbr.rel (0) target = $region45
  $region44: #{encoder_forward.9} parent=0 // pred_region
    _
  $region45: #{encoder_forward.9} parent=0 // pred_fallthru
    _
  // Predicated region
  $region46: #{encoder_forward.9} parent=0 // pred_check
    _
  $region47: #{encoder_forward.9} parent=0 // pred_check_branch
    %43 = sbr.rel (0) target = $region49
  $region48: #{encoder_forward.9} parent=0 // pred_region
    _
  $region49: #{encoder_forward.9} parent=0 // pred_fallthru
    _
  // Predicated region
  $region50: #{encoder_forward.9} parent=0 // pred_check
    _
  $region51: #{encoder_forward.9} parent=0 // pred_check_branch
    %45 = sbr.rel (0) target = $region53
  $region52: #{encoder_forward.9} parent=0 // pred_region
    _
  $region53: #{encoder_forward.9} parent=0 // pred_fallthru
    _
  // Predicated region
  $region54: #{encoder_forward.9} parent=0 // pred_check
    _
  $region55: #{encoder_forward.9} parent=0 // pred_check_branch
    %47 = sbr.rel (0) target = $region57
  $region56: #{encoder_forward.9} parent=0 // pred_region
    _
  $region57: #{encoder_forward.9} parent=0 // pred_fallthru
    _
  // Predicated region
  $region58: #{encoder_forward.9} parent=0 // pred_check
    _
  $region59: #{encoder_forward.9} parent=0 // pred_check_branch
    %49 = sbr.rel (0) target = $region61
  $region60: #{encoder_forward.9} parent=0 // pred_region
    _
  $region61: #{encoder_forward.9} parent=0 // pred_fallthru
    _
  %v50 = vld [vmem:[%s0] sm:$0x3]
  %v51 = vld [vmem:[%s1] sm:$0xff]
  %v52 = vld [vmem:[%s1 + $0x8] sm:$0xff]
  %v53 = vld [vmem:[%s1 + $0x10] sm:$0xff]
  %v54 = vld [vmem:[%s1 + $0x18] sm:$0xff]
  %v55 = vld [vmem:[%s1 + $0x20] sm:$0xff]
  %v56 = vld [vmem:[%s1 + $0x28] sm:$0xff]
  %v57 = vld [vmem:[%s1 + $0x30] sm:$0xff]
  %v58 = vld [vmem:[%s1 + $0x38] sm:$0xff]
  %v59 = vld [vmem:[%s1 + $0x40] sm:$0xff]
  %v60 = vld [vmem:[%s1 + $0x48] sm:$0xff]
  %v61 = vld [vmem:[%s1 + $0x50] sm:$0xff]
  %v62 = vld [vmem:[%s1 + $0x58] sm:$0xff]
  %v63 = vld [vmem:[%s1 + $0x60] sm:$0xff]
  %v64 = vld [vmem:[%s1 + $0x68] sm:$0xff]
  %v65 = vld [vmem:[%s1 + $0x70] sm:$0xff]
  %v66 = vld [vmem:[%s1 + $0x78] sm:$0xff]
  %v67 = vld [vmem:[%s1 + $0x80] sm:$0xff]
  %v68 = vld [vmem:[%s1 + $0x88] sm:$0xff]
  %v69 = vld [vmem:[%s1 + $0x90] sm:$0xff]
  %v70 = vld [vmem:[%s1 + $0x98] sm:$0xff]
  %v71 = vld [vmem:[%s1 + $0xa0] sm:$0xff]
  %v72 = vld [vmem:[%s1 + $0xa8] sm:$0xff]
  %v73 = vld [vmem:[%s1 + $0xb0] sm:$0xff]
  %v74 = vld [vmem:[%s1 + $0xb8] sm:$0xff]
  %v75 = vld [vmem:[%s1 + $0xc0] sm:$0xff]
  %v76 = vld [vmem:[%s1 + $0xc8] sm:$0xff]
  %v77 = vld [vmem:[%s1 + $0xd0] sm:$0xff]
  %v78 = vld [vmem:[%s1 + $0xd8] sm:$0xff]
  %v79 = vld [vmem:[%s1 + $0xe0] sm:$0xff]
  %v80 = vld [vmem:[%s1 + $0xe8] sm:$0xff]
  %v81 = vld [vmem:[%s1 + $0xf0] sm:$0xff]
  %v82 = vld [vmem:[%s1 + $0xf8] sm:$0xff]
  %v83 = vld [vmem:[%s2] sm:$0x3]
  %v85 = vlaneseq
  %v86 = vshrl.u32 %v85, 7
  %v87 = vsub.s32 0, %v86
  %v88 = vrot.slane %v83, %v87
  %v89 = vlaneseq
  %v90 = vshrl.u32 %v89, 7
  %v91 = vsub.s32 1, %v90
  %v92 = vrot.slane %v83, %v91
  %95 = vmatprep.subr.mxu0 %v82
  %96 = vmatpush1.msra.mxu0 %v81
  %97 = vmatprep.subr.mxu0 %v80
  %98 = vmatpush1.msra.mxu0 %v79
  %99 = vmatprep.subr.mxu0 %v78
  %100 = vmatpush1.msra.mxu0 %v77
  %101 = vmatprep.subr.mxu0 %v76
  %102 = vmatpush1.msra.mxu0 %v75
  %103 = vmatprep.subr.mxu0 %v74
  %104 = vmatpush1.msra.mxu0 %v73
  %105 = vmatprep.subr.mxu0 %v72
  %106 = vmatpush1.msra.mxu0 %v71
  %107 = vmatprep.subr.mxu0 %v70
  %108 = vmatpush1.msra.mxu0 %v69
  %109 = vmatprep.subr.mxu0 %v68
  %110 = vmatpush1.msra.mxu0 %v67
  %111 = vmatprep.subr.mxu0 %v66
  %112 = vmatpush1.msra.mxu0 %v65
  %113 = vmatprep.subr.mxu0 %v64
  %114 = vmatpush1.msra.mxu0 %v63
  %115 = vmatprep.subr.mxu0 %v62
  %116 = vmatpush1.msra.mxu0 %v61
  %117 = vmatprep.subr.mxu0 %v60
  %118 = vmatpush1.msra.mxu0 %v59
  %119 = vmatprep.subr.mxu0 %v58
  %120 = vmatpush1.msra.mxu0 %v57
  %121 = vmatprep.subr.mxu0 %v56
  %122 = vmatpush1.msra.mxu0 %v55
  %123 = vmatprep.subr.mxu0 %v54
  %124 = vmatpush1.msra.mxu0 %v53
  %125 = vmatprep.subr.mxu0 %v52
  %126 = vmatpush1.msra.mxu0 %v51
  %127 = vmatprep.subr.mxu0 0.0
  %128 = vmatpush2.msra.mxu0 0.0
  %129 = vmatprep.subr.mxu0 0.0
  %130 = vmatpush2.msra.mxu0 0.0
  %131 = vmatprep.subr.mxu0 0.0
  %132 = vmatpush2.msra.mxu0 0.0
  %133 = vmatprep.subr.mxu0 0.0
  %134 = vmatpush2.msra.mxu0 0.0
  %135 = vmatprep.subr.mxu0 0.0
  %136 = vmatpush2.msra.mxu0 0.0
  %137 = vmatprep.subr.mxu0 0.0
  %138 = vmatpush2.msra.mxu0 0.0
  %139 = vmatprep.subr.mxu0 0.0
  %140 = vmatpush2.msra.mxu0 0.0
  %141 = vmatprep.subr.mxu0 0.0
  %142 = vmatpush2.msra.mxu0 0.0
  %143 = vmatprep.subr.mxu0 0.0
  %144 = vmatpush2.msra.mxu0 0.0
  %145 = vmatprep.subr.mxu0 0.0
  %146 = vmatpush2.msra.mxu0 0.0
  %147 = vmatprep.subr.mxu0 0.0
  %148 = vmatpush2.msra.mxu0 0.0
  %149 = vmatprep.subr.mxu0 0.0
  %150 = vmatpush2.msra.mxu0 0.0
  %151 = vmatprep.subr.mxu0 0.0
  %152 = vmatpush2.msra.mxu0 0.0
  %153 = vmatprep.subr.mxu0 0.0
  %154 = vmatpush2.msra.mxu0 0.0
  %155 = vmatprep.subr.mxu0 0.0
  %156 = vmatpush2.msra.mxu0 0.0
  %157 = vmatprep.subr.mxu0 0.0
  %158 = vmatpush2.msra.mxu0 0.0
  %159 = vmatprep.mubr.f32.mxu0 0.0
  %160 = vmatmul.mubr.f32.gmra.mxu0 %v50
  %v161 = vpop.f32.mrf.mxu0
  %v162 = vadd.f32 %v88, %v161
  %v163 = vpop.f32.mrf.mxu0
  %v164 = vadd.f32 %v92, %v163
  %165 = vdwg.mxu0
  %v166 = vld [vmem:[%s3] sm:$0x3]
  %v167 = vld [vmem:[%s4] sm:$0x3]
  %vm168 = vcmask 1041408
  %v169 = vsel %vm168, %v162, 0.0
  %v170 = vrot.slane %v169, 4
  %v171 = vadd.f32 %v169, %v170
  %v172 = vrot.slane %v171, 2
  %v173 = vadd.f32 %v171, %v172
  %v174 = vrot.slane %v173, 1
  %v175 = vadd.f32 %v173, %v174
  %v176 = vsel %vm168, %v164, 0.0
  %v177 = vrot.slane %v176, 4
  %v178 = vadd.f32 %v176, %v177
  %v179 = vrot.slane %v178, 2
  %v180 = vadd.f32 %v178, %v179
  %v181 = vrot.slane %v180, 1
  %v182 = vadd.f32 %v180, %v181
  %v183 = vrcp.pop 2.0
  %v184 = vmul.f32 %v175, %v183
  %v185 = vmul.f32 %v182, %v183
  %v186 = vsub.f32 %v162, %v184
  %v187 = vsub.f32 %v164, %v185
  %v188 = vmul.f32 %v186, %v186
  %v189 = vmul.f32 %v187, %v187
  %v190 = vsel %vm168, %v188, 0.0
  %v191 = vrot.slane %v190, 4
  %v192 = vadd.f32 %v190, %v191
  %v193 = vrot.slane %v192, 2
  %v194 = vadd.f32 %v192, %v193
  %v195 = vrot.slane %v194, 1
  %v196 = vadd.f32 %v194, %v195
  %v197 = vsel %vm168, %v189, 0.0
  %v198 = vrot.slane %v197, 4
  %v199 = vadd.f32 %v197, %v198
  %v200 = vrot.slane %v199, 2
  %v201 = vadd.f32 %v199, %v200
  %v202 = vrot.slane %v201, 1
  %v203 = vadd.f32 %v201, %v202
  %v204 = vmul.f32 %v196, %v183
  %v205 = vmul.f32 %v203, %v183
  %v206 = vadd.f32 %v204, 1e-05
  %v207 = vadd.f32 %v205, 1e-05
  %v208 = vrsqrt.pop %v206
  %v209 = vrsqrt.pop %v207
  %v210 = vmul.f32 %v186, %v208
  %v211 = vmul.f32 %v187, %v209
  %v213 = vlaneseq
  %v214 = vshrl.u32 %v213, 7
  %v215 = vsub.s32 0, %v214
  %v216 = vrot.slane %v166, %v215
  %v217 = vlaneseq
  %v218 = vshrl.u32 %v217, 7
  %v219 = vsub.s32 1, %v218
  %v220 = vrot.slane %v166, %v219
  %v223 = vmul.f32 %v210, %v216
  %v224 = vmul.f32 %v211, %v220
  %v226 = vlaneseq
  %v227 = vshrl.u32 %v226, 7
  %v228 = vsub.s32 0, %v227
  %v229 = vrot.slane %v167, %v228
  %v230 = vlaneseq
  %v231 = vshrl.u32 %v230, 7
  %v232 = vsub.s32 1, %v231
  %v233 = vrot.slane %v167, %v232
  %v236 = vadd.f32 %v223, %v229
  %v237 = vadd.f32 %v224, %v233
  %v238 = vmax.f32 %v236, 0.0
  %v239 = vmax.f32 %v237, 0.0
  %v240 = vld [vmem:[%s5] sm:$0xff]
  %v241 = vld [vmem:[%s5 + $0x8] sm:$0xff]
  %v242 = vld [vmem:[%s5 + $0x10] sm:$0xff]
  %v243 = vld [vmem:[%s5 + $0x18] sm:$0xff]
  %v244 = vld [vmem:[%s5 + $0x20] sm:$0xff]
  %v245 = vld [vmem:[%s5 + $0x28] sm:$0xff]
  %v246 = vld [vmem:[%s5 + $0x30] sm:$0xff]
  %v247 = vld [vmem:[%s5 + $0x38] sm:$0xff]
  %v248 = vld [vmem:[%s5 + $0x40] sm:$0xff]
  %v249 = vld [vmem:[%s5 + $0x48] sm:$0xff]
  %v250 = vld [vmem:[%s5 + $0x50] sm:$0xff]
  %v251 = vld [vmem:[%s5 + $0x58] sm:$0xff]
  %v252 = vld [vmem:[%s5 + $0x60] sm:$0xff]
  %v253 = vld [vmem:[%s5 + $0x68] sm:$0xff]
  %v254 = vld [vmem:[%s5 + $0x70] sm:$0xff]
  %v255 = vld [vmem:[%s5 + $0x78] sm:$0xff]
  %v256 = vld [vmem:[%s5 + $0x80] sm:$0xff]
  %v257 = vld [vmem:[%s5 + $0x88] sm:$0xff]
  %v258 = vld [vmem:[%s5 + $0x90] sm:$0xff]
  %v259 = vld [vmem:[%s5 + $0x98] sm:$0xff]
  %v260 = vld [vmem:[%s5 + $0xa0] sm:$0xff]
  %v261 = vld [vmem:[%s5 + $0xa8] sm:$0xff]
  %v262 = vld [vmem:[%s5 + $0xb0] sm:$0xff]
  %v263 = vld [vmem:[%s5 + $0xb8] sm:$0xff]
  %v264 = vld [vmem:[%s5 + $0xc0] sm:$0xff]
  %v265 = vld [vmem:[%s5 + $0xc8] sm:$0xff]
  %v266 = vld [vmem:[%s5 + $0xd0] sm:$0xff]
  %v267 = vld [vmem:[%s5 + $0xd8] sm:$0xff]
  %v268 = vld [vmem:[%s5 + $0xe0] sm:$0xff]
  %v269 = vld [vmem:[%s5 + $0xe8] sm:$0xff]
  %v270 = vld [vmem:[%s5 + $0xf0] sm:$0xff]
  %v271 = vld [vmem:[%s5 + $0xf8] sm:$0xff]
  %v272 = vld [vmem:[%s6] sm:$0x1]
  %v274 = vlaneseq
  %v275 = vshrl.u32 %v274, 7
  %v276 = vsub.s32 0, %v275
  %v277 = vrot.slane %v272, %v276
  %279 = vmatprep.subr.mxu0 0.0
  %280 = vmatpush1.msra.mxu0 %v255
  %281 = vmatprep.subr.mxu0 0.0
  %282 = vmatpush1.msra.mxu0 %v254
  %283 = vmatprep.subr.mxu0 0.0
  %284 = vmatpush1.msra.mxu0 %v253
  %285 = vmatprep.subr.mxu0 0.0
  %286 = vmatpush1.msra.mxu0 %v252
  %287 = vmatprep.subr.mxu0 0.0
  %288 = vmatpush1.msra.mxu0 %v251
  %289 = vmatprep.subr.mxu0 0.0
  %290 = vmatpush1.msra.mxu0 %v250
  %291 = vmatprep.subr.mxu0 0.0
  %292 = vmatpush1.msra.mxu0 %v249
  %293 = vmatprep.subr.mxu0 0.0
  %294 = vmatpush1.msra.mxu0 %v248
  %295 = vmatprep.subr.mxu0 0.0
  %296 = vmatpush1.msra.mxu0 %v247
  %297 = vmatprep.subr.mxu0 0.0
  %298 = vmatpush1.msra.mxu0 %v246
  %299 = vmatprep.subr.mxu0 0.0
  %300 = vmatpush1.msra.mxu0 %v245
  %301 = vmatprep.subr.mxu0 0.0
  %302 = vmatpush1.msra.mxu0 %v244
  %303 = vmatprep.subr.mxu0 0.0
  %304 = vmatpush1.msra.mxu0 %v243
  %305 = vmatprep.subr.mxu0 0.0
  %306 = vmatpush1.msra.mxu0 %v242
  %307 = vmatprep.subr.mxu0 0.0
  %308 = vmatpush1.msra.mxu0 %v241
  %309 = vmatprep.subr.mxu0 0.0
  %310 = vmatpush1.msra.mxu0 %v240
  %311 = vmatprep.subr.mxu0 0.0
  %312 = vmatpush2.msra.mxu0 %v271
  %313 = vmatprep.subr.mxu0 0.0
  %314 = vmatpush2.msra.mxu0 %v270
  %315 = vmatprep.subr.mxu0 0.0
  %316 = vmatpush2.msra.mxu0 %v269
  %317 = vmatprep.subr.mxu0 0.0
  %318 = vmatpush2.msra.mxu0 %v268
  %319 = vmatprep.subr.mxu0 0.0
  %320 = vmatpush2.msra.mxu0 %v267
  %321 = vmatprep.subr.mxu0 0.0
  %322 = vmatpush2.msra.mxu0 %v266
  %323 = vmatprep.subr.mxu0 0.0
  %324 = vmatpush2.msra.mxu0 %v265
  %325 = vmatprep.subr.mxu0 0.0
  %326 = vmatpush2.msra.mxu0 %v264
  %327 = vmatprep.subr.mxu0 0.0
  %328 = vmatpush2.msra.mxu0 %v263
  %329 = vmatprep.subr.mxu0 0.0
  %330 = vmatpush2.msra.mxu0 %v262
  %331 = vmatprep.subr.mxu0 0.0
  %332 = vmatpush2.msra.mxu0 %v261
  %333 = vmatprep.subr.mxu0 0.0
  %334 = vmatpush2.msra.mxu0 %v260
  %335 = vmatprep.subr.mxu0 0.0
  %336 = vmatpush2.msra.mxu0 %v259
  %337 = vmatprep.subr.mxu0 0.0
  %338 = vmatpush2.msra.mxu0 %v258
  %339 = vmatprep.subr.mxu0 0.0
  %340 = vmatpush2.msra.mxu0 %v257
  %341 = vmatprep.subr.mxu0 0.0
  %342 = vmatpush2.msra.mxu0 %v256
  %343 = vmatprep.mubr.f32.mxu0 %v239
  %344 = vmatmul.mubr.f32.gmra.mxu0 %v238
  %v345 = vpop.f32.mrf.mxu0
  %v346 = vadd.f32 %v277, %v345
  %v347 = vpop.f32.mrf.mxu0
  %348 = vdwg.mxu0
  %v349 = vld [vmem:[%s7] sm:$0x1]
  %v350 = vld [vmem:[%s8] sm:$0x1]
  %v351 = vsel %vm168, %v346, 0.0
  %v352 = vrot.slane %v351, 4
  %v353 = vadd.f32 %v351, %v352
  %v354 = vrot.slane %v353, 2
  %v355 = vadd.f32 %v353, %v354
  %v356 = vrot.slane %v355, 1
  %v357 = vadd.f32 %v355, %v356
  %v358 = vmul.f32 %v357, %v183
  %v359 = vsub.f32 %v346, %v358
  %v360 = vmul.f32 %v359, %v359
  %v361 = vsel %vm168, %v360, 0.0
  %v362 = vrot.slane %v361, 4
  %v363 = vadd.f32 %v361, %v362
  %v364 = vrot.slane %v363, 2
  %v365 = vadd.f32 %v363, %v364
  %v366 = vrot.slane %v365, 1
  %v367 = vadd.f32 %v365, %v366
  %v368 = vmul.f32 %v367, %v183
  %v369 = vadd.f32 %v368, 1e-05
  %v370 = vrsqrt.pop %v369
  %v371 = vmul.f32 %v359, %v370
  %v373 = vlaneseq
  %v374 = vshrl.u32 %v373, 7
  %v375 = vsub.s32 0, %v374
  %v376 = vrot.slane %v349, %v375
  %v378 = vmul.f32 %v371, %v376
  %v380 = vlaneseq
  %v381 = vshrl.u32 %v380, 7
  %v382 = vsub.s32 0, %v381
  %v383 = vrot.slane %v350, %v382
  %v385 = vadd.f32 %v378, %v383
  %v386 = vmax.f32 %v385, 0.0
  %v387 = vld [vmem:[%s9] sm:$0xff]
  %v388 = vld [vmem:[%s9 + $0x8] sm:$0xff]
  %v389 = vld [vmem:[%s9 + $0x10] sm:$0xff]
  %v390 = vld [vmem:[%s9 + $0x18] sm:$0xff]
  %v391 = vld [vmem:[%s9 + $0x20] sm:$0xff]
  %v392 = vld [vmem:[%s9 + $0x28] sm:$0xff]
  %v393 = vld [vmem:[%s9 + $0x30] sm:$0xff]
  %v394 = vld [vmem:[%s9 + $0x38] sm:$0xff]
  %v395 = vld [vmem:[%s9 + $0x40] sm:$0xff]
  %v396 = vld [vmem:[%s9 + $0x48] sm:$0xff]
  %v397 = vld [vmem:[%s9 + $0x50] sm:$0xff]
  %v398 = vld [vmem:[%s9 + $0x58] sm:$0xff]
  %v399 = vld [vmem:[%s9 + $0x60] sm:$0xff]
  %v400 = vld [vmem:[%s9 + $0x68] sm:$0xff]
  %v401 = vld [vmem:[%s9 + $0x70] sm:$0xff]
  %v402 = vld [vmem:[%s9 + $0x78] sm:$0xff]
  %v403 = vld [vmem:[%s10] sm:$0x1]
  %v405 = vlaneseq
  %v406 = vshrl.u32 %v405, 7
  %v407 = vsub.s32 0, %v406
  %v408 = vrot.slane %v403, %v407
  %410 = vmatprep.subr.mxu0 0.0
  %411 = vmatpush1.msra.mxu0 %v402
  %412 = vmatprep.subr.mxu0 0.0
  %413 = vmatpush1.msra.mxu0 %v401
  %414 = vmatprep.subr.mxu0 0.0
  %415 = vmatpush1.msra.mxu0 %v400
  %416 = vmatprep.subr.mxu0 0.0
  %417 = vmatpush1.msra.mxu0 %v399
  %418 = vmatprep.subr.mxu0 0.0
  %419 = vmatpush1.msra.mxu0 %v398
  %420 = vmatprep.subr.mxu0 0.0
  %421 = vmatpush1.msra.mxu0 %v397
  %422 = vmatprep.subr.mxu0 0.0
  %423 = vmatpush1.msra.mxu0 %v396
  %424 = vmatprep.subr.mxu0 0.0
  %425 = vmatpush1.msra.mxu0 %v395
  %426 = vmatprep.subr.mxu0 0.0
  %427 = vmatpush1.msra.mxu0 %v394
  %428 = vmatprep.subr.mxu0 0.0
  %429 = vmatpush1.msra.mxu0 %v393
  %430 = vmatprep.subr.mxu0 0.0
  %431 = vmatpush1.msra.mxu0 %v392
  %432 = vmatprep.subr.mxu0 0.0
  %433 = vmatpush1.msra.mxu0 %v391
  %434 = vmatprep.subr.mxu0 0.0
  %435 = vmatpush1.msra.mxu0 %v390
  %436 = vmatprep.subr.mxu0 0.0
  %437 = vmatpush1.msra.mxu0 %v389
  %438 = vmatprep.subr.mxu0 0.0
  %439 = vmatpush1.msra.mxu0 %v388
  %440 = vmatprep.subr.mxu0 0.0
  %441 = vmatpush1.msra.mxu0 %v387
  %442 = vmatprep.subr.mxu0 0.0
  %443 = vmatpush2.msra.mxu0 0.0
  %444 = vmatprep.subr.mxu0 0.0
  %445 = vmatpush2.msra.mxu0 0.0
  %446 = vmatprep.subr.mxu0 0.0
  %447 = vmatpush2.msra.mxu0 0.0
  %448 = vmatprep.subr.mxu0 0.0
  %449 = vmatpush2.msra.mxu0 0.0
  %450 = vmatprep.subr.mxu0 0.0
  %451 = vmatpush2.msra.mxu0 0.0
  %452 = vmatprep.subr.mxu0 0.0
  %453 = vmatpush2.msra.mxu0 0.0
  %454 = vmatprep.subr.mxu0 0.0
  %455 = vmatpush2.msra.mxu0 0.0
  %456 = vmatprep.subr.mxu0 0.0
  %457 = vmatpush2.msra.mxu0 0.0
  %458 = vmatprep.subr.mxu0 0.0
  %459 = vmatpush2.msra.mxu0 0.0
  %460 = vmatprep.subr.mxu0 0.0
  %461 = vmatpush2.msra.mxu0 0.0
  %462 = vmatprep.subr.mxu0 0.0
  %463 = vmatpush2.msra.mxu0 0.0
  %464 = vmatprep.subr.mxu0 0.0
  %465 = vmatpush2.msra.mxu0 0.0
  %466 = vmatprep.subr.mxu0 0.0
  %467 = vmatpush2.msra.mxu0 0.0
  %468 = vmatprep.subr.mxu0 0.0
  %469 = vmatpush2.msra.mxu0 0.0
  %470 = vmatprep.subr.mxu0 0.0
  %471 = vmatpush2.msra.mxu0 0.0
  %472 = vmatprep.subr.mxu0 0.0
  %473 = vmatpush2.msra.mxu0 0.0
  %474 = vmatprep.mubr.f32.mxu0 0.0
  %475 = vmatmul.mubr.f32.gmra.mxu0 %v386
  %v476 = vpop.f32.mrf.mxu0
  %v477 = vadd.f32 %v408, %v476
  %v478 = vpop.f32.mrf.mxu0
  %479 = vdwg.mxu0
  %v480 = vld [vmem:[%s11] sm:$0x1]
  %v481 = vld [vmem:[%s12] sm:$0x1]
  %v482 = vsel %vm168, %v477, 0.0
  %v483 = vrot.slane %v482, 4
  %v484 = vadd.f32 %v482, %v483
  %v485 = vrot.slane %v484, 2
  %v486 = vadd.f32 %v484, %v485
  %v487 = vrot.slane %v486, 1
  %v488 = vadd.f32 %v486, %v487
  %v489 = vmul.f32 %v488, %v183
  %v490 = vsub.f32 %v477, %v489
  %v491 = vmul.f32 %v490, %v490
  %v492 = vsel %vm168, %v491, 0.0
  %v493 = vrot.slane %v492, 4
  %v494 = vadd.f32 %v492, %v493
  %v495 = vrot.slane %v494, 2
  %v496 = vadd.f32 %v494, %v495
  %v497 = vrot.slane %v496, 1
  %v498 = vadd.f32 %v496, %v497
  %v499 = vmul.f32 %v498, %v183
  %v500 = vadd.f32 %v499, 1e-05
  %v501 = vrsqrt.pop %v500
  %v502 = vmul.f32 %v490, %v501
  %v504 = vlaneseq
  %v505 = vshrl.u32 %v504, 7
  %v506 = vsub.s32 0, %v505
  %v507 = vrot.slane %v480, %v506
  %v509 = vmul.f32 %v502, %v507
  %v511 = vlaneseq
  %v512 = vshrl.u32 %v511, 7
  %v513 = vsub.s32 0, %v512
  %v514 = vrot.slane %v481, %v513
  %v516 = vadd.f32 %v509, %v514
  %v517 = vmax.f32 %v516, 0.0
  %v518 = vld [vmem:[%s13] sm:$0xff]
  %v519 = vld [vmem:[%s13 + $0x8] sm:$0xff]
  %v520 = vld [vmem:[%s13 + $0x10] sm:$0xff]
  %v521 = vld [vmem:[%s13 + $0x18] sm:$0xff]
  %v522 = vld [vmem:[%s13 + $0x20] sm:$0xff]
  %v523 = vld [vmem:[%s13 + $0x28] sm:$0xff]
  %v524 = vld [vmem:[%s13 + $0x30] sm:$0xff]
  %v525 = vld [vmem:[%s13 + $0x38] sm:$0xff]
  %v526 = vld [vmem:[%s13 + $0x40] sm:$0xff]
  %v527 = vld [vmem:[%s13 + $0x48] sm:$0xff]
  %v528 = vld [vmem:[%s13 + $0x50] sm:$0xff]
  %v529 = vld [vmem:[%s13 + $0x58] sm:$0xff]
  %v530 = vld [vmem:[%s13 + $0x60] sm:$0xff]
  %v531 = vld [vmem:[%s13 + $0x68] sm:$0xff]
  %v532 = vld [vmem:[%s13 + $0x70] sm:$0xff]
  %v533 = vld [vmem:[%s13 + $0x78] sm:$0xff]
  %v534 = vld [vmem:[%s14] sm:$0x1]
  %v536 = vlaneseq
  %v537 = vshrl.u32 %v536, 7
  %v538 = vsub.s32 0, %v537
  %v539 = vrot.slane %v534, %v538
  %541 = vmatprep.subr.mxu0 0.0
  %542 = vmatpush1.msra.mxu0 %v533
  %543 = vmatprep.subr.mxu0 0.0
  %544 = vmatpush1.msra.mxu0 %v532
  %545 = vmatprep.subr.mxu0 0.0
  %546 = vmatpush1.msra.mxu0 %v531
  %547 = vmatprep.subr.mxu0 0.0
  %548 = vmatpush1.msra.mxu0 %v530
  %549 = vmatprep.subr.mxu0 0.0
  %550 = vmatpush1.msra.mxu0 %v529
  %551 = vmatprep.subr.mxu0 0.0
  %552 = vmatpush1.msra.mxu0 %v528
  %553 = vmatprep.subr.mxu0 0.0
  %554 = vmatpush1.msra.mxu0 %v527
  %555 = vmatprep.subr.mxu0 0.0
  %556 = vmatpush1.msra.mxu0 %v526
  %557 = vmatprep.subr.mxu0 0.0
  %558 = vmatpush1.msra.mxu0 %v525
  %559 = vmatprep.subr.mxu0 0.0
  %560 = vmatpush1.msra.mxu0 %v524
  %561 = vmatprep.subr.mxu0 0.0
  %562 = vmatpush1.msra.mxu0 %v523
  %563 = vmatprep.subr.mxu0 0.0
  %564 = vmatpush1.msra.mxu0 %v522
  %565 = vmatprep.subr.mxu0 0.0
  %566 = vmatpush1.msra.mxu0 %v521
  %567 = vmatprep.subr.mxu0 0.0
  %568 = vmatpush1.msra.mxu0 %v520
  %569 = vmatprep.subr.mxu0 0.0
  %570 = vmatpush1.msra.mxu0 %v519
  %571 = vmatprep.subr.mxu0 0.0
  %572 = vmatpush1.msra.mxu0 %v518
  %573 = vmatprep.subr.mxu0 0.0
  %574 = vmatpush2.msra.mxu0 0.0
  %575 = vmatprep.subr.mxu0 0.0
  %576 = vmatpush2.msra.mxu0 0.0
  %577 = vmatprep.subr.mxu0 0.0
  %578 = vmatpush2.msra.mxu0 0.0
  %579 = vmatprep.subr.mxu0 0.0
  %580 = vmatpush2.msra.mxu0 0.0
  %581 = vmatprep.subr.mxu0 0.0
  %582 = vmatpush2.msra.mxu0 0.0
  %583 = vmatprep.subr.mxu0 0.0
  %584 = vmatpush2.msra.mxu0 0.0
  %585 = vmatprep.subr.mxu0 0.0
  %586 = vmatpush2.msra.mxu0 0.0
  %587 = vmatprep.subr.mxu0 0.0
  %588 = vmatpush2.msra.mxu0 0.0
  %589 = vmatprep.subr.mxu0 0.0
  %590 = vmatpush2.msra.mxu0 0.0
  %591 = vmatprep.subr.mxu0 0.0
  %592 = vmatpush2.msra.mxu0 0.0
  %593 = vmatprep.subr.mxu0 0.0
  %594 = vmatpush2.msra.mxu0 0.0
  %595 = vmatprep.subr.mxu0 0.0
  %596 = vmatpush2.msra.mxu0 0.0
  %597 = vmatprep.subr.mxu0 0.0
  %598 = vmatpush2.msra.mxu0 0.0
  %599 = vmatprep.subr.mxu0 0.0
  %600 = vmatpush2.msra.mxu0 0.0
  %601 = vmatprep.subr.mxu0 0.0
  %602 = vmatpush2.msra.mxu0 0.0
  %603 = vmatprep.subr.mxu0 0.0
  %604 = vmatpush2.msra.mxu0 0.0
  %605 = vmatprep.mubr.f32.mxu0 0.0
  %606 = vmatmul.mubr.f32.gmra.mxu0 %v517
  %v607 = vpop.f32.mrf.mxu0
  %v608 = vadd.f32 %v539, %v607
  %v609 = vpop.f32.mrf.mxu0
  %610 = vdwg.mxu0
  %vm611 = vcmask 254976
  %612 = vst.msk [vmem:[%s15] sm:$0x3] %vm611, %v608
  // Predicated region
  $region62: #{encoder_forward.9} parent=0 // pred_check
    _
  $region63: #{encoder_forward.9} parent=0 // pred_check_branch
    %614 = sbr.rel (0) target = $region65
  $region64: #{encoder_forward.9} parent=0 // pred_region
    _
  $region65: #{encoder_forward.9} parent=0 // pred_fallthru
    _
  // Predicated region
  $region66: #{encoder_forward.9} parent=0 // pred_check
    _
  $region67: #{encoder_forward.9} parent=0 // pred_check_branch
    %616 = sbr.rel (0) target = $region69
  $region68: #{encoder_forward.9} parent=0 // pred_region
    _
  $region69: #{encoder_forward.9} parent=0 // pred_fallthru
    _

// kernel: encoder_forward.6
$region0: #{encoder_forward.6}
  #allocation0 [shape = 'u32[]', space=smem, size = 0x4, offset = 0x4, fixed_abs, tag = 'smem constant byte address 0x4 - core index']
  #allocation1 [shape = 'u32[144,128]{1,0:T(1,128)}', space=vmem, size = 0x12000, scoped, tag = 'internal scratch']
  %s0 = inlined_call_operand.vmem [shape: f32[288,3200], index: 0, kind: input, shape index: {}]
  %s1 = inlined_call_operand.vmem [shape: f32[3200,128], index: 1, kind: input, shape index: {}]
  %s2 = inlined_call_operand.vmem [shape: f32[1,128], index: 2, kind: input, shape index: {}, may-alias: {2,4}]
  %s3 = inlined_call_operand.vmem [shape: f32[1,128], index: 3, kind: input, shape index: {}]
  %s4 = inlined_call_operand.vmem [shape: f32[1,128], index: 4, kind: input, shape index: {}, may-alias: {2,4}]
  %s5 = inlined_call_operand.vmem [shape: f32[288,128], index: 5, kind: output, shape index: {}]
  %s6 = sld [smem:[#allocation0]]
  $region30: #{encoder_forward.6} parent=0
    _
  %s8 = ssub.s32 1, %s6
  %s9 = scalar_select 0, %s8, %s6
  // Predicated region
  $region2: #{encoder_forward.6} parent=0 // pred_check
    _
  $region3: #{encoder_forward.6} parent=0 // pred_check_branch
    %11 = sbr.rel (0) target = $region5
  $region4: #{encoder_forward.6} parent=0 // pred_region
    _
  $region5: #{encoder_forward.6} parent=0 // pred_fallthru
    _
  // Predicated region
  $region6: #{encoder_forward.6} parent=0 // pred_check
    _
  $region7: #{encoder_forward.6} parent=0 // pred_check_branch
    %13 = sbr.rel (0) target = $region9
  $region8: #{encoder_forward.6} parent=0 // pred_region
    _
  $region9: #{encoder_forward.6} parent=0 // pred_fallthru
    _
  // Predicated region
  $region10: #{encoder_forward.6} parent=0 // pred_check
    _
  $region11: #{encoder_forward.6} parent=0 // pred_check_branch
    %15 = sbr.rel (0) target = $region13
  $region12: #{encoder_forward.6} parent=0 // pred_region
    _
  $region13: #{encoder_forward.6} parent=0 // pred_fallthru
    _
  // Predicated region
  $region14: #{encoder_forward.6} parent=0 // pred_check
    _
  $region15: #{encoder_forward.6} parent=0 // pred_check_branch
    %17 = sbr.rel (0) target = $region17
  $region16: #{encoder_forward.6} parent=0 // pred_region
    _
  $region17: #{encoder_forward.6} parent=0 // pred_fallthru
    _
  // Predicated region
  $region18: #{encoder_forward.6} parent=0 // pred_check
    _
  $region19: #{encoder_forward.6} parent=0 // pred_check_branch
    %19 = sbr.rel (0) target = $region21
  $region20: #{encoder_forward.6} parent=0 // pred_region
    _
  $region21: #{encoder_forward.6} parent=0 // pred_fallthru
    _
  %v20 = vld [vmem:[%s0] sm:$0xff]
  %v21 = vld [vmem:[%s0 + $0x8] sm:$0xff]
  %v22 = vld [vmem:[%s0 + $0x10] sm:$0xff]
  %v23 = vld [vmem:[%s0 + $0x18] sm:$0xff]
  %v24 = vld [vmem:[%s0 + $0x20] sm:$0xff]
  %v25 = vld [vmem:[%s0 + $0x28] sm:$0xff]
  %v26 = vld [vmem:[%s0 + $0x30] sm:$0xff]
  %v27 = vld [vmem:[%s0 + $0x38] sm:$0xff]
  %v28 = vld [vmem:[%s0 + $0x40] sm:$0xff]
  %v29 = vld [vmem:[%s0 + $0x48] sm:$0xff]
  %v30 = vld [vmem:[%s0 + $0x50] sm:$0xff]
  %v31 = vld [vmem:[%s0 + $0x58] sm:$0xff]
  %v32 = vld [vmem:[%s0 + $0x60] sm:$0xff]
  %v33 = vld [vmem:[%s0 + $0x68] sm:$0xff]
  %v34 = vld [vmem:[%s0 + $0x70] sm:$0xff]
  %v35 = vld [vmem:[%s0 + $0x78] sm:$0xff]
  %v36 = vld [vmem:[%s0 + $0x80] sm:$0xff]
  %v37 = vld [vmem:[%s0 + $0x88] sm:$0xff]
  %v38 = vld [vmem:[%s0 + $0x90] sm:$0xff]
  %v39 = vld [vmem:[%s0 + $0x98] sm:$0xff]
  %v40 = vld [vmem:[%s0 + $0xa0] sm:$0xff]
  %v41 = vld [vmem:[%s0 + $0xa8] sm:$0xff]
  %v42 = vld [vmem:[%s0 + $0xb0] sm:$0xff]
  %v43 = vld [vmem:[%s0 + $0xb8] sm:$0xff]
  %v44 = vld [vmem:[%s0 + $0xc0] sm:$0xff]
  %v45 = vld [vmem:[%s0 + $0xc8] sm:$0xff]
  %v46 = vld [vmem:[%s0 + $0xd0] sm:$0xff]
  %v47 = vld [vmem:[%s0 + $0xd8] sm:$0xff]
  %v48 = vld [vmem:[%s0 + $0xe0] sm:$0xff]
  %v49 = vld [vmem:[%s0 + $0xe8] sm:$0xff]
  %v50 = vld [vmem:[%s0 + $0xf0] sm:$0xff]
  %v51 = vld [vmem:[%s0 + $0xf8] sm:$0xff]
  %v52 = vld [vmem:[%s0 + $0x100] sm:$0xff]
  %v53 = vld [vmem:[%s0 + $0x108] sm:$0xff]
  %v54 = vld [vmem:[%s0 + $0x110] sm:$0xff]
  %v55 = vld [vmem:[%s0 + $0x118] sm:$0xff]
  %v56 = vld [vmem:[%s0 + $0x120] sm:$0xff]
  %v57 = vld [vmem:[%s0 + $0x128] sm:$0xff]
  %v58 = vld [vmem:[%s0 + $0x130] sm:$0xff]
  %v59 = vld [vmem:[%s0 + $0x138] sm:$0xff]
  %v60 = vld [vmem:[%s0 + $0x140] sm:$0xff]
  %v61 = vld [vmem:[%s0 + $0x148] sm:$0xff]
  %v62 = vld [vmem:[%s0 + $0x150] sm:$0xff]
  %v63 = vld [vmem:[%s0 + $0x158] sm:$0xff]
  %v64 = vld [vmem:[%s0 + $0x160] sm:$0xff]
  %v65 = vld [vmem:[%s0 + $0x168] sm:$0xff]
  %v66 = vld [vmem:[%s0 + $0x170] sm:$0xff]
  %v67 = vld [vmem:[%s0 + $0x178] sm:$0xff]
  %v68 = vld [vmem:[%s0 + $0x180] sm:$0xff]
  %v69 = vld [vmem:[%s0 + $0x188] sm:$0xff]
  %v70 = vld [vmem:[%s0 + $0x190] sm:$0xff]
  %v71 = vld [vmem:[%s0 + $0x198] sm:$0xff]
  %v72 = vld [vmem:[%s0 + $0x1a0] sm:$0xff]
  %v73 = vld [vmem:[%s0 + $0x1a8] sm:$0xff]
  %v74 = vld [vmem:[%s0 + $0x1b0] sm:$0xff]
  %v75 = vld [vmem:[%s0 + $0x1b8] sm:$0xff]
  %v76 = vld [vmem:[%s0 + $0x1c0] sm:$0xff]
  %v77 = vld [vmem:[%s0 + $0x1c8] sm:$0xff]
  %v78 = vld [vmem:[%s0 + $0x1d0] sm:$0xff]
  %v79 = vld [vmem:[%s0 + $0x1d8] sm:$0xff]
  %v80 = vld [vmem:[%s0 + $0x1e0] sm:$0xff]
  %v81 = vld [vmem:[%s0 + $0x1e8] sm:$0xff]
  %v82 = vld [vmem:[%s0 + $0x1f0] sm:$0xff]
  %v83 = vld [vmem:[%s0 + $0x1f8] sm:$0xff]
  %v84 = vld [vmem:[%s0 + $0x200] sm:$0xff]
  %v85 = vld [vmem:[%s0 + $0x208] sm:$0xff]
  %v86 = vld [vmem:[%s0 + $0x210] sm:$0xff]
  %v87 = vld [vmem:[%s0 + $0x218] sm:$0xff]
  %v88 = vld [vmem:[%s0 + $0x220] sm:$0xff]
  %v89 = vld [vmem:[%s0 + $0x228] sm:$0xff]
  %v90 = vld [vmem:[%s0 + $0x230] sm:$0xff]
  %v91 = vld [vmem:[%s0 + $0x238] sm:$0xff]
  %v92 = vld [vmem:[%s0 + $0x240] sm:$0xff]
  %v93 = vld [vmem:[%s0 + $0x248] sm:$0xff]
  %v94 = vld [vmem:[%s0 + $0x250] sm:$0xff]
  %v95 = vld [vmem:[%s0 + $0x258] sm:$0xff]
  %v96 = vld [vmem:[%s0 + $0x260] sm:$0xff]
  %v97 = vld [vmem:[%s0 + $0x268] sm:$0xff]
  %v98 = vld [vmem:[%s0 + $0x270] sm:$0xff]
  %v99 = vld [vmem:[%s0 + $0x278] sm:$0xff]
  %v100 = vld [vmem:[%s0 + $0x280] sm:$0xff]
  %v101 = vld [vmem:[%s0 + $0x288] sm:$0xff]
  %v102 = vld [vmem:[%s0 + $0x290] sm:$0xff]
  %v103 = vld [vmem:[%s0 + $0x298] sm:$0xff]
  %v104 = vld [vmem:[%s0 + $0x2a0] sm:$0xff]
  %v105 = vld [vmem:[%s0 + $0x2a8] sm:$0xff]
  %v106 = vld [vmem:[%s0 + $0x2b0] sm:$0xff]
  %v107 = vld [vmem:[%s0 + $0x2b8] sm:$0xff]
  %v108 = vld [vmem:[%s0 + $0x2c0] sm:$0xff]
  %v109 = vld [vmem:[%s0 + $0x2c8] sm:$0xff]
  %v110 = vld [vmem:[%s0 + $0x2d0] sm:$0xff]
  %v111 = vld [vmem:[%s0 + $0x2d8] sm:$0xff]
  %v112 = vld [vmem:[%s0 + $0x2e0] sm:$0xff]
  %v113 = vld [vmem:[%s0 + $0x2e8] sm:$0xff]
  %v114 = vld [vmem:[%s0 + $0x2f0] sm:$0xff]
  %v115 = vld [vmem:[%s0 + $0x2f8] sm:$0xff]
  %v116 = vld [vmem:[%s0 + $0x300] sm:$0xff]
  %v117 = vld [vmem:[%s0 + $0x308] sm:$0xff]
  %v118 = vld [vmem:[%s0 + $0x310] sm:$0xff]
  %v119 = vld [vmem:[%s0 + $0x318] sm:$0xff]
  %v120 = vld [vmem:[%s0 + $0x320] sm:$0xff]
  %v121 = vld [vmem:[%s0 + $0x328] sm:$0xff]
  %v122 = vld [vmem:[%s0 + $0x330] sm:$0xff]
  %v123 = vld [vmem:[%s0 + $0x338] sm:$0xff]
  %v124 = vld [vmem:[%s0 + $0x340] sm:$0xff]
  %v125 = vld [vmem:[%s0 + $0x348] sm:$0xff]
  %v126 = vld [vmem:[%s0 + $0x350] sm:$0xff]
  %v127 = vld [vmem:[%s0 + $0x358] sm:$0xff]
  %v128 = vld [vmem:[%s0 + $0x360] sm:$0xff]
  %v129 = vld [vmem:[%s0 + $0x368] sm:$0xff]
  %v130 = vld [vmem:[%s0 + $0x370] sm:$0xff]
  %v131 = vld [vmem:[%s0 + $0x378] sm:$0xff]
  %v132 = vld [vmem:[%s0 + $0x380] sm:$0xff]
  %v133 = vld [vmem:[%s0 + $0x388] sm:$0xff]
  %v134 = vld [vmem:[%s0 + $0x390] sm:$0xff]
  %v135 = vld [vmem:[%s0 + $0x398] sm:$0xff]
  %v136 = vld [vmem:[%s0 + $0x3a0] sm:$0xff]
  %v137 = vld [vmem:[%s0 + $0x3a8] sm:$0xff]
  %v138 = vld [vmem:[%s0 + $0x3b0] sm:$0xff]
  %v139 = vld [vmem:[%s0 + $0x3b8] sm:$0xff]
  %v140 = vld [vmem:[%s0 + $0x3c0] sm:$0xff]
  %v141 = vld [vmem:[%s0 + $0x3c8] sm:$0xff]
  %v142 = vld [vmem:[%s0 + $0x3d0] sm:$0xff]
  %v143 = vld [vmem:[%s0 + $0x3d8] sm:$0xff]
  %v144 = vld [vmem:[%s0 + $0x3e0] sm:$0xff]
  %v145 = vld [vmem:[%s0 + $0x3e8] sm:$0xff]
  %v146 = vld [vmem:[%s0 + $0x3f0] sm:$0xff]
  %v147 = vld [vmem:[%s0 + $0x3f8] sm:$0xff]
  %v148 = vld [vmem:[%s0 + $0x400] sm:$0xff]
  %v149 = vld [vmem:[%s0 + $0x408] sm:$0xff]
  %v150 = vld [vmem:[%s0 + $0x410] sm:$0xff]
  %v151 = vld [vmem:[%s0 + $0x418] sm:$0xff]
  %v152 = vld [vmem:[%s0 + $0x420] sm:$0xff]
  %v153 = vld [vmem:[%s0 + $0x428] sm:$0xff]
  %v154 = vld [vmem:[%s0 + $0x430] sm:$0xff]
  %v155 = vld [vmem:[%s0 + $0x438] sm:$0xff]
  %v156 = vld [vmem:[%s0 + $0x440] sm:$0xff]
  %v157 = vld [vmem:[%s0 + $0x448] sm:$0xff]
  %v158 = vld [vmem:[%s0 + $0x450] sm:$0xff]
  %v159 = vld [vmem:[%s0 + $0x458] sm:$0xff]
  %v160 = vld [vmem:[%s0 + $0x460] sm:$0xff]
  %v161 = vld [vmem:[%s0 + $0x468] sm:$0xff]
  %v162 = vld [vmem:[%s0 + $0x470] sm:$0xff]
  %v163 = vld [vmem:[%s0 + $0x478] sm:$0xff]
  %v164 = vld [vmem:[%s0 + $0x480] sm:$0xff]
  %v165 = vld [vmem:[%s0 + $0x488] sm:$0xff]
  %v166 = vld [vmem:[%s0 + $0x490] sm:$0xff]
  %v167 = vld [vmem:[%s0 + $0x498] sm:$0xff]
  %v168 = vld [vmem:[%s0 + $0x4a0] sm:$0xff]
  %v169 = vld [vmem:[%s0 + $0x4a8] sm:$0xff]
  %v170 = vld [vmem:[%s0 + $0x4b0] sm:$0xff]
  %v171 = vld [vmem:[%s0 + $0x4b8] sm:$0xff]
  %v172 = vld [vmem:[%s0 + $0x4c0] sm:$0xff]
  %v173 = vld [vmem:[%s0 + $0x4c8] sm:$0xff]
  %v174 = vld [vmem:[%s0 + $0x4d0] sm:$0xff]
  %v175 = vld [vmem:[%s0 + $0x4d8] sm:$0xff]
  %v176 = vld [vmem:[%s0 + $0x4e0] sm:$0xff]
  %v177 = vld [vmem:[%s0 + $0x4e8] sm:$0xff]
  %v178 = vld [vmem:[%s0 + $0x4f0] sm:$0xff]
  %v179 = vld [vmem:[%s0 + $0x4f8] sm:$0xff]
  %v180 = vld [vmem:[%s0 + $0x500] sm:$0xff]
  %v181 = vld [vmem:[%s0 + $0x508] sm:$0xff]
  %v182 = vld [vmem:[%s0 + $0x510] sm:$0xff]
  %v183 = vld [vmem:[%s0 + $0x518] sm:$0xff]
  %v184 = vld [vmem:[%s0 + $0x520] sm:$0xff]
  %v185 = vld [vmem:[%s0 + $0x528] sm:$0xff]
  %v186 = vld [vmem:[%s0 + $0x530] sm:$0xff]
  %v187 = vld [vmem:[%s0 + $0x538] sm:$0xff]
  %v188 = vld [vmem:[%s0 + $0x540] sm:$0xff]
  %v189 = vld [vmem:[%s0 + $0x548] sm:$0xff]
  %v190 = vld [vmem:[%s0 + $0x550] sm:$0xff]
  %v191 = vld [vmem:[%s0 + $0x558] sm:$0xff]
  %v192 = vld [vmem:[%s0 + $0x560] sm:$0xff]
  %v193 = vld [vmem:[%s0 + $0x568] sm:$0xff]
  %v194 = vld [vmem:[%s0 + $0x570] sm:$0xff]
  %v195 = vld [vmem:[%s0 + $0x578] sm:$0xff]
  %v196 = vld [vmem:[%s0 + $0x580] sm:$0xff]
  %v197 = vld [vmem:[%s0 + $0x588] sm:$0xff]
  %v198 = vld [vmem:[%s0 + $0x590] sm:$0xff]
  %v199 = vld [vmem:[%s0 + $0x598] sm:$0xff]
  %v200 = vld [vmem:[%s0 + $0x5a0] sm:$0xff]
  %v201 = vld [vmem:[%s0 + $0x5a8] sm:$0xff]
  %v202 = vld [vmem:[%s0 + $0x5b0] sm:$0xff]
  %v203 = vld [vmem:[%s0 + $0x5b8] sm:$0xff]
  %v204 = vld [vmem:[%s0 + $0x5c0] sm:$0xff]
  %v205 = vld [vmem:[%s0 + $0x5c8] sm:$0xff]
  %v206 = vld [vmem:[%s0 + $0x5d0] sm:$0xff]
  %v207 = vld [vmem:[%s0 + $0x5d8] sm:$0xff]
  %v208 = vld [vmem:[%s0 + $0x5e0] sm:$0xff]
  %v209 = vld [vmem:[%s0 + $0x5e8] sm:$0xff]
  %v210 = vld [vmem:[%s0 + $0x5f0] sm:$0xff]
  %v211 = vld [vmem:[%s0 + $0x5f8] sm:$0xff]
  %v212 = vld [vmem:[%s0 + $0x600] sm:$0xff]
  %v213 = vld [vmem:[%s0 + $0x608] sm:$0xff]
  %v214 = vld [vmem:[%s0 + $0x610] sm:$0xff]
  %v215 = vld [vmem:[%s0 + $0x618] sm:$0xff]
  %v216 = vld [vmem:[%s0 + $0x620] sm:$0xff]
  %v217 = vld [vmem:[%s0 + $0x628] sm:$0xff]
  %v218 = vld [vmem:[%s0 + $0x630] sm:$0xff]
  %v219 = vld [vmem:[%s0 + $0x638] sm:$0xff]
  %v220 = vld [vmem:[%s0 + $0x640] sm:$0xff]
  %v221 = vld [vmem:[%s0 + $0x648] sm:$0xff]
  %v222 = vld [vmem:[%s0 + $0x650] sm:$0xff]
  %v223 = vld [vmem:[%s0 + $0x658] sm:$0xff]
  %v224 = vld [vmem:[%s0 + $0x660] sm:$0xff]
  %v225 = vld [vmem:[%s0 + $0x668] sm:$0xff]
  %v226 = vld [vmem:[%s0 + $0x670] sm:$0xff]
  %v227 = vld [vmem:[%s0 + $0x678] sm:$0xff]
  %v228 = vld [vmem:[%s0 + $0x680] sm:$0xff]
  %v229 = vld [vmem:[%s0 + $0x688] sm:$0xff]
  %v230 = vld [vmem:[%s0 + $0x690] sm:$0xff]
  %v231 = vld [vmem:[%s0 + $0x698] sm:$0xff]
  %v232 = vld [vmem:[%s0 + $0x6a0] sm:$0xff]
  %v233 = vld [vmem:[%s0 + $0x6a8] sm:$0xff]
  %v234 = vld [vmem:[%s0 + $0x6b0] sm:$0xff]
  %v235 = vld [vmem:[%s0 + $0x6b8] sm:$0xff]
  %v236 = vld [vmem:[%s0 + $0x6c0] sm:$0xff]
  %v237 = vld [vmem:[%s0 + $0x6c8] sm:$0xff]
  %v238 = vld [vmem:[%s0 + $0x6d0] sm:$0xff]
  %v239 = vld [vmem:[%s0 + $0x6d8] sm:$0xff]
  %v240 = vld [vmem:[%s0 + $0x6e0] sm:$0xff]
  %v241 = vld [vmem:[%s0 + $0x6e8] sm:$0xff]
  %v242 = vld [vmem:[%s0 + $0x6f0] sm:$0xff]
  %v243 = vld [vmem:[%s0 + $0x6f8] sm:$0xff]
  %v244 = vld [vmem:[%s0 + $0x700] sm:$0xff]
  %v245 = vld [vmem:[%s0 + $0x708] sm:$0xff]
  %v246 = vld [vmem:[%s0 + $0x710] sm:$0xff]
  %v247 = vld [vmem:[%s0 + $0x718] sm:$0xff]
  %v248 = vld [vmem:[%s0 + $0x720] sm:$0xff]
  %v249 = vld [vmem:[%s0 + $0x728] sm:$0xff]
  %v250 = vld [vmem:[%s0 + $0x730] sm:$0xff]
  %v251 = vld [vmem:[%s0 + $0x738] sm:$0xff]
  %v252 = vld [vmem:[%s0 + $0x740] sm:$0xff]
  %v253 = vld [vmem:[%s0 + $0x748] sm:$0xff]
  %v254 = vld [vmem:[%s0 + $0x750] sm:$0xff]
  %v255 = vld [vmem:[%s0 + $0x758] sm:$0xff]
  %v256 = vld [vmem:[%s0 + $0x760] sm:$0xff]
  %v257 = vld [vmem:[%s0 + $0x768] sm:$0xff]
  %v258 = vld [vmem:[%s0 + $0x770] sm:$0xff]
  %v259 = vld [vmem:[%s0 + $0x778] sm:$0xff]
  %v260 = vld [vmem:[%s0 + $0x780] sm:$0xff]
  %v261 = vld [vmem:[%s0 + $0x788] sm:$0xff]
  %v262 = vld [vmem:[%s0 + $0x790] sm:$0xff]
  %v263 = vld [vmem:[%s0 + $0x798] sm:$0xff]
  %v264 = vld [vmem:[%s0 + $0x7a0] sm:$0xff]
  %v265 = vld [vmem:[%s0 + $0x7a8] sm:$0xff]
  %v266 = vld [vmem:[%s0 + $0x7b0] sm:$0xff]
  %v267 = vld [vmem:[%s0 + $0x7b8] sm:$0xff]
  %v268 = vld [vmem:[%s0 + $0x7c0] sm:$0xff]
  %v269 = vld [vmem:[%s0 + $0x7c8] sm:$0xff]
  %v270 = vld [vmem:[%s0 + $0x7d0] sm:$0xff]
  %v271 = vld [vmem:[%s0 + $0x7d8] sm:$0xff]
  %v272 = vld [vmem:[%s0 + $0x7e0] sm:$0xff]
  %v273 = vld [vmem:[%s0 + $0x7e8] sm:$0xff]
  %v274 = vld [vmem:[%s0 + $0x7f0] sm:$0xff]
  %v275 = vld [vmem:[%s0 + $0x7f8] sm:$0xff]
  %v276 = vld [vmem:[%s0 + $0x800] sm:$0xff]
  %v277 = vld [vmem:[%s0 + $0x808] sm:$0xff]
  %v278 = vld [vmem:[%s0 + $0x810] sm:$0xff]
  %v279 = vld [vmem:[%s0 + $0x818] sm:$0xff]
  %v280 = vld [vmem:[%s0 + $0x820] sm:$0xff]
  %v281 = vld [vmem:[%s0 + $0x828] sm:$0xff]
  %v282 = vld [vmem:[%s0 + $0x830] sm:$0xff]
  %v283 = vld [vmem:[%s0 + $0x838] sm:$0xff]
  %v284 = vld [vmem:[%s0 + $0x840] sm:$0xff]
  %v285 = vld [vmem:[%s0 + $0x848] sm:$0xff]
  %v286 = vld [vmem:[%s0 + $0x850] sm:$0xff]
  %v287 = vld [vmem:[%s0 + $0x858] sm:$0xff]
  %v288 = vld [vmem:[%s0 + $0x860] sm:$0xff]
  %v289 = vld [vmem:[%s0 + $0x868] sm:$0xff]
  %v290 = vld [vmem:[%s0 + $0x870] sm:$0xff]
  %v291 = vld [vmem:[%s0 + $0x878] sm:$0xff]
  %v292 = vld [vmem:[%s0 + $0x880] sm:$0xff]
  %v293 = vld [vmem:[%s0 + $0x888] sm:$0xff]
  %v294 = vld [vmem:[%s0 + $0x890] sm:$0xff]
  %v295 = vld [vmem:[%s0 + $0x898] sm:$0xff]
  %v296 = vld [vmem:[%s0 + $0x8a0] sm:$0xff]
  %v297 = vld [vmem:[%s0 + $0x8a8] sm:$0xff]
  %v298 = vld [vmem:[%s0 + $0x8b0] sm:$0xff]
  %v299 = vld [vmem:[%s0 + $0x8b8] sm:$0xff]
  %v300 = vld [vmem:[%s0 + $0x8c0] sm:$0xff]
  %v301 = vld [vmem:[%s0 + $0x8c8] sm:$0xff]
  %v302 = vld [vmem:[%s0 + $0x8d0] sm:$0xff]
  %v303 = vld [vmem:[%s0 + $0x8d8] sm:$0xff]
  %v304 = vld [vmem:[%s0 + $0x8e0] sm:$0xff]
  %v305 = vld [vmem:[%s0 + $0x8e8] sm:$0xff]
  %v306 = vld [vmem:[%s0 + $0x8f0] sm:$0xff]
  %v307 = vld [vmem:[%s0 + $0x8f8] sm:$0xff]
  %v308 = vld [vmem:[%s0 + $0x900] sm:$0xff]
  %v309 = vld [vmem:[%s0 + $0x908] sm:$0xff]
  %v310 = vld [vmem:[%s0 + $0x910] sm:$0xff]
  %v311 = vld [vmem:[%s0 + $0x918] sm:$0xff]
  %v312 = vld [vmem:[%s0 + $0x920] sm:$0xff]
  %v313 = vld [vmem:[%s0 + $0x928] sm:$0xff]
  %v314 = vld [vmem:[%s0 + $0x930] sm:$0xff]
  %v315 = vld [vmem:[%s0 + $0x938] sm:$0xff]
  %v316 = vld [vmem:[%s0 + $0x940] sm:$0xff]
  %v317 = vld [vmem:[%s0 + $0x948] sm:$0xff]
  %v318 = vld [vmem:[%s0 + $0x950] sm:$0xff]
  %v319 = vld [vmem:[%s0 + $0x958] sm:$0xff]
  %v320 = vld [vmem:[%s0 + $0x960] sm:$0xff]
  %v321 = vld [vmem:[%s0 + $0x968] sm:$0xff]
  %v322 = vld [vmem:[%s0 + $0x970] sm:$0xff]
  %v323 = vld [vmem:[%s0 + $0x978] sm:$0xff]
  %v324 = vld [vmem:[%s0 + $0x980] sm:$0xff]
  %v325 = vld [vmem:[%s0 + $0x988] sm:$0xff]
  %v326 = vld [vmem:[%s0 + $0x990] sm:$0xff]
  %v327 = vld [vmem:[%s0 + $0x998] sm:$0xff]
  %v328 = vld [vmem:[%s0 + $0x9a0] sm:$0xff]
  %v329 = vld [vmem:[%s0 + $0x9a8] sm:$0xff]
  %v330 = vld [vmem:[%s0 + $0x9b0] sm:$0xff]
  %v331 = vld [vmem:[%s0 + $0x9b8] sm:$0xff]
  %v332 = vld [vmem:[%s0 + $0x9c0] sm:$0xff]
  %v333 = vld [vmem:[%s0 + $0x9c8] sm:$0xff]
  %v334 = vld [vmem:[%s0 + $0x9d0] sm:$0xff]
  %v335 = vld [vmem:[%s0 + $0x9d8] sm:$0xff]
  %v336 = vld [vmem:[%s0 + $0x9e0] sm:$0xff]
  %v337 = vld [vmem:[%s0 + $0x9e8] sm:$0xff]
  %v338 = vld [vmem:[%s0 + $0x9f0] sm:$0xff]
  %v339 = vld [vmem:[%s0 + $0x9f8] sm:$0xff]
  %v340 = vld [vmem:[%s0 + $0xa00] sm:$0xff]
  %v341 = vld [vmem:[%s0 + $0xa08] sm:$0xff]
  %v342 = vld [vmem:[%s0 + $0xa10] sm:$0xff]
  %v343 = vld [vmem:[%s0 + $0xa18] sm:$0xff]
  %v344 = vld [vmem:[%s0 + $0xa20] sm:$0xff]
  %v345 = vld [vmem:[%s0 + $0xa28] sm:$0xff]
  %v346 = vld [vmem:[%s0 + $0xa30] sm:$0xff]
  %v347 = vld [vmem:[%s0 + $0xa38] sm:$0xff]
  %v348 = vld [vmem:[%s0 + $0xa40] sm:$0xff]
  %v349 = vld [vmem:[%s0 + $0xa48] sm:$0xff]
  %v350 = vld [vmem:[%s0 + $0xa50] sm:$0xff]
  %v351 = vld [vmem:[%s0 + $0xa58] sm:$0xff]
  %v352 = vld [vmem:[%s0 + $0xa60] sm:$0xff]
  %v353 = vld [vmem:[%s0 + $0xa68] sm:$0xff]
  %v354 = vld [vmem:[%s0 + $0xa70] sm:$0xff]
  %v355 = vld [vmem:[%s0 + $0xa78] sm:$0xff]
  %v356 = vld [vmem:[%s0 + $0xa80] sm:$0xff]
  %v357 = vld [vmem:[%s0 + $0xa88] sm:$0xff]
  %v358 = vld [vmem:[%s0 + $0xa90] sm:$0xff]
  %v359 = vld [vmem:[%s0 + $0xa98] sm:$0xff]
  %v360 = vld [vmem:[%s0 + $0xaa0] sm:$0xff]
  %v361 = vld [vmem:[%s0 + $0xaa8] sm:$0xff]
  %v362 = vld [vmem:[%s0 + $0xab0] sm:$0xff]
  %v363 = vld [vmem:[%s0 + $0xab8] sm:$0xff]
  %v364 = vld [vmem:[%s0 + $0xac0] sm:$0xff]
  %v365 = vld [vmem:[%s0 + $0xac8] sm:$0xff]
  %v366 = vld [vmem:[%s0 + $0xad0] sm:$0xff]
  %v367 = vld [vmem:[%s0 + $0xad8] sm:$0xff]
  %v368 = vld [vmem:[%s0 + $0xae0] sm:$0xff]
  %v369 = vld [vmem:[%s0 + $0xae8] sm:$0xff]
  %v370 = vld [vmem:[%s0 + $0xaf0] sm:$0xff]
  %v371 = vld [vmem:[%s0 + $0xaf8] sm:$0xff]
  %v372 = vld [vmem:[%s0 + $0xb00] sm:$0xff]
  %v373 = vld [vmem:[%s0 + $0xb08] sm:$0xff]
  %v374 = vld [vmem:[%s0 + $0xb10] sm:$0xff]
  %v375 = vld [vmem:[%s0 + $0xb18] sm:$0xff]
  %v376 = vld [vmem:[%s0 + $0xb20] sm:$0xff]
  %v377 = vld [vmem:[%s0 + $0xb28] sm:$0xff]
  %v378 = vld [vmem:[%s0 + $0xb30] sm:$0xff]
  %v379 = vld [vmem:[%s0 + $0xb38] sm:$0xff]
  %v380 = vld [vmem:[%s0 + $0xb40] sm:$0xff]
  %v381 = vld [vmem:[%s0 + $0xb48] sm:$0xff]
  %v382 = vld [vmem:[%s0 + $0xb50] sm:$0xff]
  %v383 = vld [vmem:[%s0 + $0xb58] sm:$0xff]
  %v384 = vld [vmem:[%s0 + $0xb60] sm:$0xff]
  %v385 = vld [vmem:[%s0 + $0xb68] sm:$0xff]
  %v386 = vld [vmem:[%s0 + $0xb70] sm:$0xff]
  %v387 = vld [vmem:[%s0 + $0xb78] sm:$0xff]
  %v388 = vld [vmem:[%s0 + $0xb80] sm:$0xff]
  %v389 = vld [vmem:[%s0 + $0xb88] sm:$0xff]
  %v390 = vld [vmem:[%s0 + $0xb90] sm:$0xff]
  %v391 = vld [vmem:[%s0 + $0xb98] sm:$0xff]
  %v392 = vld [vmem:[%s0 + $0xba0] sm:$0xff]
  %v393 = vld [vmem:[%s0 + $0xba8] sm:$0xff]
  %v394 = vld [vmem:[%s0 + $0xbb0] sm:$0xff]
  %v395 = vld [vmem:[%s0 + $0xbb8] sm:$0xff]
  %v396 = vld [vmem:[%s0 + $0xbc0] sm:$0xff]
  %v397 = vld [vmem:[%s0 + $0xbc8] sm:$0xff]
  %v398 = vld [vmem:[%s0 + $0xbd0] sm:$0xff]
  %v399 = vld [vmem:[%s0 + $0xbd8] sm:$0xff]
  %v400 = vld [vmem:[%s0 + $0xbe0] sm:$0xff]
  %v401 = vld [vmem:[%s0 + $0xbe8] sm:$0xff]
  %v402 = vld [vmem:[%s0 + $0xbf0] sm:$0xff]
  %v403 = vld [vmem:[%s0 + $0xbf8] sm:$0xff]
  %v404 = vld [vmem:[%s0 + $0xc00] sm:$0xff]
  %v405 = vld [vmem:[%s0 + $0xc08] sm:$0xff]
  %v406 = vld [vmem:[%s0 + $0xc10] sm:$0xff]
  %v407 = vld [vmem:[%s0 + $0xc18] sm:$0xff]
  %v408 = vld [vmem:[%s0 + $0xc20] sm:$0xff]
  %v409 = vld [vmem:[%s0 + $0xc28] sm:$0xff]
  %v410 = vld [vmem:[%s0 + $0xc30] sm:$0xff]
  %v411 = vld [vmem:[%s0 + $0xc38] sm:$0xff]
  %v412 = vld [vmem:[%s0 + $0xc40] sm:$0xff]
  %v413 = vld [vmem:[%s0 + $0xc48] sm:$0xff]
  %v414 = vld [vmem:[%s0 + $0xc50] sm:$0xff]
  %v415 = vld [vmem:[%s0 + $0xc58] sm:$0xff]
  %v416 = vld [vmem:[%s0 + $0xc60] sm:$0xff]
  %v417 = vld [vmem:[%s0 + $0xc68] sm:$0xff]
  %v418 = vld [vmem:[%s0 + $0xc70] sm:$0xff]
  %v419 = vld [vmem:[%s0 + $0xc78] sm:$0xff]
  %v420 = vld [vmem:[%s0 + $0xc80] sm:$0xff]
  %v421 = vld [vmem:[%s0 + $0xc88] sm:$0xff]
  %v422 = vld [vmem:[%s0 + $0xc90] sm:$0xff]
  %v423 = vld [vmem:[%s0 + $0xc98] sm:$0xff]
  %v424 = vld [vmem:[%s0 + $0xca0] sm:$0xff]
  %v425 = vld [vmem:[%s0 + $0xca8] sm:$0xff]
  %v426 = vld [vmem:[%s0 + $0xcb0] sm:$0xff]
  %v427 = vld [vmem:[%s0 + $0xcb8] sm:$0xff]
  %v428 = vld [vmem:[%s0 + $0xcc0] sm:$0xff]
  %v429 = vld [vmem:[%s0 + $0xcc8] sm:$0xff]
  %v430 = vld [vmem:[%s0 + $0xcd0] sm:$0xff]
  %v431 = vld [vmem:[%s0 + $0xcd8] sm:$0xff]
  %v432 = vld [vmem:[%s0 + $0xce0] sm:$0xff]
  %v433 = vld [vmem:[%s0 + $0xce8] sm:$0xff]
  %v434 = vld [vmem:[%s0 + $0xcf0] sm:$0xff]
  %v435 = vld [vmem:[%s0 + $0xcf8] sm:$0xff]
  %v436 = vld [vmem:[%s0 + $0xd00] sm:$0xff]
  %v437 = vld [vmem:[%s0 + $0xd08] sm:$0xff]
  %v438 = vld [vmem:[%s0 + $0xd10] sm:$0xff]
  %v439 = vld [vmem:[%s0 + $0xd18] sm:$0xff]
  %v440 = vld [vmem:[%s0 + $0xd20] sm:$0xff]
  %v441 = vld [vmem:[%s0 + $0xd28] sm:$0xff]
  %v442 = vld [vmem:[%s0 + $0xd30] sm:$0xff]
  %v443 = vld [vmem:[%s0 + $0xd38] sm:$0xff]
  %v444 = vld [vmem:[%s0 + $0xd40] sm:$0xff]
  %v445 = vld [vmem:[%s0 + $0xd48] sm:$0xff]
  %v446 = vld [vmem:[%s0 + $0xd50] sm:$0xff]
  %v447 = vld [vmem:[%s0 + $0xd58] sm:$0xff]
  %v448 = vld [vmem:[%s0 + $0xd60] sm:$0xff]
  %v449 = vld [vmem:[%s0 + $0xd68] sm:$0xff]
  %v450 = vld [vmem:[%s0 + $0xd70] sm:$0xff]
  %v451 = vld [vmem:[%s0 + $0xd78] sm:$0xff]
  %v452 = vld [vmem:[%s0 + $0xd80] sm:$0xff]
  %v453 = vld [vmem:[%s0 + $0xd88] sm:$0xff]
  %v454 = vld [vmem:[%s0 + $0xd90] sm:$0xff]
  %v455 = vld [vmem:[%s0 + $0xd98] sm:$0xff]
  %v456 = vld [vmem:[%s0 + $0xda0] sm:$0xff]
  %v457 = vld [vmem:[%s0 + $0xda8] sm:$0xff]
  %v458 = vld [vmem:[%s0 + $0xdb0] sm:$0xff]
  %v459 = vld [vmem:[%s0 + $0xdb8] sm:$0xff]
  %v460 = vld [vmem:[%s0 + $0xdc0] sm:$0xff]
  %v461 = vld [vmem:[%s0 + $0xdc8] sm:$0xff]
  %v462 = vld [vmem:[%s0 + $0xdd0] sm:$0xff]
  %v463 = vld [vmem:[%s0 + $0xdd8] sm:$0xff]
  %v464 = vld [vmem:[%s0 + $0xde0] sm:$0xff]
  %v465 = vld [vmem:[%s0 + $0xde8] sm:$0xff]
  %v466 = vld [vmem:[%s0 + $0xdf0] sm:$0xff]
  %v467 = vld [vmem:[%s0 + $0xdf8] sm:$0xff]
  %v468 = vld [vmem:[%s0 + $0xe00] sm:$0xff]
  %v469 = vld [vmem:[%s0 + $0xe08] sm:$0xff]
  %v470 = vld [vmem:[%s0 + $0xe10] sm:$0xff]
  %v471 = vld [vmem:[%s0 + $0xe18] sm:$0xff]
  %v472 = vld [vmem:[%s0 + $0xe20] sm:$0xff]
  %v473 = vld [vmem:[%s0 + $0xe28] sm:$0xff]
  %v474 = vld [vmem:[%s0 + $0xe30] sm:$0xff]
  %v475 = vld [vmem:[%s0 + $0xe38] sm:$0xff]
  %v476 = vld [vmem:[%s0 + $0xe40] sm:$0xff]
  %v477 = vld [vmem:[%s0 + $0xe48] sm:$0xff]
  %v478 = vld [vmem:[%s0 + $0xe50] sm:$0xff]
  %v479 = vld [vmem:[%s0 + $0xe58] sm:$0xff]
  %v480 = vld [vmem:[%s0 + $0xe60] sm:$0xff]
  %v481 = vld [vmem:[%s0 + $0xe68] sm:$0xff]
  %v482 = vld [vmem:[%s0 + $0xe70] sm:$0xff]
  %v483 = vld [vmem:[%s0 + $0xe78] sm:$0xff]
  %v484 = vld [vmem:[%s0 + $0xe80] sm:$0xff]
  %v485 = vld [vmem:[%s0 + $0xe88] sm:$0xff]
  %v486 = vld [vmem:[%s0 + $0xe90] sm:$0xff]
  %v487 = vld [vmem:[%s0 + $0xe98] sm:$0xff]
  %v488 = vld [vmem:[%s0 + $0xea0] sm:$0xff]
  %v489 = vld [vmem:[%s0 + $0xea8] sm:$0xff]
  %v490 = vld [vmem:[%s0 + $0xeb0] sm:$0xff]
  %v491 = vld [vmem:[%s0 + $0xeb8] sm:$0xff]
  %v492 = vld [vmem:[%s0 + $0xec0] sm:$0xff]
  %v493 = vld [vmem:[%s0 + $0xec8] sm:$0xff]
  %v494 = vld [vmem:[%s0 + $0xed0] sm:$0xff]
  %v495 = vld [vmem:[%s0 + $0xed8] sm:$0xff]
  %v496 = vld [vmem:[%s0 + $0xee0] sm:$0xff]
  %v497 = vld [vmem:[%s0 + $0xee8] sm:$0xff]
  %v498 = vld [vmem:[%s0 + $0xef0] sm:$0xff]
  %v499 = vld [vmem:[%s0 + $0xef8] sm:$0xff]
  %v500 = vld [vmem:[%s0 + $0xf00] sm:$0xff]
  %v501 = vld [vmem:[%s0 + $0xf08] sm:$0xff]
  %v502 = vld [vmem:[%s0 + $0xf10] sm:$0xff]
  %v503 = vld [vmem:[%s0 + $0xf18] sm:$0xff]
  %v504 = vld [vmem:[%s0 + $0xf20] sm:$0xff]
  %v505 = vld [vmem:[%s0 + $0xf28] sm:$0xff]
  %v506 = vld [vmem:[%s0 + $0xf30] sm:$0xff]
  %v507 = vld [vmem:[%s0 + $0xf38] sm:$0xff]
  %v508 = vld [vmem:[%s0 + $0xf40] sm:$0xff]
  %v509 = vld [vmem:[%s0 + $0xf48] sm:$0xff]
  %v510 = vld [vmem:[%s0 + $0xf50] sm:$0xff]
  %v511 = vld [vmem:[%s0 + $0xf58] sm:$0xff]
  %v512 = vld [vmem:[%s0 + $0xf60] sm:$0xff]
  %v513 = vld [vmem:[%s0 + $0xf68] sm:$0xff]
  %v514 = vld [vmem:[%s0 + $0xf70] sm:$0xff]
  %v515 = vld [vmem:[%s0 + $0xf78] sm:$0xff]
  %v516 = vld [vmem:[%s0 + $0xf80] sm:$0xff]
  %v517 = vld [vmem:[%s0 + $0xf88] sm:$0xff]
  %v518 = vld [vmem:[%s0 + $0xf90] sm:$0xff]
  %v519 = vld [vmem:[%s0 + $0xf98] sm:$0xff]
  %v520 = vld [vmem:[%s0 + $0xfa0] sm:$0xff]
  %v521 = vld [vmem:[%s0 + $0xfa8] sm:$0xff]
  %v522 = vld [vmem:[%s0 + $0xfb0] sm:$0xff]
  %v523 = vld [vmem:[%s0 + $0xfb8] sm:$0xff]
  %v524 = vld [vmem:[%s0 + $0xfc0] sm:$0xff]
  %v525 = vld [vmem:[%s0 + $0xfc8] sm:$0xff]
  %v526 = vld [vmem:[%s0 + $0xfd0] sm:$0xff]
  %v527 = vld [vmem:[%s0 + $0xfd8] sm:$0xff]
  %v528 = vld [vmem:[%s0 + $0xfe0] sm:$0xff]
  %v529 = vld [vmem:[%s0 + $0xfe8] sm:$0xff]
  %v530 = vld [vmem:[%s0 + $0xff0] sm:$0xff]
  %v531 = vld [vmem:[%s0 + $0xff8] sm:$0xff]
  %v532 = vld [vmem:[%s0 + $0x1000] sm:$0xff]
  %v533 = vld [vmem:[%s0 + $0x1008] sm:$0xff]
  %v534 = vld [vmem:[%s0 + $0x1010] sm:$0xff]
  %v535 = vld [vmem:[%s0 + $0x1018] sm:$0xff]
  %v536 = vld [vmem:[%s0 + $0x1020] sm:$0xff]
  %v537 = vld [vmem:[%s0 + $0x1028] sm:$0xff]
  %v538 = vld [vmem:[%s0 + $0x1030] sm:$0xff]
  %v539 = vld [vmem:[%s0 + $0x1038] sm:$0xff]
  %v540 = vld [vmem:[%s0 + $0x1040] sm:$0xff]
  %v541 = vld [vmem:[%s0 + $0x1048] sm:$0xff]
  %v542 = vld [vmem:[%s0 + $0x1050] sm:$0xff]
  %v543 = vld [vmem:[%s0 + $0x1058] sm:$0xff]
  %v544 = vld [vmem:[%s0 + $0x1060] sm:$0xff]
  %v545 = vld [vmem:[%s0 + $0x1068] sm:$0xff]
  %v546 = vld [vmem:[%s0 + $0x1070] sm:$0xff]
  %v547 = vld [vmem:[%s0 + $0x1078] sm:$0xff]
  %v548 = vld [vmem:[%s0 + $0x1080] sm:$0xff]
  %v549 = vld [vmem:[%s0 + $0x1088] sm:$0xff]
  %v550 = vld [vmem:[%s0 + $0x1090] sm:$0xff]
  %v551 = vld [vmem:[%s0 + $0x1098] sm:$0xff]
  %v552 = vld [vmem:[%s0 + $0x10a0] sm:$0xff]
  %v553 = vld [vmem:[%s0 + $0x10a8] sm:$0xff]
  %v554 = vld [vmem:[%s0 + $0x10b0] sm:$0xff]
  %v555 = vld [vmem:[%s0 + $0x10b8] sm:$0xff]
  %v556 = vld [vmem:[%s0 + $0x10c0] sm:$0xff]
  %v557 = vld [vmem:[%s0 + $0x10c8] sm:$0xff]
  %v558 = vld [vmem:[%s0 + $0x10d0] sm:$0xff]
  %v559 = vld [vmem:[%s0 + $0x10d8] sm:$0xff]
  %v560 = vld [vmem:[%s0 + $0x10e0] sm:$0xff]
  %v561 = vld [vmem:[%s0 + $0x10e8] sm:$0xff]
  %v562 = vld [vmem:[%s0 + $0x10f0] sm:$0xff]
  %v563 = vld [vmem:[%s0 + $0x10f8] sm:$0xff]
  %v564 = vld [vmem:[%s0 + $0x1100] sm:$0xff]
  %v565 = vld [vmem:[%s0 + $0x1108] sm:$0xff]
  %v566 = vld [vmem:[%s0 + $0x1110] sm:$0xff]
  %v567 = vld [vmem:[%s0 + $0x1118] sm:$0xff]
  %v568 = vld [vmem:[%s0 + $0x1120] sm:$0xff]
  %v569 = vld [vmem:[%s0 + $0x1128] sm:$0xff]
  %v570 = vld [vmem:[%s0 + $0x1130] sm:$0xff]
  %v571 = vld [vmem:[%s0 + $0x1138] sm:$0xff]
  %v572 = vld [vmem:[%s0 + $0x1140] sm:$0xff]
  %v573 = vld [vmem:[%s0 + $0x1148] sm:$0xff]
  %v574 = vld [vmem:[%s0 + $0x1150] sm:$0xff]
  %v575 = vld [vmem:[%s0 + $0x1158] sm:$0xff]
  %v576 = vld [vmem:[%s0 + $0x1160] sm:$0xff]
  %v577 = vld [vmem:[%s0 + $0x1168] sm:$0xff]
  %v578 = vld [vmem:[%s0 + $0x1170] sm:$0xff]
  %v579 = vld [vmem:[%s0 + $0x1178] sm:$0xff]
  %v580 = vld [vmem:[%s0 + $0x1180] sm:$0xff]
  %v581 = vld [vmem:[%s0 + $0x1188] sm:$0xff]
  %v582 = vld [vmem:[%s0 + $0x1190] sm:$0xff]
  %v583 = vld [vmem:[%s0 + $0x1198] sm:$0xff]
  %v584 = vld [vmem:[%s0 + $0x11a0] sm:$0xff]
  %v585 = vld [vmem:[%s0 + $0x11a8] sm:$0xff]
  %v586 = vld [vmem:[%s0 + $0x11b0] sm:$0xff]
  %v587 = vld [vmem:[%s0 + $0x11b8] sm:$0xff]
  %v588 = vld [vmem:[%s0 + $0x11c0] sm:$0xff]
  %v589 = vld [vmem:[%s0 + $0x11c8] sm:$0xff]
  %v590 = vld [vmem:[%s0 + $0x11d0] sm:$0xff]
  %v591 = vld [vmem:[%s0 + $0x11d8] sm:$0xff]
  %v592 = vld [vmem:[%s0 + $0x11e0] sm:$0xff]
  %v593 = vld [vmem:[%s0 + $0x11e8] sm:$0xff]
  %v594 = vld [vmem:[%s0 + $0x11f0] sm:$0xff]
  %v595 = vld [vmem:[%s0 + $0x11f8] sm:$0xff]
  %v596 = vld [vmem:[%s0 + $0x1200] sm:$0xff]
  %v597 = vld [vmem:[%s0 + $0x1208] sm:$0xff]
  %v598 = vld [vmem:[%s0 + $0x1210] sm:$0xff]
  %v599 = vld [vmem:[%s0 + $0x1218] sm:$0xff]
  %v600 = vld [vmem:[%s0 + $0x1220] sm:$0xff]
  %v601 = vld [vmem:[%s0 + $0x1228] sm:$0xff]
  %v602 = vld [vmem:[%s0 + $0x1230] sm:$0xff]
  %v603 = vld [vmem:[%s0 + $0x1238] sm:$0xff]
  %v604 = vld [vmem:[%s0 + $0x1240] sm:$0xff]
  %v605 = vld [vmem:[%s0 + $0x1248] sm:$0xff]
  %v606 = vld [vmem:[%s0 + $0x1250] sm:$0xff]
  %v607 = vld [vmem:[%s0 + $0x1258] sm:$0xff]
  %v608 = vld [vmem:[%s0 + $0x1260] sm:$0xff]
  %v609 = vld [vmem:[%s0 + $0x1268] sm:$0xff]
  %v610 = vld [vmem:[%s0 + $0x1270] sm:$0xff]
  %v611 = vld [vmem:[%s0 + $0x1278] sm:$0xff]
  %v612 = vld [vmem:[%s0 + $0x1280] sm:$0xff]
  %v613 = vld [vmem:[%s0 + $0x1288] sm:$0xff]
  %v614 = vld [vmem:[%s0 + $0x1290] sm:$0xff]
  %v615 = vld [vmem:[%s0 + $0x1298] sm:$0xff]
  %v616 = vld [vmem:[%s0 + $0x12a0] sm:$0xff]
  %v617 = vld [vmem:[%s0 + $0x12a8] sm:$0xff]
  %v618 = vld [vmem:[%s0 + $0x12b0] sm:$0xff]
  %v619 = vld [vmem:[%s0 + $0x12b8] sm:$0xff]
  %v620 = vld [vmem:[%s0 + $0x12c0] sm:$0xff]
  %v621 = vld [vmem:[%s0 + $0x12c8] sm:$0xff]
  %v622 = vld [vmem:[%s0 + $0x12d0] sm:$0xff]
  %v623 = vld [vmem:[%s0 + $0x12d8] sm:$0xff]
  %v624 = vld [vmem:[%s0 + $0x12e0] sm:$0xff]
  %v625 = vld [vmem:[%s0 + $0x12e8] sm:$0xff]
  %v626 = vld [vmem:[%s0 + $0x12f0] sm:$0xff]
  %v627 = vld [vmem:[%s0 + $0x12f8] sm:$0xff]
  %v628 = vld [vmem:[%s0 + $0x1300] sm:$0xff]
  %v629 = vld [vmem:[%s0 + $0x1308] sm:$0xff]
  %v630 = vld [vmem:[%s0 + $0x1310] sm:$0xff]
  %v631 = vld [vmem:[%s0 + $0x1318] sm:$0xff]
  %v632 = vld [vmem:[%s0 + $0x1320] sm:$0xff]
  %v633 = vld [vmem:[%s0 + $0x1328] sm:$0xff]
  %v634 = vld [vmem:[%s0 + $0x1330] sm:$0xff]
  %v635 = vld [vmem:[%s0 + $0x1338] sm:$0xff]
  %v636 = vld [vmem:[%s0 + $0x1340] sm:$0xff]
  %v637 = vld [vmem:[%s0 + $0x1348] sm:$0xff]
  %v638 = vld [vmem:[%s0 + $0x1350] sm:$0xff]
  %v639 = vld [vmem:[%s0 + $0x1358] sm:$0xff]
  %v640 = vld [vmem:[%s0 + $0x1360] sm:$0xff]
  %v641 = vld [vmem:[%s0 + $0x1368] sm:$0xff]
  %v642 = vld [vmem:[%s0 + $0x1370] sm:$0xff]
  %v643 = vld [vmem:[%s0 + $0x1378] sm:$0xff]
  %v644 = vld [vmem:[%s0 + $0x1380] sm:$0xff]
  %v645 = vld [vmem:[%s0 + $0x1388] sm:$0xff]
  %v646 = vld [vmem:[%s0 + $0x1390] sm:$0xff]
  %v647 = vld [vmem:[%s0 + $0x1398] sm:$0xff]
  %v648 = vld [vmem:[%s0 + $0x13a0] sm:$0xff]
  %v649 = vld [vmem:[%s0 + $0x13a8] sm:$0xff]
  %v650 = vld [vmem:[%s0 + $0x13b0] sm:$0xff]
  %v651 = vld [vmem:[%s0 + $0x13b8] sm:$0xff]
  %v652 = vld [vmem:[%s0 + $0x13c0] sm:$0xff]
  %v653 = vld [vmem:[%s0 + $0x13c8] sm:$0xff]
  %v654 = vld [vmem:[%s0 + $0x13d0] sm:$0xff]
  %v655 = vld [vmem:[%s0 + $0x13d8] sm:$0xff]
  %v656 = vld [vmem:[%s0 + $0x13e0] sm:$0xff]
  %v657 = vld [vmem:[%s0 + $0x13e8] sm:$0xff]
  %v658 = vld [vmem:[%s0 + $0x13f0] sm:$0xff]
  %v659 = vld [vmem:[%s0 + $0x13f8] sm:$0xff]
  %v660 = vld [vmem:[%s0 + $0x1400] sm:$0xff]
  %v661 = vld [vmem:[%s0 + $0x1408] sm:$0xff]
  %v662 = vld [vmem:[%s0 + $0x1410] sm:$0xff]
  %v663 = vld [vmem:[%s0 + $0x1418] sm:$0xff]
  %v664 = vld [vmem:[%s0 + $0x1420] sm:$0xff]
  %v665 = vld [vmem:[%s0 + $0x1428] sm:$0xff]
  %v666 = vld [vmem:[%s0 + $0x1430] sm:$0xff]
  %v667 = vld [vmem:[%s0 + $0x1438] sm:$0xff]
  %v668 = vld [vmem:[%s0 + $0x1440] sm:$0xff]
  %v669 = vld [vmem:[%s0 + $0x1448] sm:$0xff]
  %v670 = vld [vmem:[%s0 + $0x1450] sm:$0xff]
  %v671 = vld [vmem:[%s0 + $0x1458] sm:$0xff]
  %v672 = vld [vmem:[%s0 + $0x1460] sm:$0xff]
  %v673 = vld [vmem:[%s0 + $0x1468] sm:$0xff]
  %v674 = vld [vmem:[%s0 + $0x1470] sm:$0xff]
  %v675 = vld [vmem:[%s0 + $0x1478] sm:$0xff]
  %v676 = vld [vmem:[%s0 + $0x1480] sm:$0xff]
  %v677 = vld [vmem:[%s0 + $0x1488] sm:$0xff]
  %v678 = vld [vmem:[%s0 + $0x1490] sm:$0xff]
  %v679 = vld [vmem:[%s0 + $0x1498] sm:$0xff]
  %v680 = vld [vmem:[%s0 + $0x14a0] sm:$0xff]
  %v681 = vld [vmem:[%s0 + $0x14a8] sm:$0xff]
  %v682 = vld [vmem:[%s0 + $0x14b0] sm:$0xff]
  %v683 = vld [vmem:[%s0 + $0x14b8] sm:$0xff]
  %v684 = vld [vmem:[%s0 + $0x14c0] sm:$0xff]
  %v685 = vld [vmem:[%s0 + $0x14c8] sm:$0xff]
  %v686 = vld [vmem:[%s0 + $0x14d0] sm:$0xff]
  %v687 = vld [vmem:[%s0 + $0x14d8] sm:$0xff]
  %v688 = vld [vmem:[%s0 + $0x14e0] sm:$0xff]
  %v689 = vld [vmem:[%s0 + $0x14e8] sm:$0xff]
  %v690 = vld [vmem:[%s0 + $0x14f0] sm:$0xff]
  %v691 = vld [vmem:[%s0 + $0x14f8] sm:$0xff]
  %v692 = vld [vmem:[%s0 + $0x1500] sm:$0xff]
  %v693 = vld [vmem:[%s0 + $0x1508] sm:$0xff]
  %v694 = vld [vmem:[%s0 + $0x1510] sm:$0xff]
  %v695 = vld [vmem:[%s0 + $0x1518] sm:$0xff]
  %v696 = vld [vmem:[%s0 + $0x1520] sm:$0xff]
  %v697 = vld [vmem:[%s0 + $0x1528] sm:$0xff]
  %v698 = vld [vmem:[%s0 + $0x1530] sm:$0xff]
  %v699 = vld [vmem:[%s0 + $0x1538] sm:$0xff]
  %v700 = vld [vmem:[%s0 + $0x1540] sm:$0xff]
  %v701 = vld [vmem:[%s0 + $0x1548] sm:$0xff]
  %v702 = vld [vmem:[%s0 + $0x1550] sm:$0xff]
  %v703 = vld [vmem:[%s0 + $0x1558] sm:$0xff]
  %v704 = vld [vmem:[%s0 + $0x1560] sm:$0xff]
  %v705 = vld [vmem:[%s0 + $0x1568] sm:$0xff]
  %v706 = vld [vmem:[%s0 + $0x1570] sm:$0xff]
  %v707 = vld [vmem:[%s0 + $0x1578] sm:$0xff]
  %v708 = vld [vmem:[%s0 + $0x1580] sm:$0xff]
  %v709 = vld [vmem:[%s0 + $0x1588] sm:$0xff]
  %v710 = vld [vmem:[%s0 + $0x1590] sm:$0xff]
  %v711 = vld [vmem:[%s0 + $0x1598] sm:$0xff]
  %v712 = vld [vmem:[%s0 + $0x15a0] sm:$0xff]
  %v713 = vld [vmem:[%s0 + $0x15a8] sm:$0xff]
  %v714 = vld [vmem:[%s0 + $0x15b0] sm:$0xff]
  %v715 = vld [vmem:[%s0 + $0x15b8] sm:$0xff]
  %v716 = vld [vmem:[%s0 + $0x15c0] sm:$0xff]
  %v717 = vld [vmem:[%s0 + $0x15c8] sm:$0xff]
  %v718 = vld [vmem:[%s0 + $0x15d0] sm:$0xff]
  %v719 = vld [vmem:[%s0 + $0x15d8] sm:$0xff]
  %v720 = vld [vmem:[%s0 + $0x15e0] sm:$0xff]
  %v721 = vld [vmem:[%s0 + $0x15e8] sm:$0xff]
  %v722 = vld [vmem:[%s0 + $0x15f0] sm:$0xff]
  %v723 = vld [vmem:[%s0 + $0x15f8] sm:$0xff]
  %v724 = vld [vmem:[%s0 + $0x1600] sm:$0xff]
  %v725 = vld [vmem:[%s0 + $0x1608] sm:$0xff]
  %v726 = vld [vmem:[%s0 + $0x1610] sm:$0xff]
  %v727 = vld [vmem:[%s0 + $0x1618] sm:$0xff]
  %v728 = vld [vmem:[%s0 + $0x1620] sm:$0xff]
  %v729 = vld [vmem:[%s0 + $0x1628] sm:$0xff]
  %v730 = vld [vmem:[%s0 + $0x1630] sm:$0xff]
  %v731 = vld [vmem:[%s0 + $0x1638] sm:$0xff]
  %v732 = vld [vmem:[%s0 + $0x1640] sm:$0xff]
  %v733 = vld [vmem:[%s0 + $0x1648] sm:$0xff]
  %v734 = vld [vmem:[%s0 + $0x1650] sm:$0xff]
  %v735 = vld [vmem:[%s0 + $0x1658] sm:$0xff]
  %v736 = vld [vmem:[%s0 + $0x1660] sm:$0xff]
  %v737 = vld [vmem:[%s0 + $0x1668] sm:$0xff]
  %v738 = vld [vmem:[%s0 + $0x1670] sm:$0xff]
  %v739 = vld [vmem:[%s0 + $0x1678] sm:$0xff]
  %v740 = vld [vmem:[%s0 + $0x1680] sm:$0xff]
  %v741 = vld [vmem:[%s0 + $0x1688] sm:$0xff]
  %v742 = vld [vmem:[%s0 + $0x1690] sm:$0xff]
  %v743 = vld [vmem:[%s0 + $0x1698] sm:$0xff]
  %v744 = vld [vmem:[%s0 + $0x16a0] sm:$0xff]
  %v745 = vld [vmem:[%s0 + $0x16a8] sm:$0xff]
  %v746 = vld [vmem:[%s0 + $0x16b0] sm:$0xff]
  %v747 = vld [vmem:[%s0 + $0x16b8] sm:$0xff]
  %v748 = vld [vmem:[%s0 + $0x16c0] sm:$0xff]
  %v749 = vld [vmem:[%s0 + $0x16c8] sm:$0xff]
  %v750 = vld [vmem:[%s0 + $0x16d0] sm:$0xff]
  %v751 = vld [vmem:[%s0 + $0x16d8] sm:$0xff]
  %v752 = vld [vmem:[%s0 + $0x16e0] sm:$0xff]
  %v753 = vld [vmem:[%s0 + $0x16e8] sm:$0xff]
  %v754 = vld [vmem:[%s0 + $0x16f0] sm:$0xff]
  %v755 = vld [vmem:[%s0 + $0x16f8] sm:$0xff]
  %v756 = vld [vmem:[%s0 + $0x1700] sm:$0xff]
  %v757 = vld [vmem:[%s0 + $0x1708] sm:$0xff]
  %v758 = vld [vmem:[%s0 + $0x1710] sm:$0xff]
  %v759 = vld [vmem:[%s0 + $0x1718] sm:$0xff]
  %v760 = vld [vmem:[%s0 + $0x1720] sm:$0xff]
  %v761 = vld [vmem:[%s0 + $0x1728] sm:$0xff]
  %v762 = vld [vmem:[%s0 + $0x1730] sm:$0xff]
  %v763 = vld [vmem:[%s0 + $0x1738] sm:$0xff]
  %v764 = vld [vmem:[%s0 + $0x1740] sm:$0xff]
  %v765 = vld [vmem:[%s0 + $0x1748] sm:$0xff]
  %v766 = vld [vmem:[%s0 + $0x1750] sm:$0xff]
  %v767 = vld [vmem:[%s0 + $0x1758] sm:$0xff]
  %v768 = vld [vmem:[%s0 + $0x1760] sm:$0xff]
  %v769 = vld [vmem:[%s0 + $0x1768] sm:$0xff]
  %v770 = vld [vmem:[%s0 + $0x1770] sm:$0xff]
  %v771 = vld [vmem:[%s0 + $0x1778] sm:$0xff]
  %v772 = vld [vmem:[%s0 + $0x1780] sm:$0xff]
  %v773 = vld [vmem:[%s0 + $0x1788] sm:$0xff]
  %v774 = vld [vmem:[%s0 + $0x1790] sm:$0xff]
  %v775 = vld [vmem:[%s0 + $0x1798] sm:$0xff]
  %v776 = vld [vmem:[%s0 + $0x17a0] sm:$0xff]
  %v777 = vld [vmem:[%s0 + $0x17a8] sm:$0xff]
  %v778 = vld [vmem:[%s0 + $0x17b0] sm:$0xff]
  %v779 = vld [vmem:[%s0 + $0x17b8] sm:$0xff]
  %v780 = vld [vmem:[%s0 + $0x17c0] sm:$0xff]
  %v781 = vld [vmem:[%s0 + $0x17c8] sm:$0xff]
  %v782 = vld [vmem:[%s0 + $0x17d0] sm:$0xff]
  %v783 = vld [vmem:[%s0 + $0x17d8] sm:$0xff]
  %v784 = vld [vmem:[%s0 + $0x17e0] sm:$0xff]
  %v785 = vld [vmem:[%s0 + $0x17e8] sm:$0xff]
  %v786 = vld [vmem:[%s0 + $0x17f0] sm:$0xff]
  %v787 = vld [vmem:[%s0 + $0x17f8] sm:$0xff]
  %v788 = vld [vmem:[%s0 + $0x1800] sm:$0xff]
  %v789 = vld [vmem:[%s0 + $0x1808] sm:$0xff]
  %v790 = vld [vmem:[%s0 + $0x1810] sm:$0xff]
  %v791 = vld [vmem:[%s0 + $0x1818] sm:$0xff]
  %v792 = vld [vmem:[%s0 + $0x1820] sm:$0xff]
  %v793 = vld [vmem:[%s0 + $0x1828] sm:$0xff]
  %v794 = vld [vmem:[%s0 + $0x1830] sm:$0xff]
  %v795 = vld [vmem:[%s0 + $0x1838] sm:$0xff]
  %v796 = vld [vmem:[%s0 + $0x1840] sm:$0xff]
  %v797 = vld [vmem:[%s0 + $0x1848] sm:$0xff]
  %v798 = vld [vmem:[%s0 + $0x1850] sm:$0xff]
  %v799 = vld [vmem:[%s0 + $0x1858] sm:$0xff]
  %v800 = vld [vmem:[%s0 + $0x1860] sm:$0xff]
  %v801 = vld [vmem:[%s0 + $0x1868] sm:$0xff]
  %v802 = vld [vmem:[%s0 + $0x1870] sm:$0xff]
  %v803 = vld [vmem:[%s0 + $0x1878] sm:$0xff]
  %v804 = vld [vmem:[%s0 + $0x1880] sm:$0xff]
  %v805 = vld [vmem:[%s0 + $0x1888] sm:$0xff]
  %v806 = vld [vmem:[%s0 + $0x1890] sm:$0xff]
  %v807 = vld [vmem:[%s0 + $0x1898] sm:$0xff]
  %v808 = vld [vmem:[%s0 + $0x18a0] sm:$0xff]
  %v809 = vld [vmem:[%s0 + $0x18a8] sm:$0xff]
  %v810 = vld [vmem:[%s0 + $0x18b0] sm:$0xff]
  %v811 = vld [vmem:[%s0 + $0x18b8] sm:$0xff]
  %v812 = vld [vmem:[%s0 + $0x18c0] sm:$0xff]
  %v813 = vld [vmem:[%s0 + $0x18c8] sm:$0xff]
  %v814 = vld [vmem:[%s0 + $0x18d0] sm:$0xff]
  %v815 = vld [vmem:[%s0 + $0x18d8] sm:$0xff]
  %v816 = vld [vmem:[%s0 + $0x18e0] sm:$0xff]
  %v817 = vld [vmem:[%s0 + $0x18e8] sm:$0xff]
  %v818 = vld [vmem:[%s0 + $0x18f0] sm:$0xff]
  %v819 = vld [vmem:[%s0 + $0x18f8] sm:$0xff]
  %v820 = vld [vmem:[%s0 + $0x1900] sm:$0xff]
  %v821 = vld [vmem:[%s0 + $0x1908] sm:$0xff]
  %v822 = vld [vmem:[%s0 + $0x1910] sm:$0xff]
  %v823 = vld [vmem:[%s0 + $0x1918] sm:$0xff]
  %v824 = vld [vmem:[%s0 + $0x1920] sm:$0xff]
  %v825 = vld [vmem:[%s0 + $0x1928] sm:$0xff]
  %v826 = vld [vmem:[%s0 + $0x1930] sm:$0xff]
  %v827 = vld [vmem:[%s0 + $0x1938] sm:$0xff]
  %v828 = vld [vmem:[%s0 + $0x1940] sm:$0xff]
  %v829 = vld [vmem:[%s0 + $0x1948] sm:$0xff]
  %v830 = vld [vmem:[%s0 + $0x1950] sm:$0xff]
  %v831 = vld [vmem:[%s0 + $0x1958] sm:$0xff]
  %v832 = vld [vmem:[%s0 + $0x1960] sm:$0xff]
  %v833 = vld [vmem:[%s0 + $0x1968] sm:$0xff]
  %v834 = vld [vmem:[%s0 + $0x1970] sm:$0xff]
  %v835 = vld [vmem:[%s0 + $0x1978] sm:$0xff]
  %v836 = vld [vmem:[%s0 + $0x1980] sm:$0xff]
  %v837 = vld [vmem:[%s0 + $0x1988] sm:$0xff]
  %v838 = vld [vmem:[%s0 + $0x1990] sm:$0xff]
  %v839 = vld [vmem:[%s0 + $0x1998] sm:$0xff]
  %v840 = vld [vmem:[%s0 + $0x19a0] sm:$0xff]
  %v841 = vld [vmem:[%s0 + $0x19a8] sm:$0xff]
  %v842 = vld [vmem:[%s0 + $0x19b0] sm:$0xff]
  %v843 = vld [vmem:[%s0 + $0x19b8] sm:$0xff]
  %v844 = vld [vmem:[%s0 + $0x19c0] sm:$0xff]
  %v845 = vld [vmem:[%s0 + $0x19c8] sm:$0xff]
  %v846 = vld [vmem:[%s0 + $0x19d0] sm:$0xff]
  %v847 = vld [vmem:[%s0 + $0x19d8] sm:$0xff]
  %v848 = vld [vmem:[%s0 + $0x19e0] sm:$0xff]
  %v849 = vld [vmem:[%s0 + $0x19e8] sm:$0xff]
  %v850 = vld [vmem:[%s0 + $0x19f0] sm:$0xff]
  %v851 = vld [vmem:[%s0 + $0x19f8] sm:$0xff]
  %v852 = vld [vmem:[%s0 + $0x1a00] sm:$0xff]
  %v853 = vld [vmem:[%s0 + $0x1a08] sm:$0xff]
  %v854 = vld [vmem:[%s0 + $0x1a10] sm:$0xff]
  %v855 = vld [vmem:[%s0 + $0x1a18] sm:$0xff]
  %v856 = vld [vmem:[%s0 + $0x1a20] sm:$0xff]
  %v857 = vld [vmem:[%s0 + $0x1a28] sm:$0xff]
  %v858 = vld [vmem:[%s0 + $0x1a30] sm:$0xff]
  %v859 = vld [vmem:[%s0 + $0x1a38] sm:$0xff]
  %v860 = vld [vmem:[%s0 + $0x1a40] sm:$0xff]
  %v861 = vld [vmem:[%s0 + $0x1a48] sm:$0xff]
  %v862 = vld [vmem:[%s0 + $0x1a50] sm:$0xff]
  %v863 = vld [vmem:[%s0 + $0x1a58] sm:$0xff]
  %v864 = vld [vmem:[%s0 + $0x1a60] sm:$0xff]
  %v865 = vld [vmem:[%s0 + $0x1a68] sm:$0xff]
  %v866 = vld [vmem:[%s0 + $0x1a70] sm:$0xff]
  %v867 = vld [vmem:[%s0 + $0x1a78] sm:$0xff]
  %v868 = vld [vmem:[%s0 + $0x1a80] sm:$0xff]
  %v869 = vld [vmem:[%s0 + $0x1a88] sm:$0xff]
  %v870 = vld [vmem:[%s0 + $0x1a90] sm:$0xff]
  %v871 = vld [vmem:[%s0 + $0x1a98] sm:$0xff]
  %v872 = vld [vmem:[%s0 + $0x1aa0] sm:$0xff]
  %v873 = vld [vmem:[%s0 + $0x1aa8] sm:$0xff]
  %v874 = vld [vmem:[%s0 + $0x1ab0] sm:$0xff]
  %v875 = vld [vmem:[%s0 + $0x1ab8] sm:$0xff]
  %v876 = vld [vmem:[%s0 + $0x1ac0] sm:$0xff]
  %v877 = vld [vmem:[%s0 + $0x1ac8] sm:$0xff]
  %v878 = vld [vmem:[%s0 + $0x1ad0] sm:$0xff]
  %v879 = vld [vmem:[%s0 + $0x1ad8] sm:$0xff]
  %v880 = vld [vmem:[%s0 + $0x1ae0] sm:$0xff]
  %v881 = vld [vmem:[%s0 + $0x1ae8] sm:$0xff]
  %v882 = vld [vmem:[%s0 + $0x1af0] sm:$0xff]
  %v883 = vld [vmem:[%s0 + $0x1af8] sm:$0xff]
  %v884 = vld [vmem:[%s0 + $0x1b00] sm:$0xff]
  %v885 = vld [vmem:[%s0 + $0x1b08] sm:$0xff]
  %v886 = vld [vmem:[%s0 + $0x1b10] sm:$0xff]
  %v887 = vld [vmem:[%s0 + $0x1b18] sm:$0xff]
  %v888 = vld [vmem:[%s0 + $0x1b20] sm:$0xff]
  %v889 = vld [vmem:[%s0 + $0x1b28] sm:$0xff]
  %v890 = vld [vmem:[%s0 + $0x1b30] sm:$0xff]
  %v891 = vld [vmem:[%s0 + $0x1b38] sm:$0xff]
  %v892 = vld [vmem:[%s0 + $0x1b40] sm:$0xff]
  %v893 = vld [vmem:[%s0 + $0x1b48] sm:$0xff]
  %v894 = vld [vmem:[%s0 + $0x1b50] sm:$0xff]
  %v895 = vld [vmem:[%s0 + $0x1b58] sm:$0xff]
  %v896 = vld [vmem:[%s0 + $0x1b60] sm:$0xff]
  %v897 = vld [vmem:[%s0 + $0x1b68] sm:$0xff]
  %v898 = vld [vmem:[%s0 + $0x1b70] sm:$0xff]
  %v899 = vld [vmem:[%s0 + $0x1b78] sm:$0xff]
  %v900 = vld [vmem:[%s0 + $0x1b80] sm:$0xff]
  %v901 = vld [vmem:[%s0 + $0x1b88] sm:$0xff]
  %v902 = vld [vmem:[%s0 + $0x1b90] sm:$0xff]
  %v903 = vld [vmem:[%s0 + $0x1b98] sm:$0xff]
  %v904 = vld [vmem:[%s0 + $0x1ba0] sm:$0xff]
  %v905 = vld [vmem:[%s0 + $0x1ba8] sm:$0xff]
  %v906 = vld [vmem:[%s0 + $0x1bb0] sm:$0xff]
  %v907 = vld [vmem:[%s0 + $0x1bb8] sm:$0xff]
  %v908 = vld [vmem:[%s0 + $0x1bc0] sm:$0xff]
  %v909 = vld [vmem:[%s0 + $0x1bc8] sm:$0xff]
  %v910 = vld [vmem:[%s0 + $0x1bd0] sm:$0xff]
  %v911 = vld [vmem:[%s0 + $0x1bd8] sm:$0xff]
  %v912 = vld [vmem:[%s0 + $0x1be0] sm:$0xff]
  %v913 = vld [vmem:[%s0 + $0x1be8] sm:$0xff]
  %v914 = vld [vmem:[%s0 + $0x1bf0] sm:$0xff]
  %v915 = vld [vmem:[%s0 + $0x1bf8] sm:$0xff]
  %v916 = vld [vmem:[%s0 + $0x1c00] sm:$0xff]
  %v917 = vld [vmem:[%s0 + $0x1c08] sm:$0xff]
  %v918 = vld [vmem:[%s0 + $0x1c10] sm:$0xff]
  %v919 = vld [vmem:[%s0 + $0x1c18] sm:$0xff]
  %v920 = vld [vmem:[%s1] sm:$0xff]
  %v921 = vld [vmem:[%s1 + $0x8] sm:$0xff]
  %v922 = vld [vmem:[%s1 + $0x10] sm:$0xff]
  %v923 = vld [vmem:[%s1 + $0x18] sm:$0xff]
  %v924 = vld [vmem:[%s1 + $0x20] sm:$0xff]
  %v925 = vld [vmem:[%s1 + $0x28] sm:$0xff]
  %v926 = vld [vmem:[%s1 + $0x30] sm:$0xff]
  %v927 = vld [vmem:[%s1 + $0x38] sm:$0xff]
  %v928 = vld [vmem:[%s1 + $0x40] sm:$0xff]
  %v929 = vld [vmem:[%s1 + $0x48] sm:$0xff]
  %v930 = vld [vmem:[%s1 + $0x50] sm:$0xff]
  %v931 = vld [vmem:[%s1 + $0x58] sm:$0xff]
  %v932 = vld [vmem:[%s1 + $0x60] sm:$0xff]
  %v933 = vld [vmem:[%s1 + $0x68] sm:$0xff]
  %v934 = vld [vmem:[%s1 + $0x70] sm:$0xff]
  %v935 = vld [vmem:[%s1 + $0x78] sm:$0xff]
  %v936 = vld [vmem:[%s1 + $0x80] sm:$0xff]
  %v937 = vld [vmem:[%s1 + $0x88] sm:$0xff]
  %v938 = vld [vmem:[%s1 + $0x90] sm:$0xff]
  %v939 = vld [vmem:[%s1 + $0x98] sm:$0xff]
  %v940 = vld [vmem:[%s1 + $0xa0] sm:$0xff]
  %v941 = vld [vmem:[%s1 + $0xa8] sm:$0xff]
  %v942 = vld [vmem:[%s1 + $0xb0] sm:$0xff]
  %v943 = vld [vmem:[%s1 + $0xb8] sm:$0xff]
  %v944 = vld [vmem:[%s1 + $0xc0] sm:$0xff]
  %v945 = vld [vmem:[%s1 + $0xc8] sm:$0xff]
  %v946 = vld [vmem:[%s1 + $0xd0] sm:$0xff]
  %v947 = vld [vmem:[%s1 + $0xd8] sm:$0xff]
  %v948 = vld [vmem:[%s1 + $0xe0] sm:$0xff]
  %v949 = vld [vmem:[%s1 + $0xe8] sm:$0xff]
  %v950 = vld [vmem:[%s1 + $0xf0] sm:$0xff]
  %v951 = vld [vmem:[%s1 + $0xf8] sm:$0xff]
  %v952 = vld [vmem:[%s1 + $0x100] sm:$0xff]
  %v953 = vld [vmem:[%s1 + $0x108] sm:$0xff]
  %v954 = vld [vmem:[%s1 + $0x110] sm:$0xff]
  %v955 = vld [vmem:[%s1 + $0x118] sm:$0xff]
  %v956 = vld [vmem:[%s1 + $0x120] sm:$0xff]
  %v957 = vld [vmem:[%s1 + $0x128] sm:$0xff]
  %v958 = vld [vmem:[%s1 + $0x130] sm:$0xff]
  %v959 = vld [vmem:[%s1 + $0x138] sm:$0xff]
  %v960 = vld [vmem:[%s1 + $0x140] sm:$0xff]
  %v961 = vld [vmem:[%s1 + $0x148] sm:$0xff]
  %v962 = vld [vmem:[%s1 + $0x150] sm:$0xff]
  %v963 = vld [vmem:[%s1 + $0x158] sm:$0xff]
  %v964 = vld [vmem:[%s1 + $0x160] sm:$0xff]
  %v965 = vld [vmem:[%s1 + $0x168] sm:$0xff]
  %v966 = vld [vmem:[%s1 + $0x170] sm:$0xff]
  %v967 = vld [vmem:[%s1 + $0x178] sm:$0xff]
  %v968 = vld [vmem:[%s1 + $0x180] sm:$0xff]
  %v969 = vld [vmem:[%s1 + $0x188] sm:$0xff]
  %v970 = vld [vmem:[%s1 + $0x190] sm:$0xff]
  %v971 = vld [vmem:[%s1 + $0x198] sm:$0xff]
  %v972 = vld [vmem:[%s1 + $0x1a0] sm:$0xff]
  %v973 = vld [vmem:[%s1 + $0x1a8] sm:$0xff]
  %v974 = vld [vmem:[%s1 + $0x1b0] sm:$0xff]
  %v975 = vld [vmem:[%s1 + $0x1b8] sm:$0xff]
  %v976 = vld [vmem:[%s1 + $0x1c0] sm:$0xff]
  %v977 = vld [vmem:[%s1 + $0x1c8] sm:$0xff]
  %v978 = vld [vmem:[%s1 + $0x1d0] sm:$0xff]
  %v979 = vld [vmem:[%s1 + $0x1d8] sm:$0xff]
  %v980 = vld [vmem:[%s1 + $0x1e0] sm:$0xff]
  %v981 = vld [vmem:[%s1 + $0x1e8] sm:$0xff]
  %v982 = vld [vmem:[%s1 + $0x1f0] sm:$0xff]
  %v983 = vld [vmem:[%s1 + $0x1f8] sm:$0xff]
  %v984 = vld [vmem:[%s1 + $0x200] sm:$0xff]
  %v985 = vld [vmem:[%s1 + $0x208] sm:$0xff]
  %v986 = vld [vmem:[%s1 + $0x210] sm:$0xff]
  %v987 = vld [vmem:[%s1 + $0x218] sm:$0xff]
  %v988 = vld [vmem:[%s1 + $0x220] sm:$0xff]
  %v989 = vld [vmem:[%s1 + $0x228] sm:$0xff]
  %v990 = vld [vmem:[%s1 + $0x230] sm:$0xff]
  %v991 = vld [vmem:[%s1 + $0x238] sm:$0xff]
  %v992 = vld [vmem:[%s1 + $0x240] sm:$0xff]
  %v993 = vld [vmem:[%s1 + $0x248] sm:$0xff]
  %v994 = vld [vmem:[%s1 + $0x250] sm:$0xff]
  %v995 = vld [vmem:[%s1 + $0x258] sm:$0xff]
  %v996 = vld [vmem:[%s1 + $0x260] sm:$0xff]
  %v997 = vld [vmem:[%s1 + $0x268] sm:$0xff]
  %v998 = vld [vmem:[%s1 + $0x270] sm:$0xff]
  %v999 = vld [vmem:[%s1 + $0x278] sm:$0xff]
  %v1000 = vld [vmem:[%s1 + $0x280] sm:$0xff]
  %v1001 = vld [vmem:[%s1 + $0x288] sm:$0xff]
  %v1002 = vld [vmem:[%s1 + $0x290] sm:$0xff]
  %v1003 = vld [vmem:[%s1 + $0x298] sm:$0xff]
  %v1004 = vld [vmem:[%s1 + $0x2a0] sm:$0xff]
  %v1005 = vld [vmem:[%s1 + $0x2a8] sm:$0xff]
  %v1006 = vld [vmem:[%s1 + $0x2b0] sm:$0xff]
  %v1007 = vld [vmem:[%s1 + $0x2b8] sm:$0xff]
  %v1008 = vld [vmem:[%s1 + $0x2c0] sm:$0xff]
  %v1009 = vld [vmem:[%s1 + $0x2c8] sm:$0xff]
  %v1010 = vld [vmem:[%s1 + $0x2d0] sm:$0xff]
  %v1011 = vld [vmem:[%s1 + $0x2d8] sm:$0xff]
  %v1012 = vld [vmem:[%s1 + $0x2e0] sm:$0xff]
  %v1013 = vld [vmem:[%s1 + $0x2e8] sm:$0xff]
  %v1014 = vld [vmem:[%s1 + $0x2f0] sm:$0xff]
  %v1015 = vld [vmem:[%s1 + $0x2f8] sm:$0xff]
  %v1016 = vld [vmem:[%s1 + $0x300] sm:$0xff]
  %v1017 = vld [vmem:[%s1 + $0x308] sm:$0xff]
  %v1018 = vld [vmem:[%s1 + $0x310] sm:$0xff]
  %v1019 = vld [vmem:[%s1 + $0x318] sm:$0xff]
  %v1020 = vld [vmem:[%s1 + $0x320] sm:$0xff]
  %v1021 = vld [vmem:[%s1 + $0x328] sm:$0xff]
  %v1022 = vld [vmem:[%s1 + $0x330] sm:$0xff]
  %v1023 = vld [vmem:[%s1 + $0x338] sm:$0xff]
  %v1024 = vld [vmem:[%s1 + $0x340] sm:$0xff]
  %v1025 = vld [vmem:[%s1 + $0x348] sm:$0xff]
  %v1026 = vld [vmem:[%s1 + $0x350] sm:$0xff]
  %v1027 = vld [vmem:[%s1 + $0x358] sm:$0xff]
  %v1028 = vld [vmem:[%s1 + $0x360] sm:$0xff]
  %v1029 = vld [vmem:[%s1 + $0x368] sm:$0xff]
  %v1030 = vld [vmem:[%s1 + $0x370] sm:$0xff]
  %v1031 = vld [vmem:[%s1 + $0x378] sm:$0xff]
  %v1032 = vld [vmem:[%s1 + $0x380] sm:$0xff]
  %v1033 = vld [vmem:[%s1 + $0x388] sm:$0xff]
  %v1034 = vld [vmem:[%s1 + $0x390] sm:$0xff]
  %v1035 = vld [vmem:[%s1 + $0x398] sm:$0xff]
  %v1036 = vld [vmem:[%s1 + $0x3a0] sm:$0xff]
  %v1037 = vld [vmem:[%s1 + $0x3a8] sm:$0xff]
  %v1038 = vld [vmem:[%s1 + $0x3b0] sm:$0xff]
  %v1039 = vld [vmem:[%s1 + $0x3b8] sm:$0xff]
  %v1040 = vld [vmem:[%s1 + $0x3c0] sm:$0xff]
  %v1041 = vld [vmem:[%s1 + $0x3c8] sm:$0xff]
  %v1042 = vld [vmem:[%s1 + $0x3d0] sm:$0xff]
  %v1043 = vld [vmem:[%s1 + $0x3d8] sm:$0xff]
  %v1044 = vld [vmem:[%s1 + $0x3e0] sm:$0xff]
  %v1045 = vld [vmem:[%s1 + $0x3e8] sm:$0xff]
  %v1046 = vld [vmem:[%s1 + $0x3f0] sm:$0xff]
  %v1047 = vld [vmem:[%s1 + $0x3f8] sm:$0xff]
  %v1048 = vld [vmem:[%s1 + $0x400] sm:$0xff]
  %v1049 = vld [vmem:[%s1 + $0x408] sm:$0xff]
  %v1050 = vld [vmem:[%s1 + $0x410] sm:$0xff]
  %v1051 = vld [vmem:[%s1 + $0x418] sm:$0xff]
  %v1052 = vld [vmem:[%s1 + $0x420] sm:$0xff]
  %v1053 = vld [vmem:[%s1 + $0x428] sm:$0xff]
  %v1054 = vld [vmem:[%s1 + $0x430] sm:$0xff]
  %v1055 = vld [vmem:[%s1 + $0x438] sm:$0xff]
  %v1056 = vld [vmem:[%s1 + $0x440] sm:$0xff]
  %v1057 = vld [vmem:[%s1 + $0x448] sm:$0xff]
  %v1058 = vld [vmem:[%s1 + $0x450] sm:$0xff]
  %v1059 = vld [vmem:[%s1 + $0x458] sm:$0xff]
  %v1060 = vld [vmem:[%s1 + $0x460] sm:$0xff]
  %v1061 = vld [vmem:[%s1 + $0x468] sm:$0xff]
  %v1062 = vld [vmem:[%s1 + $0x470] sm:$0xff]
  %v1063 = vld [vmem:[%s1 + $0x478] sm:$0xff]
  %v1064 = vld [vmem:[%s1 + $0x480] sm:$0xff]
  %v1065 = vld [vmem:[%s1 + $0x488] sm:$0xff]
  %v1066 = vld [vmem:[%s1 + $0x490] sm:$0xff]
  %v1067 = vld [vmem:[%s1 + $0x498] sm:$0xff]
  %v1068 = vld [vmem:[%s1 + $0x4a0] sm:$0xff]
  %v1069 = vld [vmem:[%s1 + $0x4a8] sm:$0xff]
  %v1070 = vld [vmem:[%s1 + $0x4b0] sm:$0xff]
  %v1071 = vld [vmem:[%s1 + $0x4b8] sm:$0xff]
  %v1072 = vld [vmem:[%s1 + $0x4c0] sm:$0xff]
  %v1073 = vld [vmem:[%s1 + $0x4c8] sm:$0xff]
  %v1074 = vld [vmem:[%s1 + $0x4d0] sm:$0xff]
  %v1075 = vld [vmem:[%s1 + $0x4d8] sm:$0xff]
  %v1076 = vld [vmem:[%s1 + $0x4e0] sm:$0xff]
  %v1077 = vld [vmem:[%s1 + $0x4e8] sm:$0xff]
  %v1078 = vld [vmem:[%s1 + $0x4f0] sm:$0xff]
  %v1079 = vld [vmem:[%s1 + $0x4f8] sm:$0xff]
  %v1080 = vld [vmem:[%s1 + $0x500] sm:$0xff]
  %v1081 = vld [vmem:[%s1 + $0x508] sm:$0xff]
  %v1082 = vld [vmem:[%s1 + $0x510] sm:$0xff]
  %v1083 = vld [vmem:[%s1 + $0x518] sm:$0xff]
  %v1084 = vld [vmem:[%s1 + $0x520] sm:$0xff]
  %v1085 = vld [vmem:[%s1 + $0x528] sm:$0xff]
  %v1086 = vld [vmem:[%s1 + $0x530] sm:$0xff]
  %v1087 = vld [vmem:[%s1 + $0x538] sm:$0xff]
  %v1088 = vld [vmem:[%s1 + $0x540] sm:$0xff]
  %v1089 = vld [vmem:[%s1 + $0x548] sm:$0xff]
  %v1090 = vld [vmem:[%s1 + $0x550] sm:$0xff]
  %v1091 = vld [vmem:[%s1 + $0x558] sm:$0xff]
  %v1092 = vld [vmem:[%s1 + $0x560] sm:$0xff]
  %v1093 = vld [vmem:[%s1 + $0x568] sm:$0xff]
  %v1094 = vld [vmem:[%s1 + $0x570] sm:$0xff]
  %v1095 = vld [vmem:[%s1 + $0x578] sm:$0xff]
  %v1096 = vld [vmem:[%s1 + $0x580] sm:$0xff]
  %v1097 = vld [vmem:[%s1 + $0x588] sm:$0xff]
  %v1098 = vld [vmem:[%s1 + $0x590] sm:$0xff]
  %v1099 = vld [vmem:[%s1 + $0x598] sm:$0xff]
  %v1100 = vld [vmem:[%s1 + $0x5a0] sm:$0xff]
  %v1101 = vld [vmem:[%s1 + $0x5a8] sm:$0xff]
  %v1102 = vld [vmem:[%s1 + $0x5b0] sm:$0xff]
  %v1103 = vld [vmem:[%s1 + $0x5b8] sm:$0xff]
  %v1104 = vld [vmem:[%s1 + $0x5c0] sm:$0xff]
  %v1105 = vld [vmem:[%s1 + $0x5c8] sm:$0xff]
  %v1106 = vld [vmem:[%s1 + $0x5d0] sm:$0xff]
  %v1107 = vld [vmem:[%s1 + $0x5d8] sm:$0xff]
  %v1108 = vld [vmem:[%s1 + $0x5e0] sm:$0xff]
  %v1109 = vld [vmem:[%s1 + $0x5e8] sm:$0xff]
  %v1110 = vld [vmem:[%s1 + $0x5f0] sm:$0xff]
  %v1111 = vld [vmem:[%s1 + $0x5f8] sm:$0xff]
  %v1112 = vld [vmem:[%s1 + $0x600] sm:$0xff]
  %v1113 = vld [vmem:[%s1 + $0x608] sm:$0xff]
  %v1114 = vld [vmem:[%s1 + $0x610] sm:$0xff]
  %v1115 = vld [vmem:[%s1 + $0x618] sm:$0xff]
  %v1116 = vld [vmem:[%s1 + $0x620] sm:$0xff]
  %v1117 = vld [vmem:[%s1 + $0x628] sm:$0xff]
  %v1118 = vld [vmem:[%s1 + $0x630] sm:$0xff]
  %v1119 = vld [vmem:[%s1 + $0x638] sm:$0xff]
  %v1120 = vld [vmem:[%s1 + $0x640] sm:$0xff]
  %v1121 = vld [vmem:[%s1 + $0x648] sm:$0xff]
  %v1122 = vld [vmem:[%s1 + $0x650] sm:$0xff]
  %v1123 = vld [vmem:[%s1 + $0x658] sm:$0xff]
  %v1124 = vld [vmem:[%s1 + $0x660] sm:$0xff]
  %v1125 = vld [vmem:[%s1 + $0x668] sm:$0xff]
  %v1126 = vld [vmem:[%s1 + $0x670] sm:$0xff]
  %v1127 = vld [vmem:[%s1 + $0x678] sm:$0xff]
  %v1128 = vld [vmem:[%s1 + $0x680] sm:$0xff]
  %v1129 = vld [vmem:[%s1 + $0x688] sm:$0xff]
  %v1130 = vld [vmem:[%s1 + $0x690] sm:$0xff]
  %v1131 = vld [vmem:[%s1 + $0x698] sm:$0xff]
  %v1132 = vld [vmem:[%s1 + $0x6a0] sm:$0xff]
  %v1133 = vld [vmem:[%s1 + $0x6a8] sm:$0xff]
  %v1134 = vld [vmem:[%s1 + $0x6b0] sm:$0xff]
  %v1135 = vld [vmem:[%s1 + $0x6b8] sm:$0xff]
  %v1136 = vld [vmem:[%s1 + $0x6c0] sm:$0xff]
  %v1137 = vld [vmem:[%s1 + $0x6c8] sm:$0xff]
  %v1138 = vld [vmem:[%s1 + $0x6d0] sm:$0xff]
  %v1139 = vld [vmem:[%s1 + $0x6d8] sm:$0xff]
  %v1140 = vld [vmem:[%s1 + $0x6e0] sm:$0xff]
  %v1141 = vld [vmem:[%s1 + $0x6e8] sm:$0xff]
  %v1142 = vld [vmem:[%s1 + $0x6f0] sm:$0xff]
  %v1143 = vld [vmem:[%s1 + $0x6f8] sm:$0xff]
  %v1144 = vld [vmem:[%s1 + $0x700] sm:$0xff]
  %v1145 = vld [vmem:[%s1 + $0x708] sm:$0xff]
  %v1146 = vld [vmem:[%s1 + $0x710] sm:$0xff]
  %v1147 = vld [vmem:[%s1 + $0x718] sm:$0xff]
  %v1148 = vld [vmem:[%s1 + $0x720] sm:$0xff]
  %v1149 = vld [vmem:[%s1 + $0x728] sm:$0xff]
  %v1150 = vld [vmem:[%s1 + $0x730] sm:$0xff]
  %v1151 = vld [vmem:[%s1 + $0x738] sm:$0xff]
  %v1152 = vld [vmem:[%s1 + $0x740] sm:$0xff]
  %v1153 = vld [vmem:[%s1 + $0x748] sm:$0xff]
  %v1154 = vld [vmem:[%s1 + $0x750] sm:$0xff]
  %v1155 = vld [vmem:[%s1 + $0x758] sm:$0xff]
  %v1156 = vld [vmem:[%s1 + $0x760] sm:$0xff]
  %v1157 = vld [vmem:[%s1 + $0x768] sm:$0xff]
  %v1158 = vld [vmem:[%s1 + $0x770] sm:$0xff]
  %v1159 = vld [vmem:[%s1 + $0x778] sm:$0xff]
  %v1160 = vld [vmem:[%s1 + $0x780] sm:$0xff]
  %v1161 = vld [vmem:[%s1 + $0x788] sm:$0xff]
  %v1162 = vld [vmem:[%s1 + $0x790] sm:$0xff]
  %v1163 = vld [vmem:[%s1 + $0x798] sm:$0xff]
  %v1164 = vld [vmem:[%s1 + $0x7a0] sm:$0xff]
  %v1165 = vld [vmem:[%s1 + $0x7a8] sm:$0xff]
  %v1166 = vld [vmem:[%s1 + $0x7b0] sm:$0xff]
  %v1167 = vld [vmem:[%s1 + $0x7b8] sm:$0xff]
  %v1168 = vld [vmem:[%s1 + $0x7c0] sm:$0xff]
  %v1169 = vld [vmem:[%s1 + $0x7c8] sm:$0xff]
  %v1170 = vld [vmem:[%s1 + $0x7d0] sm:$0xff]
  %v1171 = vld [vmem:[%s1 + $0x7d8] sm:$0xff]
  %v1172 = vld [vmem:[%s1 + $0x7e0] sm:$0xff]
  %v1173 = vld [vmem:[%s1 + $0x7e8] sm:$0xff]
  %v1174 = vld [vmem:[%s1 + $0x7f0] sm:$0xff]
  %v1175 = vld [vmem:[%s1 + $0x7f8] sm:$0xff]
  %v1176 = vld [vmem:[%s1 + $0x800] sm:$0xff]
  %v1177 = vld [vmem:[%s1 + $0x808] sm:$0xff]
  %v1178 = vld [vmem:[%s1 + $0x810] sm:$0xff]
  %v1179 = vld [vmem:[%s1 + $0x818] sm:$0xff]
  %v1180 = vld [vmem:[%s1 + $0x820] sm:$0xff]
  %v1181 = vld [vmem:[%s1 + $0x828] sm:$0xff]
  %v1182 = vld [vmem:[%s1 + $0x830] sm:$0xff]
  %v1183 = vld [vmem:[%s1 + $0x838] sm:$0xff]
  %v1184 = vld [vmem:[%s1 + $0x840] sm:$0xff]
  %v1185 = vld [vmem:[%s1 + $0x848] sm:$0xff]
  %v1186 = vld [vmem:[%s1 + $0x850] sm:$0xff]
  %v1187 = vld [vmem:[%s1 + $0x858] sm:$0xff]
  %v1188 = vld [vmem:[%s1 + $0x860] sm:$0xff]
  %v1189 = vld [vmem:[%s1 + $0x868] sm:$0xff]
  %v1190 = vld [vmem:[%s1 + $0x870] sm:$0xff]
  %v1191 = vld [vmem:[%s1 + $0x878] sm:$0xff]
  %v1192 = vld [vmem:[%s1 + $0x880] sm:$0xff]
  %v1193 = vld [vmem:[%s1 + $0x888] sm:$0xff]
  %v1194 = vld [vmem:[%s1 + $0x890] sm:$0xff]
  %v1195 = vld [vmem:[%s1 + $0x898] sm:$0xff]
  %v1196 = vld [vmem:[%s1 + $0x8a0] sm:$0xff]
  %v1197 = vld [vmem:[%s1 + $0x8a8] sm:$0xff]
  %v1198 = vld [vmem:[%s1 + $0x8b0] sm:$0xff]
  %v1199 = vld [vmem:[%s1 + $0x8b8] sm:$0xff]
  %v1200 = vld [vmem:[%s1 + $0x8c0] sm:$0xff]
  %v1201 = vld [vmem:[%s1 + $0x8c8] sm:$0xff]
  %v1202 = vld [vmem:[%s1 + $0x8d0] sm:$0xff]
  %v1203 = vld [vmem:[%s1 + $0x8d8] sm:$0xff]
  %v1204 = vld [vmem:[%s1 + $0x8e0] sm:$0xff]
  %v1205 = vld [vmem:[%s1 + $0x8e8] sm:$0xff]
  %v1206 = vld [vmem:[%s1 + $0x8f0] sm:$0xff]
  %v1207 = vld [vmem:[%s1 + $0x8f8] sm:$0xff]
  %v1208 = vld [vmem:[%s1 + $0x900] sm:$0xff]
  %v1209 = vld [vmem:[%s1 + $0x908] sm:$0xff]
  %v1210 = vld [vmem:[%s1 + $0x910] sm:$0xff]
  %v1211 = vld [vmem:[%s1 + $0x918] sm:$0xff]
  %v1212 = vld [vmem:[%s1 + $0x920] sm:$0xff]
  %v1213 = vld [vmem:[%s1 + $0x928] sm:$0xff]
  %v1214 = vld [vmem:[%s1 + $0x930] sm:$0xff]
  %v1215 = vld [vmem:[%s1 + $0x938] sm:$0xff]
  %v1216 = vld [vmem:[%s1 + $0x940] sm:$0xff]
  %v1217 = vld [vmem:[%s1 + $0x948] sm:$0xff]
  %v1218 = vld [vmem:[%s1 + $0x950] sm:$0xff]
  %v1219 = vld [vmem:[%s1 + $0x958] sm:$0xff]
  %v1220 = vld [vmem:[%s1 + $0x960] sm:$0xff]
  %v1221 = vld [vmem:[%s1 + $0x968] sm:$0xff]
  %v1222 = vld [vmem:[%s1 + $0x970] sm:$0xff]
  %v1223 = vld [vmem:[%s1 + $0x978] sm:$0xff]
  %v1224 = vld [vmem:[%s1 + $0x980] sm:$0xff]
  %v1225 = vld [vmem:[%s1 + $0x988] sm:$0xff]
  %v1226 = vld [vmem:[%s1 + $0x990] sm:$0xff]
  %v1227 = vld [vmem:[%s1 + $0x998] sm:$0xff]
  %v1228 = vld [vmem:[%s1 + $0x9a0] sm:$0xff]
  %v1229 = vld [vmem:[%s1 + $0x9a8] sm:$0xff]
  %v1230 = vld [vmem:[%s1 + $0x9b0] sm:$0xff]
  %v1231 = vld [vmem:[%s1 + $0x9b8] sm:$0xff]
  %v1232 = vld [vmem:[%s1 + $0x9c0] sm:$0xff]
  %v1233 = vld [vmem:[%s1 + $0x9c8] sm:$0xff]
  %v1234 = vld [vmem:[%s1 + $0x9d0] sm:$0xff]
  %v1235 = vld [vmem:[%s1 + $0x9d8] sm:$0xff]
  %v1236 = vld [vmem:[%s1 + $0x9e0] sm:$0xff]
  %v1237 = vld [vmem:[%s1 + $0x9e8] sm:$0xff]
  %v1238 = vld [vmem:[%s1 + $0x9f0] sm:$0xff]
  %v1239 = vld [vmem:[%s1 + $0x9f8] sm:$0xff]
  %v1240 = vld [vmem:[%s1 + $0xa00] sm:$0xff]
  %v1241 = vld [vmem:[%s1 + $0xa08] sm:$0xff]
  %v1242 = vld [vmem:[%s1 + $0xa10] sm:$0xff]
  %v1243 = vld [vmem:[%s1 + $0xa18] sm:$0xff]
  %v1244 = vld [vmem:[%s1 + $0xa20] sm:$0xff]
  %v1245 = vld [vmem:[%s1 + $0xa28] sm:$0xff]
  %v1246 = vld [vmem:[%s1 + $0xa30] sm:$0xff]
  %v1247 = vld [vmem:[%s1 + $0xa38] sm:$0xff]
  %v1248 = vld [vmem:[%s1 + $0xa40] sm:$0xff]
  %v1249 = vld [vmem:[%s1 + $0xa48] sm:$0xff]
  %v1250 = vld [vmem:[%s1 + $0xa50] sm:$0xff]
  %v1251 = vld [vmem:[%s1 + $0xa58] sm:$0xff]
  %v1252 = vld [vmem:[%s1 + $0xa60] sm:$0xff]
  %v1253 = vld [vmem:[%s1 + $0xa68] sm:$0xff]
  %v1254 = vld [vmem:[%s1 + $0xa70] sm:$0xff]
  %v1255 = vld [vmem:[%s1 + $0xa78] sm:$0xff]
  %v1256 = vld [vmem:[%s1 + $0xa80] sm:$0xff]
  %v1257 = vld [vmem:[%s1 + $0xa88] sm:$0xff]
  %v1258 = vld [vmem:[%s1 + $0xa90] sm:$0xff]
  %v1259 = vld [vmem:[%s1 + $0xa98] sm:$0xff]
  %v1260 = vld [vmem:[%s1 + $0xaa0] sm:$0xff]
  %v1261 = vld [vmem:[%s1 + $0xaa8] sm:$0xff]
  %v1262 = vld [vmem:[%s1 + $0xab0] sm:$0xff]
  %v1263 = vld [vmem:[%s1 + $0xab8] sm:$0xff]
  %v1264 = vld [vmem:[%s1 + $0xac0] sm:$0xff]
  %v1265 = vld [vmem:[%s1 + $0xac8] sm:$0xff]
  %v1266 = vld [vmem:[%s1 + $0xad0] sm:$0xff]
  %v1267 = vld [vmem:[%s1 + $0xad8] sm:$0xff]
  %v1268 = vld [vmem:[%s1 + $0xae0] sm:$0xff]
  %v1269 = vld [vmem:[%s1 + $0xae8] sm:$0xff]
  %v1270 = vld [vmem:[%s1 + $0xaf0] sm:$0xff]
  %v1271 = vld [vmem:[%s1 + $0xaf8] sm:$0xff]
  %v1272 = vld [vmem:[%s1 + $0xb00] sm:$0xff]
  %v1273 = vld [vmem:[%s1 + $0xb08] sm:$0xff]
  %v1274 = vld [vmem:[%s1 + $0xb10] sm:$0xff]
  %v1275 = vld [vmem:[%s1 + $0xb18] sm:$0xff]
  %v1276 = vld [vmem:[%s1 + $0xb20] sm:$0xff]
  %v1277 = vld [vmem:[%s1 + $0xb28] sm:$0xff]
  %v1278 = vld [vmem:[%s1 + $0xb30] sm:$0xff]
  %v1279 = vld [vmem:[%s1 + $0xb38] sm:$0xff]
  %v1280 = vld [vmem:[%s1 + $0xb40] sm:$0xff]
  %v1281 = vld [vmem:[%s1 + $0xb48] sm:$0xff]
  %v1282 = vld [vmem:[%s1 + $0xb50] sm:$0xff]
  %v1283 = vld [vmem:[%s1 + $0xb58] sm:$0xff]
  %v1284 = vld [vmem:[%s1 + $0xb60] sm:$0xff]
  %v1285 = vld [vmem:[%s1 + $0xb68] sm:$0xff]
  %v1286 = vld [vmem:[%s1 + $0xb70] sm:$0xff]
  %v1287 = vld [vmem:[%s1 + $0xb78] sm:$0xff]
  %v1288 = vld [vmem:[%s1 + $0xb80] sm:$0xff]
  %v1289 = vld [vmem:[%s1 + $0xb88] sm:$0xff]
  %v1290 = vld [vmem:[%s1 + $0xb90] sm:$0xff]
  %v1291 = vld [vmem:[%s1 + $0xb98] sm:$0xff]
  %v1292 = vld [vmem:[%s1 + $0xba0] sm:$0xff]
  %v1293 = vld [vmem:[%s1 + $0xba8] sm:$0xff]
  %v1294 = vld [vmem:[%s1 + $0xbb0] sm:$0xff]
  %v1295 = vld [vmem:[%s1 + $0xbb8] sm:$0xff]
  %v1296 = vld [vmem:[%s1 + $0xbc0] sm:$0xff]
  %v1297 = vld [vmem:[%s1 + $0xbc8] sm:$0xff]
  %v1298 = vld [vmem:[%s1 + $0xbd0] sm:$0xff]
  %v1299 = vld [vmem:[%s1 + $0xbd8] sm:$0xff]
  %v1300 = vld [vmem:[%s1 + $0xbe0] sm:$0xff]
  %v1301 = vld [vmem:[%s1 + $0xbe8] sm:$0xff]
  %v1302 = vld [vmem:[%s1 + $0xbf0] sm:$0xff]
  %v1303 = vld [vmem:[%s1 + $0xbf8] sm:$0xff]
  %v1304 = vld [vmem:[%s1 + $0xc00] sm:$0xff]
  %v1305 = vld [vmem:[%s1 + $0xc08] sm:$0xff]
  %v1306 = vld [vmem:[%s1 + $0xc10] sm:$0xff]
  %v1307 = vld [vmem:[%s1 + $0xc18] sm:$0xff]
  %v1308 = vld [vmem:[%s1 + $0xc20] sm:$0xff]
  %v1309 = vld [vmem:[%s1 + $0xc28] sm:$0xff]
  %v1310 = vld [vmem:[%s1 + $0xc30] sm:$0xff]
  %v1311 = vld [vmem:[%s1 + $0xc38] sm:$0xff]
  %v1312 = vld [vmem:[%s1 + $0xc40] sm:$0xff]
  %v1313 = vld [vmem:[%s1 + $0xc48] sm:$0xff]
  %v1314 = vld [vmem:[%s1 + $0xc50] sm:$0xff]
  %v1315 = vld [vmem:[%s1 + $0xc58] sm:$0xff]
  %v1316 = vld [vmem:[%s1 + $0xc60] sm:$0xff]
  %v1317 = vld [vmem:[%s1 + $0xc68] sm:$0xff]
  %v1318 = vld [vmem:[%s1 + $0xc70] sm:$0xff]
  %v1319 = vld [vmem:[%s1 + $0xc78] sm:$0xff]
  %v1320 = vld [vmem:[%s2] sm:$0x1]
  %v1322 = vlaneseq
  %v1323 = vshrl.u32 %v1322, 7
  %v1324 = vsub.s32 0, %v1323
  %v1325 = vrot.slane %v1320, %v1324
  %1327 = vmatprep.subr.mxu0 0.0
  %1328 = vmatpush1.msra.mxu0 %v935
  %1329 = vmatprep.subr.mxu0 0.0
  %1330 = vmatpush1.msra.mxu0 %v934
  %1331 = vmatprep.subr.mxu0 0.0
  %1332 = vmatpush1.msra.mxu0 %v933
  %1333 = vmatprep.subr.mxu0 0.0
  %1334 = vmatpush1.msra.mxu0 %v932
  %1335 = vmatprep.subr.mxu0 0.0
  %1336 = vmatpush1.msra.mxu0 %v931
  %1337 = vmatprep.subr.mxu0 0.0
  %1338 = vmatpush1.msra.mxu0 %v930
  %1339 = vmatprep.subr.mxu0 0.0
  %1340 = vmatpush1.msra.mxu0 %v929
  %1341 = vmatprep.subr.mxu0 0.0
  %1342 = vmatpush1.msra.mxu0 %v928
  %1343 = vmatprep.subr.mxu0 0.0
  %1344 = vmatpush1.msra.mxu0 %v927
  %1345 = vmatprep.subr.mxu0 0.0
  %1346 = vmatpush1.msra.mxu0 %v926
  %1347 = vmatprep.subr.mxu0 0.0
  %1348 = vmatpush1.msra.mxu0 %v925
  %1349 = vmatprep.subr.mxu0 0.0
  %1350 = vmatpush1.msra.mxu0 %v924
  %1351 = vmatprep.subr.mxu0 0.0
  %1352 = vmatpush1.msra.mxu0 %v923
  %1353 = vmatprep.subr.mxu0 0.0
  %1354 = vmatpush1.msra.mxu0 %v922
  %1355 = vmatprep.subr.mxu0 0.0
  %1356 = vmatpush1.msra.mxu0 %v921
  %1357 = vmatprep.subr.mxu0 0.0
  %1358 = vmatpush1.msra.mxu0 %v920
  %1359 = vmatprep.subr.mxu0 0.0
  %1360 = vmatpush2.msra.mxu0 %v951
  %1361 = vmatprep.subr.mxu0 0.0
  %1362 = vmatpush2.msra.mxu0 %v950
  %1363 = vmatprep.subr.mxu0 0.0
  %1364 = vmatpush2.msra.mxu0 %v949
  %1365 = vmatprep.subr.mxu0 0.0
  %1366 = vmatpush2.msra.mxu0 %v948
  %1367 = vmatprep.subr.mxu0 0.0
  %1368 = vmatpush2.msra.mxu0 %v947
  %1369 = vmatprep.subr.mxu0 0.0
  %1370 = vmatpush2.msra.mxu0 %v946
  %1371 = vmatprep.subr.mxu0 0.0
  %1372 = vmatpush2.msra.mxu0 %v945
  %1373 = vmatprep.subr.mxu0 0.0
  %1374 = vmatpush2.msra.mxu0 %v944
  %1375 = vmatprep.subr.mxu0 0.0
  %1376 = vmatpush2.msra.mxu0 %v943
  %1377 = vmatprep.subr.mxu0 0.0
  %1378 = vmatpush2.msra.mxu0 %v942
  %1379 = vmatprep.subr.mxu0 0.0
  %1380 = vmatpush2.msra.mxu0 %v941
  %1381 = vmatprep.subr.mxu0 0.0
  %1382 = vmatpush2.msra.mxu0 %v940
  %1383 = vmatprep.subr.mxu0 0.0
  %1384 = vmatpush2.msra.mxu0 %v939
  %1385 = vmatprep.subr.mxu0 0.0
  %1386 = vmatpush2.msra.mxu0 %v938
  %1387 = vmatprep.subr.mxu0 0.0
  %1388 = vmatpush2.msra.mxu0 %v937
  %1389 = vmatprep.subr.mxu0 0.0
  %1390 = vmatpush2.msra.mxu0 %v936
  %1391 = vmatprep.mubr.f32.mxu0 %v21
  %1392 = vmatmul.mubr.f32.gmra.mxu0 %v20
  %v1393 = vpop.f32.mrf.mxu0
  %v1394 = vadd.f32 %v1325, %v1393
  %v1395 = vpop.f32.mrf.mxu0
  %1396 = vmatprep.mubr.f32.mxu0 %v46
  %1397 = vmatmul.mubr.f32.gmra.mxu0 %v45
  %v1398 = vpop.f32.mrf.mxu0
  %v1399 = vadd.f32 %v1325, %v1398
  %v1400 = vpop.f32.mrf.mxu0
  %1401 = vmatprep.mubr.f32.mxu0 %v71
  %1402 = vmatmul.mubr.f32.gmra.mxu0 %v70
  %v1403 = vpop.f32.mrf.mxu0
  %v1404 = vadd.f32 %v1325, %v1403
  %v1405 = vpop.f32.mrf.mxu0
  %1406 = vmatprep.mubr.f32.mxu0 %v96
  %1407 = vmatmul.mubr.f32.gmra.mxu0 %v95
  %v1408 = vpop.f32.mrf.mxu0
  %v1409 = vadd.f32 %v1325, %v1408
  %v1410 = vpop.f32.mrf.mxu0
  %1411 = vmatprep.mubr.f32.mxu0 %v121
  %1412 = vmatmul.mubr.f32.gmra.mxu0 %v120
  %v1413 = vpop.f32.mrf.mxu0
  %v1414 = vadd.f32 %v1325, %v1413
  %v1415 = vpop.f32.mrf.mxu0
  %1416 = vmatprep.mubr.f32.mxu0 %v146
  %1417 = vmatmul.mubr.f32.gmra.mxu0 %v145
  %v1418 = vpop.f32.mrf.mxu0
  %v1419 = vadd.f32 %v1325, %v1418
  %v1420 = vpop.f32.mrf.mxu0
  %1421 = vmatprep.mubr.f32.mxu0 %v171
  %1422 = vmatmul.mubr.f32.gmra.mxu0 %v170
  %v1423 = vpop.f32.mrf.mxu0
  %v1424 = vadd.f32 %v1325, %v1423
  %v1425 = vpop.f32.mrf.mxu0
  %1426 = vmatprep.mubr.f32.mxu0 %v196
  %1427 = vmatmul.mubr.f32.gmra.mxu0 %v195
  %v1428 = vpop.f32.mrf.mxu0
  %v1429 = vadd.f32 %v1325, %v1428
  %v1430 = vpop.f32.mrf.mxu0
  %1431 = vmatprep.mubr.f32.mxu0 %v221
  %1432 = vmatmul.mubr.f32.gmra.mxu0 %v220
  %v1433 = vpop.f32.mrf.mxu0
  %v1434 = vadd.f32 %v1325, %v1433
  %v1435 = vpop.f32.mrf.mxu0
  %1436 = vmatprep.mubr.f32.mxu0 %v246
  %1437 = vmatmul.mubr.f32.gmra.mxu0 %v245
  %v1438 = vpop.f32.mrf.mxu0
  %v1439 = vadd.f32 %v1325, %v1438
  %v1440 = vpop.f32.mrf.mxu0
  %1441 = vmatprep.mubr.f32.mxu0 %v271
  %1442 = vmatmul.mubr.f32.gmra.mxu0 %v270
  %v1443 = vpop.f32.mrf.mxu0
  %v1444 = vadd.f32 %v1325, %v1443
  %v1445 = vpop.f32.mrf.mxu0
  %1446 = vmatprep.mubr.f32.mxu0 %v296
  %1447 = vmatmul.mubr.f32.gmra.mxu0 %v295
  %v1448 = vpop.f32.mrf.mxu0
  %v1449 = vadd.f32 %v1325, %v1448
  %v1450 = vpop.f32.mrf.mxu0
  %1451 = vmatprep.mubr.f32.mxu0 %v321
  %1452 = vmatmul.mubr.f32.gmra.mxu0 %v320
  %v1453 = vpop.f32.mrf.mxu0
  %v1454 = vadd.f32 %v1325, %v1453
  %v1455 = vpop.f32.mrf.mxu0
  %1456 = vmatprep.mubr.f32.mxu0 %v346
  %1457 = vmatmul.mubr.f32.gmra.mxu0 %v345
  %v1458 = vpop.f32.mrf.mxu0
  %v1459 = vadd.f32 %v1325, %v1458
  %v1460 = vpop.f32.mrf.mxu0
  %1461 = vmatprep.mubr.f32.mxu0 %v371
  %1462 = vmatmul.mubr.f32.gmra.mxu0 %v370
  %v1463 = vpop.f32.mrf.mxu0
  %v1464 = vadd.f32 %v1325, %v1463
  %v1465 = vpop.f32.mrf.mxu0
  %1466 = vmatprep.mubr.f32.mxu0 %v396
  %1467 = vmatmul.mubr.f32.gmra.mxu0 %v395
  %v1468 = vpop.f32.mrf.mxu0
  %v1469 = vadd.f32 %v1325, %v1468
  %v1470 = vpop.f32.mrf.mxu0
  %1471 = vmatprep.mubr.f32.mxu0 %v421
  %1472 = vmatmul.mubr.f32.gmra.mxu0 %v420
  %v1473 = vpop.f32.mrf.mxu0
  %v1474 = vadd.f32 %v1325, %v1473
  %v1475 = vpop.f32.mrf.mxu0
  %1476 = vmatprep.mubr.f32.mxu0 %v446
  %1477 = vmatmul.mubr.f32.gmra.mxu0 %v445
  %v1478 = vpop.f32.mrf.mxu0
  %v1479 = vadd.f32 %v1325, %v1478
  %v1480 = vpop.f32.mrf.mxu0
  %1481 = vmatprep.mubr.f32.mxu0 %v471
  %1482 = vmatmul.mubr.f32.gmra.mxu0 %v470
  %v1483 = vpop.f32.mrf.mxu0
  %v1484 = vadd.f32 %v1325, %v1483
  %v1485 = vpop.f32.mrf.mxu0
  %1486 = vmatprep.mubr.f32.mxu0 %v496
  %1487 = vmatmul.mubr.f32.gmra.mxu0 %v495
  %v1488 = vpop.f32.mrf.mxu0
  %v1489 = vadd.f32 %v1325, %v1488
  %v1490 = vpop.f32.mrf.mxu0
  %1491 = vmatprep.mubr.f32.mxu0 %v521
  %1492 = vmatmul.mubr.f32.gmra.mxu0 %v520
  %v1493 = vpop.f32.mrf.mxu0
  %v1494 = vadd.f32 %v1325, %v1493
  %v1495 = vpop.f32.mrf.mxu0
  %1496 = vmatprep.mubr.f32.mxu0 %v546
  %1497 = vmatmul.mubr.f32.gmra.mxu0 %v545
  %v1498 = vpop.f32.mrf.mxu0
  %v1499 = vadd.f32 %v1325, %v1498
  %v1500 = vpop.f32.mrf.mxu0
  %1501 = vmatprep.mubr.f32.mxu0 %v571
  %1502 = vmatmul.mubr.f32.gmra.mxu0 %v570
  %v1503 = vpop.f32.mrf.mxu0
  %v1504 = vadd.f32 %v1325, %v1503
  %v1505 = vpop.f32.mrf.mxu0
  %1506 = vmatprep.mubr.f32.mxu0 %v596
  %1507 = vmatmul.mubr.f32.gmra.mxu0 %v595
  %v1508 = vpop.f32.mrf.mxu0
  %v1509 = vadd.f32 %v1325, %v1508
  %v1510 = vpop.f32.mrf.mxu0
  %1511 = vmatprep.mubr.f32.mxu0 %v621
  %1512 = vmatmul.mubr.f32.gmra.mxu0 %v620
  %v1513 = vpop.f32.mrf.mxu0
  %v1514 = vadd.f32 %v1325, %v1513
  %v1515 = vpop.f32.mrf.mxu0
  %1516 = vmatprep.mubr.f32.mxu0 %v646
  %1517 = vmatmul.mubr.f32.gmra.mxu0 %v645
  %v1518 = vpop.f32.mrf.mxu0
  %v1519 = vadd.f32 %v1325, %v1518
  %v1520 = vpop.f32.mrf.mxu0
  %1521 = vmatprep.mubr.f32.mxu0 %v671
  %1522 = vmatmul.mubr.f32.gmra.mxu0 %v670
  %v1523 = vpop.f32.mrf.mxu0
  %v1524 = vadd.f32 %v1325, %v1523
  %v1525 = vpop.f32.mrf.mxu0
  %1526 = vmatprep.mubr.f32.mxu0 %v696
  %1527 = vmatmul.mubr.f32.gmra.mxu0 %v695
  %v1528 = vpop.f32.mrf.mxu0
  %v1529 = vadd.f32 %v1325, %v1528
  %v1530 = vpop.f32.mrf.mxu0
  %1531 = vmatprep.mubr.f32.mxu0 %v721
  %1532 = vmatmul.mubr.f32.gmra.mxu0 %v720
  %v1533 = vpop.f32.mrf.mxu0
  %v1534 = vadd.f32 %v1325, %v1533
  %v1535 = vpop.f32.mrf.mxu0
  %1536 = vmatprep.mubr.f32.mxu0 %v746
  %1537 = vmatmul.mubr.f32.gmra.mxu0 %v745
  %v1538 = vpop.f32.mrf.mxu0
  %v1539 = vadd.f32 %v1325, %v1538
  %v1540 = vpop.f32.mrf.mxu0
  %1541 = vmatprep.mubr.f32.mxu0 %v771
  %1542 = vmatmul.mubr.f32.gmra.mxu0 %v770
  %v1543 = vpop.f32.mrf.mxu0
  %v1544 = vadd.f32 %v1325, %v1543
  %v1545 = vpop.f32.mrf.mxu0
  %1546 = vmatprep.mubr.f32.mxu0 %v796
  %1547 = vmatmul.mubr.f32.gmra.mxu0 %v795
  %v1548 = vpop.f32.mrf.mxu0
  %v1549 = vadd.f32 %v1325, %v1548
  %v1550 = vpop.f32.mrf.mxu0
  %1551 = vmatprep.mubr.f32.mxu0 %v821
  %1552 = vmatmul.mubr.f32.gmra.mxu0 %v820
  %v1553 = vpop.f32.mrf.mxu0
  %v1554 = vadd.f32 %v1325, %v1553
  %v1555 = vpop.f32.mrf.mxu0
  %1556 = vmatprep.mubr.f32.mxu0 %v846
  %1557 = vmatmul.mubr.f32.gmra.mxu0 %v845
  %v1558 = vpop.f32.mrf.mxu0
  %v1559 = vadd.f32 %v1325, %v1558
  %v1560 = vpop.f32.mrf.mxu0
  %1561 = vmatprep.mubr.f32.mxu0 %v871
  %1562 = vmatmul.mubr.f32.gmra.mxu0 %v870
  %v1563 = vpop.f32.mrf.mxu0
  %v1564 = vadd.f32 %v1325, %v1563
  %v1565 = vpop.f32.mrf.mxu0
  %1566 = vmatprep.mubr.f32.mxu0 %v896
  %1567 = vmatmul.mubr.f32.gmra.mxu0 %v895
  %v1568 = vpop.f32.mrf.mxu0
  %v1569 = vadd.f32 %v1325, %v1568
  %v1570 = vpop.f32.mrf.mxu0
  %1571 = vdwg.mxu0
  %1572 = vmatprep.subr.mxu0 0.0
  %1573 = vmatpush1.msra.mxu0 %v967
  %1574 = vmatprep.subr.mxu0 0.0
  %1575 = vmatpush1.msra.mxu0 %v966
  %1576 = vmatprep.subr.mxu0 0.0
  %1577 = vmatpush1.msra.mxu0 %v965
  %1578 = vmatprep.subr.mxu0 0.0
  %1579 = vmatpush1.msra.mxu0 %v964
  %1580 = vmatprep.subr.mxu0 0.0
  %1581 = vmatpush1.msra.mxu0 %v963
  %1582 = vmatprep.subr.mxu0 0.0
  %1583 = vmatpush1.msra.mxu0 %v962
  %1584 = vmatprep.subr.mxu0 0.0
  %1585 = vmatpush1.msra.mxu0 %v961
  %1586 = vmatprep.subr.mxu0 0.0
  %1587 = vmatpush1.msra.mxu0 %v960
  %1588 = vmatprep.subr.mxu0 0.0
  %1589 = vmatpush1.msra.mxu0 %v959
  %1590 = vmatprep.subr.mxu0 0.0
  %1591 = vmatpush1.msra.mxu0 %v958
  %1592 = vmatprep.subr.mxu0 0.0
  %1593 = vmatpush1.msra.mxu0 %v957
  %1594 = vmatprep.subr.mxu0 0.0
  %1595 = vmatpush1.msra.mxu0 %v956
  %1596 = vmatprep.subr.mxu0 0.0
  %1597 = vmatpush1.msra.mxu0 %v955
  %1598 = vmatprep.subr.mxu0 0.0
  %1599 = vmatpush1.msra.mxu0 %v954
  %1600 = vmatprep.subr.mxu0 0.0
  %1601 = vmatpush1.msra.mxu0 %v953
  %1602 = vmatprep.subr.mxu0 0.0
  %1603 = vmatpush1.msra.mxu0 %v952
  %1604 = vmatprep.subr.mxu0 0.0
  %1605 = vmatpush2.msra.mxu0 %v983
  %1606 = vmatprep.subr.mxu0 0.0
  %1607 = vmatpush2.msra.mxu0 %v982
  %1608 = vmatprep.subr.mxu0 0.0
  %1609 = vmatpush2.msra.mxu0 %v981
  %1610 = vmatprep.subr.mxu0 0.0
  %1611 = vmatpush2.msra.mxu0 %v980
  %1612 = vmatprep.subr.mxu0 0.0
  %1613 = vmatpush2.msra.mxu0 %v979
  %1614 = vmatprep.subr.mxu0 0.0
  %1615 = vmatpush2.msra.mxu0 %v978
  %1616 = vmatprep.subr.mxu0 0.0
  %1617 = vmatpush2.msra.mxu0 %v977
  %1618 = vmatprep.subr.mxu0 0.0
  %1619 = vmatpush2.msra.mxu0 %v976
  %1620 = vmatprep.subr.mxu0 0.0
  %1621 = vmatpush2.msra.mxu0 %v975
  %1622 = vmatprep.subr.mxu0 0.0
  %1623 = vmatpush2.msra.mxu0 %v974
  %1624 = vmatprep.subr.mxu0 0.0
  %1625 = vmatpush2.msra.mxu0 %v973
  %1626 = vmatprep.subr.mxu0 0.0
  %1627 = vmatpush2.msra.mxu0 %v972
  %1628 = vmatprep.subr.mxu0 0.0
  %1629 = vmatpush2.msra.mxu0 %v971
  %1630 = vmatprep.subr.mxu0 0.0
  %1631 = vmatpush2.msra.mxu0 %v970
  %1632 = vmatprep.subr.mxu0 0.0
  %1633 = vmatpush2.msra.mxu0 %v969
  %1634 = vmatprep.subr.mxu0 0.0
  %1635 = vmatpush2.msra.mxu0 %v968
  %1636 = vmatprep.mubr.f32.mxu0 %v23
  %1637 = vmatmul.mubr.f32.gmra.mxu0 %v22
  %v1638 = vpop.f32.mrf.mxu0
  %v1639 = vadd.f32 %v1394, %v1638
  %v1640 = vpop.f32.mrf.mxu0
  %1641 = vmatprep.mubr.f32.mxu0 %v48
  %1642 = vmatmul.mubr.f32.gmra.mxu0 %v47
  %v1643 = vpop.f32.mrf.mxu0
  %v1644 = vadd.f32 %v1399, %v1643
  %v1645 = vpop.f32.mrf.mxu0
  %1646 = vmatprep.mubr.f32.mxu0 %v73
  %1647 = vmatmul.mubr.f32.gmra.mxu0 %v72
  %v1648 = vpop.f32.mrf.mxu0
  %v1649 = vadd.f32 %v1404, %v1648
  %v1650 = vpop.f32.mrf.mxu0
  %1651 = vmatprep.mubr.f32.mxu0 %v98
  %1652 = vmatmul.mubr.f32.gmra.mxu0 %v97
  %v1653 = vpop.f32.mrf.mxu0
  %v1654 = vadd.f32 %v1409, %v1653
  %v1655 = vpop.f32.mrf.mxu0
  %1656 = vmatprep.mubr.f32.mxu0 %v123
  %1657 = vmatmul.mubr.f32.gmra.mxu0 %v122
  %v1658 = vpop.f32.mrf.mxu0
  %v1659 = vadd.f32 %v1414, %v1658
  %v1660 = vpop.f32.mrf.mxu0
  %1661 = vmatprep.mubr.f32.mxu0 %v148
  %1662 = vmatmul.mubr.f32.gmra.mxu0 %v147
  %v1663 = vpop.f32.mrf.mxu0
  %v1664 = vadd.f32 %v1419, %v1663
  %v1665 = vpop.f32.mrf.mxu0
  %1666 = vmatprep.mubr.f32.mxu0 %v173
  %1667 = vmatmul.mubr.f32.gmra.mxu0 %v172
  %v1668 = vpop.f32.mrf.mxu0
  %v1669 = vadd.f32 %v1424, %v1668
  %v1670 = vpop.f32.mrf.mxu0
  %1671 = vmatprep.mubr.f32.mxu0 %v198
  %1672 = vmatmul.mubr.f32.gmra.mxu0 %v197
  %v1673 = vpop.f32.mrf.mxu0
  %v1674 = vadd.f32 %v1429, %v1673
  %v1675 = vpop.f32.mrf.mxu0
  %1676 = vmatprep.mubr.f32.mxu0 %v223
  %1677 = vmatmul.mubr.f32.gmra.mxu0 %v222
  %v1678 = vpop.f32.mrf.mxu0
  %v1679 = vadd.f32 %v1434, %v1678
  %v1680 = vpop.f32.mrf.mxu0
  %1681 = vmatprep.mubr.f32.mxu0 %v248
  %1682 = vmatmul.mubr.f32.gmra.mxu0 %v247
  %v1683 = vpop.f32.mrf.mxu0
  %v1684 = vadd.f32 %v1439, %v1683
  %v1685 = vpop.f32.mrf.mxu0
  %1686 = vmatprep.mubr.f32.mxu0 %v273
  %1687 = vmatmul.mubr.f32.gmra.mxu0 %v272
  %v1688 = vpop.f32.mrf.mxu0
  %v1689 = vadd.f32 %v1444, %v1688
  %v1690 = vpop.f32.mrf.mxu0
  %1691 = vmatprep.mubr.f32.mxu0 %v298
  %1692 = vmatmul.mubr.f32.gmra.mxu0 %v297
  %v1693 = vpop.f32.mrf.mxu0
  %v1694 = vadd.f32 %v1449, %v1693
  %v1695 = vpop.f32.mrf.mxu0
  %1696 = vmatprep.mubr.f32.mxu0 %v323
  %1697 = vmatmul.mubr.f32.gmra.mxu0 %v322
  %v1698 = vpop.f32.mrf.mxu0
  %v1699 = vadd.f32 %v1454, %v1698
  %v1700 = vpop.f32.mrf.mxu0
  %1701 = vmatprep.mubr.f32.mxu0 %v348
  %1702 = vmatmul.mubr.f32.gmra.mxu0 %v347
  %v1703 = vpop.f32.mrf.mxu0
  %v1704 = vadd.f32 %v1459, %v1703
  %v1705 = vpop.f32.mrf.mxu0
  %1706 = vmatprep.mubr.f32.mxu0 %v373
  %1707 = vmatmul.mubr.f32.gmra.mxu0 %v372
  %v1708 = vpop.f32.mrf.mxu0
  %v1709 = vadd.f32 %v1464, %v1708
  %v1710 = vpop.f32.mrf.mxu0
  %1711 = vmatprep.mubr.f32.mxu0 %v398
  %1712 = vmatmul.mubr.f32.gmra.mxu0 %v397
  %v1713 = vpop.f32.mrf.mxu0
  %v1714 = vadd.f32 %v1469, %v1713
  %v1715 = vpop.f32.mrf.mxu0
  %1716 = vmatprep.mubr.f32.mxu0 %v423
  %1717 = vmatmul.mubr.f32.gmra.mxu0 %v422
  %v1718 = vpop.f32.mrf.mxu0
  %v1719 = vadd.f32 %v1474, %v1718
  %v1720 = vpop.f32.mrf.mxu0
  %1721 = vmatprep.mubr.f32.mxu0 %v448
  %1722 = vmatmul.mubr.f32.gmra.mxu0 %v447
  %v1723 = vpop.f32.mrf.mxu0
  %v1724 = vadd.f32 %v1479, %v1723
  %v1725 = vpop.f32.mrf.mxu0
  %1726 = vmatprep.mubr.f32.mxu0 %v473
  %1727 = vmatmul.mubr.f32.gmra.mxu0 %v472
  %v1728 = vpop.f32.mrf.mxu0
  %v1729 = vadd.f32 %v1484, %v1728
  %v1730 = vpop.f32.mrf.mxu0
  %1731 = vmatprep.mubr.f32.mxu0 %v498
  %1732 = vmatmul.mubr.f32.gmra.mxu0 %v497
  %v1733 = vpop.f32.mrf.mxu0
  %v1734 = vadd.f32 %v1489, %v1733
  %v1735 = vpop.f32.mrf.mxu0
  %1736 = vmatprep.mubr.f32.mxu0 %v523
  %1737 = vmatmul.mubr.f32.gmra.mxu0 %v522
  %v1738 = vpop.f32.mrf.mxu0
  %v1739 = vadd.f32 %v1494, %v1738
  %v1740 = vpop.f32.mrf.mxu0
  %1741 = vmatprep.mubr.f32.mxu0 %v548
  %1742 = vmatmul.mubr.f32.gmra.mxu0 %v547
  %v1743 = vpop.f32.mrf.mxu0
  %v1744 = vadd.f32 %v1499, %v1743
  %v1745 = vpop.f32.mrf.mxu0
  %1746 = vmatprep.mubr.f32.mxu0 %v573
  %1747 = vmatmul.mubr.f32.gmra.mxu0 %v572
  %v1748 = vpop.f32.mrf.mxu0
  %v1749 = vadd.f32 %v1504, %v1748
  %v1750 = vpop.f32.mrf.mxu0
  %1751 = vmatprep.mubr.f32.mxu0 %v598
  %1752 = vmatmul.mubr.f32.gmra.mxu0 %v597
  %v1753 = vpop.f32.mrf.mxu0
  %v1754 = vadd.f32 %v1509, %v1753
  %v1755 = vpop.f32.mrf.mxu0
  %1756 = vmatprep.mubr.f32.mxu0 %v623
  %1757 = vmatmul.mubr.f32.gmra.mxu0 %v622
  %v1758 = vpop.f32.mrf.mxu0
  %v1759 = vadd.f32 %v1514, %v1758
  %v1760 = vpop.f32.mrf.mxu0
  %1761 = vmatprep.mubr.f32.mxu0 %v648
  %1762 = vmatmul.mubr.f32.gmra.mxu0 %v647
  %v1763 = vpop.f32.mrf.mxu0
  %v1764 = vadd.f32 %v1519, %v1763
  %v1765 = vpop.f32.mrf.mxu0
  %1766 = vmatprep.mubr.f32.mxu0 %v673
  %1767 = vmatmul.mubr.f32.gmra.mxu0 %v672
  %v1768 = vpop.f32.mrf.mxu0
  %v1769 = vadd.f32 %v1524, %v1768
  %v1770 = vpop.f32.mrf.mxu0
  %1771 = vmatprep.mubr.f32.mxu0 %v698
  %1772 = vmatmul.mubr.f32.gmra.mxu0 %v697
  %v1773 = vpop.f32.mrf.mxu0
  %v1774 = vadd.f32 %v1529, %v1773
  %v1775 = vpop.f32.mrf.mxu0
  %1776 = vmatprep.mubr.f32.mxu0 %v723
  %1777 = vmatmul.mubr.f32.gmra.mxu0 %v722
  %v1778 = vpop.f32.mrf.mxu0
  %v1779 = vadd.f32 %v1534, %v1778
  %v1780 = vpop.f32.mrf.mxu0
  %1781 = vmatprep.mubr.f32.mxu0 %v748
  %1782 = vmatmul.mubr.f32.gmra.mxu0 %v747
  %v1783 = vpop.f32.mrf.mxu0
  %v1784 = vadd.f32 %v1539, %v1783
  %v1785 = vpop.f32.mrf.mxu0
  %1786 = vmatprep.mubr.f32.mxu0 %v773
  %1787 = vmatmul.mubr.f32.gmra.mxu0 %v772
  %v1788 = vpop.f32.mrf.mxu0
  %v1789 = vadd.f32 %v1544, %v1788
  %v1790 = vpop.f32.mrf.mxu0
  %1791 = vmatprep.mubr.f32.mxu0 %v798
  %1792 = vmatmul.mubr.f32.gmra.mxu0 %v797
  %v1793 = vpop.f32.mrf.mxu0
  %v1794 = vadd.f32 %v1549, %v1793
  %v1795 = vpop.f32.mrf.mxu0
  %1796 = vmatprep.mubr.f32.mxu0 %v823
  %1797 = vmatmul.mubr.f32.gmra.mxu0 %v822
  %v1798 = vpop.f32.mrf.mxu0
  %v1799 = vadd.f32 %v1554, %v1798
  %v1800 = vpop.f32.mrf.mxu0
  %1801 = vmatprep.mubr.f32.mxu0 %v848
  %1802 = vmatmul.mubr.f32.gmra.mxu0 %v847
  %v1803 = vpop.f32.mrf.mxu0
  %v1804 = vadd.f32 %v1559, %v1803
  %v1805 = vpop.f32.mrf.mxu0
  %1806 = vmatprep.mubr.f32.mxu0 %v873
  %1807 = vmatmul.mubr.f32.gmra.mxu0 %v872
  %v1808 = vpop.f32.mrf.mxu0
  %v1809 = vadd.f32 %v1564, %v1808
  %v1810 = vpop.f32.mrf.mxu0
  %1811 = vmatprep.mubr.f32.mxu0 %v898
  %1812 = vmatmul.mubr.f32.gmra.mxu0 %v897
  %v1813 = vpop.f32.mrf.mxu0
  %v1814 = vadd.f32 %v1569, %v1813
  %v1815 = vpop.f32.mrf.mxu0
  %1816 = vdwg.mxu0
  %1817 = vmatprep.subr.mxu0 0.0
  %1818 = vmatpush1.msra.mxu0 %v999
  %1819 = vmatprep.subr.mxu0 0.0
  %1820 = vmatpush1.msra.mxu0 %v998
  %1821 = vmatprep.subr.mxu0 0.0
  %1822 = vmatpush1.msra.mxu0 %v997
  %1823 = vmatprep.subr.mxu0 0.0
  %1824 = vmatpush1.msra.mxu0 %v996
  %1825 = vmatprep.subr.mxu0 0.0
  %1826 = vmatpush1.msra.mxu0 %v995
  %1827 = vmatprep.subr.mxu0 0.0
  %1828 = vmatpush1.msra.mxu0 %v994
  %1829 = vmatprep.subr.mxu0 0.0
  %1830 = vmatpush1.msra.mxu0 %v993
  %1831 = vmatprep.subr.mxu0 0.0
  %1832 = vmatpush1.msra.mxu0 %v992
  %1833 = vmatprep.subr.mxu0 0.0
  %1834 = vmatpush1.msra.mxu0 %v991
  %1835 = vmatprep.subr.mxu0 0.0
  %1836 = vmatpush1.msra.mxu0 %v990
  %1837 = vmatprep.subr.mxu0 0.0
  %1838 = vmatpush1.msra.mxu0 %v989
  %1839 = vmatprep.subr.mxu0 0.0
  %1840 = vmatpush1.msra.mxu0 %v988
  %1841 = vmatprep.subr.mxu0 0.0
  %1842 = vmatpush1.msra.mxu0 %v987
  %1843 = vmatprep.subr.mxu0 0.0
  %1844 = vmatpush1.msra.mxu0 %v986
  %1845 = vmatprep.subr.mxu0 0.0
  %1846 = vmatpush1.msra.mxu0 %v985
  %1847 = vmatprep.subr.mxu0 0.0
  %1848 = vmatpush1.msra.mxu0 %v984
  %1849 = vmatprep.subr.mxu0 0.0
  %1850 = vmatpush2.msra.mxu0 %v1015
  %1851 = vmatprep.subr.mxu0 0.0
  %1852 = vmatpush2.msra.mxu0 %v1014
  %1853 = vmatprep.subr.mxu0 0.0
  %1854 = vmatpush2.msra.mxu0 %v1013
  %1855 = vmatprep.subr.mxu0 0.0
  %1856 = vmatpush2.msra.mxu0 %v1012
  %1857 = vmatprep.subr.mxu0 0.0
  %1858 = vmatpush2.msra.mxu0 %v1011
  %1859 = vmatprep.subr.mxu0 0.0
  %1860 = vmatpush2.msra.mxu0 %v1010
  %1861 = vmatprep.subr.mxu0 0.0
  %1862 = vmatpush2.msra.mxu0 %v1009
  %1863 = vmatprep.subr.mxu0 0.0
  %1864 = vmatpush2.msra.mxu0 %v1008
  %1865 = vmatprep.subr.mxu0 0.0
  %1866 = vmatpush2.msra.mxu0 %v1007
  %1867 = vmatprep.subr.mxu0 0.0
  %1868 = vmatpush2.msra.mxu0 %v1006
  %1869 = vmatprep.subr.mxu0 0.0
  %1870 = vmatpush2.msra.mxu0 %v1005
  %1871 = vmatprep.subr.mxu0 0.0
  %1872 = vmatpush2.msra.mxu0 %v1004
  %1873 = vmatprep.subr.mxu0 0.0
  %1874 = vmatpush2.msra.mxu0 %v1003
  %1875 = vmatprep.subr.mxu0 0.0
  %1876 = vmatpush2.msra.mxu0 %v1002
  %1877 = vmatprep.subr.mxu0 0.0
  %1878 = vmatpush2.msra.mxu0 %v1001
  %1879 = vmatprep.subr.mxu0 0.0
  %1880 = vmatpush2.msra.mxu0 %v1000
  %1881 = vmatprep.mubr.f32.mxu0 %v25
  %1882 = vmatmul.mubr.f32.gmra.mxu0 %v24
  %v1883 = vpop.f32.mrf.mxu0
  %v1884 = vadd.f32 %v1639, %v1883
  %v1885 = vpop.f32.mrf.mxu0
  %1886 = vmatprep.mubr.f32.mxu0 %v50
  %1887 = vmatmul.mubr.f32.gmra.mxu0 %v49
  %v1888 = vpop.f32.mrf.mxu0
  %v1889 = vadd.f32 %v1644, %v1888
  %v1890 = vpop.f32.mrf.mxu0
  %1891 = vmatprep.mubr.f32.mxu0 %v75
  %1892 = vmatmul.mubr.f32.gmra.mxu0 %v74
  %v1893 = vpop.f32.mrf.mxu0
  %v1894 = vadd.f32 %v1649, %v1893
  %v1895 = vpop.f32.mrf.mxu0
  %1896 = vmatprep.mubr.f32.mxu0 %v100
  %1897 = vmatmul.mubr.f32.gmra.mxu0 %v99
  %v1898 = vpop.f32.mrf.mxu0
  %v1899 = vadd.f32 %v1654, %v1898
  %v1900 = vpop.f32.mrf.mxu0
  %1901 = vmatprep.mubr.f32.mxu0 %v125
  %1902 = vmatmul.mubr.f32.gmra.mxu0 %v124
  %v1903 = vpop.f32.mrf.mxu0
  %v1904 = vadd.f32 %v1659, %v1903
  %v1905 = vpop.f32.mrf.mxu0
  %1906 = vmatprep.mubr.f32.mxu0 %v150
  %1907 = vmatmul.mubr.f32.gmra.mxu0 %v149
  %v1908 = vpop.f32.mrf.mxu0
  %v1909 = vadd.f32 %v1664, %v1908
  %v1910 = vpop.f32.mrf.mxu0
  %1911 = vmatprep.mubr.f32.mxu0 %v175
  %1912 = vmatmul.mubr.f32.gmra.mxu0 %v174
  %v1913 = vpop.f32.mrf.mxu0
  %v1914 = vadd.f32 %v1669, %v1913
  %v1915 = vpop.f32.mrf.mxu0
  %1916 = vmatprep.mubr.f32.mxu0 %v200
  %1917 = vmatmul.mubr.f32.gmra.mxu0 %v199
  %v1918 = vpop.f32.mrf.mxu0
  %v1919 = vadd.f32 %v1674, %v1918
  %v1920 = vpop.f32.mrf.mxu0
  %1921 = vmatprep.mubr.f32.mxu0 %v225
  %1922 = vmatmul.mubr.f32.gmra.mxu0 %v224
  %v1923 = vpop.f32.mrf.mxu0
  %v1924 = vadd.f32 %v1679, %v1923
  %v1925 = vpop.f32.mrf.mxu0
  %1926 = vmatprep.mubr.f32.mxu0 %v250
  %1927 = vmatmul.mubr.f32.gmra.mxu0 %v249
  %v1928 = vpop.f32.mrf.mxu0
  %v1929 = vadd.f32 %v1684, %v1928
  %v1930 = vpop.f32.mrf.mxu0
  %1931 = vmatprep.mubr.f32.mxu0 %v275
  %1932 = vmatmul.mubr.f32.gmra.mxu0 %v274
  %v1933 = vpop.f32.mrf.mxu0
  %v1934 = vadd.f32 %v1689, %v1933
  %v1935 = vpop.f32.mrf.mxu0
  %1936 = vmatprep.mubr.f32.mxu0 %v300
  %1937 = vmatmul.mubr.f32.gmra.mxu0 %v299
  %v1938 = vpop.f32.mrf.mxu0
  %v1939 = vadd.f32 %v1694, %v1938
  %v1940 = vpop.f32.mrf.mxu0
  %1941 = vmatprep.mubr.f32.mxu0 %v325
  %1942 = vmatmul.mubr.f32.gmra.mxu0 %v324
  %v1943 = vpop.f32.mrf.mxu0
  %v1944 = vadd.f32 %v1699, %v1943
  %v1945 = vpop.f32.mrf.mxu0
  %1946 = vmatprep.mubr.f32.mxu0 %v350
  %1947 = vmatmul.mubr.f32.gmra.mxu0 %v349
  %v1948 = vpop.f32.mrf.mxu0
  %v1949 = vadd.f32 %v1704, %v1948
  %v1950 = vpop.f32.mrf.mxu0
  %1951 = vmatprep.mubr.f32.mxu0 %v375
  %1952 = vmatmul.mubr.f32.gmra.mxu0 %v374
  %v1953 = vpop.f32.mrf.mxu0
  %v1954 = vadd.f32 %v1709, %v1953
  %v1955 = vpop.f32.mrf.mxu0
  %1956 = vmatprep.mubr.f32.mxu0 %v400
  %1957 = vmatmul.mubr.f32.gmra.mxu0 %v399
  %v1958 = vpop.f32.mrf.mxu0
  %v1959 = vadd.f32 %v1714, %v1958
  %v1960 = vpop.f32.mrf.mxu0
  %1961 = vmatprep.mubr.f32.mxu0 %v425
  %1962 = vmatmul.mubr.f32.gmra.mxu0 %v424
  %v1963 = vpop.f32.mrf.mxu0
  %v1964 = vadd.f32 %v1719, %v1963
  %v1965 = vpop.f32.mrf.mxu0
  %1966 = vmatprep.mubr.f32.mxu0 %v450
  %1967 = vmatmul.mubr.f32.gmra.mxu0 %v449
  %v1968 = vpop.f32.mrf.mxu0
  %v1969 = vadd.f32 %v1724, %v1968
  %v1970 = vpop.f32.mrf.mxu0
  %1971 = vmatprep.mubr.f32.mxu0 %v475
  %1972 = vmatmul.mubr.f32.gmra.mxu0 %v474
  %v1973 = vpop.f32.mrf.mxu0
  %v1974 = vadd.f32 %v1729, %v1973
  %v1975 = vpop.f32.mrf.mxu0
  %1976 = vmatprep.mubr.f32.mxu0 %v500
  %1977 = vmatmul.mubr.f32.gmra.mxu0 %v499
  %v1978 = vpop.f32.mrf.mxu0
  %v1979 = vadd.f32 %v1734, %v1978
  %v1980 = vpop.f32.mrf.mxu0
  %1981 = vmatprep.mubr.f32.mxu0 %v525
  %1982 = vmatmul.mubr.f32.gmra.mxu0 %v524
  %v1983 = vpop.f32.mrf.mxu0
  %v1984 = vadd.f32 %v1739, %v1983
  %v1985 = vpop.f32.mrf.mxu0
  %1986 = vmatprep.mubr.f32.mxu0 %v550
  %1987 = vmatmul.mubr.f32.gmra.mxu0 %v549
  %v1988 = vpop.f32.mrf.mxu0
  %v1989 = vadd.f32 %v1744, %v1988
  %v1990 = vpop.f32.mrf.mxu0
  %1991 = vmatprep.mubr.f32.mxu0 %v575
  %1992 = vmatmul.mubr.f32.gmra.mxu0 %v574
  %v1993 = vpop.f32.mrf.mxu0
  %v1994 = vadd.f32 %v1749, %v1993
  %v1995 = vpop.f32.mrf.mxu0
  %1996 = vmatprep.mubr.f32.mxu0 %v600
  %1997 = vmatmul.mubr.f32.gmra.mxu0 %v599
  %v1998 = vpop.f32.mrf.mxu0
  %v1999 = vadd.f32 %v1754, %v1998
  %v2000 = vpop.f32.mrf.mxu0
  %2001 = vmatprep.mubr.f32.mxu0 %v625
  %2002 = vmatmul.mubr.f32.gmra.mxu0 %v624
  %v2003 = vpop.f32.mrf.mxu0
  %v2004 = vadd.f32 %v1759, %v2003
  %v2005 = vpop.f32.mrf.mxu0
  %2006 = vmatprep.mubr.f32.mxu0 %v650
  %2007 = vmatmul.mubr.f32.gmra.mxu0 %v649
  %v2008 = vpop.f32.mrf.mxu0
  %v2009 = vadd.f32 %v1764, %v2008
  %v2010 = vpop.f32.mrf.mxu0
  %2011 = vmatprep.mubr.f32.mxu0 %v675
  %2012 = vmatmul.mubr.f32.gmra.mxu0 %v674
  %v2013 = vpop.f32.mrf.mxu0
  %v2014 = vadd.f32 %v1769, %v2013
  %v2015 = vpop.f32.mrf.mxu0
  %2016 = vmatprep.mubr.f32.mxu0 %v700
  %2017 = vmatmul.mubr.f32.gmra.mxu0 %v699
  %v2018 = vpop.f32.mrf.mxu0
  %v2019 = vadd.f32 %v1774, %v2018
  %v2020 = vpop.f32.mrf.mxu0
  %2021 = vmatprep.mubr.f32.mxu0 %v725
  %2022 = vmatmul.mubr.f32.gmra.mxu0 %v724
  %v2023 = vpop.f32.mrf.mxu0
  %v2024 = vadd.f32 %v1779, %v2023
  %v2025 = vpop.f32.mrf.mxu0
  %2026 = vmatprep.mubr.f32.mxu0 %v750
  %2027 = vmatmul.mubr.f32.gmra.mxu0 %v749
  %v2028 = vpop.f32.mrf.mxu0
  %v2029 = vadd.f32 %v1784, %v2028
  %v2030 = vpop.f32.mrf.mxu0
  %2031 = vmatprep.mubr.f32.mxu0 %v775
  %2032 = vmatmul.mubr.f32.gmra.mxu0 %v774
  %v2033 = vpop.f32.mrf.mxu0
  %v2034 = vadd.f32 %v1789, %v2033
  %v2035 = vpop.f32.mrf.mxu0
  %2036 = vmatprep.mubr.f32.mxu0 %v800
  %2037 = vmatmul.mubr.f32.gmra.mxu0 %v799
  %v2038 = vpop.f32.mrf.mxu0
  %v2039 = vadd.f32 %v1794, %v2038
  %v2040 = vpop.f32.mrf.mxu0
  %2041 = vmatprep.mubr.f32.mxu0 %v825
  %2042 = vmatmul.mubr.f32.gmra.mxu0 %v824
  %v2043 = vpop.f32.mrf.mxu0
  %v2044 = vadd.f32 %v1799, %v2043
  %v2045 = vpop.f32.mrf.mxu0
  %2046 = vmatprep.mubr.f32.mxu0 %v850
  %2047 = vmatmul.mubr.f32.gmra.mxu0 %v849
  %v2048 = vpop.f32.mrf.mxu0
  %v2049 = vadd.f32 %v1804, %v2048
  %v2050 = vpop.f32.mrf.mxu0
  %2051 = vmatprep.mubr.f32.mxu0 %v875
  %2052 = vmatmul.mubr.f32.gmra.mxu0 %v874
  %v2053 = vpop.f32.mrf.mxu0
  %v2054 = vadd.f32 %v1809, %v2053
  %v2055 = vpop.f32.mrf.mxu0
  %2056 = vmatprep.mubr.f32.mxu0 %v900
  %2057 = vmatmul.mubr.f32.gmra.mxu0 %v899
  %v2058 = vpop.f32.mrf.mxu0
  %v2059 = vadd.f32 %v1814, %v2058
  %v2060 = vpop.f32.mrf.mxu0
  %2061 = vdwg.mxu0
  %2062 = vmatprep.subr.mxu0 0.0
  %2063 = vmatpush1.msra.mxu0 %v1031
  %2064 = vmatprep.subr.mxu0 0.0
  %2065 = vmatpush1.msra.mxu0 %v1030
  %2066 = vmatprep.subr.mxu0 0.0
  %2067 = vmatpush1.msra.mxu0 %v1029
  %2068 = vmatprep.subr.mxu0 0.0
  %2069 = vmatpush1.msra.mxu0 %v1028
  %2070 = vmatprep.subr.mxu0 0.0
  %2071 = vmatpush1.msra.mxu0 %v1027
  %2072 = vmatprep.subr.mxu0 0.0
  %2073 = vmatpush1.msra.mxu0 %v1026
  %2074 = vmatprep.subr.mxu0 0.0
  %2075 = vmatpush1.msra.mxu0 %v1025
  %2076 = vmatprep.subr.mxu0 0.0
  %2077 = vmatpush1.msra.mxu0 %v1024
  %2078 = vmatprep.subr.mxu0 0.0
  %2079 = vmatpush1.msra.mxu0 %v1023
  %2080 = vmatprep.subr.mxu0 0.0
  %2081 = vmatpush1.msra.mxu0 %v1022
  %2082 = vmatprep.subr.mxu0 0.0
  %2083 = vmatpush1.msra.mxu0 %v1021
  %2084 = vmatprep.subr.mxu0 0.0
  %2085 = vmatpush1.msra.mxu0 %v1020
  %2086 = vmatprep.subr.mxu0 0.0
  %2087 = vmatpush1.msra.mxu0 %v1019
  %2088 = vmatprep.subr.mxu0 0.0
  %2089 = vmatpush1.msra.mxu0 %v1018
  %2090 = vmatprep.subr.mxu0 0.0
  %2091 = vmatpush1.msra.mxu0 %v1017
  %2092 = vmatprep.subr.mxu0 0.0
  %2093 = vmatpush1.msra.mxu0 %v1016
  %2094 = vmatprep.subr.mxu0 0.0
  %2095 = vmatpush2.msra.mxu0 %v1047
  %2096 = vmatprep.subr.mxu0 0.0
  %2097 = vmatpush2.msra.mxu0 %v1046
  %2098 = vmatprep.subr.mxu0 0.0
  %2099 = vmatpush2.msra.mxu0 %v1045
  %2100 = vmatprep.subr.mxu0 0.0
  %2101 = vmatpush2.msra.mxu0 %v1044
  %2102 = vmatprep.subr.mxu0 0.0
  %2103 = vmatpush2.msra.mxu0 %v1043
  %2104 = vmatprep.subr.mxu0 0.0
  %2105 = vmatpush2.msra.mxu0 %v1042
  %2106 = vmatprep.subr.mxu0 0.0
  %2107 = vmatpush2.msra.mxu0 %v1041
  %2108 = vmatprep.subr.mxu0 0.0
  %2109 = vmatpush2.msra.mxu0 %v1040
  %2110 = vmatprep.subr.mxu0 0.0
  %2111 = vmatpush2.msra.mxu0 %v1039
  %2112 = vmatprep.subr.mxu0 0.0
  %2113 = vmatpush2.msra.mxu0 %v1038
  %2114 = vmatprep.subr.mxu0 0.0
  %2115 = vmatpush2.msra.mxu0 %v1037
  %2116 = vmatprep.subr.mxu0 0.0
  %2117 = vmatpush2.msra.mxu0 %v1036
  %2118 = vmatprep.subr.mxu0 0.0
  %2119 = vmatpush2.msra.mxu0 %v1035
  %2120 = vmatprep.subr.mxu0 0.0
  %2121 = vmatpush2.msra.mxu0 %v1034
  %2122 = vmatprep.subr.mxu0 0.0
  %2123 = vmatpush2.msra.mxu0 %v1033
  %2124 = vmatprep.subr.mxu0 0.0
  %2125 = vmatpush2.msra.mxu0 %v1032
  %2126 = vmatprep.mubr.f32.mxu0 %v27
  %2127 = vmatmul.mubr.f32.gmra.mxu0 %v26
  %v2128 = vpop.f32.mrf.mxu0
  %v2129 = vadd.f32 %v1884, %v2128
  %v2130 = vpop.f32.mrf.mxu0
  %2131 = vmatprep.mubr.f32.mxu0 %v52
  %2132 = vmatmul.mubr.f32.gmra.mxu0 %v51
  %v2133 = vpop.f32.mrf.mxu0
  %v2134 = vadd.f32 %v1889, %v2133
  %v2135 = vpop.f32.mrf.mxu0
  %2136 = vmatprep.mubr.f32.mxu0 %v77
  %2137 = vmatmul.mubr.f32.gmra.mxu0 %v76
  %v2138 = vpop.f32.mrf.mxu0
  %v2139 = vadd.f32 %v1894, %v2138
  %v2140 = vpop.f32.mrf.mxu0
  %2141 = vmatprep.mubr.f32.mxu0 %v102
  %2142 = vmatmul.mubr.f32.gmra.mxu0 %v101
  %v2143 = vpop.f32.mrf.mxu0
  %v2144 = vadd.f32 %v1899, %v2143
  %v2145 = vpop.f32.mrf.mxu0
  %2146 = vmatprep.mubr.f32.mxu0 %v127
  %2147 = vmatmul.mubr.f32.gmra.mxu0 %v126
  %v2148 = vpop.f32.mrf.mxu0
  %v2149 = vadd.f32 %v1904, %v2148
  %v2150 = vpop.f32.mrf.mxu0
  %2151 = vmatprep.mubr.f32.mxu0 %v152
  %2152 = vmatmul.mubr.f32.gmra.mxu0 %v151
  %v2153 = vpop.f32.mrf.mxu0
  %v2154 = vadd.f32 %v1909, %v2153
  %v2155 = vpop.f32.mrf.mxu0
  %2156 = vmatprep.mubr.f32.mxu0 %v177
  %2157 = vmatmul.mubr.f32.gmra.mxu0 %v176
  %v2158 = vpop.f32.mrf.mxu0
  %v2159 = vadd.f32 %v1914, %v2158
  %v2160 = vpop.f32.mrf.mxu0
  %2161 = vmatprep.mubr.f32.mxu0 %v202
  %2162 = vmatmul.mubr.f32.gmra.mxu0 %v201
  %v2163 = vpop.f32.mrf.mxu0
  %v2164 = vadd.f32 %v1919, %v2163
  %v2165 = vpop.f32.mrf.mxu0
  %2166 = vmatprep.mubr.f32.mxu0 %v227
  %2167 = vmatmul.mubr.f32.gmra.mxu0 %v226
  %v2168 = vpop.f32.mrf.mxu0
  %v2169 = vadd.f32 %v1924, %v2168
  %v2170 = vpop.f32.mrf.mxu0
  %2171 = vmatprep.mubr.f32.mxu0 %v252
  %2172 = vmatmul.mubr.f32.gmra.mxu0 %v251
  %v2173 = vpop.f32.mrf.mxu0
  %v2174 = vadd.f32 %v1929, %v2173
  %v2175 = vpop.f32.mrf.mxu0
  %2176 = vmatprep.mubr.f32.mxu0 %v277
  %2177 = vmatmul.mubr.f32.gmra.mxu0 %v276
  %v2178 = vpop.f32.mrf.mxu0
  %v2179 = vadd.f32 %v1934, %v2178
  %v2180 = vpop.f32.mrf.mxu0
  %2181 = vmatprep.mubr.f32.mxu0 %v302
  %2182 = vmatmul.mubr.f32.gmra.mxu0 %v301
  %v2183 = vpop.f32.mrf.mxu0
  %v2184 = vadd.f32 %v1939, %v2183
  %v2185 = vpop.f32.mrf.mxu0
  %2186 = vmatprep.mubr.f32.mxu0 %v327
  %2187 = vmatmul.mubr.f32.gmra.mxu0 %v326
  %v2188 = vpop.f32.mrf.mxu0
  %v2189 = vadd.f32 %v1944, %v2188
  %v2190 = vpop.f32.mrf.mxu0
  %2191 = vmatprep.mubr.f32.mxu0 %v352
  %2192 = vmatmul.mubr.f32.gmra.mxu0 %v351
  %v2193 = vpop.f32.mrf.mxu0
  %v2194 = vadd.f32 %v1949, %v2193
  %v2195 = vpop.f32.mrf.mxu0
  %2196 = vmatprep.mubr.f32.mxu0 %v377
  %2197 = vmatmul.mubr.f32.gmra.mxu0 %v376
  %v2198 = vpop.f32.mrf.mxu0
  %v2199 = vadd.f32 %v1954, %v2198
  %v2200 = vpop.f32.mrf.mxu0
  %2201 = vmatprep.mubr.f32.mxu0 %v402
  %2202 = vmatmul.mubr.f32.gmra.mxu0 %v401
  %v2203 = vpop.f32.mrf.mxu0
  %v2204 = vadd.f32 %v1959, %v2203
  %v2205 = vpop.f32.mrf.mxu0
  %2206 = vmatprep.mubr.f32.mxu0 %v427
  %2207 = vmatmul.mubr.f32.gmra.mxu0 %v426
  %v2208 = vpop.f32.mrf.mxu0
  %v2209 = vadd.f32 %v1964, %v2208
  %v2210 = vpop.f32.mrf.mxu0
  %2211 = vmatprep.mubr.f32.mxu0 %v452
  %2212 = vmatmul.mubr.f32.gmra.mxu0 %v451
  %v2213 = vpop.f32.mrf.mxu0
  %v2214 = vadd.f32 %v1969, %v2213
  %v2215 = vpop.f32.mrf.mxu0
  %2216 = vmatprep.mubr.f32.mxu0 %v477
  %2217 = vmatmul.mubr.f32.gmra.mxu0 %v476
  %v2218 = vpop.f32.mrf.mxu0
  %v2219 = vadd.f32 %v1974, %v2218
  %v2220 = vpop.f32.mrf.mxu0
  %2221 = vmatprep.mubr.f32.mxu0 %v502
  %2222 = vmatmul.mubr.f32.gmra.mxu0 %v501
  %v2223 = vpop.f32.mrf.mxu0
  %v2224 = vadd.f32 %v1979, %v2223
  %v2225 = vpop.f32.mrf.mxu0
  %2226 = vmatprep.mubr.f32.mxu0 %v527
  %2227 = vmatmul.mubr.f32.gmra.mxu0 %v526
  %v2228 = vpop.f32.mrf.mxu0
  %v2229 = vadd.f32 %v1984, %v2228
  %v2230 = vpop.f32.mrf.mxu0
  %2231 = vmatprep.mubr.f32.mxu0 %v552
  %2232 = vmatmul.mubr.f32.gmra.mxu0 %v551
  %v2233 = vpop.f32.mrf.mxu0
  %v2234 = vadd.f32 %v1989, %v2233
  %v2235 = vpop.f32.mrf.mxu0
  %2236 = vmatprep.mubr.f32.mxu0 %v577
  %2237 = vmatmul.mubr.f32.gmra.mxu0 %v576
  %v2238 = vpop.f32.mrf.mxu0
  %v2239 = vadd.f32 %v1994, %v2238
  %v2240 = vpop.f32.mrf.mxu0
  %2241 = vmatprep.mubr.f32.mxu0 %v602
  %2242 = vmatmul.mubr.f32.gmra.mxu0 %v601
  %v2243 = vpop.f32.mrf.mxu0
  %v2244 = vadd.f32 %v1999, %v2243
  %v2245 = vpop.f32.mrf.mxu0
  %2246 = vmatprep.mubr.f32.mxu0 %v627
  %2247 = vmatmul.mubr.f32.gmra.mxu0 %v626
  %v2248 = vpop.f32.mrf.mxu0
  %v2249 = vadd.f32 %v2004, %v2248
  %v2250 = vpop.f32.mrf.mxu0
  %2251 = vmatprep.mubr.f32.mxu0 %v652
  %2252 = vmatmul.mubr.f32.gmra.mxu0 %v651
  %v2253 = vpop.f32.mrf.mxu0
  %v2254 = vadd.f32 %v2009, %v2253
  %v2255 = vpop.f32.mrf.mxu0
  %2256 = vmatprep.mubr.f32.mxu0 %v677
  %2257 = vmatmul.mubr.f32.gmra.mxu0 %v676
  %v2258 = vpop.f32.mrf.mxu0
  %v2259 = vadd.f32 %v2014, %v2258
  %v2260 = vpop.f32.mrf.mxu0
  %2261 = vmatprep.mubr.f32.mxu0 %v702
  %2262 = vmatmul.mubr.f32.gmra.mxu0 %v701
  %v2263 = vpop.f32.mrf.mxu0
  %v2264 = vadd.f32 %v2019, %v2263
  %v2265 = vpop.f32.mrf.mxu0
  %2266 = vmatprep.mubr.f32.mxu0 %v727
  %2267 = vmatmul.mubr.f32.gmra.mxu0 %v726
  %v2268 = vpop.f32.mrf.mxu0
  %v2269 = vadd.f32 %v2024, %v2268
  %v2270 = vpop.f32.mrf.mxu0
  %2271 = vmatprep.mubr.f32.mxu0 %v752
  %2272 = vmatmul.mubr.f32.gmra.mxu0 %v751
  %v2273 = vpop.f32.mrf.mxu0
  %v2274 = vadd.f32 %v2029, %v2273
  %v2275 = vpop.f32.mrf.mxu0
  %2276 = vmatprep.mubr.f32.mxu0 %v777
  %2277 = vmatmul.mubr.f32.gmra.mxu0 %v776
  %v2278 = vpop.f32.mrf.mxu0
  %v2279 = vadd.f32 %v2034, %v2278
  %v2280 = vpop.f32.mrf.mxu0
  %2281 = vmatprep.mubr.f32.mxu0 %v802
  %2282 = vmatmul.mubr.f32.gmra.mxu0 %v801
  %v2283 = vpop.f32.mrf.mxu0
  %v2284 = vadd.f32 %v2039, %v2283
  %v2285 = vpop.f32.mrf.mxu0
  %2286 = vmatprep.mubr.f32.mxu0 %v827
  %2287 = vmatmul.mubr.f32.gmra.mxu0 %v826
  %v2288 = vpop.f32.mrf.mxu0
  %v2289 = vadd.f32 %v2044, %v2288
  %v2290 = vpop.f32.mrf.mxu0
  %2291 = vmatprep.mubr.f32.mxu0 %v852
  %2292 = vmatmul.mubr.f32.gmra.mxu0 %v851
  %v2293 = vpop.f32.mrf.mxu0
  %v2294 = vadd.f32 %v2049, %v2293
  %v2295 = vpop.f32.mrf.mxu0
  %2296 = vmatprep.mubr.f32.mxu0 %v877
  %2297 = vmatmul.mubr.f32.gmra.mxu0 %v876
  %v2298 = vpop.f32.mrf.mxu0
  %v2299 = vadd.f32 %v2054, %v2298
  %v2300 = vpop.f32.mrf.mxu0
  %2301 = vmatprep.mubr.f32.mxu0 %v902
  %2302 = vmatmul.mubr.f32.gmra.mxu0 %v901
  %v2303 = vpop.f32.mrf.mxu0
  %v2304 = vadd.f32 %v2059, %v2303
  %v2305 = vpop.f32.mrf.mxu0
  %2306 = vdwg.mxu0
  %2307 = vmatprep.subr.mxu0 0.0
  %2308 = vmatpush1.msra.mxu0 %v1063
  %2309 = vmatprep.subr.mxu0 0.0
  %2310 = vmatpush1.msra.mxu0 %v1062
  %2311 = vmatprep.subr.mxu0 0.0
  %2312 = vmatpush1.msra.mxu0 %v1061
  %2313 = vmatprep.subr.mxu0 0.0
  %2314 = vmatpush1.msra.mxu0 %v1060
  %2315 = vmatprep.subr.mxu0 0.0
  %2316 = vmatpush1.msra.mxu0 %v1059
  %2317 = vmatprep.subr.mxu0 0.0
  %2318 = vmatpush1.msra.mxu0 %v1058
  %2319 = vmatprep.subr.mxu0 0.0
  %2320 = vmatpush1.msra.mxu0 %v1057
  %2321 = vmatprep.subr.mxu0 0.0
  %2322 = vmatpush1.msra.mxu0 %v1056
  %2323 = vmatprep.subr.mxu0 0.0
  %2324 = vmatpush1.msra.mxu0 %v1055
  %2325 = vmatprep.subr.mxu0 0.0
  %2326 = vmatpush1.msra.mxu0 %v1054
  %2327 = vmatprep.subr.mxu0 0.0
  %2328 = vmatpush1.msra.mxu0 %v1053
  %2329 = vmatprep.subr.mxu0 0.0
  %2330 = vmatpush1.msra.mxu0 %v1052
  %2331 = vmatprep.subr.mxu0 0.0
  %2332 = vmatpush1.msra.mxu0 %v1051
  %2333 = vmatprep.subr.mxu0 0.0
  %2334 = vmatpush1.msra.mxu0 %v1050
  %2335 = vmatprep.subr.mxu0 0.0
  %2336 = vmatpush1.msra.mxu0 %v1049
  %2337 = vmatprep.subr.mxu0 0.0
  %2338 = vmatpush1.msra.mxu0 %v1048
  %2339 = vmatprep.subr.mxu0 0.0
  %2340 = vmatpush2.msra.mxu0 %v1079
  %2341 = vmatprep.subr.mxu0 0.0
  %2342 = vmatpush2.msra.mxu0 %v1078
  %2343 = vmatprep.subr.mxu0 0.0
  %2344 = vmatpush2.msra.mxu0 %v1077
  %2345 = vmatprep.subr.mxu0 0.0
  %2346 = vmatpush2.msra.mxu0 %v1076
  %2347 = vmatprep.subr.mxu0 0.0
  %2348 = vmatpush2.msra.mxu0 %v1075
  %2349 = vmatprep.subr.mxu0 0.0
  %2350 = vmatpush2.msra.mxu0 %v1074
  %2351 = vmatprep.subr.mxu0 0.0
  %2352 = vmatpush2.msra.mxu0 %v1073
  %2353 = vmatprep.subr.mxu0 0.0
  %2354 = vmatpush2.msra.mxu0 %v1072
  %2355 = vmatprep.subr.mxu0 0.0
  %2356 = vmatpush2.msra.mxu0 %v1071
  %2357 = vmatprep.subr.mxu0 0.0
  %2358 = vmatpush2.msra.mxu0 %v1070
  %2359 = vmatprep.subr.mxu0 0.0
  %2360 = vmatpush2.msra.mxu0 %v1069
  %2361 = vmatprep.subr.mxu0 0.0
  %2362 = vmatpush2.msra.mxu0 %v1068
  %2363 = vmatprep.subr.mxu0 0.0
  %2364 = vmatpush2.msra.mxu0 %v1067
  %2365 = vmatprep.subr.mxu0 0.0
  %2366 = vmatpush2.msra.mxu0 %v1066
  %2367 = vmatprep.subr.mxu0 0.0
  %2368 = vmatpush2.msra.mxu0 %v1065
  %2369 = vmatprep.subr.mxu0 0.0
  %2370 = vmatpush2.msra.mxu0 %v1064
  %2371 = vmatprep.mubr.f32.mxu0 %v29
  %2372 = vmatmul.mubr.f32.gmra.mxu0 %v28
  %v2373 = vpop.f32.mrf.mxu0
  %v2374 = vadd.f32 %v2129, %v2373
  %v2375 = vpop.f32.mrf.mxu0
  %2376 = vmatprep.mubr.f32.mxu0 %v54
  %2377 = vmatmul.mubr.f32.gmra.mxu0 %v53
  %v2378 = vpop.f32.mrf.mxu0
  %v2379 = vadd.f32 %v2134, %v2378
  %v2380 = vpop.f32.mrf.mxu0
  %2381 = vmatprep.mubr.f32.mxu0 %v79
  %2382 = vmatmul.mubr.f32.gmra.mxu0 %v78
  %v2383 = vpop.f32.mrf.mxu0
  %v2384 = vadd.f32 %v2139, %v2383
  %v2385 = vpop.f32.mrf.mxu0
  %2386 = vmatprep.mubr.f32.mxu0 %v104
  %2387 = vmatmul.mubr.f32.gmra.mxu0 %v103
  %v2388 = vpop.f32.mrf.mxu0
  %v2389 = vadd.f32 %v2144, %v2388
  %v2390 = vpop.f32.mrf.mxu0
  %2391 = vmatprep.mubr.f32.mxu0 %v129
  %2392 = vmatmul.mubr.f32.gmra.mxu0 %v128
  %v2393 = vpop.f32.mrf.mxu0
  %v2394 = vadd.f32 %v2149, %v2393
  %v2395 = vpop.f32.mrf.mxu0
  %2396 = vmatprep.mubr.f32.mxu0 %v154
  %2397 = vmatmul.mubr.f32.gmra.mxu0 %v153
  %v2398 = vpop.f32.mrf.mxu0
  %v2399 = vadd.f32 %v2154, %v2398
  %v2400 = vpop.f32.mrf.mxu0
  %2401 = vmatprep.mubr.f32.mxu0 %v179
  %2402 = vmatmul.mubr.f32.gmra.mxu0 %v178
  %v2403 = vpop.f32.mrf.mxu0
  %v2404 = vadd.f32 %v2159, %v2403
  %v2405 = vpop.f32.mrf.mxu0
  %2406 = vmatprep.mubr.f32.mxu0 %v204
  %2407 = vmatmul.mubr.f32.gmra.mxu0 %v203
  %v2408 = vpop.f32.mrf.mxu0
  %v2409 = vadd.f32 %v2164, %v2408
  %v2410 = vpop.f32.mrf.mxu0
  %2411 = vmatprep.mubr.f32.mxu0 %v229
  %2412 = vmatmul.mubr.f32.gmra.mxu0 %v228
  %v2413 = vpop.f32.mrf.mxu0
  %v2414 = vadd.f32 %v2169, %v2413
  %v2415 = vpop.f32.mrf.mxu0
  %2416 = vmatprep.mubr.f32.mxu0 %v254
  %2417 = vmatmul.mubr.f32.gmra.mxu0 %v253
  %v2418 = vpop.f32.mrf.mxu0
  %v2419 = vadd.f32 %v2174, %v2418
  %v2420 = vpop.f32.mrf.mxu0
  %2421 = vmatprep.mubr.f32.mxu0 %v279
  %2422 = vmatmul.mubr.f32.gmra.mxu0 %v278
  %v2423 = vpop.f32.mrf.mxu0
  %v2424 = vadd.f32 %v2179, %v2423
  %v2425 = vpop.f32.mrf.mxu0
  %2426 = vmatprep.mubr.f32.mxu0 %v304
  %2427 = vmatmul.mubr.f32.gmra.mxu0 %v303
  %v2428 = vpop.f32.mrf.mxu0
  %v2429 = vadd.f32 %v2184, %v2428
  %v2430 = vpop.f32.mrf.mxu0
  %2431 = vmatprep.mubr.f32.mxu0 %v329
  %2432 = vmatmul.mubr.f32.gmra.mxu0 %v328
  %v2433 = vpop.f32.mrf.mxu0
  %v2434 = vadd.f32 %v2189, %v2433
  %v2435 = vpop.f32.mrf.mxu0
  %2436 = vmatprep.mubr.f32.mxu0 %v354
  %2437 = vmatmul.mubr.f32.gmra.mxu0 %v353
  %v2438 = vpop.f32.mrf.mxu0
  %v2439 = vadd.f32 %v2194, %v2438
  %v2440 = vpop.f32.mrf.mxu0
  %2441 = vmatprep.mubr.f32.mxu0 %v379
  %2442 = vmatmul.mubr.f32.gmra.mxu0 %v378
  %v2443 = vpop.f32.mrf.mxu0
  %v2444 = vadd.f32 %v2199, %v2443
  %v2445 = vpop.f32.mrf.mxu0
  %2446 = vmatprep.mubr.f32.mxu0 %v404
  %2447 = vmatmul.mubr.f32.gmra.mxu0 %v403
  %v2448 = vpop.f32.mrf.mxu0
  %v2449 = vadd.f32 %v2204, %v2448
  %v2450 = vpop.f32.mrf.mxu0
  %2451 = vmatprep.mubr.f32.mxu0 %v429
  %2452 = vmatmul.mubr.f32.gmra.mxu0 %v428
  %v2453 = vpop.f32.mrf.mxu0
  %v2454 = vadd.f32 %v2209, %v2453
  %v2455 = vpop.f32.mrf.mxu0
  %2456 = vmatprep.mubr.f32.mxu0 %v454
  %2457 = vmatmul.mubr.f32.gmra.mxu0 %v453
  %v2458 = vpop.f32.mrf.mxu0
  %v2459 = vadd.f32 %v2214, %v2458
  %v2460 = vpop.f32.mrf.mxu0
  %2461 = vmatprep.mubr.f32.mxu0 %v479
  %2462 = vmatmul.mubr.f32.gmra.mxu0 %v478
  %v2463 = vpop.f32.mrf.mxu0
  %v2464 = vadd.f32 %v2219, %v2463
  %v2465 = vpop.f32.mrf.mxu0
  %2466 = vmatprep.mubr.f32.mxu0 %v504
  %2467 = vmatmul.mubr.f32.gmra.mxu0 %v503
  %v2468 = vpop.f32.mrf.mxu0
  %v2469 = vadd.f32 %v2224, %v2468
  %v2470 = vpop.f32.mrf.mxu0
  %2471 = vmatprep.mubr.f32.mxu0 %v529
  %2472 = vmatmul.mubr.f32.gmra.mxu0 %v528
  %v2473 = vpop.f32.mrf.mxu0
  %v2474 = vadd.f32 %v2229, %v2473
  %v2475 = vpop.f32.mrf.mxu0
  %2476 = vmatprep.mubr.f32.mxu0 %v554
  %2477 = vmatmul.mubr.f32.gmra.mxu0 %v553
  %v2478 = vpop.f32.mrf.mxu0
  %v2479 = vadd.f32 %v2234, %v2478
  %v2480 = vpop.f32.mrf.mxu0
  %2481 = vmatprep.mubr.f32.mxu0 %v579
  %2482 = vmatmul.mubr.f32.gmra.mxu0 %v578
  %v2483 = vpop.f32.mrf.mxu0
  %v2484 = vadd.f32 %v2239, %v2483
  %v2485 = vpop.f32.mrf.mxu0
  %2486 = vmatprep.mubr.f32.mxu0 %v604
  %2487 = vmatmul.mubr.f32.gmra.mxu0 %v603
  %v2488 = vpop.f32.mrf.mxu0
  %v2489 = vadd.f32 %v2244, %v2488
  %v2490 = vpop.f32.mrf.mxu0
  %2491 = vmatprep.mubr.f32.mxu0 %v629
  %2492 = vmatmul.mubr.f32.gmra.mxu0 %v628
  %v2493 = vpop.f32.mrf.mxu0
  %v2494 = vadd.f32 %v2249, %v2493
  %v2495 = vpop.f32.mrf.mxu0
  %2496 = vmatprep.mubr.f32.mxu0 %v654
  %2497 = vmatmul.mubr.f32.gmra.mxu0 %v653
  %v2498 = vpop.f32.mrf.mxu0
  %v2499 = vadd.f32 %v2254, %v2498
  %v2500 = vpop.f32.mrf.mxu0
  %2501 = vmatprep.mubr.f32.mxu0 %v679
  %2502 = vmatmul.mubr.f32.gmra.mxu0 %v678
  %v2503 = vpop.f32.mrf.mxu0
  %v2504 = vadd.f32 %v2259, %v2503
  %v2505 = vpop.f32.mrf.mxu0
  %2506 = vmatprep.mubr.f32.mxu0 %v704
  %2507 = vmatmul.mubr.f32.gmra.mxu0 %v703
  %v2508 = vpop.f32.mrf.mxu0
  %v2509 = vadd.f32 %v2264, %v2508
  %v2510 = vpop.f32.mrf.mxu0
  %2511 = vmatprep.mubr.f32.mxu0 %v729
  %2512 = vmatmul.mubr.f32.gmra.mxu0 %v728
  %v2513 = vpop.f32.mrf.mxu0
  %v2514 = vadd.f32 %v2269, %v2513
  %v2515 = vpop.f32.mrf.mxu0
  %2516 = vmatprep.mubr.f32.mxu0 %v754
  %2517 = vmatmul.mubr.f32.gmra.mxu0 %v753
  %v2518 = vpop.f32.mrf.mxu0
  %v2519 = vadd.f32 %v2274, %v2518
  %v2520 = vpop.f32.mrf.mxu0
  %2521 = vmatprep.mubr.f32.mxu0 %v779
  %2522 = vmatmul.mubr.f32.gmra.mxu0 %v778
  %v2523 = vpop.f32.mrf.mxu0
  %v2524 = vadd.f32 %v2279, %v2523
  %v2525 = vpop.f32.mrf.mxu0
  %2526 = vmatprep.mubr.f32.mxu0 %v804
  %2527 = vmatmul.mubr.f32.gmra.mxu0 %v803
  %v2528 = vpop.f32.mrf.mxu0
  %v2529 = vadd.f32 %v2284, %v2528
  %v2530 = vpop.f32.mrf.mxu0
  %2531 = vmatprep.mubr.f32.mxu0 %v829
  %2532 = vmatmul.mubr.f32.gmra.mxu0 %v828
  %v2533 = vpop.f32.mrf.mxu0
  %v2534 = vadd.f32 %v2289, %v2533
  %v2535 = vpop.f32.mrf.mxu0
  %2536 = vmatprep.mubr.f32.mxu0 %v854
  %2537 = vmatmul.mubr.f32.gmra.mxu0 %v853
  %v2538 = vpop.f32.mrf.mxu0
  %v2539 = vadd.f32 %v2294, %v2538
  %v2540 = vpop.f32.mrf.mxu0
  %2541 = vmatprep.mubr.f32.mxu0 %v879
  %2542 = vmatmul.mubr.f32.gmra.mxu0 %v878
  %v2543 = vpop.f32.mrf.mxu0
  %v2544 = vadd.f32 %v2299, %v2543
  %v2545 = vpop.f32.mrf.mxu0
  %2546 = vmatprep.mubr.f32.mxu0 %v904
  %2547 = vmatmul.mubr.f32.gmra.mxu0 %v903
  %v2548 = vpop.f32.mrf.mxu0
  %v2549 = vadd.f32 %v2304, %v2548
  %v2550 = vpop.f32.mrf.mxu0
  %2551 = vdwg.mxu0
  %2552 = vmatprep.subr.mxu0 0.0
  %2553 = vmatpush1.msra.mxu0 %v1095
  %2554 = vmatprep.subr.mxu0 0.0
  %2555 = vmatpush1.msra.mxu0 %v1094
  %2556 = vmatprep.subr.mxu0 0.0
  %2557 = vmatpush1.msra.mxu0 %v1093
  %2558 = vmatprep.subr.mxu0 0.0
  %2559 = vmatpush1.msra.mxu0 %v1092
  %2560 = vmatprep.subr.mxu0 0.0
  %2561 = vmatpush1.msra.mxu0 %v1091
  %2562 = vmatprep.subr.mxu0 0.0
  %2563 = vmatpush1.msra.mxu0 %v1090
  %2564 = vmatprep.subr.mxu0 0.0
  %2565 = vmatpush1.msra.mxu0 %v1089
  %2566 = vmatprep.subr.mxu0 0.0
  %2567 = vmatpush1.msra.mxu0 %v1088
  %2568 = vmatprep.subr.mxu0 0.0
  %2569 = vmatpush1.msra.mxu0 %v1087
  %2570 = vmatprep.subr.mxu0 0.0
  %2571 = vmatpush1.msra.mxu0 %v1086
  %2572 = vmatprep.subr.mxu0 0.0
  %2573 = vmatpush1.msra.mxu0 %v1085
  %2574 = vmatprep.subr.mxu0 0.0
  %2575 = vmatpush1.msra.mxu0 %v1084
  %2576 = vmatprep.subr.mxu0 0.0
  %2577 = vmatpush1.msra.mxu0 %v1083
  %2578 = vmatprep.subr.mxu0 0.0
  %2579 = vmatpush1.msra.mxu0 %v1082
  %2580 = vmatprep.subr.mxu0 0.0
  %2581 = vmatpush1.msra.mxu0 %v1081
  %2582 = vmatprep.subr.mxu0 0.0
  %2583 = vmatpush1.msra.mxu0 %v1080
  %2584 = vmatprep.subr.mxu0 0.0
  %2585 = vmatpush2.msra.mxu0 %v1111
  %2586 = vmatprep.subr.mxu0 0.0
  %2587 = vmatpush2.msra.mxu0 %v1110
  %2588 = vmatprep.subr.mxu0 0.0
  %2589 = vmatpush2.msra.mxu0 %v1109
  %2590 = vmatprep.subr.mxu0 0.0
  %2591 = vmatpush2.msra.mxu0 %v1108
  %2592 = vmatprep.subr.mxu0 0.0
  %2593 = vmatpush2.msra.mxu0 %v1107
  %2594 = vmatprep.subr.mxu0 0.0
  %2595 = vmatpush2.msra.mxu0 %v1106
  %2596 = vmatprep.subr.mxu0 0.0
  %2597 = vmatpush2.msra.mxu0 %v1105
  %2598 = vmatprep.subr.mxu0 0.0
  %2599 = vmatpush2.msra.mxu0 %v1104
  %2600 = vmatprep.subr.mxu0 0.0
  %2601 = vmatpush2.msra.mxu0 %v1103
  %2602 = vmatprep.subr.mxu0 0.0
  %2603 = vmatpush2.msra.mxu0 %v1102
  %2604 = vmatprep.subr.mxu0 0.0
  %2605 = vmatpush2.msra.mxu0 %v1101
  %2606 = vmatprep.subr.mxu0 0.0
  %2607 = vmatpush2.msra.mxu0 %v1100
  %2608 = vmatprep.subr.mxu0 0.0
  %2609 = vmatpush2.msra.mxu0 %v1099
  %2610 = vmatprep.subr.mxu0 0.0
  %2611 = vmatpush2.msra.mxu0 %v1098
  %2612 = vmatprep.subr.mxu0 0.0
  %2613 = vmatpush2.msra.mxu0 %v1097
  %2614 = vmatprep.subr.mxu0 0.0
  %2615 = vmatpush2.msra.mxu0 %v1096
  %2616 = vmatprep.mubr.f32.mxu0 %v31
  %2617 = vmatmul.mubr.f32.gmra.mxu0 %v30
  %v2618 = vpop.f32.mrf.mxu0
  %v2619 = vadd.f32 %v2374, %v2618
  %v2620 = vpop.f32.mrf.mxu0
  %2621 = vmatprep.mubr.f32.mxu0 %v56
  %2622 = vmatmul.mubr.f32.gmra.mxu0 %v55
  %v2623 = vpop.f32.mrf.mxu0
  %v2624 = vadd.f32 %v2379, %v2623
  %v2625 = vpop.f32.mrf.mxu0
  %2626 = vmatprep.mubr.f32.mxu0 %v81
  %2627 = vmatmul.mubr.f32.gmra.mxu0 %v80
  %v2628 = vpop.f32.mrf.mxu0
  %v2629 = vadd.f32 %v2384, %v2628
  %v2630 = vpop.f32.mrf.mxu0
  %2631 = vmatprep.mubr.f32.mxu0 %v106
  %2632 = vmatmul.mubr.f32.gmra.mxu0 %v105
  %v2633 = vpop.f32.mrf.mxu0
  %v2634 = vadd.f32 %v2389, %v2633
  %v2635 = vpop.f32.mrf.mxu0
  %2636 = vmatprep.mubr.f32.mxu0 %v131
  %2637 = vmatmul.mubr.f32.gmra.mxu0 %v130
  %v2638 = vpop.f32.mrf.mxu0
  %v2639 = vadd.f32 %v2394, %v2638
  %v2640 = vpop.f32.mrf.mxu0
  %2641 = vmatprep.mubr.f32.mxu0 %v156
  %2642 = vmatmul.mubr.f32.gmra.mxu0 %v155
  %v2643 = vpop.f32.mrf.mxu0
  %v2644 = vadd.f32 %v2399, %v2643
  %v2645 = vpop.f32.mrf.mxu0
  %2646 = vmatprep.mubr.f32.mxu0 %v181
  %2647 = vmatmul.mubr.f32.gmra.mxu0 %v180
  %v2648 = vpop.f32.mrf.mxu0
  %v2649 = vadd.f32 %v2404, %v2648
  %v2650 = vpop.f32.mrf.mxu0
  %2651 = vmatprep.mubr.f32.mxu0 %v206
  %2652 = vmatmul.mubr.f32.gmra.mxu0 %v205
  %v2653 = vpop.f32.mrf.mxu0
  %v2654 = vadd.f32 %v2409, %v2653
  %v2655 = vpop.f32.mrf.mxu0
  %2656 = vmatprep.mubr.f32.mxu0 %v231
  %2657 = vmatmul.mubr.f32.gmra.mxu0 %v230
  %v2658 = vpop.f32.mrf.mxu0
  %v2659 = vadd.f32 %v2414, %v2658
  %v2660 = vpop.f32.mrf.mxu0
  %2661 = vmatprep.mubr.f32.mxu0 %v256
  %2662 = vmatmul.mubr.f32.gmra.mxu0 %v255
  %v2663 = vpop.f32.mrf.mxu0
  %v2664 = vadd.f32 %v2419, %v2663
  %v2665 = vpop.f32.mrf.mxu0
  %2666 = vmatprep.mubr.f32.mxu0 %v281
  %2667 = vmatmul.mubr.f32.gmra.mxu0 %v280
  %v2668 = vpop.f32.mrf.mxu0
  %v2669 = vadd.f32 %v2424, %v2668
  %v2670 = vpop.f32.mrf.mxu0
  %2671 = vmatprep.mubr.f32.mxu0 %v306
  %2672 = vmatmul.mubr.f32.gmra.mxu0 %v305
  %v2673 = vpop.f32.mrf.mxu0
  %v2674 = vadd.f32 %v2429, %v2673
  %v2675 = vpop.f32.mrf.mxu0
  %2676 = vmatprep.mubr.f32.mxu0 %v331
  %2677 = vmatmul.mubr.f32.gmra.mxu0 %v330
  %v2678 = vpop.f32.mrf.mxu0
  %v2679 = vadd.f32 %v2434, %v2678
  %v2680 = vpop.f32.mrf.mxu0
  %2681 = vmatprep.mubr.f32.mxu0 %v356
  %2682 = vmatmul.mubr.f32.gmra.mxu0 %v355
  %v2683 = vpop.f32.mrf.mxu0
  %v2684 = vadd.f32 %v2439, %v2683
  %v2685 = vpop.f32.mrf.mxu0
  %2686 = vmatprep.mubr.f32.mxu0 %v381
  %2687 = vmatmul.mubr.f32.gmra.mxu0 %v380
  %v2688 = vpop.f32.mrf.mxu0
  %v2689 = vadd.f32 %v2444, %v2688
  %v2690 = vpop.f32.mrf.mxu0
  %2691 = vmatprep.mubr.f32.mxu0 %v406
  %2692 = vmatmul.mubr.f32.gmra.mxu0 %v405
  %v2693 = vpop.f32.mrf.mxu0
  %v2694 = vadd.f32 %v2449, %v2693
  %v2695 = vpop.f32.mrf.mxu0
  %2696 = vmatprep.mubr.f32.mxu0 %v431
  %2697 = vmatmul.mubr.f32.gmra.mxu0 %v430
  %v2698 = vpop.f32.mrf.mxu0
  %v2699 = vadd.f32 %v2454, %v2698
  %v2700 = vpop.f32.mrf.mxu0
  %2701 = vmatprep.mubr.f32.mxu0 %v456
  %2702 = vmatmul.mubr.f32.gmra.mxu0 %v455
  %v2703 = vpop.f32.mrf.mxu0
  %v2704 = vadd.f32 %v2459, %v2703
  %v2705 = vpop.f32.mrf.mxu0
  %2706 = vmatprep.mubr.f32.mxu0 %v481
  %2707 = vmatmul.mubr.f32.gmra.mxu0 %v480
  %v2708 = vpop.f32.mrf.mxu0
  %v2709 = vadd.f32 %v2464, %v2708
  %v2710 = vpop.f32.mrf.mxu0
  %2711 = vmatprep.mubr.f32.mxu0 %v506
  %2712 = vmatmul.mubr.f32.gmra.mxu0 %v505
  %v2713 = vpop.f32.mrf.mxu0
  %v2714 = vadd.f32 %v2469, %v2713
  %v2715 = vpop.f32.mrf.mxu0
  %2716 = vmatprep.mubr.f32.mxu0 %v531
  %2717 = vmatmul.mubr.f32.gmra.mxu0 %v530
  %v2718 = vpop.f32.mrf.mxu0
  %v2719 = vadd.f32 %v2474, %v2718
  %v2720 = vpop.f32.mrf.mxu0
  %2721 = vmatprep.mubr.f32.mxu0 %v556
  %2722 = vmatmul.mubr.f32.gmra.mxu0 %v555
  %v2723 = vpop.f32.mrf.mxu0
  %v2724 = vadd.f32 %v2479, %v2723
  %v2725 = vpop.f32.mrf.mxu0
  %2726 = vmatprep.mubr.f32.mxu0 %v581
  %2727 = vmatmul.mubr.f32.gmra.mxu0 %v580
  %v2728 = vpop.f32.mrf.mxu0
  %v2729 = vadd.f32 %v2484, %v2728
  %v2730 = vpop.f32.mrf.mxu0
  %2731 = vmatprep.mubr.f32.mxu0 %v606
  %2732 = vmatmul.mubr.f32.gmra.mxu0 %v605
  %v2733 = vpop.f32.mrf.mxu0
  %v2734 = vadd.f32 %v2489, %v2733
  %v2735 = vpop.f32.mrf.mxu0
  %2736 = vmatprep.mubr.f32.mxu0 %v631
  %2737 = vmatmul.mubr.f32.gmra.mxu0 %v630
  %v2738 = vpop.f32.mrf.mxu0
  %v2739 = vadd.f32 %v2494, %v2738
  %v2740 = vpop.f32.mrf.mxu0
  %2741 = vmatprep.mubr.f32.mxu0 %v656
  %2742 = vmatmul.mubr.f32.gmra.mxu0 %v655
  %v2743 = vpop.f32.mrf.mxu0
  %v2744 = vadd.f32 %v2499, %v2743
  %v2745 = vpop.f32.mrf.mxu0
  %2746 = vmatprep.mubr.f32.mxu0 %v681
  %2747 = vmatmul.mubr.f32.gmra.mxu0 %v680
  %v2748 = vpop.f32.mrf.mxu0
  %v2749 = vadd.f32 %v2504, %v2748
  %v2750 = vpop.f32.mrf.mxu0
  %2751 = vmatprep.mubr.f32.mxu0 %v706
  %2752 = vmatmul.mubr.f32.gmra.mxu0 %v705
  %v2753 = vpop.f32.mrf.mxu0
  %v2754 = vadd.f32 %v2509, %v2753
  %v2755 = vpop.f32.mrf.mxu0
  %2756 = vmatprep.mubr.f32.mxu0 %v731
  %2757 = vmatmul.mubr.f32.gmra.mxu0 %v730
  %v2758 = vpop.f32.mrf.mxu0
  %v2759 = vadd.f32 %v2514, %v2758
  %v2760 = vpop.f32.mrf.mxu0
  %2761 = vmatprep.mubr.f32.mxu0 %v756
  %2762 = vmatmul.mubr.f32.gmra.mxu0 %v755
  %v2763 = vpop.f32.mrf.mxu0
  %v2764 = vadd.f32 %v2519, %v2763
  %v2765 = vpop.f32.mrf.mxu0
  %2766 = vmatprep.mubr.f32.mxu0 %v781
  %2767 = vmatmul.mubr.f32.gmra.mxu0 %v780
  %v2768 = vpop.f32.mrf.mxu0
  %v2769 = vadd.f32 %v2524, %v2768
  %v2770 = vpop.f32.mrf.mxu0
  %2771 = vmatprep.mubr.f32.mxu0 %v806
  %2772 = vmatmul.mubr.f32.gmra.mxu0 %v805
  %v2773 = vpop.f32.mrf.mxu0
  %v2774 = vadd.f32 %v2529, %v2773
  %v2775 = vpop.f32.mrf.mxu0
  %2776 = vmatprep.mubr.f32.mxu0 %v831
  %2777 = vmatmul.mubr.f32.gmra.mxu0 %v830
  %v2778 = vpop.f32.mrf.mxu0
  %v2779 = vadd.f32 %v2534, %v2778
  %v2780 = vpop.f32.mrf.mxu0
  %2781 = vmatprep.mubr.f32.mxu0 %v856
  %2782 = vmatmul.mubr.f32.gmra.mxu0 %v855
  %v2783 = vpop.f32.mrf.mxu0
  %v2784 = vadd.f32 %v2539, %v2783
  %v2785 = vpop.f32.mrf.mxu0
  %2786 = vmatprep.mubr.f32.mxu0 %v881
  %2787 = vmatmul.mubr.f32.gmra.mxu0 %v880
  %v2788 = vpop.f32.mrf.mxu0
  %v2789 = vadd.f32 %v2544, %v2788
  %v2790 = vpop.f32.mrf.mxu0
  %2791 = vmatprep.mubr.f32.mxu0 %v906
  %2792 = vmatmul.mubr.f32.gmra.mxu0 %v905
  %v2793 = vpop.f32.mrf.mxu0
  %v2794 = vadd.f32 %v2549, %v2793
  %v2795 = vpop.f32.mrf.mxu0
  %2796 = vdwg.mxu0
  %2797 = vmatprep.subr.mxu0 0.0
  %2798 = vmatpush1.msra.mxu0 %v1127
  %2799 = vmatprep.subr.mxu0 0.0
  %2800 = vmatpush1.msra.mxu0 %v1126
  %2801 = vmatprep.subr.mxu0 0.0
  %2802 = vmatpush1.msra.mxu0 %v1125
  %2803 = vmatprep.subr.mxu0 0.0
  %2804 = vmatpush1.msra.mxu0 %v1124
  %2805 = vmatprep.subr.mxu0 0.0
  %2806 = vmatpush1.msra.mxu0 %v1123
  %2807 = vmatprep.subr.mxu0 0.0
  %2808 = vmatpush1.msra.mxu0 %v1122
  %2809 = vmatprep.subr.mxu0 0.0
  %2810 = vmatpush1.msra.mxu0 %v1121
  %2811 = vmatprep.subr.mxu0 0.0
  %2812 = vmatpush1.msra.mxu0 %v1120
  %2813 = vmatprep.subr.mxu0 0.0
  %2814 = vmatpush1.msra.mxu0 %v1119
  %2815 = vmatprep.subr.mxu0 0.0
  %2816 = vmatpush1.msra.mxu0 %v1118
  %2817 = vmatprep.subr.mxu0 0.0
  %2818 = vmatpush1.msra.mxu0 %v1117
  %2819 = vmatprep.subr.mxu0 0.0
  %2820 = vmatpush1.msra.mxu0 %v1116
  %2821 = vmatprep.subr.mxu0 0.0
  %2822 = vmatpush1.msra.mxu0 %v1115
  %2823 = vmatprep.subr.mxu0 0.0
  %2824 = vmatpush1.msra.mxu0 %v1114
  %2825 = vmatprep.subr.mxu0 0.0
  %2826 = vmatpush1.msra.mxu0 %v1113
  %2827 = vmatprep.subr.mxu0 0.0
  %2828 = vmatpush1.msra.mxu0 %v1112
  %2829 = vmatprep.subr.mxu0 0.0
  %2830 = vmatpush2.msra.mxu0 %v1143
  %2831 = vmatprep.subr.mxu0 0.0
  %2832 = vmatpush2.msra.mxu0 %v1142
  %2833 = vmatprep.subr.mxu0 0.0
  %2834 = vmatpush2.msra.mxu0 %v1141
  %2835 = vmatprep.subr.mxu0 0.0
  %2836 = vmatpush2.msra.mxu0 %v1140
  %2837 = vmatprep.subr.mxu0 0.0
  %2838 = vmatpush2.msra.mxu0 %v1139
  %2839 = vmatprep.subr.mxu0 0.0
  %2840 = vmatpush2.msra.mxu0 %v1138
  %2841 = vmatprep.subr.mxu0 0.0
  %2842 = vmatpush2.msra.mxu0 %v1137
  %2843 = vmatprep.subr.mxu0 0.0
  %2844 = vmatpush2.msra.mxu0 %v1136
  %2845 = vmatprep.subr.mxu0 0.0
  %2846 = vmatpush2.msra.mxu0 %v1135
  %2847 = vmatprep.subr.mxu0 0.0
  %2848 = vmatpush2.msra.mxu0 %v1134
  %2849 = vmatprep.subr.mxu0 0.0
  %2850 = vmatpush2.msra.mxu0 %v1133
  %2851 = vmatprep.subr.mxu0 0.0
  %2852 = vmatpush2.msra.mxu0 %v1132
  %2853 = vmatprep.subr.mxu0 0.0
  %2854 = vmatpush2.msra.mxu0 %v1131
  %2855 = vmatprep.subr.mxu0 0.0
  %2856 = vmatpush2.msra.mxu0 %v1130
  %2857 = vmatprep.subr.mxu0 0.0
  %2858 = vmatpush2.msra.mxu0 %v1129
  %2859 = vmatprep.subr.mxu0 0.0
  %2860 = vmatpush2.msra.mxu0 %v1128
  %2861 = vmatprep.mubr.f32.mxu0 %v33
  %2862 = vmatmul.mubr.f32.gmra.mxu0 %v32
  %v2863 = vpop.f32.mrf.mxu0
  %v2864 = vadd.f32 %v2619, %v2863
  %v2865 = vpop.f32.mrf.mxu0
  %2866 = vmatprep.mubr.f32.mxu0 %v58
  %2867 = vmatmul.mubr.f32.gmra.mxu0 %v57
  %v2868 = vpop.f32.mrf.mxu0
  %v2869 = vadd.f32 %v2624, %v2868
  %v2870 = vpop.f32.mrf.mxu0
  %2871 = vmatprep.mubr.f32.mxu0 %v83
  %2872 = vmatmul.mubr.f32.gmra.mxu0 %v82
  %v2873 = vpop.f32.mrf.mxu0
  %v2874 = vadd.f32 %v2629, %v2873
  %v2875 = vpop.f32.mrf.mxu0
  %2876 = vmatprep.mubr.f32.mxu0 %v108
  %2877 = vmatmul.mubr.f32.gmra.mxu0 %v107
  %v2878 = vpop.f32.mrf.mxu0
  %v2879 = vadd.f32 %v2634, %v2878
  %v2880 = vpop.f32.mrf.mxu0
  %2881 = vmatprep.mubr.f32.mxu0 %v133
  %2882 = vmatmul.mubr.f32.gmra.mxu0 %v132
  %v2883 = vpop.f32.mrf.mxu0
  %v2884 = vadd.f32 %v2639, %v2883
  %v2885 = vpop.f32.mrf.mxu0
  %2886 = vmatprep.mubr.f32.mxu0 %v158
  %2887 = vmatmul.mubr.f32.gmra.mxu0 %v157
  %v2888 = vpop.f32.mrf.mxu0
  %v2889 = vadd.f32 %v2644, %v2888
  %v2890 = vpop.f32.mrf.mxu0
  %2891 = vmatprep.mubr.f32.mxu0 %v183
  %2892 = vmatmul.mubr.f32.gmra.mxu0 %v182
  %v2893 = vpop.f32.mrf.mxu0
  %v2894 = vadd.f32 %v2649, %v2893
  %v2895 = vpop.f32.mrf.mxu0
  %2896 = vmatprep.mubr.f32.mxu0 %v208
  %2897 = vmatmul.mubr.f32.gmra.mxu0 %v207
  %v2898 = vpop.f32.mrf.mxu0
  %v2899 = vadd.f32 %v2654, %v2898
  %v2900 = vpop.f32.mrf.mxu0
  %2901 = vmatprep.mubr.f32.mxu0 %v233
  %2902 = vmatmul.mubr.f32.gmra.mxu0 %v232
  %v2903 = vpop.f32.mrf.mxu0
  %v2904 = vadd.f32 %v2659, %v2903
  %v2905 = vpop.f32.mrf.mxu0
  %2906 = vmatprep.mubr.f32.mxu0 %v258
  %2907 = vmatmul.mubr.f32.gmra.mxu0 %v257
  %v2908 = vpop.f32.mrf.mxu0
  %v2909 = vadd.f32 %v2664, %v2908
  %v2910 = vpop.f32.mrf.mxu0
  %2911 = vmatprep.mubr.f32.mxu0 %v283
  %2912 = vmatmul.mubr.f32.gmra.mxu0 %v282
  %v2913 = vpop.f32.mrf.mxu0
  %v2914 = vadd.f32 %v2669, %v2913
  %v2915 = vpop.f32.mrf.mxu0
  %2916 = vmatprep.mubr.f32.mxu0 %v308
  %2917 = vmatmul.mubr.f32.gmra.mxu0 %v307
  %v2918 = vpop.f32.mrf.mxu0
  %v2919 = vadd.f32 %v2674, %v2918
  %v2920 = vpop.f32.mrf.mxu0
  %2921 = vmatprep.mubr.f32.mxu0 %v333
  %2922 = vmatmul.mubr.f32.gmra.mxu0 %v332
  %v2923 = vpop.f32.mrf.mxu0
  %v2924 = vadd.f32 %v2679, %v2923
  %v2925 = vpop.f32.mrf.mxu0
  %2926 = vmatprep.mubr.f32.mxu0 %v358
  %2927 = vmatmul.mubr.f32.gmra.mxu0 %v357
  %v2928 = vpop.f32.mrf.mxu0
  %v2929 = vadd.f32 %v2684, %v2928
  %v2930 = vpop.f32.mrf.mxu0
  %2931 = vmatprep.mubr.f32.mxu0 %v383
  %2932 = vmatmul.mubr.f32.gmra.mxu0 %v382
  %v2933 = vpop.f32.mrf.mxu0
  %v2934 = vadd.f32 %v2689, %v2933
  %v2935 = vpop.f32.mrf.mxu0
  %2936 = vmatprep.mubr.f32.mxu0 %v408
  %2937 = vmatmul.mubr.f32.gmra.mxu0 %v407
  %v2938 = vpop.f32.mrf.mxu0
  %v2939 = vadd.f32 %v2694, %v2938
  %v2940 = vpop.f32.mrf.mxu0
  %2941 = vmatprep.mubr.f32.mxu0 %v433
  %2942 = vmatmul.mubr.f32.gmra.mxu0 %v432
  %v2943 = vpop.f32.mrf.mxu0
  %v2944 = vadd.f32 %v2699, %v2943
  %v2945 = vpop.f32.mrf.mxu0
  %2946 = vmatprep.mubr.f32.mxu0 %v458
  %2947 = vmatmul.mubr.f32.gmra.mxu0 %v457
  %v2948 = vpop.f32.mrf.mxu0
  %v2949 = vadd.f32 %v2704, %v2948
  %v2950 = vpop.f32.mrf.mxu0
  %2951 = vmatprep.mubr.f32.mxu0 %v483
  %2952 = vmatmul.mubr.f32.gmra.mxu0 %v482
  %v2953 = vpop.f32.mrf.mxu0
  %v2954 = vadd.f32 %v2709, %v2953
  %v2955 = vpop.f32.mrf.mxu0
  %2956 = vmatprep.mubr.f32.mxu0 %v508
  %2957 = vmatmul.mubr.f32.gmra.mxu0 %v507
  %v2958 = vpop.f32.mrf.mxu0
  %v2959 = vadd.f32 %v2714, %v2958
  %v2960 = vpop.f32.mrf.mxu0
  %2961 = vmatprep.mubr.f32.mxu0 %v533
  %2962 = vmatmul.mubr.f32.gmra.mxu0 %v532
  %v2963 = vpop.f32.mrf.mxu0
  %v2964 = vadd.f32 %v2719, %v2963
  %v2965 = vpop.f32.mrf.mxu0
  %2966 = vmatprep.mubr.f32.mxu0 %v558
  %2967 = vmatmul.mubr.f32.gmra.mxu0 %v557
  %v2968 = vpop.f32.mrf.mxu0
  %v2969 = vadd.f32 %v2724, %v2968
  %v2970 = vpop.f32.mrf.mxu0
  %2971 = vmatprep.mubr.f32.mxu0 %v583
  %2972 = vmatmul.mubr.f32.gmra.mxu0 %v582
  %v2973 = vpop.f32.mrf.mxu0
  %v2974 = vadd.f32 %v2729, %v2973
  %v2975 = vpop.f32.mrf.mxu0
  %2976 = vmatprep.mubr.f32.mxu0 %v608
  %2977 = vmatmul.mubr.f32.gmra.mxu0 %v607
  %v2978 = vpop.f32.mrf.mxu0
  %v2979 = vadd.f32 %v2734, %v2978
  %v2980 = vpop.f32.mrf.mxu0
  %2981 = vmatprep.mubr.f32.mxu0 %v633
  %2982 = vmatmul.mubr.f32.gmra.mxu0 %v632
  %v2983 = vpop.f32.mrf.mxu0
  %v2984 = vadd.f32 %v2739, %v2983
  %v2985 = vpop.f32.mrf.mxu0
  %2986 = vmatprep.mubr.f32.mxu0 %v658
  %2987 = vmatmul.mubr.f32.gmra.mxu0 %v657
  %v2988 = vpop.f32.mrf.mxu0
  %v2989 = vadd.f32 %v2744, %v2988
  %v2990 = vpop.f32.mrf.mxu0
  %2991 = vmatprep.mubr.f32.mxu0 %v683
  %2992 = vmatmul.mubr.f32.gmra.mxu0 %v682
  %v2993 = vpop.f32.mrf.mxu0
  %v2994 = vadd.f32 %v2749, %v2993
  %v2995 = vpop.f32.mrf.mxu0
  %2996 = vmatprep.mubr.f32.mxu0 %v708
  %2997 = vmatmul.mubr.f32.gmra.mxu0 %v707
  %v2998 = vpop.f32.mrf.mxu0
  %v2999 = vadd.f32 %v2754, %v2998
  %v3000 = vpop.f32.mrf.mxu0
  %3001 = vmatprep.mubr.f32.mxu0 %v733
  %3002 = vmatmul.mubr.f32.gmra.mxu0 %v732
  %v3003 = vpop.f32.mrf.mxu0
  %v3004 = vadd.f32 %v2759, %v3003
  %v3005 = vpop.f32.mrf.mxu0
  %3006 = vmatprep.mubr.f32.mxu0 %v758
  %3007 = vmatmul.mubr.f32.gmra.mxu0 %v757
  %v3008 = vpop.f32.mrf.mxu0
  %v3009 = vadd.f32 %v2764, %v3008
  %v3010 = vpop.f32.mrf.mxu0
  %3011 = vmatprep.mubr.f32.mxu0 %v783
  %3012 = vmatmul.mubr.f32.gmra.mxu0 %v782
  %v3013 = vpop.f32.mrf.mxu0
  %v3014 = vadd.f32 %v2769, %v3013
  %v3015 = vpop.f32.mrf.mxu0
  %3016 = vmatprep.mubr.f32.mxu0 %v808
  %3017 = vmatmul.mubr.f32.gmra.mxu0 %v807
  %v3018 = vpop.f32.mrf.mxu0
  %v3019 = vadd.f32 %v2774, %v3018
  %v3020 = vpop.f32.mrf.mxu0
  %3021 = vmatprep.mubr.f32.mxu0 %v833
  %3022 = vmatmul.mubr.f32.gmra.mxu0 %v832
  %v3023 = vpop.f32.mrf.mxu0
  %v3024 = vadd.f32 %v2779, %v3023
  %v3025 = vpop.f32.mrf.mxu0
  %3026 = vmatprep.mubr.f32.mxu0 %v858
  %3027 = vmatmul.mubr.f32.gmra.mxu0 %v857
  %v3028 = vpop.f32.mrf.mxu0
  %v3029 = vadd.f32 %v2784, %v3028
  %v3030 = vpop.f32.mrf.mxu0
  %3031 = vmatprep.mubr.f32.mxu0 %v883
  %3032 = vmatmul.mubr.f32.gmra.mxu0 %v882
  %v3033 = vpop.f32.mrf.mxu0
  %v3034 = vadd.f32 %v2789, %v3033
  %v3035 = vpop.f32.mrf.mxu0
  %3036 = vmatprep.mubr.f32.mxu0 %v908
  %3037 = vmatmul.mubr.f32.gmra.mxu0 %v907
  %v3038 = vpop.f32.mrf.mxu0
  %v3039 = vadd.f32 %v2794, %v3038
  %v3040 = vpop.f32.mrf.mxu0
  %3041 = vdwg.mxu0
  %3042 = vmatprep.subr.mxu0 0.0
  %3043 = vmatpush1.msra.mxu0 %v1159
  %3044 = vmatprep.subr.mxu0 0.0
  %3045 = vmatpush1.msra.mxu0 %v1158
  %3046 = vmatprep.subr.mxu0 0.0
  %3047 = vmatpush1.msra.mxu0 %v1157
  %3048 = vmatprep.subr.mxu0 0.0
  %3049 = vmatpush1.msra.mxu0 %v1156
  %3050 = vmatprep.subr.mxu0 0.0
  %3051 = vmatpush1.msra.mxu0 %v1155
  %3052 = vmatprep.subr.mxu0 0.0
  %3053 = vmatpush1.msra.mxu0 %v1154
  %3054 = vmatprep.subr.mxu0 0.0
  %3055 = vmatpush1.msra.mxu0 %v1153
  %3056 = vmatprep.subr.mxu0 0.0
  %3057 = vmatpush1.msra.mxu0 %v1152
  %3058 = vmatprep.subr.mxu0 0.0
  %3059 = vmatpush1.msra.mxu0 %v1151
  %3060 = vmatprep.subr.mxu0 0.0
  %3061 = vmatpush1.msra.mxu0 %v1150
  %3062 = vmatprep.subr.mxu0 0.0
  %3063 = vmatpush1.msra.mxu0 %v1149
  %3064 = vmatprep.subr.mxu0 0.0
  %3065 = vmatpush1.msra.mxu0 %v1148
  %3066 = vmatprep.subr.mxu0 0.0
  %3067 = vmatpush1.msra.mxu0 %v1147
  %3068 = vmatprep.subr.mxu0 0.0
  %3069 = vmatpush1.msra.mxu0 %v1146
  %3070 = vmatprep.subr.mxu0 0.0
  %3071 = vmatpush1.msra.mxu0 %v1145
  %3072 = vmatprep.subr.mxu0 0.0
  %3073 = vmatpush1.msra.mxu0 %v1144
  %3074 = vmatprep.subr.mxu0 0.0
  %3075 = vmatpush2.msra.mxu0 %v1175
  %3076 = vmatprep.subr.mxu0 0.0
  %3077 = vmatpush2.msra.mxu0 %v1174
  %3078 = vmatprep.subr.mxu0 0.0
  %3079 = vmatpush2.msra.mxu0 %v1173
  %3080 = vmatprep.subr.mxu0 0.0
  %3081 = vmatpush2.msra.mxu0 %v1172
  %3082 = vmatprep.subr.mxu0 0.0
  %3083 = vmatpush2.msra.mxu0 %v1171
  %3084 = vmatprep.subr.mxu0 0.0
  %3085 = vmatpush2.msra.mxu0 %v1170
  %3086 = vmatprep.subr.mxu0 0.0
  %3087 = vmatpush2.msra.mxu0 %v1169
  %3088 = vmatprep.subr.mxu0 0.0
  %3089 = vmatpush2.msra.mxu0 %v1168
  %3090 = vmatprep.subr.mxu0 0.0
  %3091 = vmatpush2.msra.mxu0 %v1167
  %3092 = vmatprep.subr.mxu0 0.0
  %3093 = vmatpush2.msra.mxu0 %v1166
  %3094 = vmatprep.subr.mxu0 0.0
  %3095 = vmatpush2.msra.mxu0 %v1165
  %3096 = vmatprep.subr.mxu0 0.0
  %3097 = vmatpush2.msra.mxu0 %v1164
  %3098 = vmatprep.subr.mxu0 0.0
  %3099 = vmatpush2.msra.mxu0 %v1163
  %3100 = vmatprep.subr.mxu0 0.0
  %3101 = vmatpush2.msra.mxu0 %v1162
  %3102 = vmatprep.subr.mxu0 0.0
  %3103 = vmatpush2.msra.mxu0 %v1161
  %3104 = vmatprep.subr.mxu0 0.0
  %3105 = vmatpush2.msra.mxu0 %v1160
  %3106 = vmatprep.mubr.f32.mxu0 %v35
  %3107 = vmatmul.mubr.f32.gmra.mxu0 %v34
  %v3108 = vpop.f32.mrf.mxu0
  %v3109 = vadd.f32 %v2864, %v3108
  %v3110 = vpop.f32.mrf.mxu0
  %3111 = vmatprep.mubr.f32.mxu0 %v60
  %3112 = vmatmul.mubr.f32.gmra.mxu0 %v59
  %v3113 = vpop.f32.mrf.mxu0
  %v3114 = vadd.f32 %v2869, %v3113
  %v3115 = vpop.f32.mrf.mxu0
  %3116 = vmatprep.mubr.f32.mxu0 %v85
  %3117 = vmatmul.mubr.f32.gmra.mxu0 %v84
  %v3118 = vpop.f32.mrf.mxu0
  %v3119 = vadd.f32 %v2874, %v3118
  %v3120 = vpop.f32.mrf.mxu0
  %3121 = vmatprep.mubr.f32.mxu0 %v110
  %3122 = vmatmul.mubr.f32.gmra.mxu0 %v109
  %v3123 = vpop.f32.mrf.mxu0
  %v3124 = vadd.f32 %v2879, %v3123
  %v3125 = vpop.f32.mrf.mxu0
  %3126 = vmatprep.mubr.f32.mxu0 %v135
  %3127 = vmatmul.mubr.f32.gmra.mxu0 %v134
  %v3128 = vpop.f32.mrf.mxu0
  %v3129 = vadd.f32 %v2884, %v3128
  %v3130 = vpop.f32.mrf.mxu0
  %3131 = vmatprep.mubr.f32.mxu0 %v160
  %3132 = vmatmul.mubr.f32.gmra.mxu0 %v159
  %v3133 = vpop.f32.mrf.mxu0
  %v3134 = vadd.f32 %v2889, %v3133
  %v3135 = vpop.f32.mrf.mxu0
  %3136 = vmatprep.mubr.f32.mxu0 %v185
  %3137 = vmatmul.mubr.f32.gmra.mxu0 %v184
  %v3138 = vpop.f32.mrf.mxu0
  %v3139 = vadd.f32 %v2894, %v3138
  %v3140 = vpop.f32.mrf.mxu0
  %3141 = vmatprep.mubr.f32.mxu0 %v210
  %3142 = vmatmul.mubr.f32.gmra.mxu0 %v209
  %v3143 = vpop.f32.mrf.mxu0
  %v3144 = vadd.f32 %v2899, %v3143
  %v3145 = vpop.f32.mrf.mxu0
  %3146 = vmatprep.mubr.f32.mxu0 %v235
  %3147 = vmatmul.mubr.f32.gmra.mxu0 %v234
  %v3148 = vpop.f32.mrf.mxu0
  %v3149 = vadd.f32 %v2904, %v3148
  %v3150 = vpop.f32.mrf.mxu0
  %3151 = vmatprep.mubr.f32.mxu0 %v260
  %3152 = vmatmul.mubr.f32.gmra.mxu0 %v259
  %v3153 = vpop.f32.mrf.mxu0
  %v3154 = vadd.f32 %v2909, %v3153
  %v3155 = vpop.f32.mrf.mxu0
  %3156 = vmatprep.mubr.f32.mxu0 %v285
  %3157 = vmatmul.mubr.f32.gmra.mxu0 %v284
  %v3158 = vpop.f32.mrf.mxu0
  %v3159 = vadd.f32 %v2914, %v3158
  %v3160 = vpop.f32.mrf.mxu0
  %3161 = vmatprep.mubr.f32.mxu0 %v310
  %3162 = vmatmul.mubr.f32.gmra.mxu0 %v309
  %v3163 = vpop.f32.mrf.mxu0
  %v3164 = vadd.f32 %v2919, %v3163
  %v3165 = vpop.f32.mrf.mxu0
  %3166 = vmatprep.mubr.f32.mxu0 %v335
  %3167 = vmatmul.mubr.f32.gmra.mxu0 %v334
  %v3168 = vpop.f32.mrf.mxu0
  %v3169 = vadd.f32 %v2924, %v3168
  %v3170 = vpop.f32.mrf.mxu0
  %3171 = vmatprep.mubr.f32.mxu0 %v360
  %3172 = vmatmul.mubr.f32.gmra.mxu0 %v359
  %v3173 = vpop.f32.mrf.mxu0
  %v3174 = vadd.f32 %v2929, %v3173
  %v3175 = vpop.f32.mrf.mxu0
  %3176 = vmatprep.mubr.f32.mxu0 %v385
  %3177 = vmatmul.mubr.f32.gmra.mxu0 %v384
  %v3178 = vpop.f32.mrf.mxu0
  %v3179 = vadd.f32 %v2934, %v3178
  %v3180 = vpop.f32.mrf.mxu0
  %3181 = vmatprep.mubr.f32.mxu0 %v410
  %3182 = vmatmul.mubr.f32.gmra.mxu0 %v409
  %v3183 = vpop.f32.mrf.mxu0
  %v3184 = vadd.f32 %v2939, %v3183
  %v3185 = vpop.f32.mrf.mxu0
  %3186 = vmatprep.mubr.f32.mxu0 %v435
  %3187 = vmatmul.mubr.f32.gmra.mxu0 %v434
  %v3188 = vpop.f32.mrf.mxu0
  %v3189 = vadd.f32 %v2944, %v3188
  %v3190 = vpop.f32.mrf.mxu0
  %3191 = vmatprep.mubr.f32.mxu0 %v460
  %3192 = vmatmul.mubr.f32.gmra.mxu0 %v459
  %v3193 = vpop.f32.mrf.mxu0
  %v3194 = vadd.f32 %v2949, %v3193
  %v3195 = vpop.f32.mrf.mxu0
  %3196 = vmatprep.mubr.f32.mxu0 %v485
  %3197 = vmatmul.mubr.f32.gmra.mxu0 %v484
  %v3198 = vpop.f32.mrf.mxu0
  %v3199 = vadd.f32 %v2954, %v3198
  %v3200 = vpop.f32.mrf.mxu0
  %3201 = vmatprep.mubr.f32.mxu0 %v510
  %3202 = vmatmul.mubr.f32.gmra.mxu0 %v509
  %v3203 = vpop.f32.mrf.mxu0
  %v3204 = vadd.f32 %v2959, %v3203
  %v3205 = vpop.f32.mrf.mxu0
  %3206 = vmatprep.mubr.f32.mxu0 %v535
  %3207 = vmatmul.mubr.f32.gmra.mxu0 %v534
  %v3208 = vpop.f32.mrf.mxu0
  %v3209 = vadd.f32 %v2964, %v3208
  %v3210 = vpop.f32.mrf.mxu0
  %3211 = vmatprep.mubr.f32.mxu0 %v560
  %3212 = vmatmul.mubr.f32.gmra.mxu0 %v559
  %v3213 = vpop.f32.mrf.mxu0
  %v3214 = vadd.f32 %v2969, %v3213
  %v3215 = vpop.f32.mrf.mxu0
  %3216 = vmatprep.mubr.f32.mxu0 %v585
  %3217 = vmatmul.mubr.f32.gmra.mxu0 %v584
  %v3218 = vpop.f32.mrf.mxu0
  %v3219 = vadd.f32 %v2974, %v3218
  %v3220 = vpop.f32.mrf.mxu0
  %3221 = vmatprep.mubr.f32.mxu0 %v610
  %3222 = vmatmul.mubr.f32.gmra.mxu0 %v609
  %v3223 = vpop.f32.mrf.mxu0
  %v3224 = vadd.f32 %v2979, %v3223
  %v3225 = vpop.f32.mrf.mxu0
  %3226 = vmatprep.mubr.f32.mxu0 %v635
  %3227 = vmatmul.mubr.f32.gmra.mxu0 %v634
  %v3228 = vpop.f32.mrf.mxu0
  %v3229 = vadd.f32 %v2984, %v3228
  %v3230 = vpop.f32.mrf.mxu0
  %3231 = vmatprep.mubr.f32.mxu0 %v660
  %3232 = vmatmul.mubr.f32.gmra.mxu0 %v659
  %v3233 = vpop.f32.mrf.mxu0
  %v3234 = vadd.f32 %v2989, %v3233
  %v3235 = vpop.f32.mrf.mxu0
  %3236 = vmatprep.mubr.f32.mxu0 %v685
  %3237 = vmatmul.mubr.f32.gmra.mxu0 %v684
  %v3238 = vpop.f32.mrf.mxu0
  %v3239 = vadd.f32 %v2994, %v3238
  %v3240 = vpop.f32.mrf.mxu0
  %3241 = vmatprep.mubr.f32.mxu0 %v710
  %3242 = vmatmul.mubr.f32.gmra.mxu0 %v709
  %v3243 = vpop.f32.mrf.mxu0
  %v3244 = vadd.f32 %v2999, %v3243
  %v3245 = vpop.f32.mrf.mxu0
  %3246 = vmatprep.mubr.f32.mxu0 %v735
  %3247 = vmatmul.mubr.f32.gmra.mxu0 %v734
  %v3248 = vpop.f32.mrf.mxu0
  %v3249 = vadd.f32 %v3004, %v3248
  %v3250 = vpop.f32.mrf.mxu0
  %3251 = vmatprep.mubr.f32.mxu0 %v760
  %3252 = vmatmul.mubr.f32.gmra.mxu0 %v759
  %v3253 = vpop.f32.mrf.mxu0
  %v3254 = vadd.f32 %v3009, %v3253
  %v3255 = vpop.f32.mrf.mxu0
  %3256 = vmatprep.mubr.f32.mxu0 %v785
  %3257 = vmatmul.mubr.f32.gmra.mxu0 %v784
  %v3258 = vpop.f32.mrf.mxu0
  %v3259 = vadd.f32 %v3014, %v3258
  %v3260 = vpop.f32.mrf.mxu0
  %3261 = vmatprep.mubr.f32.mxu0 %v810
  %3262 = vmatmul.mubr.f32.gmra.mxu0 %v809
  %v3263 = vpop.f32.mrf.mxu0
  %v3264 = vadd.f32 %v3019, %v3263
  %v3265 = vpop.f32.mrf.mxu0
  %3266 = vmatprep.mubr.f32.mxu0 %v835
  %3267 = vmatmul.mubr.f32.gmra.mxu0 %v834
  %v3268 = vpop.f32.mrf.mxu0
  %v3269 = vadd.f32 %v3024, %v3268
  %v3270 = vpop.f32.mrf.mxu0
  %3271 = vmatprep.mubr.f32.mxu0 %v860
  %3272 = vmatmul.mubr.f32.gmra.mxu0 %v859
  %v3273 = vpop.f32.mrf.mxu0
  %v3274 = vadd.f32 %v3029, %v3273
  %v3275 = vpop.f32.mrf.mxu0
  %3276 = vmatprep.mubr.f32.mxu0 %v885
  %3277 = vmatmul.mubr.f32.gmra.mxu0 %v884
  %v3278 = vpop.f32.mrf.mxu0
  %v3279 = vadd.f32 %v3034, %v3278
  %v3280 = vpop.f32.mrf.mxu0
  %3281 = vmatprep.mubr.f32.mxu0 %v910
  %3282 = vmatmul.mubr.f32.gmra.mxu0 %v909
  %v3283 = vpop.f32.mrf.mxu0
  %v3284 = vadd.f32 %v3039, %v3283
  %v3285 = vpop.f32.mrf.mxu0
  %3286 = vdwg.mxu0
  %3287 = vmatprep.subr.mxu0 0.0
  %3288 = vmatpush1.msra.mxu0 %v1191
  %3289 = vmatprep.subr.mxu0 0.0
  %3290 = vmatpush1.msra.mxu0 %v1190
  %3291 = vmatprep.subr.mxu0 0.0
  %3292 = vmatpush1.msra.mxu0 %v1189
  %3293 = vmatprep.subr.mxu0 0.0
  %3294 = vmatpush1.msra.mxu0 %v1188
  %3295 = vmatprep.subr.mxu0 0.0
  %3296 = vmatpush1.msra.mxu0 %v1187
  %3297 = vmatprep.subr.mxu0 0.0
  %3298 = vmatpush1.msra.mxu0 %v1186
  %3299 = vmatprep.subr.mxu0 0.0
  %3300 = vmatpush1.msra.mxu0 %v1185
  %3301 = vmatprep.subr.mxu0 0.0
  %3302 = vmatpush1.msra.mxu0 %v1184
  %3303 = vmatprep.subr.mxu0 0.0
  %3304 = vmatpush1.msra.mxu0 %v1183
  %3305 = vmatprep.subr.mxu0 0.0
  %3306 = vmatpush1.msra.mxu0 %v1182
  %3307 = vmatprep.subr.mxu0 0.0
  %3308 = vmatpush1.msra.mxu0 %v1181
  %3309 = vmatprep.subr.mxu0 0.0
  %3310 = vmatpush1.msra.mxu0 %v1180
  %3311 = vmatprep.subr.mxu0 0.0
  %3312 = vmatpush1.msra.mxu0 %v1179
  %3313 = vmatprep.subr.mxu0 0.0
  %3314 = vmatpush1.msra.mxu0 %v1178
  %3315 = vmatprep.subr.mxu0 0.0
  %3316 = vmatpush1.msra.mxu0 %v1177
  %3317 = vmatprep.subr.mxu0 0.0
  %3318 = vmatpush1.msra.mxu0 %v1176
  %3319 = vmatprep.subr.mxu0 0.0
  %3320 = vmatpush2.msra.mxu0 %v1207
  %3321 = vmatprep.subr.mxu0 0.0
  %3322 = vmatpush2.msra.mxu0 %v1206
  %3323 = vmatprep.subr.mxu0 0.0
  %3324 = vmatpush2.msra.mxu0 %v1205
  %3325 = vmatprep.subr.mxu0 0.0
  %3326 = vmatpush2.msra.mxu0 %v1204
  %3327 = vmatprep.subr.mxu0 0.0
  %3328 = vmatpush2.msra.mxu0 %v1203
  %3329 = vmatprep.subr.mxu0 0.0
  %3330 = vmatpush2.msra.mxu0 %v1202
  %3331 = vmatprep.subr.mxu0 0.0
  %3332 = vmatpush2.msra.mxu0 %v1201
  %3333 = vmatprep.subr.mxu0 0.0
  %3334 = vmatpush2.msra.mxu0 %v1200
  %3335 = vmatprep.subr.mxu0 0.0
  %3336 = vmatpush2.msra.mxu0 %v1199
  %3337 = vmatprep.subr.mxu0 0.0
  %3338 = vmatpush2.msra.mxu0 %v1198
  %3339 = vmatprep.subr.mxu0 0.0
  %3340 = vmatpush2.msra.mxu0 %v1197
  %3341 = vmatprep.subr.mxu0 0.0
  %3342 = vmatpush2.msra.mxu0 %v1196
  %3343 = vmatprep.subr.mxu0 0.0
  %3344 = vmatpush2.msra.mxu0 %v1195
  %3345 = vmatprep.subr.mxu0 0.0
  %3346 = vmatpush2.msra.mxu0 %v1194
  %3347 = vmatprep.subr.mxu0 0.0
  %3348 = vmatpush2.msra.mxu0 %v1193
  %3349 = vmatprep.subr.mxu0 0.0
  %3350 = vmatpush2.msra.mxu0 %v1192
  %3351 = vmatprep.mubr.f32.mxu0 %v37
  %3352 = vmatmul.mubr.f32.gmra.mxu0 %v36
  %v3353 = vpop.f32.mrf.mxu0
  %v3354 = vadd.f32 %v3109, %v3353
  %v3355 = vpop.f32.mrf.mxu0
  %3356 = vmatprep.mubr.f32.mxu0 %v62
  %3357 = vmatmul.mubr.f32.gmra.mxu0 %v61
  %v3358 = vpop.f32.mrf.mxu0
  %v3359 = vadd.f32 %v3114, %v3358
  %v3360 = vpop.f32.mrf.mxu0
  %3361 = vmatprep.mubr.f32.mxu0 %v87
  %3362 = vmatmul.mubr.f32.gmra.mxu0 %v86
  %v3363 = vpop.f32.mrf.mxu0
  %v3364 = vadd.f32 %v3119, %v3363
  %v3365 = vpop.f32.mrf.mxu0
  %3366 = vmatprep.mubr.f32.mxu0 %v112
  %3367 = vmatmul.mubr.f32.gmra.mxu0 %v111
  %v3368 = vpop.f32.mrf.mxu0
  %v3369 = vadd.f32 %v3124, %v3368
  %v3370 = vpop.f32.mrf.mxu0
  %3371 = vmatprep.mubr.f32.mxu0 %v137
  %3372 = vmatmul.mubr.f32.gmra.mxu0 %v136
  %v3373 = vpop.f32.mrf.mxu0
  %v3374 = vadd.f32 %v3129, %v3373
  %v3375 = vpop.f32.mrf.mxu0
  %3376 = vmatprep.mubr.f32.mxu0 %v162
  %3377 = vmatmul.mubr.f32.gmra.mxu0 %v161
  %v3378 = vpop.f32.mrf.mxu0
  %v3379 = vadd.f32 %v3134, %v3378
  %v3380 = vpop.f32.mrf.mxu0
  %3381 = vmatprep.mubr.f32.mxu0 %v187
  %3382 = vmatmul.mubr.f32.gmra.mxu0 %v186
  %v3383 = vpop.f32.mrf.mxu0
  %v3384 = vadd.f32 %v3139, %v3383
  %v3385 = vpop.f32.mrf.mxu0
  %3386 = vmatprep.mubr.f32.mxu0 %v212
  %3387 = vmatmul.mubr.f32.gmra.mxu0 %v211
  %v3388 = vpop.f32.mrf.mxu0
  %v3389 = vadd.f32 %v3144, %v3388
  %v3390 = vpop.f32.mrf.mxu0
  %3391 = vmatprep.mubr.f32.mxu0 %v237
  %3392 = vmatmul.mubr.f32.gmra.mxu0 %v236
  %v3393 = vpop.f32.mrf.mxu0
  %v3394 = vadd.f32 %v3149, %v3393
  %v3395 = vpop.f32.mrf.mxu0
  %3396 = vmatprep.mubr.f32.mxu0 %v262
  %3397 = vmatmul.mubr.f32.gmra.mxu0 %v261
  %v3398 = vpop.f32.mrf.mxu0
  %v3399 = vadd.f32 %v3154, %v3398
  %v3400 = vpop.f32.mrf.mxu0
  %3401 = vmatprep.mubr.f32.mxu0 %v287
  %3402 = vmatmul.mubr.f32.gmra.mxu0 %v286
  %v3403 = vpop.f32.mrf.mxu0
  %v3404 = vadd.f32 %v3159, %v3403
  %v3405 = vpop.f32.mrf.mxu0
  %3406 = vmatprep.mubr.f32.mxu0 %v312
  %3407 = vmatmul.mubr.f32.gmra.mxu0 %v311
  %v3408 = vpop.f32.mrf.mxu0
  %v3409 = vadd.f32 %v3164, %v3408
  %v3410 = vpop.f32.mrf.mxu0
  %3411 = vmatprep.mubr.f32.mxu0 %v337
  %3412 = vmatmul.mubr.f32.gmra.mxu0 %v336
  %v3413 = vpop.f32.mrf.mxu0
  %v3414 = vadd.f32 %v3169, %v3413
  %v3415 = vpop.f32.mrf.mxu0
  %3416 = vmatprep.mubr.f32.mxu0 %v362
  %3417 = vmatmul.mubr.f32.gmra.mxu0 %v361
  %v3418 = vpop.f32.mrf.mxu0
  %v3419 = vadd.f32 %v3174, %v3418
  %v3420 = vpop.f32.mrf.mxu0
  %3421 = vmatprep.mubr.f32.mxu0 %v387
  %3422 = vmatmul.mubr.f32.gmra.mxu0 %v386
  %v3423 = vpop.f32.mrf.mxu0
  %v3424 = vadd.f32 %v3179, %v3423
  %v3425 = vpop.f32.mrf.mxu0
  %3426 = vmatprep.mubr.f32.mxu0 %v412
  %3427 = vmatmul.mubr.f32.gmra.mxu0 %v411
  %v3428 = vpop.f32.mrf.mxu0
  %v3429 = vadd.f32 %v3184, %v3428
  %v3430 = vpop.f32.mrf.mxu0
  %3431 = vmatprep.mubr.f32.mxu0 %v437
  %3432 = vmatmul.mubr.f32.gmra.mxu0 %v436
  %v3433 = vpop.f32.mrf.mxu0
  %v3434 = vadd.f32 %v3189, %v3433
  %v3435 = vpop.f32.mrf.mxu0
  %3436 = vmatprep.mubr.f32.mxu0 %v462
  %3437 = vmatmul.mubr.f32.gmra.mxu0 %v461
  %v3438 = vpop.f32.mrf.mxu0
  %v3439 = vadd.f32 %v3194, %v3438
  %v3440 = vpop.f32.mrf.mxu0
  %3441 = vmatprep.mubr.f32.mxu0 %v487
  %3442 = vmatmul.mubr.f32.gmra.mxu0 %v486
  %v3443 = vpop.f32.mrf.mxu0
  %v3444 = vadd.f32 %v3199, %v3443
  %v3445 = vpop.f32.mrf.mxu0
  %3446 = vmatprep.mubr.f32.mxu0 %v512
  %3447 = vmatmul.mubr.f32.gmra.mxu0 %v511
  %v3448 = vpop.f32.mrf.mxu0
  %v3449 = vadd.f32 %v3204, %v3448
  %v3450 = vpop.f32.mrf.mxu0
  %3451 = vmatprep.mubr.f32.mxu0 %v537
  %3452 = vmatmul.mubr.f32.gmra.mxu0 %v536
  %v3453 = vpop.f32.mrf.mxu0
  %v3454 = vadd.f32 %v3209, %v3453
  %v3455 = vpop.f32.mrf.mxu0
  %3456 = vmatprep.mubr.f32.mxu0 %v562
  %3457 = vmatmul.mubr.f32.gmra.mxu0 %v561
  %v3458 = vpop.f32.mrf.mxu0
  %v3459 = vadd.f32 %v3214, %v3458
  %v3460 = vpop.f32.mrf.mxu0
  %3461 = vmatprep.mubr.f32.mxu0 %v587
  %3462 = vmatmul.mubr.f32.gmra.mxu0 %v586
  %v3463 = vpop.f32.mrf.mxu0
  %v3464 = vadd.f32 %v3219, %v3463
  %v3465 = vpop.f32.mrf.mxu0
  %3466 = vmatprep.mubr.f32.mxu0 %v612
  %3467 = vmatmul.mubr.f32.gmra.mxu0 %v611
  %v3468 = vpop.f32.mrf.mxu0
  %v3469 = vadd.f32 %v3224, %v3468
  %v3470 = vpop.f32.mrf.mxu0
  %3471 = vmatprep.mubr.f32.mxu0 %v637
  %3472 = vmatmul.mubr.f32.gmra.mxu0 %v636
  %v3473 = vpop.f32.mrf.mxu0
  %v3474 = vadd.f32 %v3229, %v3473
  %v3475 = vpop.f32.mrf.mxu0
  %3476 = vmatprep.mubr.f32.mxu0 %v662
  %3477 = vmatmul.mubr.f32.gmra.mxu0 %v661
  %v3478 = vpop.f32.mrf.mxu0
  %v3479 = vadd.f32 %v3234, %v3478
  %v3480 = vpop.f32.mrf.mxu0
  %3481 = vmatprep.mubr.f32.mxu0 %v687
  %3482 = vmatmul.mubr.f32.gmra.mxu0 %v686
  %v3483 = vpop.f32.mrf.mxu0
  %v3484 = vadd.f32 %v3239, %v3483
  %v3485 = vpop.f32.mrf.mxu0
  %3486 = vmatprep.mubr.f32.mxu0 %v712
  %3487 = vmatmul.mubr.f32.gmra.mxu0 %v711
  %v3488 = vpop.f32.mrf.mxu0
  %v3489 = vadd.f32 %v3244, %v3488
  %v3490 = vpop.f32.mrf.mxu0
  %3491 = vmatprep.mubr.f32.mxu0 %v737
  %3492 = vmatmul.mubr.f32.gmra.mxu0 %v736
  %v3493 = vpop.f32.mrf.mxu0
  %v3494 = vadd.f32 %v3249, %v3493
  %v3495 = vpop.f32.mrf.mxu0
  %3496 = vmatprep.mubr.f32.mxu0 %v762
  %3497 = vmatmul.mubr.f32.gmra.mxu0 %v761
  %v3498 = vpop.f32.mrf.mxu0
  %v3499 = vadd.f32 %v3254, %v3498
  %v3500 = vpop.f32.mrf.mxu0
  %3501 = vmatprep.mubr.f32.mxu0 %v787
  %3502 = vmatmul.mubr.f32.gmra.mxu0 %v786
  %v3503 = vpop.f32.mrf.mxu0
  %v3504 = vadd.f32 %v3259, %v3503
  %v3505 = vpop.f32.mrf.mxu0
  %3506 = vmatprep.mubr.f32.mxu0 %v812
  %3507 = vmatmul.mubr.f32.gmra.mxu0 %v811
  %v3508 = vpop.f32.mrf.mxu0
  %v3509 = vadd.f32 %v3264, %v3508
  %v3510 = vpop.f32.mrf.mxu0
  %3511 = vmatprep.mubr.f32.mxu0 %v837
  %3512 = vmatmul.mubr.f32.gmra.mxu0 %v836
  %v3513 = vpop.f32.mrf.mxu0
  %v3514 = vadd.f32 %v3269, %v3513
  %v3515 = vpop.f32.mrf.mxu0
  %3516 = vmatprep.mubr.f32.mxu0 %v862
  %3517 = vmatmul.mubr.f32.gmra.mxu0 %v861
  %v3518 = vpop.f32.mrf.mxu0
  %v3519 = vadd.f32 %v3274, %v3518
  %v3520 = vpop.f32.mrf.mxu0
  %3521 = vmatprep.mubr.f32.mxu0 %v887
  %3522 = vmatmul.mubr.f32.gmra.mxu0 %v886
  %v3523 = vpop.f32.mrf.mxu0
  %v3524 = vadd.f32 %v3279, %v3523
  %v3525 = vpop.f32.mrf.mxu0
  %3526 = vmatprep.mubr.f32.mxu0 %v912
  %3527 = vmatmul.mubr.f32.gmra.mxu0 %v911
  %v3528 = vpop.f32.mrf.mxu0
  %v3529 = vadd.f32 %v3284, %v3528
  %v3530 = vpop.f32.mrf.mxu0
  %3531 = vdwg.mxu0
  %3532 = vmatprep.subr.mxu0 0.0
  %3533 = vmatpush1.msra.mxu0 %v1223
  %3534 = vmatprep.subr.mxu0 0.0
  %3535 = vmatpush1.msra.mxu0 %v1222
  %3536 = vmatprep.subr.mxu0 0.0
  %3537 = vmatpush1.msra.mxu0 %v1221
  %3538 = vmatprep.subr.mxu0 0.0
  %3539 = vmatpush1.msra.mxu0 %v1220
  %3540 = vmatprep.subr.mxu0 0.0
  %3541 = vmatpush1.msra.mxu0 %v1219
  %3542 = vmatprep.subr.mxu0 0.0
  %3543 = vmatpush1.msra.mxu0 %v1218
  %3544 = vmatprep.subr.mxu0 0.0
  %3545 = vmatpush1.msra.mxu0 %v1217
  %3546 = vmatprep.subr.mxu0 0.0
  %3547 = vmatpush1.msra.mxu0 %v1216
  %3548 = vmatprep.subr.mxu0 0.0
  %3549 = vmatpush1.msra.mxu0 %v1215
  %3550 = vmatprep.subr.mxu0 0.0
  %3551 = vmatpush1.msra.mxu0 %v1214
  %3552 = vmatprep.subr.mxu0 0.0
  %3553 = vmatpush1.msra.mxu0 %v1213
  %3554 = vmatprep.subr.mxu0 0.0
  %3555 = vmatpush1.msra.mxu0 %v1212
  %3556 = vmatprep.subr.mxu0 0.0
  %3557 = vmatpush1.msra.mxu0 %v1211
  %3558 = vmatprep.subr.mxu0 0.0
  %3559 = vmatpush1.msra.mxu0 %v1210
  %3560 = vmatprep.subr.mxu0 0.0
  %3561 = vmatpush1.msra.mxu0 %v1209
  %3562 = vmatprep.subr.mxu0 0.0
  %3563 = vmatpush1.msra.mxu0 %v1208
  %3564 = vmatprep.subr.mxu0 0.0
  %3565 = vmatpush2.msra.mxu0 %v1239
  %3566 = vmatprep.subr.mxu0 0.0
  %3567 = vmatpush2.msra.mxu0 %v1238
  %3568 = vmatprep.subr.mxu0 0.0
  %3569 = vmatpush2.msra.mxu0 %v1237
  %3570 = vmatprep.subr.mxu0 0.0
  %3571 = vmatpush2.msra.mxu0 %v1236
  %3572 = vmatprep.subr.mxu0 0.0
  %3573 = vmatpush2.msra.mxu0 %v1235
  %3574 = vmatprep.subr.mxu0 0.0
  %3575 = vmatpush2.msra.mxu0 %v1234
  %3576 = vmatprep.subr.mxu0 0.0
  %3577 = vmatpush2.msra.mxu0 %v1233
  %3578 = vmatprep.subr.mxu0 0.0
  %3579 = vmatpush2.msra.mxu0 %v1232
  %3580 = vmatprep.subr.mxu0 0.0
  %3581 = vmatpush2.msra.mxu0 %v1231
  %3582 = vmatprep.subr.mxu0 0.0
  %3583 = vmatpush2.msra.mxu0 %v1230
  %3584 = vmatprep.subr.mxu0 0.0
  %3585 = vmatpush2.msra.mxu0 %v1229
  %3586 = vmatprep.subr.mxu0 0.0
  %3587 = vmatpush2.msra.mxu0 %v1228
  %3588 = vmatprep.subr.mxu0 0.0
  %3589 = vmatpush2.msra.mxu0 %v1227
  %3590 = vmatprep.subr.mxu0 0.0
  %3591 = vmatpush2.msra.mxu0 %v1226
  %3592 = vmatprep.subr.mxu0 0.0
  %3593 = vmatpush2.msra.mxu0 %v1225
  %3594 = vmatprep.subr.mxu0 0.0
  %3595 = vmatpush2.msra.mxu0 %v1224
  %3596 = vmatprep.mubr.f32.mxu0 %v39
  %3597 = vmatmul.mubr.f32.gmra.mxu0 %v38
  %v3598 = vpop.f32.mrf.mxu0
  %v3599 = vadd.f32 %v3354, %v3598
  %v3600 = vpop.f32.mrf.mxu0
  %3601 = vmatprep.mubr.f32.mxu0 %v64
  %3602 = vmatmul.mubr.f32.gmra.mxu0 %v63
  %v3603 = vpop.f32.mrf.mxu0
  %v3604 = vadd.f32 %v3359, %v3603
  %v3605 = vpop.f32.mrf.mxu0
  %3606 = vmatprep.mubr.f32.mxu0 %v89
  %3607 = vmatmul.mubr.f32.gmra.mxu0 %v88
  %v3608 = vpop.f32.mrf.mxu0
  %v3609 = vadd.f32 %v3364, %v3608
  %v3610 = vpop.f32.mrf.mxu0
  %3611 = vmatprep.mubr.f32.mxu0 %v114
  %3612 = vmatmul.mubr.f32.gmra.mxu0 %v113
  %v3613 = vpop.f32.mrf.mxu0
  %v3614 = vadd.f32 %v3369, %v3613
  %v3615 = vpop.f32.mrf.mxu0
  %3616 = vmatprep.mubr.f32.mxu0 %v139
  %3617 = vmatmul.mubr.f32.gmra.mxu0 %v138
  %v3618 = vpop.f32.mrf.mxu0
  %v3619 = vadd.f32 %v3374, %v3618
  %v3620 = vpop.f32.mrf.mxu0
  %3621 = vmatprep.mubr.f32.mxu0 %v164
  %3622 = vmatmul.mubr.f32.gmra.mxu0 %v163
  %v3623 = vpop.f32.mrf.mxu0
  %v3624 = vadd.f32 %v3379, %v3623
  %v3625 = vpop.f32.mrf.mxu0
  %3626 = vmatprep.mubr.f32.mxu0 %v189
  %3627 = vmatmul.mubr.f32.gmra.mxu0 %v188
  %v3628 = vpop.f32.mrf.mxu0
  %v3629 = vadd.f32 %v3384, %v3628
  %v3630 = vpop.f32.mrf.mxu0
  %3631 = vmatprep.mubr.f32.mxu0 %v214
  %3632 = vmatmul.mubr.f32.gmra.mxu0 %v213
  %v3633 = vpop.f32.mrf.mxu0
  %v3634 = vadd.f32 %v3389, %v3633
  %v3635 = vpop.f32.mrf.mxu0
  %3636 = vmatprep.mubr.f32.mxu0 %v239
  %3637 = vmatmul.mubr.f32.gmra.mxu0 %v238
  %v3638 = vpop.f32.mrf.mxu0
  %v3639 = vadd.f32 %v3394, %v3638
  %v3640 = vpop.f32.mrf.mxu0
  %3641 = vmatprep.mubr.f32.mxu0 %v264
  %3642 = vmatmul.mubr.f32.gmra.mxu0 %v263
  %v3643 = vpop.f32.mrf.mxu0
  %v3644 = vadd.f32 %v3399, %v3643
  %v3645 = vpop.f32.mrf.mxu0
  %3646 = vmatprep.mubr.f32.mxu0 %v289
  %3647 = vmatmul.mubr.f32.gmra.mxu0 %v288
  %v3648 = vpop.f32.mrf.mxu0
  %v3649 = vadd.f32 %v3404, %v3648
  %v3650 = vpop.f32.mrf.mxu0
  %3651 = vmatprep.mubr.f32.mxu0 %v314
  %3652 = vmatmul.mubr.f32.gmra.mxu0 %v313
  %v3653 = vpop.f32.mrf.mxu0
  %v3654 = vadd.f32 %v3409, %v3653
  %v3655 = vpop.f32.mrf.mxu0
  %3656 = vmatprep.mubr.f32.mxu0 %v339
  %3657 = vmatmul.mubr.f32.gmra.mxu0 %v338
  %v3658 = vpop.f32.mrf.mxu0
  %v3659 = vadd.f32 %v3414, %v3658
  %v3660 = vpop.f32.mrf.mxu0
  %3661 = vmatprep.mubr.f32.mxu0 %v364
  %3662 = vmatmul.mubr.f32.gmra.mxu0 %v363
  %v3663 = vpop.f32.mrf.mxu0
  %v3664 = vadd.f32 %v3419, %v3663
  %v3665 = vpop.f32.mrf.mxu0
  %3666 = vmatprep.mubr.f32.mxu0 %v389
  %3667 = vmatmul.mubr.f32.gmra.mxu0 %v388
  %v3668 = vpop.f32.mrf.mxu0
  %v3669 = vadd.f32 %v3424, %v3668
  %v3670 = vpop.f32.mrf.mxu0
  %3671 = vmatprep.mubr.f32.mxu0 %v414
  %3672 = vmatmul.mubr.f32.gmra.mxu0 %v413
  %v3673 = vpop.f32.mrf.mxu0
  %v3674 = vadd.f32 %v3429, %v3673
  %v3675 = vpop.f32.mrf.mxu0
  %3676 = vmatprep.mubr.f32.mxu0 %v439
  %3677 = vmatmul.mubr.f32.gmra.mxu0 %v438
  %v3678 = vpop.f32.mrf.mxu0
  %v3679 = vadd.f32 %v3434, %v3678
  %v3680 = vpop.f32.mrf.mxu0
  %3681 = vmatprep.mubr.f32.mxu0 %v464
  %3682 = vmatmul.mubr.f32.gmra.mxu0 %v463
  %v3683 = vpop.f32.mrf.mxu0
  %v3684 = vadd.f32 %v3439, %v3683
  %v3685 = vpop.f32.mrf.mxu0
  %3686 = vmatprep.mubr.f32.mxu0 %v489
  %3687 = vmatmul.mubr.f32.gmra.mxu0 %v488
  %v3688 = vpop.f32.mrf.mxu0
  %v3689 = vadd.f32 %v3444, %v3688
  %v3690 = vpop.f32.mrf.mxu0
  %3691 = vmatprep.mubr.f32.mxu0 %v514
  %3692 = vmatmul.mubr.f32.gmra.mxu0 %v513
  %v3693 = vpop.f32.mrf.mxu0
  %v3694 = vadd.f32 %v3449, %v3693
  %v3695 = vpop.f32.mrf.mxu0
  %3696 = vmatprep.mubr.f32.mxu0 %v539
  %3697 = vmatmul.mubr.f32.gmra.mxu0 %v538
  %v3698 = vpop.f32.mrf.mxu0
  %v3699 = vadd.f32 %v3454, %v3698
  %v3700 = vpop.f32.mrf.mxu0
  %3701 = vmatprep.mubr.f32.mxu0 %v564
  %3702 = vmatmul.mubr.f32.gmra.mxu0 %v563
  %v3703 = vpop.f32.mrf.mxu0
  %v3704 = vadd.f32 %v3459, %v3703
  %v3705 = vpop.f32.mrf.mxu0
  %3706 = vmatprep.mubr.f32.mxu0 %v589
  %3707 = vmatmul.mubr.f32.gmra.mxu0 %v588
  %v3708 = vpop.f32.mrf.mxu0
  %v3709 = vadd.f32 %v3464, %v3708
  %v3710 = vpop.f32.mrf.mxu0
  %3711 = vmatprep.mubr.f32.mxu0 %v614
  %3712 = vmatmul.mubr.f32.gmra.mxu0 %v613
  %v3713 = vpop.f32.mrf.mxu0
  %v3714 = vadd.f32 %v3469, %v3713
  %v3715 = vpop.f32.mrf.mxu0
  %3716 = vmatprep.mubr.f32.mxu0 %v639
  %3717 = vmatmul.mubr.f32.gmra.mxu0 %v638
  %v3718 = vpop.f32.mrf.mxu0
  %v3719 = vadd.f32 %v3474, %v3718
  %v3720 = vpop.f32.mrf.mxu0
  %3721 = vmatprep.mubr.f32.mxu0 %v664
  %3722 = vmatmul.mubr.f32.gmra.mxu0 %v663
  %v3723 = vpop.f32.mrf.mxu0
  %v3724 = vadd.f32 %v3479, %v3723
  %v3725 = vpop.f32.mrf.mxu0
  %3726 = vmatprep.mubr.f32.mxu0 %v689
  %3727 = vmatmul.mubr.f32.gmra.mxu0 %v688
  %v3728 = vpop.f32.mrf.mxu0
  %v3729 = vadd.f32 %v3484, %v3728
  %v3730 = vpop.f32.mrf.mxu0
  %3731 = vmatprep.mubr.f32.mxu0 %v714
  %3732 = vmatmul.mubr.f32.gmra.mxu0 %v713
  %v3733 = vpop.f32.mrf.mxu0
  %v3734 = vadd.f32 %v3489, %v3733
  %v3735 = vpop.f32.mrf.mxu0
  %3736 = vmatprep.mubr.f32.mxu0 %v739
  %3737 = vmatmul.mubr.f32.gmra.mxu0 %v738
  %v3738 = vpop.f32.mrf.mxu0
  %v3739 = vadd.f32 %v3494, %v3738
  %v3740 = vpop.f32.mrf.mxu0
  %3741 = vmatprep.mubr.f32.mxu0 %v764
  %3742 = vmatmul.mubr.f32.gmra.mxu0 %v763
  %v3743 = vpop.f32.mrf.mxu0
  %v3744 = vadd.f32 %v3499, %v3743
  %v3745 = vpop.f32.mrf.mxu0
  %3746 = vmatprep.mubr.f32.mxu0 %v789
  %3747 = vmatmul.mubr.f32.gmra.mxu0 %v788
  %v3748 = vpop.f32.mrf.mxu0
  %v3749 = vadd.f32 %v3504, %v3748
  %v3750 = vpop.f32.mrf.mxu0
  %3751 = vmatprep.mubr.f32.mxu0 %v814
  %3752 = vmatmul.mubr.f32.gmra.mxu0 %v813
  %v3753 = vpop.f32.mrf.mxu0
  %v3754 = vadd.f32 %v3509, %v3753
  %v3755 = vpop.f32.mrf.mxu0
  %3756 = vmatprep.mubr.f32.mxu0 %v839
  %3757 = vmatmul.mubr.f32.gmra.mxu0 %v838
  %v3758 = vpop.f32.mrf.mxu0
  %v3759 = vadd.f32 %v3514, %v3758
  %v3760 = vpop.f32.mrf.mxu0
  %3761 = vmatprep.mubr.f32.mxu0 %v864
  %3762 = vmatmul.mubr.f32.gmra.mxu0 %v863
  %v3763 = vpop.f32.mrf.mxu0
  %v3764 = vadd.f32 %v3519, %v3763
  %v3765 = vpop.f32.mrf.mxu0
  %3766 = vmatprep.mubr.f32.mxu0 %v889
  %3767 = vmatmul.mubr.f32.gmra.mxu0 %v888
  %v3768 = vpop.f32.mrf.mxu0
  %v3769 = vadd.f32 %v3524, %v3768
  %v3770 = vpop.f32.mrf.mxu0
  %3771 = vmatprep.mubr.f32.mxu0 %v914
  %3772 = vmatmul.mubr.f32.gmra.mxu0 %v913
  %v3773 = vpop.f32.mrf.mxu0
  %v3774 = vadd.f32 %v3529, %v3773
  %v3775 = vpop.f32.mrf.mxu0
  %3776 = vdwg.mxu0
  %3777 = vmatprep.subr.mxu0 0.0
  %3778 = vmatpush1.msra.mxu0 %v1255
  %3779 = vmatprep.subr.mxu0 0.0
  %3780 = vmatpush1.msra.mxu0 %v1254
  %3781 = vmatprep.subr.mxu0 0.0
  %3782 = vmatpush1.msra.mxu0 %v1253
  %3783 = vmatprep.subr.mxu0 0.0
  %3784 = vmatpush1.msra.mxu0 %v1252
  %3785 = vmatprep.subr.mxu0 0.0
  %3786 = vmatpush1.msra.mxu0 %v1251
  %3787 = vmatprep.subr.mxu0 0.0
  %3788 = vmatpush1.msra.mxu0 %v1250
  %3789 = vmatprep.subr.mxu0 0.0
  %3790 = vmatpush1.msra.mxu0 %v1249
  %3791 = vmatprep.subr.mxu0 0.0
  %3792 = vmatpush1.msra.mxu0 %v1248
  %3793 = vmatprep.subr.mxu0 0.0
  %3794 = vmatpush1.msra.mxu0 %v1247
  %3795 = vmatprep.subr.mxu0 0.0
  %3796 = vmatpush1.msra.mxu0 %v1246
  %3797 = vmatprep.subr.mxu0 0.0
  %3798 = vmatpush1.msra.mxu0 %v1245
  %3799 = vmatprep.subr.mxu0 0.0
  %3800 = vmatpush1.msra.mxu0 %v1244
  %3801 = vmatprep.subr.mxu0 0.0
  %3802 = vmatpush1.msra.mxu0 %v1243
  %3803 = vmatprep.subr.mxu0 0.0
  %3804 = vmatpush1.msra.mxu0 %v1242
  %3805 = vmatprep.subr.mxu0 0.0
  %3806 = vmatpush1.msra.mxu0 %v1241
  %3807 = vmatprep.subr.mxu0 0.0
  %3808 = vmatpush1.msra.mxu0 %v1240
  %3809 = vmatprep.subr.mxu0 0.0
  %3810 = vmatpush2.msra.mxu0 %v1271
  %3811 = vmatprep.subr.mxu0 0.0
  %3812 = vmatpush2.msra.mxu0 %v1270
  %3813 = vmatprep.subr.mxu0 0.0
  %3814 = vmatpush2.msra.mxu0 %v1269
  %3815 = vmatprep.subr.mxu0 0.0
  %3816 = vmatpush2.msra.mxu0 %v1268
  %3817 = vmatprep.subr.mxu0 0.0
  %3818 = vmatpush2.msra.mxu0 %v1267
  %3819 = vmatprep.subr.mxu0 0.0
  %3820 = vmatpush2.msra.mxu0 %v1266
  %3821 = vmatprep.subr.mxu0 0.0
  %3822 = vmatpush2.msra.mxu0 %v1265
  %3823 = vmatprep.subr.mxu0 0.0
  %3824 = vmatpush2.msra.mxu0 %v1264
  %3825 = vmatprep.subr.mxu0 0.0
  %3826 = vmatpush2.msra.mxu0 %v1263
  %3827 = vmatprep.subr.mxu0 0.0
  %3828 = vmatpush2.msra.mxu0 %v1262
  %3829 = vmatprep.subr.mxu0 0.0
  %3830 = vmatpush2.msra.mxu0 %v1261
  %3831 = vmatprep.subr.mxu0 0.0
  %3832 = vmatpush2.msra.mxu0 %v1260
  %3833 = vmatprep.subr.mxu0 0.0
  %3834 = vmatpush2.msra.mxu0 %v1259
  %3835 = vmatprep.subr.mxu0 0.0
  %3836 = vmatpush2.msra.mxu0 %v1258
  %3837 = vmatprep.subr.mxu0 0.0
  %3838 = vmatpush2.msra.mxu0 %v1257
  %3839 = vmatprep.subr.mxu0 0.0
  %3840 = vmatpush2.msra.mxu0 %v1256
  %3841 = vmatprep.mubr.f32.mxu0 %v41
  %3842 = vmatmul.mubr.f32.gmra.mxu0 %v40
  %v3843 = vpop.f32.mrf.mxu0
  %v3844 = vadd.f32 %v3599, %v3843
  %v3845 = vpop.f32.mrf.mxu0
  %3846 = vmatprep.mubr.f32.mxu0 %v66
  %3847 = vmatmul.mubr.f32.gmra.mxu0 %v65
  %v3848 = vpop.f32.mrf.mxu0
  %v3849 = vadd.f32 %v3604, %v3848
  %v3850 = vpop.f32.mrf.mxu0
  %3851 = vmatprep.mubr.f32.mxu0 %v91
  %3852 = vmatmul.mubr.f32.gmra.mxu0 %v90
  %v3853 = vpop.f32.mrf.mxu0
  %v3854 = vadd.f32 %v3609, %v3853
  %v3855 = vpop.f32.mrf.mxu0
  %3856 = vmatprep.mubr.f32.mxu0 %v116
  %3857 = vmatmul.mubr.f32.gmra.mxu0 %v115
  %v3858 = vpop.f32.mrf.mxu0
  %v3859 = vadd.f32 %v3614, %v3858
  %v3860 = vpop.f32.mrf.mxu0
  %3861 = vmatprep.mubr.f32.mxu0 %v141
  %3862 = vmatmul.mubr.f32.gmra.mxu0 %v140
  %v3863 = vpop.f32.mrf.mxu0
  %v3864 = vadd.f32 %v3619, %v3863
  %v3865 = vpop.f32.mrf.mxu0
  %3866 = vmatprep.mubr.f32.mxu0 %v166
  %3867 = vmatmul.mubr.f32.gmra.mxu0 %v165
  %v3868 = vpop.f32.mrf.mxu0
  %v3869 = vadd.f32 %v3624, %v3868
  %v3870 = vpop.f32.mrf.mxu0
  %3871 = vmatprep.mubr.f32.mxu0 %v191
  %3872 = vmatmul.mubr.f32.gmra.mxu0 %v190
  %v3873 = vpop.f32.mrf.mxu0
  %v3874 = vadd.f32 %v3629, %v3873
  %v3875 = vpop.f32.mrf.mxu0
  %3876 = vmatprep.mubr.f32.mxu0 %v216
  %3877 = vmatmul.mubr.f32.gmra.mxu0 %v215
  %v3878 = vpop.f32.mrf.mxu0
  %v3879 = vadd.f32 %v3634, %v3878
  %v3880 = vpop.f32.mrf.mxu0
  %3881 = vmatprep.mubr.f32.mxu0 %v241
  %3882 = vmatmul.mubr.f32.gmra.mxu0 %v240
  %v3883 = vpop.f32.mrf.mxu0
  %v3884 = vadd.f32 %v3639, %v3883
  %v3885 = vpop.f32.mrf.mxu0
  %3886 = vmatprep.mubr.f32.mxu0 %v266
  %3887 = vmatmul.mubr.f32.gmra.mxu0 %v265
  %v3888 = vpop.f32.mrf.mxu0
  %v3889 = vadd.f32 %v3644, %v3888
  %v3890 = vpop.f32.mrf.mxu0
  %3891 = vmatprep.mubr.f32.mxu0 %v291
  %3892 = vmatmul.mubr.f32.gmra.mxu0 %v290
  %v3893 = vpop.f32.mrf.mxu0
  %v3894 = vadd.f32 %v3649, %v3893
  %v3895 = vpop.f32.mrf.mxu0
  %3896 = vmatprep.mubr.f32.mxu0 %v316
  %3897 = vmatmul.mubr.f32.gmra.mxu0 %v315
  %v3898 = vpop.f32.mrf.mxu0
  %v3899 = vadd.f32 %v3654, %v3898
  %v3900 = vpop.f32.mrf.mxu0
  %3901 = vmatprep.mubr.f32.mxu0 %v341
  %3902 = vmatmul.mubr.f32.gmra.mxu0 %v340
  %v3903 = vpop.f32.mrf.mxu0
  %v3904 = vadd.f32 %v3659, %v3903
  %v3905 = vpop.f32.mrf.mxu0
  %3906 = vmatprep.mubr.f32.mxu0 %v366
  %3907 = vmatmul.mubr.f32.gmra.mxu0 %v365
  %v3908 = vpop.f32.mrf.mxu0
  %v3909 = vadd.f32 %v3664, %v3908
  %v3910 = vpop.f32.mrf.mxu0
  %3911 = vmatprep.mubr.f32.mxu0 %v391
  %3912 = vmatmul.mubr.f32.gmra.mxu0 %v390
  %v3913 = vpop.f32.mrf.mxu0
  %v3914 = vadd.f32 %v3669, %v3913
  %v3915 = vpop.f32.mrf.mxu0
  %3916 = vmatprep.mubr.f32.mxu0 %v416
  %3917 = vmatmul.mubr.f32.gmra.mxu0 %v415
  %v3918 = vpop.f32.mrf.mxu0
  %v3919 = vadd.f32 %v3674, %v3918
  %v3920 = vpop.f32.mrf.mxu0
  %3921 = vmatprep.mubr.f32.mxu0 %v441
  %3922 = vmatmul.mubr.f32.gmra.mxu0 %v440
  %v3923 = vpop.f32.mrf.mxu0
  %v3924 = vadd.f32 %v3679, %v3923
  %v3925 = vpop.f32.mrf.mxu0
  %3926 = vmatprep.mubr.f32.mxu0 %v466
  %3927 = vmatmul.mubr.f32.gmra.mxu0 %v465
  %v3928 = vpop.f32.mrf.mxu0
  %v3929 = vadd.f32 %v3684, %v3928
  %v3930 = vpop.f32.mrf.mxu0
  %3931 = vmatprep.mubr.f32.mxu0 %v491
  %3932 = vmatmul.mubr.f32.gmra.mxu0 %v490
  %v3933 = vpop.f32.mrf.mxu0
  %v3934 = vadd.f32 %v3689, %v3933
  %v3935 = vpop.f32.mrf.mxu0
  %3936 = vmatprep.mubr.f32.mxu0 %v516
  %3937 = vmatmul.mubr.f32.gmra.mxu0 %v515
  %v3938 = vpop.f32.mrf.mxu0
  %v3939 = vadd.f32 %v3694, %v3938
  %v3940 = vpop.f32.mrf.mxu0
  %3941 = vmatprep.mubr.f32.mxu0 %v541
  %3942 = vmatmul.mubr.f32.gmra.mxu0 %v540
  %v3943 = vpop.f32.mrf.mxu0
  %v3944 = vadd.f32 %v3699, %v3943
  %v3945 = vpop.f32.mrf.mxu0
  %3946 = vmatprep.mubr.f32.mxu0 %v566
  %3947 = vmatmul.mubr.f32.gmra.mxu0 %v565
  %v3948 = vpop.f32.mrf.mxu0
  %v3949 = vadd.f32 %v3704, %v3948
  %v3950 = vpop.f32.mrf.mxu0
  %3951 = vmatprep.mubr.f32.mxu0 %v591
  %3952 = vmatmul.mubr.f32.gmra.mxu0 %v590
  %v3953 = vpop.f32.mrf.mxu0
  %v3954 = vadd.f32 %v3709, %v3953
  %v3955 = vpop.f32.mrf.mxu0
  %3956 = vmatprep.mubr.f32.mxu0 %v616
  %3957 = vmatmul.mubr.f32.gmra.mxu0 %v615
  %v3958 = vpop.f32.mrf.mxu0
  %v3959 = vadd.f32 %v3714, %v3958
  %v3960 = vpop.f32.mrf.mxu0
  %3961 = vmatprep.mubr.f32.mxu0 %v641
  %3962 = vmatmul.mubr.f32.gmra.mxu0 %v640
  %v3963 = vpop.f32.mrf.mxu0
  %v3964 = vadd.f32 %v3719, %v3963
  %v3965 = vpop.f32.mrf.mxu0
  %3966 = vmatprep.mubr.f32.mxu0 %v666
  %3967 = vmatmul.mubr.f32.gmra.mxu0 %v665
  %v3968 = vpop.f32.mrf.mxu0
  %v3969 = vadd.f32 %v3724, %v3968
  %v3970 = vpop.f32.mrf.mxu0
  %3971 = vmatprep.mubr.f32.mxu0 %v691
  %3972 = vmatmul.mubr.f32.gmra.mxu0 %v690
  %v3973 = vpop.f32.mrf.mxu0
  %v3974 = vadd.f32 %v3729, %v3973
  %v3975 = vpop.f32.mrf.mxu0
  %3976 = vmatprep.mubr.f32.mxu0 %v716
  %3977 = vmatmul.mubr.f32.gmra.mxu0 %v715
  %v3978 = vpop.f32.mrf.mxu0
  %v3979 = vadd.f32 %v3734, %v3978
  %v3980 = vpop.f32.mrf.mxu0
  %3981 = vmatprep.mubr.f32.mxu0 %v741
  %3982 = vmatmul.mubr.f32.gmra.mxu0 %v740
  %v3983 = vpop.f32.mrf.mxu0
  %v3984 = vadd.f32 %v3739, %v3983
  %v3985 = vpop.f32.mrf.mxu0
  %3986 = vmatprep.mubr.f32.mxu0 %v766
  %3987 = vmatmul.mubr.f32.gmra.mxu0 %v765
  %v3988 = vpop.f32.mrf.mxu0
  %v3989 = vadd.f32 %v3744, %v3988
  %v3990 = vpop.f32.mrf.mxu0
  %3991 = vmatprep.mubr.f32.mxu0 %v791
  %3992 = vmatmul.mubr.f32.gmra.mxu0 %v790
  %v3993 = vpop.f32.mrf.mxu0
  %v3994 = vadd.f32 %v3749, %v3993
  %v3995 = vpop.f32.mrf.mxu0
  %3996 = vmatprep.mubr.f32.mxu0 %v816
  %3997 = vmatmul.mubr.f32.gmra.mxu0 %v815
  %v3998 = vpop.f32.mrf.mxu0
  %v3999 = vadd.f32 %v3754, %v3998
  %v4000 = vpop.f32.mrf.mxu0
  %4001 = vmatprep.mubr.f32.mxu0 %v841
  %4002 = vmatmul.mubr.f32.gmra.mxu0 %v840
  %v4003 = vpop.f32.mrf.mxu0
  %v4004 = vadd.f32 %v3759, %v4003
  %v4005 = vpop.f32.mrf.mxu0
  %4006 = vmatprep.mubr.f32.mxu0 %v866
  %4007 = vmatmul.mubr.f32.gmra.mxu0 %v865
  %v4008 = vpop.f32.mrf.mxu0
  %v4009 = vadd.f32 %v3764, %v4008
  %v4010 = vpop.f32.mrf.mxu0
  %4011 = vmatprep.mubr.f32.mxu0 %v891
  %4012 = vmatmul.mubr.f32.gmra.mxu0 %v890
  %v4013 = vpop.f32.mrf.mxu0
  %v4014 = vadd.f32 %v3769, %v4013
  %v4015 = vpop.f32.mrf.mxu0
  %4016 = vmatprep.mubr.f32.mxu0 %v916
  %4017 = vmatmul.mubr.f32.gmra.mxu0 %v915
  %v4018 = vpop.f32.mrf.mxu0
  %v4019 = vadd.f32 %v3774, %v4018
  %v4020 = vpop.f32.mrf.mxu0
  %4021 = vdwg.mxu0
  %4022 = vmatprep.subr.mxu0 0.0
  %4023 = vmatpush1.msra.mxu0 %v1287
  %4024 = vmatprep.subr.mxu0 0.0
  %4025 = vmatpush1.msra.mxu0 %v1286
  %4026 = vmatprep.subr.mxu0 0.0
  %4027 = vmatpush1.msra.mxu0 %v1285
  %4028 = vmatprep.subr.mxu0 0.0
  %4029 = vmatpush1.msra.mxu0 %v1284
  %4030 = vmatprep.subr.mxu0 0.0
  %4031 = vmatpush1.msra.mxu0 %v1283
  %4032 = vmatprep.subr.mxu0 0.0
  %4033 = vmatpush1.msra.mxu0 %v1282
  %4034 = vmatprep.subr.mxu0 0.0
  %4035 = vmatpush1.msra.mxu0 %v1281
  %4036 = vmatprep.subr.mxu0 0.0
  %4037 = vmatpush1.msra.mxu0 %v1280
  %4038 = vmatprep.subr.mxu0 0.0
  %4039 = vmatpush1.msra.mxu0 %v1279
  %4040 = vmatprep.subr.mxu0 0.0
  %4041 = vmatpush1.msra.mxu0 %v1278
  %4042 = vmatprep.subr.mxu0 0.0
  %4043 = vmatpush1.msra.mxu0 %v1277
  %4044 = vmatprep.subr.mxu0 0.0
  %4045 = vmatpush1.msra.mxu0 %v1276
  %4046 = vmatprep.subr.mxu0 0.0
  %4047 = vmatpush1.msra.mxu0 %v1275
  %4048 = vmatprep.subr.mxu0 0.0
  %4049 = vmatpush1.msra.mxu0 %v1274
  %4050 = vmatprep.subr.mxu0 0.0
  %4051 = vmatpush1.msra.mxu0 %v1273
  %4052 = vmatprep.subr.mxu0 0.0
  %4053 = vmatpush1.msra.mxu0 %v1272
  %4054 = vmatprep.subr.mxu0 0.0
  %4055 = vmatpush2.msra.mxu0 %v1303
  %4056 = vmatprep.subr.mxu0 0.0
  %4057 = vmatpush2.msra.mxu0 %v1302
  %4058 = vmatprep.subr.mxu0 0.0
  %4059 = vmatpush2.msra.mxu0 %v1301
  %4060 = vmatprep.subr.mxu0 0.0
  %4061 = vmatpush2.msra.mxu0 %v1300
  %4062 = vmatprep.subr.mxu0 0.0
  %4063 = vmatpush2.msra.mxu0 %v1299
  %4064 = vmatprep.subr.mxu0 0.0
  %4065 = vmatpush2.msra.mxu0 %v1298
  %4066 = vmatprep.subr.mxu0 0.0
  %4067 = vmatpush2.msra.mxu0 %v1297
  %4068 = vmatprep.subr.mxu0 0.0
  %4069 = vmatpush2.msra.mxu0 %v1296
  %4070 = vmatprep.subr.mxu0 0.0
  %4071 = vmatpush2.msra.mxu0 %v1295
  %4072 = vmatprep.subr.mxu0 0.0
  %4073 = vmatpush2.msra.mxu0 %v1294
  %4074 = vmatprep.subr.mxu0 0.0
  %4075 = vmatpush2.msra.mxu0 %v1293
  %4076 = vmatprep.subr.mxu0 0.0
  %4077 = vmatpush2.msra.mxu0 %v1292
  %4078 = vmatprep.subr.mxu0 0.0
  %4079 = vmatpush2.msra.mxu0 %v1291
  %4080 = vmatprep.subr.mxu0 0.0
  %4081 = vmatpush2.msra.mxu0 %v1290
  %4082 = vmatprep.subr.mxu0 0.0
  %4083 = vmatpush2.msra.mxu0 %v1289
  %4084 = vmatprep.subr.mxu0 0.0
  %4085 = vmatpush2.msra.mxu0 %v1288
  %4086 = vmatprep.mubr.f32.mxu0 %v43
  %4087 = vmatmul.mubr.f32.gmra.mxu0 %v42
  %v4088 = vpop.f32.mrf.mxu0
  %v4089 = vadd.f32 %v3844, %v4088
  %v4090 = vpop.f32.mrf.mxu0
  %4091 = vmatprep.mubr.f32.mxu0 %v68
  %4092 = vmatmul.mubr.f32.gmra.mxu0 %v67
  %v4093 = vpop.f32.mrf.mxu0
  %v4094 = vadd.f32 %v3849, %v4093
  %v4095 = vpop.f32.mrf.mxu0
  %4096 = vmatprep.mubr.f32.mxu0 %v93
  %4097 = vmatmul.mubr.f32.gmra.mxu0 %v92
  %v4098 = vpop.f32.mrf.mxu0
  %v4099 = vadd.f32 %v3854, %v4098
  %v4100 = vpop.f32.mrf.mxu0
  %4101 = vmatprep.mubr.f32.mxu0 %v118
  %4102 = vmatmul.mubr.f32.gmra.mxu0 %v117
  %v4103 = vpop.f32.mrf.mxu0
  %v4104 = vadd.f32 %v3859, %v4103
  %v4105 = vpop.f32.mrf.mxu0
  %4106 = vmatprep.mubr.f32.mxu0 %v143
  %4107 = vmatmul.mubr.f32.gmra.mxu0 %v142
  %v4108 = vpop.f32.mrf.mxu0
  %v4109 = vadd.f32 %v3864, %v4108
  %v4110 = vpop.f32.mrf.mxu0
  %4111 = vmatprep.mubr.f32.mxu0 %v168
  %4112 = vmatmul.mubr.f32.gmra.mxu0 %v167
  %v4113 = vpop.f32.mrf.mxu0
  %v4114 = vadd.f32 %v3869, %v4113
  %v4115 = vpop.f32.mrf.mxu0
  %4116 = vmatprep.mubr.f32.mxu0 %v193
  %4117 = vmatmul.mubr.f32.gmra.mxu0 %v192
  %v4118 = vpop.f32.mrf.mxu0
  %v4119 = vadd.f32 %v3874, %v4118
  %v4120 = vpop.f32.mrf.mxu0
  %4121 = vmatprep.mubr.f32.mxu0 %v218
  %4122 = vmatmul.mubr.f32.gmra.mxu0 %v217
  %v4123 = vpop.f32.mrf.mxu0
  %v4124 = vadd.f32 %v3879, %v4123
  %v4125 = vpop.f32.mrf.mxu0
  %4126 = vmatprep.mubr.f32.mxu0 %v243
  %4127 = vmatmul.mubr.f32.gmra.mxu0 %v242
  %v4128 = vpop.f32.mrf.mxu0
  %v4129 = vadd.f32 %v3884, %v4128
  %v4130 = vpop.f32.mrf.mxu0
  %4131 = vmatprep.mubr.f32.mxu0 %v268
  %4132 = vmatmul.mubr.f32.gmra.mxu0 %v267
  %v4133 = vpop.f32.mrf.mxu0
  %v4134 = vadd.f32 %v3889, %v4133
  %v4135 = vpop.f32.mrf.mxu0
  %4136 = vmatprep.mubr.f32.mxu0 %v293
  %4137 = vmatmul.mubr.f32.gmra.mxu0 %v292
  %v4138 = vpop.f32.mrf.mxu0
  %v4139 = vadd.f32 %v3894, %v4138
  %v4140 = vpop.f32.mrf.mxu0
  %4141 = vmatprep.mubr.f32.mxu0 %v318
  %4142 = vmatmul.mubr.f32.gmra.mxu0 %v317
  %v4143 = vpop.f32.mrf.mxu0
  %v4144 = vadd.f32 %v3899, %v4143
  %v4145 = vpop.f32.mrf.mxu0
  %4146 = vmatprep.mubr.f32.mxu0 %v343
  %4147 = vmatmul.mubr.f32.gmra.mxu0 %v342
  %v4148 = vpop.f32.mrf.mxu0
  %v4149 = vadd.f32 %v3904, %v4148
  %v4150 = vpop.f32.mrf.mxu0
  %4151 = vmatprep.mubr.f32.mxu0 %v368
  %4152 = vmatmul.mubr.f32.gmra.mxu0 %v367
  %v4153 = vpop.f32.mrf.mxu0
  %v4154 = vadd.f32 %v3909, %v4153
  %v4155 = vpop.f32.mrf.mxu0
  %4156 = vmatprep.mubr.f32.mxu0 %v393
  %4157 = vmatmul.mubr.f32.gmra.mxu0 %v392
  %v4158 = vpop.f32.mrf.mxu0
  %v4159 = vadd.f32 %v3914, %v4158
  %v4160 = vpop.f32.mrf.mxu0
  %4161 = vmatprep.mubr.f32.mxu0 %v418
  %4162 = vmatmul.mubr.f32.gmra.mxu0 %v417
  %v4163 = vpop.f32.mrf.mxu0
  %v4164 = vadd.f32 %v3919, %v4163
  %v4165 = vpop.f32.mrf.mxu0
  %4166 = vmatprep.mubr.f32.mxu0 %v443
  %4167 = vmatmul.mubr.f32.gmra.mxu0 %v442
  %v4168 = vpop.f32.mrf.mxu0
  %v4169 = vadd.f32 %v3924, %v4168
  %v4170 = vpop.f32.mrf.mxu0
  %4171 = vmatprep.mubr.f32.mxu0 %v468
  %4172 = vmatmul.mubr.f32.gmra.mxu0 %v467
  %v4173 = vpop.f32.mrf.mxu0
  %v4174 = vadd.f32 %v3929, %v4173
  %v4175 = vpop.f32.mrf.mxu0
  %4176 = vmatprep.mubr.f32.mxu0 %v493
  %4177 = vmatmul.mubr.f32.gmra.mxu0 %v492
  %v4178 = vpop.f32.mrf.mxu0
  %v4179 = vadd.f32 %v3934, %v4178
  %v4180 = vpop.f32.mrf.mxu0
  %4181 = vmatprep.mubr.f32.mxu0 %v518
  %4182 = vmatmul.mubr.f32.gmra.mxu0 %v517
  %v4183 = vpop.f32.mrf.mxu0
  %v4184 = vadd.f32 %v3939, %v4183
  %v4185 = vpop.f32.mrf.mxu0
  %4186 = vmatprep.mubr.f32.mxu0 %v543
  %4187 = vmatmul.mubr.f32.gmra.mxu0 %v542
  %v4188 = vpop.f32.mrf.mxu0
  %v4189 = vadd.f32 %v3944, %v4188
  %v4190 = vpop.f32.mrf.mxu0
  %4191 = vmatprep.mubr.f32.mxu0 %v568
  %4192 = vmatmul.mubr.f32.gmra.mxu0 %v567
  %v4193 = vpop.f32.mrf.mxu0
  %v4194 = vadd.f32 %v3949, %v4193
  %v4195 = vpop.f32.mrf.mxu0
  %4196 = vmatprep.mubr.f32.mxu0 %v593
  %4197 = vmatmul.mubr.f32.gmra.mxu0 %v592
  %v4198 = vpop.f32.mrf.mxu0
  %v4199 = vadd.f32 %v3954, %v4198
  %v4200 = vpop.f32.mrf.mxu0
  %4201 = vmatprep.mubr.f32.mxu0 %v618
  %4202 = vmatmul.mubr.f32.gmra.mxu0 %v617
  %v4203 = vpop.f32.mrf.mxu0
  %v4204 = vadd.f32 %v3959, %v4203
  %v4205 = vpop.f32.mrf.mxu0
  %4206 = vmatprep.mubr.f32.mxu0 %v643
  %4207 = vmatmul.mubr.f32.gmra.mxu0 %v642
  %v4208 = vpop.f32.mrf.mxu0
  %v4209 = vadd.f32 %v3964, %v4208
  %v4210 = vpop.f32.mrf.mxu0
  %4211 = vmatprep.mubr.f32.mxu0 %v668
  %4212 = vmatmul.mubr.f32.gmra.mxu0 %v667
  %v4213 = vpop.f32.mrf.mxu0
  %v4214 = vadd.f32 %v3969, %v4213
  %v4215 = vpop.f32.mrf.mxu0
  %4216 = vmatprep.mubr.f32.mxu0 %v693
  %4217 = vmatmul.mubr.f32.gmra.mxu0 %v692
  %v4218 = vpop.f32.mrf.mxu0
  %v4219 = vadd.f32 %v3974, %v4218
  %v4220 = vpop.f32.mrf.mxu0
  %4221 = vmatprep.mubr.f32.mxu0 %v718
  %4222 = vmatmul.mubr.f32.gmra.mxu0 %v717
  %v4223 = vpop.f32.mrf.mxu0
  %v4224 = vadd.f32 %v3979, %v4223
  %v4225 = vpop.f32.mrf.mxu0
  %4226 = vmatprep.mubr.f32.mxu0 %v743
  %4227 = vmatmul.mubr.f32.gmra.mxu0 %v742
  %v4228 = vpop.f32.mrf.mxu0
  %v4229 = vadd.f32 %v3984, %v4228
  %v4230 = vpop.f32.mrf.mxu0
  %4231 = vmatprep.mubr.f32.mxu0 %v768
  %4232 = vmatmul.mubr.f32.gmra.mxu0 %v767
  %v4233 = vpop.f32.mrf.mxu0
  %v4234 = vadd.f32 %v3989, %v4233
  %v4235 = vpop.f32.mrf.mxu0
  %4236 = vmatprep.mubr.f32.mxu0 %v793
  %4237 = vmatmul.mubr.f32.gmra.mxu0 %v792
  %v4238 = vpop.f32.mrf.mxu0
  %v4239 = vadd.f32 %v3994, %v4238
  %v4240 = vpop.f32.mrf.mxu0
  %4241 = vmatprep.mubr.f32.mxu0 %v818
  %4242 = vmatmul.mubr.f32.gmra.mxu0 %v817
  %v4243 = vpop.f32.mrf.mxu0
  %v4244 = vadd.f32 %v3999, %v4243
  %v4245 = vpop.f32.mrf.mxu0
  %4246 = vmatprep.mubr.f32.mxu0 %v843
  %4247 = vmatmul.mubr.f32.gmra.mxu0 %v842
  %v4248 = vpop.f32.mrf.mxu0
  %v4249 = vadd.f32 %v4004, %v4248
  %v4250 = vpop.f32.mrf.mxu0
  %4251 = vmatprep.mubr.f32.mxu0 %v868
  %4252 = vmatmul.mubr.f32.gmra.mxu0 %v867
  %v4253 = vpop.f32.mrf.mxu0
  %v4254 = vadd.f32 %v4009, %v4253
  %v4255 = vpop.f32.mrf.mxu0
  %4256 = vmatprep.mubr.f32.mxu0 %v893
  %4257 = vmatmul.mubr.f32.gmra.mxu0 %v892
  %v4258 = vpop.f32.mrf.mxu0
  %v4259 = vadd.f32 %v4014, %v4258
  %v4260 = vpop.f32.mrf.mxu0
  %4261 = vmatprep.mubr.f32.mxu0 %v918
  %4262 = vmatmul.mubr.f32.gmra.mxu0 %v917
  %v4263 = vpop.f32.mrf.mxu0
  %v4264 = vadd.f32 %v4019, %v4263
  %v4265 = vpop.f32.mrf.mxu0
  %4266 = vdwg.mxu0
  %4267 = vmatprep.subr.mxu0 0.0
  %4268 = vmatpush1.msra.mxu0 %v1319
  %4269 = vmatprep.subr.mxu0 0.0
  %4270 = vmatpush1.msra.mxu0 %v1318
  %4271 = vmatprep.subr.mxu0 0.0
  %4272 = vmatpush1.msra.mxu0 %v1317
  %4273 = vmatprep.subr.mxu0 0.0
  %4274 = vmatpush1.msra.mxu0 %v1316
  %4275 = vmatprep.subr.mxu0 0.0
  %4276 = vmatpush1.msra.mxu0 %v1315
  %4277 = vmatprep.subr.mxu0 0.0
  %4278 = vmatpush1.msra.mxu0 %v1314
  %4279 = vmatprep.subr.mxu0 0.0
  %4280 = vmatpush1.msra.mxu0 %v1313
  %4281 = vmatprep.subr.mxu0 0.0
  %4282 = vmatpush1.msra.mxu0 %v1312
  %4283 = vmatprep.subr.mxu0 0.0
  %4284 = vmatpush1.msra.mxu0 %v1311
  %4285 = vmatprep.subr.mxu0 0.0
  %4286 = vmatpush1.msra.mxu0 %v1310
  %4287 = vmatprep.subr.mxu0 0.0
  %4288 = vmatpush1.msra.mxu0 %v1309
  %4289 = vmatprep.subr.mxu0 0.0
  %4290 = vmatpush1.msra.mxu0 %v1308
  %4291 = vmatprep.subr.mxu0 0.0
  %4292 = vmatpush1.msra.mxu0 %v1307
  %4293 = vmatprep.subr.mxu0 0.0
  %4294 = vmatpush1.msra.mxu0 %v1306
  %4295 = vmatprep.subr.mxu0 0.0
  %4296 = vmatpush1.msra.mxu0 %v1305
  %4297 = vmatprep.subr.mxu0 0.0
  %4298 = vmatpush1.msra.mxu0 %v1304
  %4299 = vmatprep.subr.mxu0 0.0
  %4300 = vmatpush2.msra.mxu0 0.0
  %4301 = vmatprep.subr.mxu0 0.0
  %4302 = vmatpush2.msra.mxu0 0.0
  %4303 = vmatprep.subr.mxu0 0.0
  %4304 = vmatpush2.msra.mxu0 0.0
  %4305 = vmatprep.subr.mxu0 0.0
  %4306 = vmatpush2.msra.mxu0 0.0
  %4307 = vmatprep.subr.mxu0 0.0
  %4308 = vmatpush2.msra.mxu0 0.0
  %4309 = vmatprep.subr.mxu0 0.0
  %4310 = vmatpush2.msra.mxu0 0.0
  %4311 = vmatprep.subr.mxu0 0.0
  %4312 = vmatpush2.msra.mxu0 0.0
  %4313 = vmatprep.subr.mxu0 0.0
  %4314 = vmatpush2.msra.mxu0 0.0
  %4315 = vmatprep.subr.mxu0 0.0
  %4316 = vmatpush2.msra.mxu0 0.0
  %4317 = vmatprep.subr.mxu0 0.0
  %4318 = vmatpush2.msra.mxu0 0.0
  %4319 = vmatprep.subr.mxu0 0.0
  %4320 = vmatpush2.msra.mxu0 0.0
  %4321 = vmatprep.subr.mxu0 0.0
  %4322 = vmatpush2.msra.mxu0 0.0
  %4323 = vmatprep.subr.mxu0 0.0
  %4324 = vmatpush2.msra.mxu0 0.0
  %4325 = vmatprep.subr.mxu0 0.0
  %4326 = vmatpush2.msra.mxu0 0.0
  %4327 = vmatprep.subr.mxu0 0.0
  %4328 = vmatpush2.msra.mxu0 0.0
  %4329 = vmatprep.subr.mxu0 0.0
  %4330 = vmatpush2.msra.mxu0 0.0
  %4331 = vmatprep.mubr.f32.mxu0 0.0
  %4332 = vmatmul.mubr.f32.gmra.mxu0 %v44
  %v4333 = vpop.f32.mrf.mxu0
  %v4334 = vadd.f32 %v4089, %v4333
  %v4335 = vpop.f32.mrf.mxu0
  %4336 = vmatprep.mubr.f32.mxu0 0.0
  %4337 = vmatmul.mubr.f32.gmra.mxu0 %v69
  %v4338 = vpop.f32.mrf.mxu0
  %v4339 = vadd.f32 %v4094, %v4338
  %v4340 = vpop.f32.mrf.mxu0
  %4341 = vmatprep.mubr.f32.mxu0 0.0
  %4342 = vmatmul.mubr.f32.gmra.mxu0 %v94
  %v4343 = vpop.f32.mrf.mxu0
  %v4344 = vadd.f32 %v4099, %v4343
  %v4345 = vpop.f32.mrf.mxu0
  %4346 = vmatprep.mubr.f32.mxu0 0.0
  %4347 = vmatmul.mubr.f32.gmra.mxu0 %v119
  %v4348 = vpop.f32.mrf.mxu0
  %v4349 = vadd.f32 %v4104, %v4348
  %v4350 = vpop.f32.mrf.mxu0
  %4351 = vmatprep.mubr.f32.mxu0 0.0
  %4352 = vmatmul.mubr.f32.gmra.mxu0 %v144
  %v4353 = vpop.f32.mrf.mxu0
  %v4354 = vadd.f32 %v4109, %v4353
  %v4355 = vpop.f32.mrf.mxu0
  %4356 = vmatprep.mubr.f32.mxu0 0.0
  %4357 = vmatmul.mubr.f32.gmra.mxu0 %v169
  %v4358 = vpop.f32.mrf.mxu0
  %v4359 = vadd.f32 %v4114, %v4358
  %v4360 = vpop.f32.mrf.mxu0
  %4361 = vmatprep.mubr.f32.mxu0 0.0
  %4362 = vmatmul.mubr.f32.gmra.mxu0 %v194
  %v4363 = vpop.f32.mrf.mxu0
  %v4364 = vadd.f32 %v4119, %v4363
  %v4365 = vpop.f32.mrf.mxu0
  %4366 = vmatprep.mubr.f32.mxu0 0.0
  %4367 = vmatmul.mubr.f32.gmra.mxu0 %v219
  %v4368 = vpop.f32.mrf.mxu0
  %v4369 = vadd.f32 %v4124, %v4368
  %v4370 = vpop.f32.mrf.mxu0
  %4371 = vmatprep.mubr.f32.mxu0 0.0
  %4372 = vmatmul.mubr.f32.gmra.mxu0 %v244
  %v4373 = vpop.f32.mrf.mxu0
  %v4374 = vadd.f32 %v4129, %v4373
  %v4375 = vpop.f32.mrf.mxu0
  %4376 = vmatprep.mubr.f32.mxu0 0.0
  %4377 = vmatmul.mubr.f32.gmra.mxu0 %v269
  %v4378 = vpop.f32.mrf.mxu0
  %v4379 = vadd.f32 %v4134, %v4378
  %v4380 = vpop.f32.mrf.mxu0
  %4381 = vmatprep.mubr.f32.mxu0 0.0
  %4382 = vmatmul.mubr.f32.gmra.mxu0 %v294
  %v4383 = vpop.f32.mrf.mxu0
  %v4384 = vadd.f32 %v4139, %v4383
  %v4385 = vpop.f32.mrf.mxu0
  %4386 = vmatprep.mubr.f32.mxu0 0.0
  %4387 = vmatmul.mubr.f32.gmra.mxu0 %v319
  %v4388 = vpop.f32.mrf.mxu0
  %v4389 = vadd.f32 %v4144, %v4388
  %v4390 = vpop.f32.mrf.mxu0
  %4391 = vmatprep.mubr.f32.mxu0 0.0
  %4392 = vmatmul.mubr.f32.gmra.mxu0 %v344
  %v4393 = vpop.f32.mrf.mxu0
  %v4394 = vadd.f32 %v4149, %v4393
  %v4395 = vpop.f32.mrf.mxu0
  %4396 = vmatprep.mubr.f32.mxu0 0.0
  %4397 = vmatmul.mubr.f32.gmra.mxu0 %v369
  %v4398 = vpop.f32.mrf.mxu0
  %v4399 = vadd.f32 %v4154, %v4398
  %v4400 = vpop.f32.mrf.mxu0
  %4401 = vmatprep.mubr.f32.mxu0 0.0
  %4402 = vmatmul.mubr.f32.gmra.mxu0 %v394
  %v4403 = vpop.f32.mrf.mxu0
  %v4404 = vadd.f32 %v4159, %v4403
  %v4405 = vpop.f32.mrf.mxu0
  %4406 = vmatprep.mubr.f32.mxu0 0.0
  %4407 = vmatmul.mubr.f32.gmra.mxu0 %v419
  %v4408 = vpop.f32.mrf.mxu0
  %v4409 = vadd.f32 %v4164, %v4408
  %v4410 = vpop.f32.mrf.mxu0
  %4411 = vmatprep.mubr.f32.mxu0 0.0
  %4412 = vmatmul.mubr.f32.gmra.mxu0 %v444
  %v4413 = vpop.f32.mrf.mxu0
  %v4414 = vadd.f32 %v4169, %v4413
  %v4415 = vpop.f32.mrf.mxu0
  %4416 = vmatprep.mubr.f32.mxu0 0.0
  %4417 = vmatmul.mubr.f32.gmra.mxu0 %v469
  %v4418 = vpop.f32.mrf.mxu0
  %v4419 = vadd.f32 %v4174, %v4418
  %v4420 = vpop.f32.mrf.mxu0
  %4421 = vmatprep.mubr.f32.mxu0 0.0
  %4422 = vmatmul.mubr.f32.gmra.mxu0 %v494
  %v4423 = vpop.f32.mrf.mxu0
  %v4424 = vadd.f32 %v4179, %v4423
  %v4425 = vpop.f32.mrf.mxu0
  %4426 = vmatprep.mubr.f32.mxu0 0.0
  %4427 = vmatmul.mubr.f32.gmra.mxu0 %v519
  %v4428 = vpop.f32.mrf.mxu0
  %v4429 = vadd.f32 %v4184, %v4428
  %v4430 = vpop.f32.mrf.mxu0
  %4431 = vmatprep.mubr.f32.mxu0 0.0
  %4432 = vmatmul.mubr.f32.gmra.mxu0 %v544
  %v4433 = vpop.f32.mrf.mxu0
  %v4434 = vadd.f32 %v4189, %v4433
  %v4435 = vpop.f32.mrf.mxu0
  %4436 = vmatprep.mubr.f32.mxu0 0.0
  %4437 = vmatmul.mubr.f32.gmra.mxu0 %v569
  %v4438 = vpop.f32.mrf.mxu0
  %v4439 = vadd.f32 %v4194, %v4438
  %v4440 = vpop.f32.mrf.mxu0
  %4441 = vmatprep.mubr.f32.mxu0 0.0
  %4442 = vmatmul.mubr.f32.gmra.mxu0 %v594
  %v4443 = vpop.f32.mrf.mxu0
  %v4444 = vadd.f32 %v4199, %v4443
  %v4445 = vpop.f32.mrf.mxu0
  %4446 = vmatprep.mubr.f32.mxu0 0.0
  %4447 = vmatmul.mubr.f32.gmra.mxu0 %v619
  %v4448 = vpop.f32.mrf.mxu0
  %v4449 = vadd.f32 %v4204, %v4448
  %v4450 = vpop.f32.mrf.mxu0
  %4451 = vmatprep.mubr.f32.mxu0 0.0
  %4452 = vmatmul.mubr.f32.gmra.mxu0 %v644
  %v4453 = vpop.f32.mrf.mxu0
  %v4454 = vadd.f32 %v4209, %v4453
  %v4455 = vpop.f32.mrf.mxu0
  %4456 = vmatprep.mubr.f32.mxu0 0.0
  %4457 = vmatmul.mubr.f32.gmra.mxu0 %v669
  %v4458 = vpop.f32.mrf.mxu0
  %v4459 = vadd.f32 %v4214, %v4458
  %v4460 = vpop.f32.mrf.mxu0
  %4461 = vmatprep.mubr.f32.mxu0 0.0
  %4462 = vmatmul.mubr.f32.gmra.mxu0 %v694
  %v4463 = vpop.f32.mrf.mxu0
  %v4464 = vadd.f32 %v4219, %v4463
  %v4465 = vpop.f32.mrf.mxu0
  %4466 = vmatprep.mubr.f32.mxu0 0.0
  %4467 = vmatmul.mubr.f32.gmra.mxu0 %v719
  %v4468 = vpop.f32.mrf.mxu0
  %v4469 = vadd.f32 %v4224, %v4468
  %v4470 = vpop.f32.mrf.mxu0
  %4471 = vmatprep.mubr.f32.mxu0 0.0
  %4472 = vmatmul.mubr.f32.gmra.mxu0 %v744
  %v4473 = vpop.f32.mrf.mxu0
  %v4474 = vadd.f32 %v4229, %v4473
  %v4475 = vpop.f32.mrf.mxu0
  %4476 = vmatprep.mubr.f32.mxu0 0.0
  %4477 = vmatmul.mubr.f32.gmra.mxu0 %v769
  %v4478 = vpop.f32.mrf.mxu0
  %v4479 = vadd.f32 %v4234, %v4478
  %v4480 = vpop.f32.mrf.mxu0
  %4481 = vmatprep.mubr.f32.mxu0 0.0
  %4482 = vmatmul.mubr.f32.gmra.mxu0 %v794
  %v4483 = vpop.f32.mrf.mxu0
  %v4484 = vadd.f32 %v4239, %v4483
  %v4485 = vpop.f32.mrf.mxu0
  %4486 = vmatprep.mubr.f32.mxu0 0.0
  %4487 = vmatmul.mubr.f32.gmra.mxu0 %v819
  %v4488 = vpop.f32.mrf.mxu0
  %v4489 = vadd.f32 %v4244, %v4488
  %v4490 = vpop.f32.mrf.mxu0
  %4491 = vmatprep.mubr.f32.mxu0 0.0
  %4492 = vmatmul.mubr.f32.gmra.mxu0 %v844
  %v4493 = vpop.f32.mrf.mxu0
  %v4494 = vadd.f32 %v4249, %v4493
  %v4495 = vpop.f32.mrf.mxu0
  %4496 = vmatprep.mubr.f32.mxu0 0.0
  %4497 = vmatmul.mubr.f32.gmra.mxu0 %v869
  %v4498 = vpop.f32.mrf.mxu0
  %v4499 = vadd.f32 %v4254, %v4498
  %v4500 = vpop.f32.mrf.mxu0
  %4501 = vmatprep.mubr.f32.mxu0 0.0
  %4502 = vmatmul.mubr.f32.gmra.mxu0 %v894
  %v4503 = vpop.f32.mrf.mxu0
  %v4504 = vadd.f32 %v4259, %v4503
  %v4505 = vpop.f32.mrf.mxu0
  %4506 = vmatprep.mubr.f32.mxu0 0.0
  %4507 = vmatmul.mubr.f32.gmra.mxu0 %v919
  %v4508 = vpop.f32.mrf.mxu0
  %v4509 = vadd.f32 %v4264, %v4508
  %v4510 = vpop.f32.mrf.mxu0
  %4511 = vdwg.mxu0
  %v4512 = vadd.f32 %v4334, %v4339
  %v4513 = vadd.f32 %v4512, %v4344
  %v4514 = vadd.f32 %v4513, %v4349
  %v4515 = vadd.f32 %v4514, %v4354
  %v4516 = vadd.f32 %v4515, %v4359
  %v4517 = vadd.f32 %v4516, %v4364
  %v4518 = vadd.f32 %v4517, %v4369
  %v4519 = vadd.f32 %v4518, %v4374
  %v4520 = vadd.f32 %v4519, %v4379
  %v4521 = vadd.f32 %v4520, %v4384
  %v4522 = vadd.f32 %v4521, %v4389
  %v4523 = vadd.f32 %v4522, %v4394
  %v4524 = vadd.f32 %v4523, %v4399
  %v4525 = vadd.f32 %v4524, %v4404
  %v4526 = vadd.f32 %v4525, %v4409
  %v4527 = vadd.f32 %v4526, %v4414
  %v4528 = vadd.f32 %v4527, %v4419
  %v4529 = vadd.f32 %v4528, %v4424
  %v4530 = vadd.f32 %v4529, %v4429
  %v4531 = vadd.f32 %v4530, %v4434
  %v4532 = vadd.f32 %v4531, %v4439
  %v4533 = vadd.f32 %v4532, %v4444
  %v4534 = vadd.f32 %v4533, %v4449
  %v4535 = vadd.f32 %v4534, %v4454
  %v4536 = vadd.f32 %v4535, %v4459
  %v4537 = vadd.f32 %v4536, %v4464
  %v4538 = vadd.f32 %v4537, %v4469
  %v4539 = vadd.f32 %v4538, %v4474
  %v4540 = vadd.f32 %v4539, %v4479
  %v4541 = vadd.f32 %v4540, %v4484
  %v4542 = vadd.f32 %v4541, %v4489
  %v4543 = vadd.f32 %v4542, %v4494
  %v4544 = vadd.f32 %v4543, %v4499
  %v4545 = vadd.f32 %v4544, %v4504
  %v4546 = vadd.f32 %v4545, %v4509
  %v4547 = vrot.slane %v4546, 4
  %v4548 = vadd.f32 %v4546, %v4547
  %v4549 = vrot.slane %v4548, 2
  %v4550 = vadd.f32 %v4548, %v4549
  %v4551 = vrot.slane %v4550, 1
  %v4552 = vadd.f32 %v4550, %v4551
  %v4553 = vrcp.pop 288.0
  %v4554 = vmul.f32 %v4552, %v4553
  %v4555 = vsub.f32 %v4334, %v4554
  %v4556 = vsub.f32 %v4339, %v4554
  %v4557 = vsub.f32 %v4344, %v4554
  %v4558 = vsub.f32 %v4349, %v4554
  %v4559 = vsub.f32 %v4354, %v4554
  %v4560 = vsub.f32 %v4359, %v4554
  %v4561 = vsub.f32 %v4364, %v4554
  %v4562 = vsub.f32 %v4369, %v4554
  %v4563 = vsub.f32 %v4374, %v4554
  %v4564 = vsub.f32 %v4379, %v4554
  %v4565 = vsub.f32 %v4384, %v4554
  %v4566 = vsub.f32 %v4389, %v4554
  %v4567 = vsub.f32 %v4394, %v4554
  %v4568 = vsub.f32 %v4399, %v4554
  %v4569 = vsub.f32 %v4404, %v4554
  %v4570 = vsub.f32 %v4409, %v4554
  %v4571 = vsub.f32 %v4414, %v4554
  %v4572 = vsub.f32 %v4419, %v4554
  %v4573 = vsub.f32 %v4424, %v4554
  %v4574 = vsub.f32 %v4429, %v4554
  %v4575 = vsub.f32 %v4434, %v4554
  %v4576 = vsub.f32 %v4439, %v4554
  %v4577 = vsub.f32 %v4444, %v4554
  %v4578 = vsub.f32 %v4449, %v4554
  %v4579 = vsub.f32 %v4454, %v4554
  %v4580 = vsub.f32 %v4459, %v4554
  %v4581 = vsub.f32 %v4464, %v4554
  %v4582 = vsub.f32 %v4469, %v4554
  %v4583 = vsub.f32 %v4474, %v4554
  %v4584 = vsub.f32 %v4479, %v4554
  %v4585 = vsub.f32 %v4484, %v4554
  %v4586 = vsub.f32 %v4489, %v4554
  %v4587 = vsub.f32 %v4494, %v4554
  %v4588 = vsub.f32 %v4499, %v4554
  %v4589 = vsub.f32 %v4504, %v4554
  %v4590 = vsub.f32 %v4509, %v4554
  %v4591 = vmul.f32 %v4555, %v4555
  %v4592 = vmul.f32 %v4556, %v4556
  %v4593 = vmul.f32 %v4557, %v4557
  %v4594 = vmul.f32 %v4558, %v4558
  %v4595 = vmul.f32 %v4559, %v4559
  %v4596 = vmul.f32 %v4560, %v4560
  %v4597 = vmul.f32 %v4561, %v4561
  %v4598 = vmul.f32 %v4562, %v4562
  %v4599 = vmul.f32 %v4563, %v4563
  %v4600 = vmul.f32 %v4564, %v4564
  %v4601 = vmul.f32 %v4565, %v4565
  %v4602 = vmul.f32 %v4566, %v4566
  %v4603 = vmul.f32 %v4567, %v4567
  %v4604 = vmul.f32 %v4568, %v4568
  %v4605 = vmul.f32 %v4569, %v4569
  %v4606 = vmul.f32 %v4570, %v4570
  %v4607 = vmul.f32 %v4571, %v4571
  %v4608 = vmul.f32 %v4572, %v4572
  %v4609 = vmul.f32 %v4573, %v4573
  %v4610 = vmul.f32 %v4574, %v4574
  %v4611 = vmul.f32 %v4575, %v4575
  %v4612 = vmul.f32 %v4576, %v4576
  %v4613 = vmul.f32 %v4577, %v4577
  %v4614 = vmul.f32 %v4578, %v4578
  %v4615 = vmul.f32 %v4579, %v4579
  %v4616 = vmul.f32 %v4580, %v4580
  %v4617 = vmul.f32 %v4581, %v4581
  %v4618 = vmul.f32 %v4582, %v4582
  %v4619 = vmul.f32 %v4583, %v4583
  %v4620 = vmul.f32 %v4584, %v4584
  %v4621 = vmul.f32 %v4585, %v4585
  %v4622 = vmul.f32 %v4586, %v4586
  %v4623 = vmul.f32 %v4587, %v4587
  %v4624 = vmul.f32 %v4588, %v4588
  %v4625 = vmul.f32 %v4589, %v4589
  %v4626 = vmul.f32 %v4590, %v4590
  %v4627 = vadd.f32 %v4591, %v4592
  %v4628 = vadd.f32 %v4627, %v4593
  %v4629 = vadd.f32 %v4628, %v4594
  %v4630 = vadd.f32 %v4629, %v4595
  %v4631 = vadd.f32 %v4630, %v4596
  %v4632 = vadd.f32 %v4631, %v4597
  %v4633 = vadd.f32 %v4632, %v4598
  %v4634 = vadd.f32 %v4633, %v4599
  %v4635 = vadd.f32 %v4634, %v4600
  %v4636 = vadd.f32 %v4635, %v4601
  %v4637 = vadd.f32 %v4636, %v4602
  %v4638 = vadd.f32 %v4637, %v4603
  %v4639 = vadd.f32 %v4638, %v4604
  %v4640 = vadd.f32 %v4639, %v4605
  %v4641 = vadd.f32 %v4640, %v4606
  %v4642 = vadd.f32 %v4641, %v4607
  %v4643 = vadd.f32 %v4642, %v4608
  %v4644 = vadd.f32 %v4643, %v4609
  %v4645 = vadd.f32 %v4644, %v4610
  %v4646 = vadd.f32 %v4645, %v4611
  %v4647 = vadd.f32 %v4646, %v4612
  %v4648 = vadd.f32 %v4647, %v4613
  %v4649 = vadd.f32 %v4648, %v4614
  %v4650 = vadd.f32 %v4649, %v4615
  %v4651 = vadd.f32 %v4650, %v4616
  %v4652 = vadd.f32 %v4651, %v4617
  %v4653 = vadd.f32 %v4652, %v4618
  %v4654 = vadd.f32 %v4653, %v4619
  %v4655 = vadd.f32 %v4654, %v4620
  %v4656 = vadd.f32 %v4655, %v4621
  %v4657 = vadd.f32 %v4656, %v4622
  %v4658 = vadd.f32 %v4657, %v4623
  %v4659 = vadd.f32 %v4658, %v4624
  %v4660 = vadd.f32 %v4659, %v4625
  %v4661 = vadd.f32 %v4660, %v4626
  %v4662 = vrot.slane %v4661, 4
  %v4663 = vadd.f32 %v4661, %v4662
  %v4664 = vrot.slane %v4663, 2
  %v4665 = vadd.f32 %v4663, %v4664
  %v4666 = vrot.slane %v4665, 1
  %v4667 = vadd.f32 %v4665, %v4666
  %v4668 = vmul.f32 %v4667, %v4553
  %v4669 = vadd.f32 %v4668, 1e-05
  %v4670 = vrsqrt.pop %v4669
  %v4671 = vmul.f32 %v4555, %v4670
  %v4672 = vmul.f32 %v4556, %v4670
  %v4673 = vmul.f32 %v4557, %v4670
  %v4674 = vmul.f32 %v4558, %v4670
  %v4675 = vmul.f32 %v4559, %v4670
  %v4676 = vmul.f32 %v4560, %v4670
  %v4677 = vmul.f32 %v4561, %v4670
  %v4678 = vmul.f32 %v4562, %v4670
  %v4679 = vmul.f32 %v4563, %v4670
  %v4680 = vmul.f32 %v4564, %v4670
  %v4681 = vmul.f32 %v4565, %v4670
  %v4682 = vmul.f32 %v4566, %v4670
  %v4683 = vmul.f32 %v4567, %v4670
  %v4684 = vmul.f32 %v4568, %v4670
  %v4685 = vmul.f32 %v4569, %v4670
  %v4686 = vmul.f32 %v4570, %v4670
  %v4687 = vmul.f32 %v4571, %v4670
  %v4688 = vmul.f32 %v4572, %v4670
  %v4689 = vmul.f32 %v4573, %v4670
  %v4690 = vmul.f32 %v4574, %v4670
  %v4691 = vmul.f32 %v4575, %v4670
  %v4692 = vmul.f32 %v4576, %v4670
  %v4693 = vmul.f32 %v4577, %v4670
  %v4694 = vmul.f32 %v4578, %v4670
  %v4695 = vmul.f32 %v4579, %v4670
  %v4696 = vmul.f32 %v4580, %v4670
  %v4697 = vmul.f32 %v4581, %v4670
  %v4698 = vmul.f32 %v4582, %v4670
  %v4699 = vmul.f32 %v4583, %v4670
  %v4700 = vmul.f32 %v4584, %v4670
  %v4701 = vmul.f32 %v4585, %v4670
  %v4702 = vmul.f32 %v4586, %v4670
  %v4703 = vmul.f32 %v4587, %v4670
  %v4704 = vmul.f32 %v4588, %v4670
  %v4705 = vmul.f32 %v4589, %v4670
  %v4706 = vmul.f32 %v4590, %v4670
  %v4707 = vld [vmem:[%s3] sm:$0x1]
  %v4709 = vlaneseq
  %v4710 = vshrl.u32 %v4709, 7
  %v4711 = vsub.s32 0, %v4710
  %v4712 = vrot.slane %v4707, %v4711
  %v4714 = vmul.f32 %v4671, %v4712
  %v4715 = vmul.f32 %v4672, %v4712
  %v4716 = vmul.f32 %v4673, %v4712
  %v4717 = vmul.f32 %v4674, %v4712
  %v4718 = vmul.f32 %v4675, %v4712
  %v4719 = vmul.f32 %v4676, %v4712
  %v4720 = vmul.f32 %v4677, %v4712
  %v4721 = vmul.f32 %v4678, %v4712
  %v4722 = vmul.f32 %v4679, %v4712
  %v4723 = vmul.f32 %v4680, %v4712
  %v4724 = vmul.f32 %v4681, %v4712
  %v4725 = vmul.f32 %v4682, %v4712
  %v4726 = vmul.f32 %v4683, %v4712
  %v4727 = vmul.f32 %v4684, %v4712
  %v4728 = vmul.f32 %v4685, %v4712
  %v4729 = vmul.f32 %v4686, %v4712
  %v4730 = vmul.f32 %v4687, %v4712
  %v4731 = vmul.f32 %v4688, %v4712
  %v4732 = vmul.f32 %v4689, %v4712
  %v4733 = vmul.f32 %v4690, %v4712
  %v4734 = vmul.f32 %v4691, %v4712
  %v4735 = vmul.f32 %v4692, %v4712
  %v4736 = vmul.f32 %v4693, %v4712
  %v4737 = vmul.f32 %v4694, %v4712
  %v4738 = vmul.f32 %v4695, %v4712
  %v4739 = vmul.f32 %v4696, %v4712
  %v4740 = vmul.f32 %v4697, %v4712
  %v4741 = vmul.f32 %v4698, %v4712
  %v4742 = vmul.f32 %v4699, %v4712
  %v4743 = vmul.f32 %v4700, %v4712
  %v4744 = vmul.f32 %v4701, %v4712
  %v4745 = vmul.f32 %v4702, %v4712
  %v4746 = vmul.f32 %v4703, %v4712
  %v4747 = vmul.f32 %v4704, %v4712
  %v4748 = vmul.f32 %v4705, %v4712
  %v4749 = vmul.f32 %v4706, %v4712
  %v4750 = vld [vmem:[%s4] sm:$0x1]
  %v4752 = vlaneseq
  %v4753 = vshrl.u32 %v4752, 7
  %v4754 = vsub.s32 0, %v4753
  %v4755 = vrot.slane %v4750, %v4754
  %v4757 = vadd.f32 %v4714, %v4755
  %v4758 = vadd.f32 %v4715, %v4755
  %v4759 = vadd.f32 %v4716, %v4755
  %v4760 = vadd.f32 %v4717, %v4755
  %v4761 = vadd.f32 %v4718, %v4755
  %v4762 = vadd.f32 %v4719, %v4755
  %v4763 = vadd.f32 %v4720, %v4755
  %v4764 = vadd.f32 %v4721, %v4755
  %v4765 = vadd.f32 %v4722, %v4755
  %v4766 = vadd.f32 %v4723, %v4755
  %v4767 = vadd.f32 %v4724, %v4755
  %v4768 = vadd.f32 %v4725, %v4755
  %v4769 = vadd.f32 %v4726, %v4755
  %v4770 = vadd.f32 %v4727, %v4755
  %v4771 = vadd.f32 %v4728, %v4755
  %v4772 = vadd.f32 %v4729, %v4755
  %v4773 = vadd.f32 %v4730, %v4755
  %v4774 = vadd.f32 %v4731, %v4755
  %v4775 = vadd.f32 %v4732, %v4755
  %v4776 = vadd.f32 %v4733, %v4755
  %v4777 = vadd.f32 %v4734, %v4755
  %v4778 = vadd.f32 %v4735, %v4755
  %v4779 = vadd.f32 %v4736, %v4755
  %v4780 = vadd.f32 %v4737, %v4755
  %v4781 = vadd.f32 %v4738, %v4755
  %v4782 = vadd.f32 %v4739, %v4755
  %v4783 = vadd.f32 %v4740, %v4755
  %v4784 = vadd.f32 %v4741, %v4755
  %v4785 = vadd.f32 %v4742, %v4755
  %v4786 = vadd.f32 %v4743, %v4755
  %v4787 = vadd.f32 %v4744, %v4755
  %v4788 = vadd.f32 %v4745, %v4755
  %v4789 = vadd.f32 %v4746, %v4755
  %v4790 = vadd.f32 %v4747, %v4755
  %v4791 = vadd.f32 %v4748, %v4755
  %v4792 = vadd.f32 %v4749, %v4755
  %v4793 = vmax.f32 %v4757, 0.0
  %v4794 = vmax.f32 %v4758, 0.0
  %v4795 = vmax.f32 %v4759, 0.0
  %v4796 = vmax.f32 %v4760, 0.0
  %v4797 = vmax.f32 %v4761, 0.0
  %v4798 = vmax.f32 %v4762, 0.0
  %v4799 = vmax.f32 %v4763, 0.0
  %v4800 = vmax.f32 %v4764, 0.0
  %v4801 = vmax.f32 %v4765, 0.0
  %v4802 = vmax.f32 %v4766, 0.0
  %v4803 = vmax.f32 %v4767, 0.0
  %v4804 = vmax.f32 %v4768, 0.0
  %v4805 = vmax.f32 %v4769, 0.0
  %v4806 = vmax.f32 %v4770, 0.0
  %v4807 = vmax.f32 %v4771, 0.0
  %v4808 = vmax.f32 %v4772, 0.0
  %v4809 = vmax.f32 %v4773, 0.0
  %v4810 = vmax.f32 %v4774, 0.0
  %v4811 = vmax.f32 %v4775, 0.0
  %v4812 = vmax.f32 %v4776, 0.0
  %v4813 = vmax.f32 %v4777, 0.0
  %v4814 = vmax.f32 %v4778, 0.0
  %v4815 = vmax.f32 %v4779, 0.0
  %v4816 = vmax.f32 %v4780, 0.0
  %v4817 = vmax.f32 %v4781, 0.0
  %v4818 = vmax.f32 %v4782, 0.0
  %v4819 = vmax.f32 %v4783, 0.0
  %v4820 = vmax.f32 %v4784, 0.0
  %v4821 = vmax.f32 %v4785, 0.0
  %v4822 = vmax.f32 %v4786, 0.0
  %v4823 = vmax.f32 %v4787, 0.0
  %v4824 = vmax.f32 %v4788, 0.0
  %v4825 = vmax.f32 %v4789, 0.0
  %v4826 = vmax.f32 %v4790, 0.0
  %v4827 = vmax.f32 %v4791, 0.0
  %v4828 = vmax.f32 %v4792, 0.0
  %4829 = vst [vmem:[%s5] sm:$0xff] %v4793
  %4830 = vst [vmem:[%s5 + $0x8] sm:$0xff] %v4794
  %4831 = vst [vmem:[%s5 + $0x10] sm:$0xff] %v4795
  %4832 = vst [vmem:[%s5 + $0x18] sm:$0xff] %v4796
  %4833 = vst [vmem:[%s5 + $0x20] sm:$0xff] %v4797
  %4834 = vst [vmem:[%s5 + $0x28] sm:$0xff] %v4798
  %4835 = vst [vmem:[%s5 + $0x30] sm:$0xff] %v4799
  %4836 = vst [vmem:[%s5 + $0x38] sm:$0xff] %v4800
  %4837 = vst [vmem:[%s5 + $0x40] sm:$0xff] %v4801
  %4838 = vst [vmem:[%s5 + $0x48] sm:$0xff] %v4802
  %4839 = vst [vmem:[%s5 + $0x50] sm:$0xff] %v4803
  %4840 = vst [vmem:[%s5 + $0x58] sm:$0xff] %v4804
  %4841 = vst [vmem:[%s5 + $0x60] sm:$0xff] %v4805
  %4842 = vst [vmem:[%s5 + $0x68] sm:$0xff] %v4806
  %4843 = vst [vmem:[%s5 + $0x70] sm:$0xff] %v4807
  %4844 = vst [vmem:[%s5 + $0x78] sm:$0xff] %v4808
  %4845 = vst [vmem:[%s5 + $0x80] sm:$0xff] %v4809
  %4846 = vst [vmem:[%s5 + $0x88] sm:$0xff] %v4810
  %4847 = vst [vmem:[%s5 + $0x90] sm:$0xff] %v4811
  %4848 = vst [vmem:[%s5 + $0x98] sm:$0xff] %v4812
  %4849 = vst [vmem:[%s5 + $0xa0] sm:$0xff] %v4813
  %4850 = vst [vmem:[%s5 + $0xa8] sm:$0xff] %v4814
  %4851 = vst [vmem:[%s5 + $0xb0] sm:$0xff] %v4815
  %4852 = vst [vmem:[%s5 + $0xb8] sm:$0xff] %v4816
  %4853 = vst [vmem:[%s5 + $0xc0] sm:$0xff] %v4817
  %4854 = vst [vmem:[%s5 + $0xc8] sm:$0xff] %v4818
  %4855 = vst [vmem:[%s5 + $0xd0] sm:$0xff] %v4819
  %4856 = vst [vmem:[%s5 + $0xd8] sm:$0xff] %v4820
  %4857 = vst [vmem:[%s5 + $0xe0] sm:$0xff] %v4821
  %4858 = vst [vmem:[%s5 + $0xe8] sm:$0xff] %v4822
  %4859 = vst [vmem:[%s5 + $0xf0] sm:$0xff] %v4823
  %4860 = vst [vmem:[%s5 + $0xf8] sm:$0xff] %v4824
  %4861 = vst [vmem:[%s5 + $0x100] sm:$0xff] %v4825
  %4862 = vst [vmem:[%s5 + $0x108] sm:$0xff] %v4826
  %4863 = vst [vmem:[%s5 + $0x110] sm:$0xff] %v4827
  %4864 = vst [vmem:[%s5 + $0x118] sm:$0xff] %v4828
  // Predicated region
  $region22: #{encoder_forward.6} parent=0 // pred_check
    _
  $region23: #{encoder_forward.6} parent=0 // pred_check_branch
    %4866 = sbr.rel (0) target = $region25
  $region24: #{encoder_forward.6} parent=0 // pred_region
    _
  $region25: #{encoder_forward.6} parent=0 // pred_fallthru
    _
  // Predicated region
  $region26: #{encoder_forward.6} parent=0 // pred_check
    _
  $region27: #{encoder_forward.6} parent=0 // pred_check_branch
    %4868 = sbr.rel (0) target = $region29
  $region28: #{encoder_forward.6} parent=0 // pred_region
    _
  $region29: #{encoder_forward.6} parent=0 // pred_fallthru
    _

</llo_original>
